<compile_context>
chip_gen: v6e
topology: v6e:2x2x1
jax: 0.10.0
libtpu: 0.0.40
codegen_flags: <defaults>
</compile_context>

<pallas_src>
import functools

import jax
import jax.numpy as jnp
from jax.experimental import pallas as pl
from jax.experimental.pallas import tpu as pltpu


# conv_1_2 .. conv_1_16 configurations (asy=False, bias=True).
# BatchNorm2d is present only when dil == 1 (per conv_norm_act.__init__).
LAYER_CFGS = [
    dict(k=1, pad=0, dil=1, bn=True),   # conv_1_2
    dict(k=3, pad=1, dil=1, bn=True),   # conv_1_3
    dict(k=5, pad=2, dil=1, bn=True),   # conv_1_4
    dict(k=3, pad=2, dil=2, bn=False),  # conv_1_5
    dict(k=1, pad=0, dil=1, bn=True),   # conv_1_6
    dict(k=3, pad=1, dil=1, bn=True),   # conv_1_7
    dict(k=5, pad=2, dil=1, bn=True),   # conv_1_8
    dict(k=3, pad=2, dil=2, bn=False),  # conv_1_9
    dict(k=1, pad=0, dil=1, bn=True),   # conv_1_10
    dict(k=3, pad=1, dil=1, bn=True),   # conv_1_11
    dict(k=5, pad=2, dil=1, bn=True),   # conv_1_12
    dict(k=3, pad=2, dil=2, bn=False),  # conv_1_13
    dict(k=1, pad=0, dil=1, bn=True),   # conv_1_14
    dict(k=3, pad=1, dil=1, bn=True),   # conv_1_15
    dict(k=5, pad=2, dil=1, bn=True),   # conv_1_16
]

STAGE_LAYERS = ((0, 1, 2), (4, 5, 6), (8, 9, 10), (12, 13, 14))
MID_LAYERS = (3, 7, 11)

STAGE_SHIFTS = (-2, -1, 0, 1, 2)   # union of row taps of the k=1/3/5 branches
MID_SHIFTS = (-2, 0, 2)            # row taps of the k=3, dil=2 layers

# Zero rows above/below each image in the VMEM line buffer.  Only 2 are needed
# (max pad = 2); 8 keeps the interior writes on full (8,128) sublane tiles.
PAD_ROWS = 8


# ------------------------------ Pallas kernel -------------------------------

def _mish(y):
    """mish(y) = y * tanh(softplus(y)), cancellation-free form.

    tanh(log(1+e)) = (e^2 + 2e) / (e^2 + 2e + 2), e = exp(y).  No subtraction,
    so strongly negative y no longer hits catastrophic cancellation (review
    note).  The clamp at 20 keeps e^2 finite; mish(y >= 20) == y to f32 eps.
    """
    e = jnp.exp(jnp.minimum(y, 20.0))
    num = e * (e + 2.0)
    return y * num * pl.reciprocal(num + 2.0, approx=True)


def _mkm_bone_kernel(x_ref, sshift_ref, mshift_ref,
                     ws0_ref, ws1_ref, ws2_ref, ws3_ref,
                     wm0_ref, wm1_ref, wm2_ref,
                     o_ref, pbuf, *, H, WC, IMG):
    """Fused mkm_bone forward for IMG stacked images.

      x_ref      : (IMG, H, WC)        lane-dense input images
      sshift_ref : (4, 3*WC)           per-stage conv-bias*scale + BN shift
      mshift_ref : (3, WC)             per-mid-layer conv bias
      ws*_ref    : (5*WC, 3*WC) bf16   stage-merged lane-space weights
      wm*_ref    : (3*WC, WC)   bf16   dil=2 layer lane-space weights
      o_ref      : (IMG, H, WC)
      pbuf       : (IMG, H+2*PAD_ROWS, WC) f32 VMEM line buffer (H zero pad)
    """
    M = IMG * H

    # H-direction zero padding: zero only the pad rows (interior rows are
    # rewritten by every layer; pad rows never are).
    zpad = jnp.zeros((IMG, PAD_ROWS, WC), jnp.float32)
    pbuf[:, pl.ds(0, PAD_ROWS), :] = zpad
    pbuf[:, pl.ds(PAD_ROWS + H, PAD_ROWS), :] = zpad
    pbuf[:, pl.ds(PAD_ROWS, H), :] = x_ref[...]

    def shifted_lhs(shifts):
        # ONE aligned whole-slab load; the row-shifted tap copies are static
        # slices of the in-register value (no per-tap unaligned VMEM reads),
        # lane-concatenated into the K axis of the wide GEMM, cast to bf16.
        slab = pbuf[...]                                     # (IMG, Hp, WC) f32
        parts = [slab[:, PAD_ROWS + s:PAD_ROWS + s + H, :].reshape(M, WC)
                 for s in shifts]
        return jnp.concatenate(parts, axis=-1).astype(jnp.bfloat16)

    def stage(w_ref, si):
        # All 3 branches x all row taps of one stage as ONE bf16 MXU GEMM with
        # f32 accumulation: (M, 5*WC) x (5*WC, 3*WC).  Single K-concatenated
        # dot => MRB-friendly on v7x (no per-tap VPU accumulate chain).
        y = jnp.dot(shifted_lhs(STAGE_SHIFTS), w_ref[...],
                    preferred_element_type=jnp.float32)      # (M, 3*WC) f32
        y = y + sshift_ref[pl.ds(si, 1), :]    # conv bias * bn_scale + bn_shift
        return (_mish(y[:, 0:WC]) + _mish(y[:, WC:2 * WC])
                + _mish(y[:, 2 * WC:3 * WC]))                # (M, WC) f32

    def mid(w_ref, mi):
        # dil=2, k=3 layer (no BN): one (M, 3*WC) x (3*WC, WC) GEMM.
        y = jnp.dot(shifted_lhs(MID_SHIFTS), w_ref[...],
                    preferred_element_type=jnp.float32)
        y = y + mshift_ref[pl.ds(mi, 1), :]                  # conv bias
        return _mish(y)

    def store(val):
        pbuf[:, pl.ds(PAD_ROWS, H), :] = val.reshape(IMG, H, WC)

    store(stage(ws0_ref, 0))   # x1 = mish(c1_2) + mish(c1_3) + mish(c1_4)
    store(mid(wm0_ref, 0))     # x1 = conv_1_5(x1)   (dil=2, no BN)
    store(stage(ws1_ref, 1))   # x2
    store(mid(wm1_ref, 1))     # x2 = conv_1_9(x2)
    store(stage(ws2_ref, 2))   # x3
    store(mid(wm2_ref, 2))     # x3 = conv_1_13(x3)
    o_ref[...] = stage(ws3_ref, 3).reshape(IMG, H, WC)       # x4


# --------------------------- wrapper-side folding ----------------------------

def _fold_tap_matrix(w_kh, pad, dil, scale, W, C):
    """Fold one row tap (fixed kh) into a (W*C, W*C) lane-space matrix.

    m[w_in*C+ci, w_out*C+co] = w_kh[kw, ci, co] * scale[co]
      with w_in = w_out + kw*dil - pad (zero otherwise -- this also encodes the
      W-direction zero padding).  BN scale is folded into the output columns so
      the kernel only needs a shift add after the GEMM.
    """
    k = w_kh.shape[0]
    WC = W * C
    idx = jnp.arange(W)
    m = jnp.zeros((WC, WC), jnp.float32)
    for kw in range(k):
        s = kw * dil - pad
        ind = (idx[:, None] == (idx[None, :] + s)).astype(jnp.float32)
        m = m + jnp.kron(ind, w_kh[kw] * scale[None, :])
    return m


def _fold_stage(branches, W, C):
    """Merge one 3-branch stage (k=1,3,5; dil=1) into a single bf16 weight.

    Returns
      w_stage   : (len(STAGE_SHIFTS)*W*C, 3*W*C) bf16 -- block (si, b) is
                  branch b's lane matrix for the row tap at STAGE_SHIFTS[si]
                  (zero if that branch has no such tap).
      shift_row : (3*W*C,) f32  per-branch conv-bias*scale + BN shift.
    """
    WC = W * C
    rows = []
    for s in STAGE_SHIFTS:
        blocks = []
        for p in branches:
            k, pad, dil = p["k"], p["pad"], p["dil"]
            kh = s + pad                       # dil == 1 for stage branches
            if 0 <= kh < k:
                blocks.append(_fold_tap_matrix(p["w"][kh], pad, dil,
                                               p["scale"], W, C))
            else:
                blocks.append(jnp.zeros((WC, WC), jnp.float32))
        rows.append(jnp.concatenate(blocks, axis=1))
    w_stage = jnp.concatenate(rows, axis=0).astype(jnp.bfloat16)
    shift_row = jnp.concatenate(
        [jnp.tile(p["b"] * p["scale"] + p["shift"], W) for p in branches])
    return w_stage, shift_row.astype(jnp.float32)


def _fold_mid(p, W, C):
    """Fold one dil=2, k=3 layer into a bf16 (3*W*C, W*C) weight + shift row."""
    rows = []
    for s in MID_SHIFTS:
        kh = (s + p["pad"]) // p["dil"]        # pad=2, dil=2: -2,0,2 -> 0,1,2
        rows.append(_fold_tap_matrix(p["w"][kh], p["pad"], p["dil"],
                                     p["scale"], W, C))
    w_mid = jnp.concatenate(rows, axis=0).astype(jnp.bfloat16)
    shift_row = jnp.tile(p["b"] * p["scale"] + p["shift"], W)
    return w_mid, shift_row.astype(jnp.float32)


# ------------------------------ Pallas wrapper -------------------------------

def mkm_bone_pallas(x_nchw, params, *, images_per_step=None):
    """Fused mkm_bone forward.  x_nchw: (N, C, H, W) f32 -> (N, C, H, W) f32."""
    N, C, H, W = x_nchw.shape
    WC = W * C
    assert WC % 128 == 0 and H % 8 == 0, (WC, H)
    if images_per_step is None:
        # Stack 2 images per grid step (more MXU rows, amortized epilogue)
        # while keeping >= 2 grid steps when possible for v7x's 2 TensorCores.
        images_per_step = 2 if N % 2 == 0 else 1
    IMG = images_per_step
    assert N % IMG == 0, (N, IMG)

    # NCHW -> NHWC -> lane-dense (N, H, W*C).
    x = jnp.transpose(x_nchw, (0, 2, 3, 1)).reshape(N, H, WC)

    w_stages, stage_shifts = [], []
    for idxs in STAGE_LAYERS:
        wst, sh = _fold_stage([params[i] for i in idxs], W, C)
        w_stages.append(wst)
        stage_shifts.append(sh)
    w_mids, mid_shifts = [], []
    for i in MID_LAYERS:
        wmd, sh = _fold_mid(params[i], W, C)
        w_mids.append(wmd)
        mid_shifts.append(sh)
    stage_shift_all = jnp.stack(stage_shifts)   # (4, 3*WC) f32
    mid_shift_all = jnp.stack(mid_shifts)       # (3, WC)   f32

    kernel = functools.partial(_mkm_bone_kernel, H=H, WC=WC, IMG=IMG)

    def const_spec(a):   # constant across grid steps (index map always 0)
        return pl.BlockSpec(a.shape, lambda g: (0, 0))

    in_specs = ([pl.BlockSpec((IMG, H, WC), lambda g: (g, 0, 0)),   # x
                 const_spec(stage_shift_all),
                 const_spec(mid_shift_all)]
                + [const_spec(w) for w in w_stages]
                + [const_spec(w) for w in w_mids])

    out = pl.pallas_call(
        kernel,
        out_shape=jax.ShapeDtypeStruct((N, H, WC), jnp.float32),
        grid_spec=pltpu.PrefetchScalarGridSpec(
            num_scalar_prefetch=0,
            grid=(N // IMG,),
            in_specs=in_specs,
            out_specs=pl.BlockSpec((IMG, H, WC), lambda g: (g, 0, 0)),
            scratch_shapes=[
                pltpu.VMEM((IMG, H + 2 * PAD_ROWS, WC), jnp.float32)],
        ),
        compiler_params=pltpu.CompilerParams(
            dimension_semantics=("parallel",)),
    )(x, stage_shift_all, mid_shift_all, *w_stages, *w_mids)

    # Back to NCHW for parity with the PyTorch module.
    return jnp.transpose(out.reshape(N, H, W, C), (0, 3, 1, 2))


# ---------------------------- plain-JAX reference ----------------------------

def _ref_conv_bn_act(x, w, b, scale, shift, *, pad, dil):
    y = jax.lax.conv_general_dilated(
        x, w, window_strides=(1, 1),
        padding=[(pad, pad), (pad, pad)],
        rhs_dilation=(dil, dil),
        dimension_numbers=("NHWC", "HWIO", "NHWC"))
    y = (y + b) * scale + shift
    sp = jnp.maximum(y, 0.0) + jnp.log1p(jnp.exp(-jnp.abs(y)))   # stable softplus
    return y * jnp.tanh(sp)


def mkm_bone_reference(x_nchw, params):
    x = jnp.transpose(x_nchw, (0, 2, 3, 1))   # NCHW -> NHWC

    def L(i, inp):
        p = params[i]
        return _ref_conv_bn_act(inp, p["w"], p["b"], p["scale"], p["shift"],
                                pad=p["pad"], dil=p["dil"])

    x1 = L(3, L(0, x) + L(1, x) + L(2, x))
    x2 = L(7, L(4, x1) + L(5, x1) + L(6, x1))
    x3 = L(11, L(8, x2) + L(9, x2) + L(10, x2))
    x4 = L(12, x3) + L(13, x3) + L(14, x3)
    return jnp.transpose(x4, (0, 3, 1, 2))    # NHWC -> NCHW


# --------------------------------- parameters --------------------------------

def init_params(key, basic_ch):
    """Deterministic synthetic parameters (conv weight/bias, folded BN)."""
    params = []
    eps = 1e-5
    for cfg in LAYER_CFGS:
        key, kw_, kb, kg, kbe, km, kv = jax.random.split(key, 7)
        k = cfg["k"]
        fan_in = basic_ch * k * k
        w = jax.random.normal(kw_, (k, k, basic_ch, basic_ch),
                              jnp.float32) / jnp.sqrt(float(fan_in))
        b = 0.05 * jax.random.normal(kb, (basic_ch,), jnp.float32)
        if cfg["bn"]:
            # TODO(synk): training-mode BatchNorm (batch stats + running-stat
            # update) is not reproduced; inference-mode BN is folded instead.
            gamma = 1.0 + 0.1 * jax.random.normal(kg, (basic_ch,), jnp.float32)
            beta = 0.05 * jax.random.normal(kbe, (basic_ch,), jnp.float32)
            mean = 0.05 * jax.random.normal(km, (basic_ch,), jnp.float32)
            var = 1.0 + 0.1 * jax.random.uniform(kv, (basic_ch,), jnp.float32)
            scale = gamma / jnp.sqrt(var + eps)
            shift = beta - mean * scale
        else:
            scale = jnp.ones((basic_ch,), jnp.float32)
            shift = jnp.zeros((basic_ch,), jnp.float32)
        p = dict(cfg)
        p.update(w=w, b=b, scale=scale, shift=shift)
        params.append(p)
    return params


# ------------------------------------ main ------------------------------------

if __name__ == "__main__":
    BASIC_CH = 8          # basic_ch = 8 ; act_name='mish', asy=False, bias=True
    N, H, W = 4, 16, 16   # W * BASIC_CH = 128 -> lane-dense tiles; 2 imgs/step

    key = jax.random.PRNGKey(0)
    kx, kp = jax.random.split(key)
    x = jax.random.normal(kx, (N, BASIC_CH, H, W), jnp.float32)   # NCHW
    params = init_params(kp, BASIC_CH)

    out = jax.block_until_ready(mkm_bone_pallas(x, params))
    ref = jax.block_until_ready(mkm_bone_reference(x, params))

    rel_l2 = float(jnp.linalg.norm(out - ref) / jnp.linalg.norm(ref))
    assert out.shape == (N, BASIC_CH, H, W), out.shape
    assert bool(jnp.isfinite(out).all())
    # bf16 matmul operands (f32 accumulation) over the 15-conv chain give ~1%
    # relative drift vs. the exact-f32 reference; gate at 3%.
    assert rel_l2 < 3e-2, f"rel_l2={rel_l2}"
    print("KERNEL_OK")
</pallas_src>

<mosaic_0001>
module attributes {stable_mosaic.version = 11 : i64} {
  func.func @_mkm_bone_kernel(%arg0: i32, %arg1: memref<2x16x128xf32, #tpu.memory_space<vmem>>, %arg2: memref<4x384xf32, #tpu.memory_space<vmem>>, %arg3: memref<3x128xf32, #tpu.memory_space<vmem>>, %arg4: memref<640x384xbf16, #tpu.memory_space<vmem>>, %arg5: memref<640x384xbf16, #tpu.memory_space<vmem>>, %arg6: memref<640x384xbf16, #tpu.memory_space<vmem>>, %arg7: memref<640x384xbf16, #tpu.memory_space<vmem>>, %arg8: memref<384x128xbf16, #tpu.memory_space<vmem>>, %arg9: memref<384x128xbf16, #tpu.memory_space<vmem>>, %arg10: memref<384x128xbf16, #tpu.memory_space<vmem>>, %arg11: memref<2x16x128xf32, #tpu.memory_space<vmem>>, %arg12: memref<2x32x128xf32, #tpu.memory_space<vmem>>) attributes {dimension_semantics = [#tpu.dimension_semantics<parallel>], iteration_bounds = array<i64: 2>, scalar_prefetch = 0 : i64, scratch_operands = 1 : i64, tpu.core_type = #tpu.core_type<tc>, window_params = [{transform_indices = @transform_0, window_bounds = array<i64: 2, 16, 128>}, {pipeline_mode = #tpu.pipeline_mode<synchronous>, transform_indices = @transform_1, window_bounds = array<i64: 4, 384>}, {pipeline_mode = #tpu.pipeline_mode<synchronous>, transform_indices = @transform_2, window_bounds = array<i64: 3, 128>}, {pipeline_mode = #tpu.pipeline_mode<synchronous>, transform_indices = @transform_3, window_bounds = array<i64: 640, 384>}, {pipeline_mode = #tpu.pipeline_mode<synchronous>, transform_indices = @transform_4, window_bounds = array<i64: 640, 384>}, {pipeline_mode = #tpu.pipeline_mode<synchronous>, transform_indices = @transform_5, window_bounds = array<i64: 640, 384>}, {pipeline_mode = #tpu.pipeline_mode<synchronous>, transform_indices = @transform_6, window_bounds = array<i64: 640, 384>}, {pipeline_mode = #tpu.pipeline_mode<synchronous>, transform_indices = @transform_7, window_bounds = array<i64: 384, 128>}, {pipeline_mode = #tpu.pipeline_mode<synchronous>, transform_indices = @transform_8, window_bounds = array<i64: 384, 128>}, {pipeline_mode = #tpu.pipeline_mode<synchronous>, transform_indices = @transform_9, window_bounds = array<i64: 384, 128>}, {transform_indices = @transform_10, window_bounds = array<i64: 2, 16, 128>}]} {
    %cst = arith.constant 0.000000e+00 : f32
    %0 = vector.broadcast %cst : f32 to vector<2x8x128xf32>
    %c0 = arith.constant 0 : index
    %c0_0 = arith.constant 0 : index
    %c0_1 = arith.constant 0 : index
    %1 = vector.load %arg12[%c0, %c0_0, %c0_1] : memref<2x32x128xf32, #tpu.memory_space<vmem>>, vector<2x8x128xf32>
    tpu.vector_store %arg12[%c0, %c0_0, %c0_1], %0 {strides = array<i32>} : memref<2x32x128xf32, #tpu.memory_space<vmem>>, vector<2x8x128xf32>,
    %c0_2 = arith.constant 0 : index
    %c24 = arith.constant 24 : index
    %c0_3 = arith.constant 0 : index
    %2 = vector.load %arg12[%c0_2, %c24, %c0_3] : memref<2x32x128xf32, #tpu.memory_space<vmem>>, vector<2x8x128xf32>
    tpu.vector_store %arg12[%c0_2, %c24, %c0_3], %0 {strides = array<i32>} : memref<2x32x128xf32, #tpu.memory_space<vmem>>, vector<2x8x128xf32>,
    %c0_4 = arith.constant 0 : index
    %c0_5 = arith.constant 0 : index
    %c0_6 = arith.constant 0 : index
    %3 = vector.load %arg1[%c0_4, %c0_5, %c0_6] : memref<2x16x128xf32, #tpu.memory_space<vmem>>, vector<2x16x128xf32>
    %c0_7 = arith.constant 0 : index
    %c8 = arith.constant 8 : index
    %c0_8 = arith.constant 0 : index
    %4 = vector.load %arg12[%c0_7, %c8, %c0_8] : memref<2x32x128xf32, #tpu.memory_space<vmem>>, vector<2x16x128xf32>
    tpu.vector_store %arg12[%c0_7, %c8, %c0_8], %3 {strides = array<i32>} : memref<2x32x128xf32, #tpu.memory_space<vmem>>, vector<2x16x128xf32>,
    %c0_9 = arith.constant 0 : index
    %c0_10 = arith.constant 0 : index
    %c0_11 = arith.constant 0 : index
    %5 = vector.load %arg12[%c0_9, %c0_10, %c0_11] : memref<2x32x128xf32, #tpu.memory_space<vmem>>, vector<2x32x128xf32>
    %6 = vector.extract_strided_slice %5 {offsets = [0, 6, 0], sizes = [2, 16, 128], strides = [1, 1, 1]} : vector<2x32x128xf32> to vector<2x16x128xf32>
    %7 = vector.shape_cast %6 : vector<2x16x128xf32> to vector<32x128xf32>
    %8 = vector.extract_strided_slice %5 {offsets = [0, 7, 0], sizes = [2, 16, 128], strides = [1, 1, 1]} : vector<2x32x128xf32> to vector<2x16x128xf32>
    %9 = vector.shape_cast %8 : vector<2x16x128xf32> to vector<32x128xf32>
    %10 = vector.extract_strided_slice %5 {offsets = [0, 8, 0], sizes = [2, 16, 128], strides = [1, 1, 1]} : vector<2x32x128xf32> to vector<2x16x128xf32>
    %11 = vector.shape_cast %10 : vector<2x16x128xf32> to vector<32x128xf32>
    %12 = vector.extract_strided_slice %5 {offsets = [0, 9, 0], sizes = [2, 16, 128], strides = [1, 1, 1]} : vector<2x32x128xf32> to vector<2x16x128xf32>
    %13 = vector.shape_cast %12 : vector<2x16x128xf32> to vector<32x128xf32>
    %14 = vector.extract_strided_slice %5 {offsets = [0, 10, 0], sizes = [2, 16, 128], strides = [1, 1, 1]} : vector<2x32x128xf32> to vector<2x16x128xf32>
    %15 = vector.shape_cast %14 : vector<2x16x128xf32> to vector<32x128xf32>
    %16 = tpu.concatenate %7, %9, %11, %13, %15 in 1 : vector<32x128xf32>, vector<32x128xf32>, vector<32x128xf32>, vector<32x128xf32>, vector<32x128xf32> -> vector<32x640xf32>
    %17 = arith.truncf %16 : vector<32x640xf32> to vector<32x640xbf16>
    %c0_12 = arith.constant 0 : index
    %c0_13 = arith.constant 0 : index
    %18 = vector.load %arg4[%c0_12, %c0_13] : memref<640x384xbf16, #tpu.memory_space<vmem>>, vector<640x384xbf16>
    %cst_14 = arith.constant dense<0.000000e+00> : vector<32x384xf32>
    %19 = tpu.matmul %17, %18, %cst_14 {dimension_numbers = #tpu.dot_dimension_numbers<[1], [0], [0], [1], [0, 0, 1, 1], [], []>} : vector<32x640xbf16>, vector<640x384xbf16>, vector<32x384xf32> -> vector<32x384xf32>
    %c0_15 = arith.constant 0 : index
    %c0_16 = arith.constant 0 : index
    %20 = vector.load %arg2[%c0_15, %c0_16] : memref<4x384xf32, #tpu.memory_space<vmem>>, vector<1x384xf32>
    %21 = vector.broadcast %20 : vector<1x384xf32> to vector<32x384xf32>
    %22 = arith.addf %19, %21 : vector<32x384xf32>
    %23 = vector.extract_strided_slice %22 {offsets = [0, 0], sizes = [32, 128], strides = [1, 1]} : vector<32x384xf32> to vector<32x128xf32>
    %cst_17 = arith.constant 2.000000e+01 : f32
    %24 = vector.broadcast %cst_17 : f32 to vector<32x128xf32>
    %25 = arith.minimumf %23, %24 : vector<32x128xf32>
    %26 = math.exp %25 : vector<32x128xf32>
    %cst_18 = arith.constant 2.000000e+00 : f32
    %27 = vector.broadcast %cst_18 : f32 to vector<32x128xf32>
    %28 = arith.addf %26, %27 : vector<32x128xf32>
    %29 = arith.mulf %26, %28 : vector<32x128xf32>
    %30 = arith.mulf %23, %29 : vector<32x128xf32>
    %cst_19 = arith.constant 2.000000e+00 : f32
    %31 = vector.broadcast %cst_19 : f32 to vector<32x128xf32>
    %32 = arith.addf %29, %31 : vector<32x128xf32>
    %33 = tpu.reciprocal %32 {approx = true} : vector<32x128xf32> -> vector<32x128xf32>
    %34 = arith.mulf %30, %33 : vector<32x128xf32>
    %35 = vector.extract_strided_slice %22 {offsets = [0, 128], sizes = [32, 128], strides = [1, 1]} : vector<32x384xf32> to vector<32x128xf32>
    %cst_20 = arith.constant 2.000000e+01 : f32
    %36 = vector.broadcast %cst_20 : f32 to vector<32x128xf32>
    %37 = arith.minimumf %35, %36 : vector<32x128xf32>
    %38 = math.exp %37 : vector<32x128xf32>
    %cst_21 = arith.constant 2.000000e+00 : f32
    %39 = vector.broadcast %cst_21 : f32 to vector<32x128xf32>
    %40 = arith.addf %38, %39 : vector<32x128xf32>
    %41 = arith.mulf %38, %40 : vector<32x128xf32>
    %42 = arith.mulf %35, %41 : vector<32x128xf32>
    %cst_22 = arith.constant 2.000000e+00 : f32
    %43 = vector.broadcast %cst_22 : f32 to vector<32x128xf32>
    %44 = arith.addf %41, %43 : vector<32x128xf32>
    %45 = tpu.reciprocal %44 {approx = true} : vector<32x128xf32> -> vector<32x128xf32>
    %46 = arith.mulf %42, %45 : vector<32x128xf32>
    %47 = arith.addf %34, %46 : vector<32x128xf32>
    %48 = vector.extract_strided_slice %22 {offsets = [0, 256], sizes = [32, 128], strides = [1, 1]} : vector<32x384xf32> to vector<32x128xf32>
    %cst_23 = arith.constant 2.000000e+01 : f32
    %49 = vector.broadcast %cst_23 : f32 to vector<32x128xf32>
    %50 = arith.minimumf %48, %49 : vector<32x128xf32>
    %51 = math.exp %50 : vector<32x128xf32>
    %cst_24 = arith.constant 2.000000e+00 : f32
    %52 = vector.broadcast %cst_24 : f32 to vector<32x128xf32>
    %53 = arith.addf %51, %52 : vector<32x128xf32>
    %54 = arith.mulf %51, %53 : vector<32x128xf32>
    %55 = arith.mulf %48, %54 : vector<32x128xf32>
    %cst_25 = arith.constant 2.000000e+00 : f32
    %56 = vector.broadcast %cst_25 : f32 to vector<32x128xf32>
    %57 = arith.addf %54, %56 : vector<32x128xf32>
    %58 = tpu.reciprocal %57 {approx = true} : vector<32x128xf32> -> vector<32x128xf32>
    %59 = arith.mulf %55, %58 : vector<32x128xf32>
    %60 = arith.addf %47, %59 : vector<32x128xf32>
    %61 = vector.shape_cast %60 : vector<32x128xf32> to vector<2x16x128xf32>
    %c0_26 = arith.constant 0 : index
    %c8_27 = arith.constant 8 : index
    %c0_28 = arith.constant 0 : index
    %62 = vector.load %arg12[%c0_26, %c8_27, %c0_28] : memref<2x32x128xf32, #tpu.memory_space<vmem>>, vector<2x16x128xf32>
    tpu.vector_store %arg12[%c0_26, %c8_27, %c0_28], %61 {strides = array<i32>} : memref<2x32x128xf32, #tpu.memory_space<vmem>>, vector<2x16x128xf32>,
    %c0_29 = arith.constant 0 : index
    %c0_30 = arith.constant 0 : index
    %c0_31 = arith.constant 0 : index
    %63 = vector.load %arg12[%c0_29, %c0_30, %c0_31] : memref<2x32x128xf32, #tpu.memory_space<vmem>>, vector<2x32x128xf32>
    %64 = vector.extract_strided_slice %63 {offsets = [0, 6, 0], sizes = [2, 16, 128], strides = [1, 1, 1]} : vector<2x32x128xf32> to vector<2x16x128xf32>
    %65 = vector.shape_cast %64 : vector<2x16x128xf32> to vector<32x128xf32>
    %66 = vector.extract_strided_slice %63 {offsets = [0, 8, 0], sizes = [2, 16, 128], strides = [1, 1, 1]} : vector<2x32x128xf32> to vector<2x16x128xf32>
    %67 = vector.shape_cast %66 : vector<2x16x128xf32> to vector<32x128xf32>
    %68 = vector.extract_strided_slice %63 {offsets = [0, 10, 0], sizes = [2, 16, 128], strides = [1, 1, 1]} : vector<2x32x128xf32> to vector<2x16x128xf32>
    %69 = vector.shape_cast %68 : vector<2x16x128xf32> to vector<32x128xf32>
    %70 = tpu.concatenate %65, %67, %69 in 1 : vector<32x128xf32>, vector<32x128xf32>, vector<32x128xf32> -> vector<32x384xf32>
    %71 = arith.truncf %70 : vector<32x384xf32> to vector<32x384xbf16>
    %c0_32 = arith.constant 0 : index
    %c0_33 = arith.constant 0 : index
    %72 = vector.load %arg8[%c0_32, %c0_33] : memref<384x128xbf16, #tpu.memory_space<vmem>>, vector<384x128xbf16>
    %cst_34 = arith.constant dense<0.000000e+00> : vector<32x128xf32>
    %73 = tpu.matmul %71, %72, %cst_34 {dimension_numbers = #tpu.dot_dimension_numbers<[1], [0], [0], [1], [0, 0, 1, 1], [], []>} : vector<32x384xbf16>, vector<384x128xbf16>, vector<32x128xf32> -> vector<32x128xf32>
    %c0_35 = arith.constant 0 : index
    %c0_36 = arith.constant 0 : index
    %74 = vector.load %arg3[%c0_35, %c0_36] : memref<3x128xf32, #tpu.memory_space<vmem>>, vector<1x128xf32>
    %75 = vector.broadcast %74 : vector<1x128xf32> to vector<32x128xf32>
    %76 = arith.addf %73, %75 : vector<32x128xf32>
    %cst_37 = arith.constant 2.000000e+01 : f32
    %77 = vector.broadcast %cst_37 : f32 to vector<32x128xf32>
    %78 = arith.minimumf %76, %77 : vector<32x128xf32>
    %79 = math.exp %78 : vector<32x128xf32>
    %cst_38 = arith.constant 2.000000e+00 : f32
    %80 = vector.broadcast %cst_38 : f32 to vector<32x128xf32>
    %81 = arith.addf %79, %80 : vector<32x128xf32>
    %82 = arith.mulf %79, %81 : vector<32x128xf32>
    %83 = arith.mulf %76, %82 : vector<32x128xf32>
    %cst_39 = arith.constant 2.000000e+00 : f32
    %84 = vector.broadcast %cst_39 : f32 to vector<32x128xf32>
    %85 = arith.addf %82, %84 : vector<32x128xf32>
    %86 = tpu.reciprocal %85 {approx = true} : vector<32x128xf32> -> vector<32x128xf32>
    %87 = arith.mulf %83, %86 : vector<32x128xf32>
    %88 = vector.shape_cast %87 : vector<32x128xf32> to vector<2x16x128xf32>
    %c0_40 = arith.constant 0 : index
    %c8_41 = arith.constant 8 : index
    %c0_42 = arith.constant 0 : index
    %89 = vector.load %arg12[%c0_40, %c8_41, %c0_42] : memref<2x32x128xf32, #tpu.memory_space<vmem>>, vector<2x16x128xf32>
    tpu.vector_store %arg12[%c0_40, %c8_41, %c0_42], %88 {strides = array<i32>} : memref<2x32x128xf32, #tpu.memory_space<vmem>>, vector<2x16x128xf32>,
    %c0_43 = arith.constant 0 : index
    %c0_44 = arith.constant 0 : index
    %c0_45 = arith.constant 0 : index
    %90 = vector.load %arg12[%c0_43, %c0_44, %c0_45] : memref<2x32x128xf32, #tpu.memory_space<vmem>>, vector<2x32x128xf32>
    %91 = vector.extract_strided_slice %90 {offsets = [0, 6, 0], sizes = [2, 16, 128], strides = [1, 1, 1]} : vector<2x32x128xf32> to vector<2x16x128xf32>
    %92 = vector.shape_cast %91 : vector<2x16x128xf32> to vector<32x128xf32>
    %93 = vector.extract_strided_slice %90 {offsets = [0, 7, 0], sizes = [2, 16, 128], strides = [1, 1, 1]} : vector<2x32x128xf32> to vector<2x16x128xf32>
    %94 = vector.shape_cast %93 : vector<2x16x128xf32> to vector<32x128xf32>
    %95 = vector.extract_strided_slice %90 {offsets = [0, 8, 0], sizes = [2, 16, 128], strides = [1, 1, 1]} : vector<2x32x128xf32> to vector<2x16x128xf32>
    %96 = vector.shape_cast %95 : vector<2x16x128xf32> to vector<32x128xf32>
    %97 = vector.extract_strided_slice %90 {offsets = [0, 9, 0], sizes = [2, 16, 128], strides = [1, 1, 1]} : vector<2x32x128xf32> to vector<2x16x128xf32>
    %98 = vector.shape_cast %97 : vector<2x16x128xf32> to vector<32x128xf32>
    %99 = vector.extract_strided_slice %90 {offsets = [0, 10, 0], sizes = [2, 16, 128], strides = [1, 1, 1]} : vector<2x32x128xf32> to vector<2x16x128xf32>
    %100 = vector.shape_cast %99 : vector<2x16x128xf32> to vector<32x128xf32>
    %101 = tpu.concatenate %92, %94, %96, %98, %100 in 1 : vector<32x128xf32>, vector<32x128xf32>, vector<32x128xf32>, vector<32x128xf32>, vector<32x128xf32> -> vector<32x640xf32>
    %102 = arith.truncf %101 : vector<32x640xf32> to vector<32x640xbf16>
    %c0_46 = arith.constant 0 : index
    %c0_47 = arith.constant 0 : index
    %103 = vector.load %arg5[%c0_46, %c0_47] : memref<640x384xbf16, #tpu.memory_space<vmem>>, vector<640x384xbf16>
    %cst_48 = arith.constant dense<0.000000e+00> : vector<32x384xf32>
    %104 = tpu.matmul %102, %103, %cst_48 {dimension_numbers = #tpu.dot_dimension_numbers<[1], [0], [0], [1], [0, 0, 1, 1], [], []>} : vector<32x640xbf16>, vector<640x384xbf16>, vector<32x384xf32> -> vector<32x384xf32>
    %c1 = arith.constant 1 : index
    %c0_49 = arith.constant 0 : index
    %105 = vector.load %arg2[%c1, %c0_49] : memref<4x384xf32, #tpu.memory_space<vmem>>, vector<1x384xf32>
    %106 = vector.broadcast %105 : vector<1x384xf32> to vector<32x384xf32>
    %107 = arith.addf %104, %106 : vector<32x384xf32>
    %108 = vector.extract_strided_slice %107 {offsets = [0, 0], sizes = [32, 128], strides = [1, 1]} : vector<32x384xf32> to vector<32x128xf32>
    %cst_50 = arith.constant 2.000000e+01 : f32
    %109 = vector.broadcast %cst_50 : f32 to vector<32x128xf32>
    %110 = arith.minimumf %108, %109 : vector<32x128xf32>
    %111 = math.exp %110 : vector<32x128xf32>
    %cst_51 = arith.constant 2.000000e+00 : f32
    %112 = vector.broadcast %cst_51 : f32 to vector<32x128xf32>
    %113 = arith.addf %111, %112 : vector<32x128xf32>
    %114 = arith.mulf %111, %113 : vector<32x128xf32>
    %115 = arith.mulf %108, %114 : vector<32x128xf32>
    %cst_52 = arith.constant 2.000000e+00 : f32
    %116 = vector.broadcast %cst_52 : f32 to vector<32x128xf32>
    %117 = arith.addf %114, %116 : vector<32x128xf32>
    %118 = tpu.reciprocal %117 {approx = true} : vector<32x128xf32> -> vector<32x128xf32>
    %119 = arith.mulf %115, %118 : vector<32x128xf32>
    %120 = vector.extract_strided_slice %107 {offsets = [0, 128], sizes = [32, 128], strides = [1, 1]} : vector<32x384xf32> to vector<32x128xf32>
    %cst_53 = arith.constant 2.000000e+01 : f32
    %121 = vector.broadcast %cst_53 : f32 to vector<32x128xf32>
    %122 = arith.minimumf %120, %121 : vector<32x128xf32>
    %123 = math.exp %122 : vector<32x128xf32>
    %cst_54 = arith.constant 2.000000e+00 : f32
    %124 = vector.broadcast %cst_54 : f32 to vector<32x128xf32>
    %125 = arith.addf %123, %124 : vector<32x128xf32>
    %126 = arith.mulf %123, %125 : vector<32x128xf32>
    %127 = arith.mulf %120, %126 : vector<32x128xf32>
    %cst_55 = arith.constant 2.000000e+00 : f32
    %128 = vector.broadcast %cst_55 : f32 to vector<32x128xf32>
    %129 = arith.addf %126, %128 : vector<32x128xf32>
    %130 = tpu.reciprocal %129 {approx = true} : vector<32x128xf32> -> vector<32x128xf32>
    %131 = arith.mulf %127, %130 : vector<32x128xf32>
    %132 = arith.addf %119, %131 : vector<32x128xf32>
    %133 = vector.extract_strided_slice %107 {offsets = [0, 256], sizes = [32, 128], strides = [1, 1]} : vector<32x384xf32> to vector<32x128xf32>
    %cst_56 = arith.constant 2.000000e+01 : f32
    %134 = vector.broadcast %cst_56 : f32 to vector<32x128xf32>
    %135 = arith.minimumf %133, %134 : vector<32x128xf32>
    %136 = math.exp %135 : vector<32x128xf32>
    %cst_57 = arith.constant 2.000000e+00 : f32
    %137 = vector.broadcast %cst_57 : f32 to vector<32x128xf32>
    %138 = arith.addf %136, %137 : vector<32x128xf32>
    %139 = arith.mulf %136, %138 : vector<32x128xf32>
    %140 = arith.mulf %133, %139 : vector<32x128xf32>
    %cst_58 = arith.constant 2.000000e+00 : f32
    %141 = vector.broadcast %cst_58 : f32 to vector<32x128xf32>
    %142 = arith.addf %139, %141 : vector<32x128xf32>
    %143 = tpu.reciprocal %142 {approx = true} : vector<32x128xf32> -> vector<32x128xf32>
    %144 = arith.mulf %140, %143 : vector<32x128xf32>
    %145 = arith.addf %132, %144 : vector<32x128xf32>
    %146 = vector.shape_cast %145 : vector<32x128xf32> to vector<2x16x128xf32>
    %c0_59 = arith.constant 0 : index
    %c8_60 = arith.constant 8 : index
    %c0_61 = arith.constant 0 : index
    %147 = vector.load %arg12[%c0_59, %c8_60, %c0_61] : memref<2x32x128xf32, #tpu.memory_space<vmem>>, vector<2x16x128xf32>
    tpu.vector_store %arg12[%c0_59, %c8_60, %c0_61], %146 {strides = array<i32>} : memref<2x32x128xf32, #tpu.memory_space<vmem>>, vector<2x16x128xf32>,
    %c0_62 = arith.constant 0 : index
    %c0_63 = arith.constant 0 : index
    %c0_64 = arith.constant 0 : index
    %148 = vector.load %arg12[%c0_62, %c0_63, %c0_64] : memref<2x32x128xf32, #tpu.memory_space<vmem>>, vector<2x32x128xf32>
    %149 = vector.extract_strided_slice %148 {offsets = [0, 6, 0], sizes = [2, 16, 128], strides = [1, 1, 1]} : vector<2x32x128xf32> to vector<2x16x128xf32>
    %150 = vector.shape_cast %149 : vector<2x16x128xf32> to vector<32x128xf32>
    %151 = vector.extract_strided_slice %148 {offsets = [0, 8, 0], sizes = [2, 16, 128], strides = [1, 1, 1]} : vector<2x32x128xf32> to vector<2x16x128xf32>
    %152 = vector.shape_cast %151 : vector<2x16x128xf32> to vector<32x128xf32>
    %153 = vector.extract_strided_slice %148 {offsets = [0, 10, 0], sizes = [2, 16, 128], strides = [1, 1, 1]} : vector<2x32x128xf32> to vector<2x16x128xf32>
    %154 = vector.shape_cast %153 : vector<2x16x128xf32> to vector<32x128xf32>
    %155 = tpu.concatenate %150, %152, %154 in 1 : vector<32x128xf32>, vector<32x128xf32>, vector<32x128xf32> -> vector<32x384xf32>
    %156 = arith.truncf %155 : vector<32x384xf32> to vector<32x384xbf16>
    %c0_65 = arith.constant 0 : index
    %c0_66 = arith.constant 0 : index
    %157 = vector.load %arg9[%c0_65, %c0_66] : memref<384x128xbf16, #tpu.memory_space<vmem>>, vector<384x128xbf16>
    %cst_67 = arith.constant dense<0.000000e+00> : vector<32x128xf32>
    %158 = tpu.matmul %156, %157, %cst_67 {dimension_numbers = #tpu.dot_dimension_numbers<[1], [0], [0], [1], [0, 0, 1, 1], [], []>} : vector<32x384xbf16>, vector<384x128xbf16>, vector<32x128xf32> -> vector<32x128xf32>
    %c1_68 = arith.constant 1 : index
    %c0_69 = arith.constant 0 : index
    %159 = vector.load %arg3[%c1_68, %c0_69] : memref<3x128xf32, #tpu.memory_space<vmem>>, vector<1x128xf32>
    %160 = vector.broadcast %159 : vector<1x128xf32> to vector<32x128xf32>
    %161 = arith.addf %158, %160 : vector<32x128xf32>
    %cst_70 = arith.constant 2.000000e+01 : f32
    %162 = vector.broadcast %cst_70 : f32 to vector<32x128xf32>
    %163 = arith.minimumf %161, %162 : vector<32x128xf32>
    %164 = math.exp %163 : vector<32x128xf32>
    %cst_71 = arith.constant 2.000000e+00 : f32
    %165 = vector.broadcast %cst_71 : f32 to vector<32x128xf32>
    %166 = arith.addf %164, %165 : vector<32x128xf32>
    %167 = arith.mulf %164, %166 : vector<32x128xf32>
    %168 = arith.mulf %161, %167 : vector<32x128xf32>
    %cst_72 = arith.constant 2.000000e+00 : f32
    %169 = vector.broadcast %cst_72 : f32 to vector<32x128xf32>
    %170 = arith.addf %167, %169 : vector<32x128xf32>
    %171 = tpu.reciprocal %170 {approx = true} : vector<32x128xf32> -> vector<32x128xf32>
    %172 = arith.mulf %168, %171 : vector<32x128xf32>
    %173 = vector.shape_cast %172 : vector<32x128xf32> to vector<2x16x128xf32>
    %c0_73 = arith.constant 0 : index
    %c8_74 = arith.constant 8 : index
    %c0_75 = arith.constant 0 : index
    %174 = vector.load %arg12[%c0_73, %c8_74, %c0_75] : memref<2x32x128xf32, #tpu.memory_space<vmem>>, vector<2x16x128xf32>
    tpu.vector_store %arg12[%c0_73, %c8_74, %c0_75], %173 {strides = array<i32>} : memref<2x32x128xf32, #tpu.memory_space<vmem>>, vector<2x16x128xf32>,
    %c0_76 = arith.constant 0 : index
    %c0_77 = arith.constant 0 : index
    %c0_78 = arith.constant 0 : index
    %175 = vector.load %arg12[%c0_76, %c0_77, %c0_78] : memref<2x32x128xf32, #tpu.memory_space<vmem>>, vector<2x32x128xf32>
    %176 = vector.extract_strided_slice %175 {offsets = [0, 6, 0], sizes = [2, 16, 128], strides = [1, 1, 1]} : vector<2x32x128xf32> to vector<2x16x128xf32>
    %177 = vector.shape_cast %176 : vector<2x16x128xf32> to vector<32x128xf32>
    %178 = vector.extract_strided_slice %175 {offsets = [0, 7, 0], sizes = [2, 16, 128], strides = [1, 1, 1]} : vector<2x32x128xf32> to vector<2x16x128xf32>
    %179 = vector.shape_cast %178 : vector<2x16x128xf32> to vector<32x128xf32>
    %180 = vector.extract_strided_slice %175 {offsets = [0, 8, 0], sizes = [2, 16, 128], strides = [1, 1, 1]} : vector<2x32x128xf32> to vector<2x16x128xf32>
    %181 = vector.shape_cast %180 : vector<2x16x128xf32> to vector<32x128xf32>
    %182 = vector.extract_strided_slice %175 {offsets = [0, 9, 0], sizes = [2, 16, 128], strides = [1, 1, 1]} : vector<2x32x128xf32> to vector<2x16x128xf32>
    %183 = vector.shape_cast %182 : vector<2x16x128xf32> to vector<32x128xf32>
    %184 = vector.extract_strided_slice %175 {offsets = [0, 10, 0], sizes = [2, 16, 128], strides = [1, 1, 1]} : vector<2x32x128xf32> to vector<2x16x128xf32>
    %185 = vector.shape_cast %184 : vector<2x16x128xf32> to vector<32x128xf32>
    %186 = tpu.concatenate %177, %179, %181, %183, %185 in 1 : vector<32x128xf32>, vector<32x128xf32>, vector<32x128xf32>, vector<32x128xf32>, vector<32x128xf32> -> vector<32x640xf32>
    %187 = arith.truncf %186 : vector<32x640xf32> to vector<32x640xbf16>
    %c0_79 = arith.constant 0 : index
    %c0_80 = arith.constant 0 : index
    %188 = vector.load %arg6[%c0_79, %c0_80] : memref<640x384xbf16, #tpu.memory_space<vmem>>, vector<640x384xbf16>
    %cst_81 = arith.constant dense<0.000000e+00> : vector<32x384xf32>
    %189 = tpu.matmul %187, %188, %cst_81 {dimension_numbers = #tpu.dot_dimension_numbers<[1], [0], [0], [1], [0, 0, 1, 1], [], []>} : vector<32x640xbf16>, vector<640x384xbf16>, vector<32x384xf32> -> vector<32x384xf32>
    %c2 = arith.constant 2 : index
    %c0_82 = arith.constant 0 : index
    %190 = vector.load %arg2[%c2, %c0_82] : memref<4x384xf32, #tpu.memory_space<vmem>>, vector<1x384xf32>
    %191 = vector.broadcast %190 : vector<1x384xf32> to vector<32x384xf32>
    %192 = arith.addf %189, %191 : vector<32x384xf32>
    %193 = vector.extract_strided_slice %192 {offsets = [0, 0], sizes = [32, 128], strides = [1, 1]} : vector<32x384xf32> to vector<32x128xf32>
    %cst_83 = arith.constant 2.000000e+01 : f32
    %194 = vector.broadcast %cst_83 : f32 to vector<32x128xf32>
    %195 = arith.minimumf %193, %194 : vector<32x128xf32>
    %196 = math.exp %195 : vector<32x128xf32>
    %cst_84 = arith.constant 2.000000e+00 : f32
    %197 = vector.broadcast %cst_84 : f32 to vector<32x128xf32>
    %198 = arith.addf %196, %197 : vector<32x128xf32>
    %199 = arith.mulf %196, %198 : vector<32x128xf32>
    %200 = arith.mulf %193, %199 : vector<32x128xf32>
    %cst_85 = arith.constant 2.000000e+00 : f32
    %201 = vector.broadcast %cst_85 : f32 to vector<32x128xf32>
    %202 = arith.addf %199, %201 : vector<32x128xf32>
    %203 = tpu.reciprocal %202 {approx = true} : vector<32x128xf32> -> vector<32x128xf32>
    %204 = arith.mulf %200, %203 : vector<32x128xf32>
    %205 = vector.extract_strided_slice %192 {offsets = [0, 128], sizes = [32, 128], strides = [1, 1]} : vector<32x384xf32> to vector<32x128xf32>
    %cst_86 = arith.constant 2.000000e+01 : f32
    %206 = vector.broadcast %cst_86 : f32 to vector<32x128xf32>
    %207 = arith.minimumf %205, %206 : vector<32x128xf32>
    %208 = math.exp %207 : vector<32x128xf32>
    %cst_87 = arith.constant 2.000000e+00 : f32
    %209 = vector.broadcast %cst_87 : f32 to vector<32x128xf32>
    %210 = arith.addf %208, %209 : vector<32x128xf32>
    %211 = arith.mulf %208, %210 : vector<32x128xf32>
    %212 = arith.mulf %205, %211 : vector<32x128xf32>
    %cst_88 = arith.constant 2.000000e+00 : f32
    %213 = vector.broadcast %cst_88 : f32 to vector<32x128xf32>
    %214 = arith.addf %211, %213 : vector<32x128xf32>
    %215 = tpu.reciprocal %214 {approx = true} : vector<32x128xf32> -> vector<32x128xf32>
    %216 = arith.mulf %212, %215 : vector<32x128xf32>
    %217 = arith.addf %204, %216 : vector<32x128xf32>
    %218 = vector.extract_strided_slice %192 {offsets = [0, 256], sizes = [32, 128], strides = [1, 1]} : vector<32x384xf32> to vector<32x128xf32>
    %cst_89 = arith.constant 2.000000e+01 : f32
    %219 = vector.broadcast %cst_89 : f32 to vector<32x128xf32>
    %220 = arith.minimumf %218, %219 : vector<32x128xf32>
    %221 = math.exp %220 : vector<32x128xf32>
    %cst_90 = arith.constant 2.000000e+00 : f32
    %222 = vector.broadcast %cst_90 : f32 to vector<32x128xf32>
    %223 = arith.addf %221, %222 : vector<32x128xf32>
    %224 = arith.mulf %221, %223 : vector<32x128xf32>
    %225 = arith.mulf %218, %224 : vector<32x128xf32>
    %cst_91 = arith.constant 2.000000e+00 : f32
    %226 = vector.broadcast %cst_91 : f32 to vector<32x128xf32>
    %227 = arith.addf %224, %226 : vector<32x128xf32>
    %228 = tpu.reciprocal %227 {approx = true} : vector<32x128xf32> -> vector<32x128xf32>
    %229 = arith.mulf %225, %228 : vector<32x128xf32>
    %230 = arith.addf %217, %229 : vector<32x128xf32>
    %231 = vector.shape_cast %230 : vector<32x128xf32> to vector<2x16x128xf32>
    %c0_92 = arith.constant 0 : index
    %c8_93 = arith.constant 8 : index
    %c0_94 = arith.constant 0 : index
    %232 = vector.load %arg12[%c0_92, %c8_93, %c0_94] : memref<2x32x128xf32, #tpu.memory_space<vmem>>, vector<2x16x128xf32>
    tpu.vector_store %arg12[%c0_92, %c8_93, %c0_94], %231 {strides = array<i32>} : memref<2x32x128xf32, #tpu.memory_space<vmem>>, vector<2x16x128xf32>,
    %c0_95 = arith.constant 0 : index
    %c0_96 = arith.constant 0 : index
    %c0_97 = arith.constant 0 : index
    %233 = vector.load %arg12[%c0_95, %c0_96, %c0_97] : memref<2x32x128xf32, #tpu.memory_space<vmem>>, vector<2x32x128xf32>
    %234 = vector.extract_strided_slice %233 {offsets = [0, 6, 0], sizes = [2, 16, 128], strides = [1, 1, 1]} : vector<2x32x128xf32> to vector<2x16x128xf32>
    %235 = vector.shape_cast %234 : vector<2x16x128xf32> to vector<32x128xf32>
    %236 = vector.extract_strided_slice %233 {offsets = [0, 8, 0], sizes = [2, 16, 128], strides = [1, 1, 1]} : vector<2x32x128xf32> to vector<2x16x128xf32>
    %237 = vector.shape_cast %236 : vector<2x16x128xf32> to vector<32x128xf32>
    %238 = vector.extract_strided_slice %233 {offsets = [0, 10, 0], sizes = [2, 16, 128], strides = [1, 1, 1]} : vector<2x32x128xf32> to vector<2x16x128xf32>
    %239 = vector.shape_cast %238 : vector<2x16x128xf32> to vector<32x128xf32>
    %240 = tpu.concatenate %235, %237, %239 in 1 : vector<32x128xf32>, vector<32x128xf32>, vector<32x128xf32> -> vector<32x384xf32>
    %241 = arith.truncf %240 : vector<32x384xf32> to vector<32x384xbf16>
    %c0_98 = arith.constant 0 : index
    %c0_99 = arith.constant 0 : index
    %242 = vector.load %arg10[%c0_98, %c0_99] : memref<384x128xbf16, #tpu.memory_space<vmem>>, vector<384x128xbf16>
    %cst_100 = arith.constant dense<0.000000e+00> : vector<32x128xf32>
    %243 = tpu.matmul %241, %242, %cst_100 {dimension_numbers = #tpu.dot_dimension_numbers<[1], [0], [0], [1], [0, 0, 1, 1], [], []>} : vector<32x384xbf16>, vector<384x128xbf16>, vector<32x128xf32> -> vector<32x128xf32>
    %c2_101 = arith.constant 2 : index
    %c0_102 = arith.constant 0 : index
    %244 = vector.load %arg3[%c2_101, %c0_102] : memref<3x128xf32, #tpu.memory_space<vmem>>, vector<1x128xf32>
    %245 = vector.broadcast %244 : vector<1x128xf32> to vector<32x128xf32>
    %246 = arith.addf %243, %245 : vector<32x128xf32>
    %cst_103 = arith.constant 2.000000e+01 : f32
    %247 = vector.broadcast %cst_103 : f32 to vector<32x128xf32>
    %248 = arith.minimumf %246, %247 : vector<32x128xf32>
    %249 = math.exp %248 : vector<32x128xf32>
    %cst_104 = arith.constant 2.000000e+00 : f32
    %250 = vector.broadcast %cst_104 : f32 to vector<32x128xf32>
    %251 = arith.addf %249, %250 : vector<32x128xf32>
    %252 = arith.mulf %249, %251 : vector<32x128xf32>
    %253 = arith.mulf %246, %252 : vector<32x128xf32>
    %cst_105 = arith.constant 2.000000e+00 : f32
    %254 = vector.broadcast %cst_105 : f32 to vector<32x128xf32>
    %255 = arith.addf %252, %254 : vector<32x128xf32>
    %256 = tpu.reciprocal %255 {approx = true} : vector<32x128xf32> -> vector<32x128xf32>
    %257 = arith.mulf %253, %256 : vector<32x128xf32>
    %258 = vector.shape_cast %257 : vector<32x128xf32> to vector<2x16x128xf32>
    %c0_106 = arith.constant 0 : index
    %c8_107 = arith.constant 8 : index
    %c0_108 = arith.constant 0 : index
    %259 = vector.load %arg12[%c0_106, %c8_107, %c0_108] : memref<2x32x128xf32, #tpu.memory_space<vmem>>, vector<2x16x128xf32>
    tpu.vector_store %arg12[%c0_106, %c8_107, %c0_108], %258 {strides = array<i32>} : memref<2x32x128xf32, #tpu.memory_space<vmem>>, vector<2x16x128xf32>,
    %c0_109 = arith.constant 0 : index
    %c0_110 = arith.constant 0 : index
    %c0_111 = arith.constant 0 : index
    %260 = vector.load %arg12[%c0_109, %c0_110, %c0_111] : memref<2x32x128xf32, #tpu.memory_space<vmem>>, vector<2x32x128xf32>
    %261 = vector.extract_strided_slice %260 {offsets = [0, 6, 0], sizes = [2, 16, 128], strides = [1, 1, 1]} : vector<2x32x128xf32> to vector<2x16x128xf32>
    %262 = vector.shape_cast %261 : vector<2x16x128xf32> to vector<32x128xf32>
    %263 = vector.extract_strided_slice %260 {offsets = [0, 7, 0], sizes = [2, 16, 128], strides = [1, 1, 1]} : vector<2x32x128xf32> to vector<2x16x128xf32>
    %264 = vector.shape_cast %263 : vector<2x16x128xf32> to vector<32x128xf32>
    %265 = vector.extract_strided_slice %260 {offsets = [0, 8, 0], sizes = [2, 16, 128], strides = [1, 1, 1]} : vector<2x32x128xf32> to vector<2x16x128xf32>
    %266 = vector.shape_cast %265 : vector<2x16x128xf32> to vector<32x128xf32>
    %267 = vector.extract_strided_slice %260 {offsets = [0, 9, 0], sizes = [2, 16, 128], strides = [1, 1, 1]} : vector<2x32x128xf32> to vector<2x16x128xf32>
    %268 = vector.shape_cast %267 : vector<2x16x128xf32> to vector<32x128xf32>
    %269 = vector.extract_strided_slice %260 {offsets = [0, 10, 0], sizes = [2, 16, 128], strides = [1, 1, 1]} : vector<2x32x128xf32> to vector<2x16x128xf32>
    %270 = vector.shape_cast %269 : vector<2x16x128xf32> to vector<32x128xf32>
    %271 = tpu.concatenate %262, %264, %266, %268, %270 in 1 : vector<32x128xf32>, vector<32x128xf32>, vector<32x128xf32>, vector<32x128xf32>, vector<32x128xf32> -> vector<32x640xf32>
    %272 = arith.truncf %271 : vector<32x640xf32> to vector<32x640xbf16>
    %c0_112 = arith.constant 0 : index
    %c0_113 = arith.constant 0 : index
    %273 = vector.load %arg7[%c0_112, %c0_113] : memref<640x384xbf16, #tpu.memory_space<vmem>>, vector<640x384xbf16>
    %cst_114 = arith.constant dense<0.000000e+00> : vector<32x384xf32>
    %274 = tpu.matmul %272, %273, %cst_114 {dimension_numbers = #tpu.dot_dimension_numbers<[1], [0], [0], [1], [0, 0, 1, 1], [], []>} : vector<32x640xbf16>, vector<640x384xbf16>, vector<32x384xf32> -> vector<32x384xf32>
    %c3 = arith.constant 3 : index
    %c0_115 = arith.constant 0 : index
    %275 = vector.load %arg2[%c3, %c0_115] : memref<4x384xf32, #tpu.memory_space<vmem>>, vector<1x384xf32>
    %276 = vector.broadcast %275 : vector<1x384xf32> to vector<32x384xf32>
    %277 = arith.addf %274, %276 : vector<32x384xf32>
    %278 = vector.extract_strided_slice %277 {offsets = [0, 0], sizes = [32, 128], strides = [1, 1]} : vector<32x384xf32> to vector<32x128xf32>
    %cst_116 = arith.constant 2.000000e+01 : f32
    %279 = vector.broadcast %cst_116 : f32 to vector<32x128xf32>
    %280 = arith.minimumf %278, %279 : vector<32x128xf32>
    %281 = math.exp %280 : vector<32x128xf32>
    %cst_117 = arith.constant 2.000000e+00 : f32
    %282 = vector.broadcast %cst_117 : f32 to vector<32x128xf32>
    %283 = arith.addf %281, %282 : vector<32x128xf32>
    %284 = arith.mulf %281, %283 : vector<32x128xf32>
    %285 = arith.mulf %278, %284 : vector<32x128xf32>
    %cst_118 = arith.constant 2.000000e+00 : f32
    %286 = vector.broadcast %cst_118 : f32 to vector<32x128xf32>
    %287 = arith.addf %284, %286 : vector<32x128xf32>
    %288 = tpu.reciprocal %287 {approx = true} : vector<32x128xf32> -> vector<32x128xf32>
    %289 = arith.mulf %285, %288 : vector<32x128xf32>
    %290 = vector.extract_strided_slice %277 {offsets = [0, 128], sizes = [32, 128], strides = [1, 1]} : vector<32x384xf32> to vector<32x128xf32>
    %cst_119 = arith.constant 2.000000e+01 : f32
    %291 = vector.broadcast %cst_119 : f32 to vector<32x128xf32>
    %292 = arith.minimumf %290, %291 : vector<32x128xf32>
    %293 = math.exp %292 : vector<32x128xf32>
    %cst_120 = arith.constant 2.000000e+00 : f32
    %294 = vector.broadcast %cst_120 : f32 to vector<32x128xf32>
    %295 = arith.addf %293, %294 : vector<32x128xf32>
    %296 = arith.mulf %293, %295 : vector<32x128xf32>
    %297 = arith.mulf %290, %296 : vector<32x128xf32>
    %cst_121 = arith.constant 2.000000e+00 : f32
    %298 = vector.broadcast %cst_121 : f32 to vector<32x128xf32>
    %299 = arith.addf %296, %298 : vector<32x128xf32>
    %300 = tpu.reciprocal %299 {approx = true} : vector<32x128xf32> -> vector<32x128xf32>
    %301 = arith.mulf %297, %300 : vector<32x128xf32>
    %302 = arith.addf %289, %301 : vector<32x128xf32>
    %303 = vector.extract_strided_slice %277 {offsets = [0, 256], sizes = [32, 128], strides = [1, 1]} : vector<32x384xf32> to vector<32x128xf32>
    %cst_122 = arith.constant 2.000000e+01 : f32
    %304 = vector.broadcast %cst_122 : f32 to vector<32x128xf32>
    %305 = arith.minimumf %303, %304 : vector<32x128xf32>
    %306 = math.exp %305 : vector<32x128xf32>
    %cst_123 = arith.constant 2.000000e+00 : f32
    %307 = vector.broadcast %cst_123 : f32 to vector<32x128xf32>
    %308 = arith.addf %306, %307 : vector<32x128xf32>
    %309 = arith.mulf %306, %308 : vector<32x128xf32>
    %310 = arith.mulf %303, %309 : vector<32x128xf32>
    %cst_124 = arith.constant 2.000000e+00 : f32
    %311 = vector.broadcast %cst_124 : f32 to vector<32x128xf32>
    %312 = arith.addf %309, %311 : vector<32x128xf32>
    %313 = tpu.reciprocal %312 {approx = true} : vector<32x128xf32> -> vector<32x128xf32>
    %314 = arith.mulf %310, %313 : vector<32x128xf32>
    %315 = arith.addf %302, %314 : vector<32x128xf32>
    %316 = vector.shape_cast %315 : vector<32x128xf32> to vector<2x16x128xf32>
    %c0_125 = arith.constant 0 : index
    %c0_126 = arith.constant 0 : index
    %c0_127 = arith.constant 0 : index
    %317 = vector.load %arg11[%c0_125, %c0_126, %c0_127] : memref<2x16x128xf32, #tpu.memory_space<vmem>>, vector<2x16x128xf32>
    tpu.vector_store %arg11[%c0_125, %c0_126, %c0_127], %316 {strides = array<i32>} : memref<2x16x128xf32, #tpu.memory_space<vmem>>, vector<2x16x128xf32>,
    return
  }
  func.func @transform_0(%arg0: i32) -> (i32, i32, i32) {
    %c0_i32 = arith.constant 0 : i32
    %c0_i32_0 = arith.constant 0 : i32
    %c0_i32_1 = arith.constant 0 : i32
    return %arg0, %c0_i32, %c0_i32_0 : i32, i32, i32
  }
  func.func @transform_1(%arg0: i32) -> (i32, i32) {
    %c0_i32 = arith.constant 0 : i32
    %c0_i32_0 = arith.constant 0 : i32
    %c0_i32_1 = arith.constant 0 : i32
    return %c0_i32, %c0_i32_0 : i32, i32
  }
  func.func @transform_2(%arg0: i32) -> (i32, i32) {
    %c0_i32 = arith.constant 0 : i32
    %c0_i32_0 = arith.constant 0 : i32
    %c0_i32_1 = arith.constant 0 : i32
    return %c0_i32, %c0_i32_0 : i32, i32
  }
  func.func @transform_3(%arg0: i32) -> (i32, i32) {
    %c0_i32 = arith.constant 0 : i32
    %c0_i32_0 = arith.constant 0 : i32
    %c0_i32_1 = arith.constant 0 : i32
    return %c0_i32, %c0_i32_0 : i32, i32
  }
  func.func @transform_4(%arg0: i32) -> (i32, i32) {
    %c0_i32 = arith.constant 0 : i32
    %c0_i32_0 = arith.constant 0 : i32
    %c0_i32_1 = arith.constant 0 : i32
    return %c0_i32, %c0_i32_0 : i32, i32
  }
  func.func @transform_5(%arg0: i32) -> (i32, i32) {
    %c0_i32 = arith.constant 0 : i32
    %c0_i32_0 = arith.constant 0 : i32
    %c0_i32_1 = arith.constant 0 : i32
    return %c0_i32, %c0_i32_0 : i32, i32
  }
  func.func @transform_6(%arg0: i32) -> (i32, i32) {
    %c0_i32 = arith.constant 0 : i32
    %c0_i32_0 = arith.constant 0 : i32
    %c0_i32_1 = arith.constant 0 : i32
    return %c0_i32, %c0_i32_0 : i32, i32
  }
  func.func @transform_7(%arg0: i32) -> (i32, i32) {
    %c0_i32 = arith.constant 0 : i32
    %c0_i32_0 = arith.constant 0 : i32
    %c0_i32_1 = arith.constant 0 : i32
    return %c0_i32, %c0_i32_0 : i32, i32
  }
  func.func @transform_8(%arg0: i32) -> (i32, i32) {
    %c0_i32 = arith.constant 0 : i32
    %c0_i32_0 = arith.constant 0 : i32
    %c0_i32_1 = arith.constant 0 : i32
    return %c0_i32, %c0_i32_0 : i32, i32
  }
  func.func @transform_9(%arg0: i32) -> (i32, i32) {
    %c0_i32 = arith.constant 0 : i32
    %c0_i32_0 = arith.constant 0 : i32
    %c0_i32_1 = arith.constant 0 : i32
    return %c0_i32, %c0_i32_0 : i32, i32
  }
  func.func @transform_10(%arg0: i32) -> (i32, i32, i32) {
    %c0_i32 = arith.constant 0 : i32
    %c0_i32_0 = arith.constant 0 : i32
    %c0_i32_1 = arith.constant 0 : i32
    return %arg0, %c0_i32, %c0_i32_0 : i32, i32, i32
  }
}

</mosaic_0001>

<llo_original>
// kernel: tpu_custom_call.1
$region0: #{tpu_custom_call.1}
  #allocation0 [shape = 'u32[]', space=smem, size = 0x4, offset = 0x4, fixed_abs, tag = 'smem constant byte address 0x4 - core index']
  #allocation1 [shape = 'u32[144,128]{1,0:T(1,128)}', space=vmem, size = 0x12000, scoped, tag = 'internal scratch']
  #allocation2 [shape = 'f32[2,32,128]{2,1,0:T(8,128)}', space=vmem, size = 0x8000, scoped, tag = 'scratch operand']
  %s0 = inlined_call_operand.hbm [shape: f32[4,16,128], index: 0, kind: input, shape index: {}]
  %s1 = inlined_call_operand.hbm [shape: f32[4,384], index: 1, kind: input, shape index: {}]
  %s2 = inlined_call_operand.hbm [shape: f32[3,128], index: 2, kind: input, shape index: {}]
  %s3 = inlined_call_operand.hbm [shape: bf16[640,384], index: 3, kind: input, shape index: {}]
  %s4 = inlined_call_operand.hbm [shape: bf16[640,384], index: 4, kind: input, shape index: {}]
  %s5 = inlined_call_operand.hbm [shape: bf16[640,384], index: 5, kind: input, shape index: {}]
  %s6 = inlined_call_operand.hbm [shape: bf16[640,384], index: 6, kind: input, shape index: {}]
  %s7 = inlined_call_operand.hbm [shape: bf16[384,128], index: 7, kind: input, shape index: {}]
  %s8 = inlined_call_operand.hbm [shape: bf16[384,128], index: 8, kind: input, shape index: {}]
  %s9 = inlined_call_operand.hbm [shape: bf16[384,128], index: 9, kind: input, shape index: {}]
  %s10 = inlined_call_operand.hbm [shape: f32[4,16,128], index: 10, kind: output, shape index: {}]
  %s11 = sld [smem:[#allocation0]]
  $region113: #{tpu_custom_call.1} parent=0
    _
  %s13 = ssub.s32 1, %s11
  %s14 = scalar_select 0, %s13, %s11
  $region1: #{tpu_custom_call.1} parent=0
    #allocation3 [shape = 'u8[32768]{0}', space=vmem, size = 0x8000, scoped, tag = 'input window, operand 0']
    #allocation4 [shape = 's32[2]{0}', space=sflag, size = 0x8, scoped, tag = 'scoped memory for tpu_custom_call.1']
    #allocation5 [shape = 's32[2]{0}', space=sflag, size = 0x8, scoped, tag = 'scoped memory for tpu_custom_call.1']
    #allocation6 [shape = 'u8[6144]{0}', space=vmem, size = 0x1800, scoped, tag = 'input window, operand 1, single buffered']
    #allocation7 [shape = 's32[1]{0}', space=sflag, size = 0x4, scoped, tag = 'scoped memory for tpu_custom_call.1']
    #allocation8 [shape = 'u8[2048]{0}', space=vmem, size = 0x800, scoped, tag = 'input window, operand 2, single buffered']
    #allocation9 [shape = 'u8[491520]{0}', space=vmem, size = 0x78000, scoped, tag = 'input window, operand 3, single buffered']
    #allocation10 [shape = 's32[1]{0}', space=sflag, size = 0x4, scoped, tag = 'scoped memory for tpu_custom_call.1']
    #allocation11 [shape = 'u8[491520]{0}', space=vmem, size = 0x78000, scoped, tag = 'input window, operand 4, single buffered']
    #allocation12 [shape = 'u8[491520]{0}', space=vmem, size = 0x78000, scoped, tag = 'input window, operand 5, single buffered']
    #allocation13 [shape = 's32[1]{0}', space=sflag, size = 0x4, scoped, tag = 'scoped memory for tpu_custom_call.1']
    #allocation14 [shape = 'u8[491520]{0}', space=vmem, size = 0x78000, scoped, tag = 'input window, operand 6, single buffered']
    #allocation15 [shape = 'u8[98304]{0}', space=vmem, size = 0x18000, scoped, tag = 'input window, operand 7, single buffered']
    #allocation16 [shape = 's32[1]{0}', space=sflag, size = 0x4, scoped, tag = 'scoped memory for tpu_custom_call.1']
    #allocation17 [shape = 'u8[98304]{0}', space=vmem, size = 0x18000, scoped, tag = 'input window, operand 8, single buffered']
    #allocation18 [shape = 'u8[98304]{0}', space=vmem, size = 0x18000, scoped, tag = 'input window, operand 9, single buffered']
    #allocation19 [shape = 's32[1]{0}', space=sflag, size = 0x4, scoped, tag = 'scoped memory for tpu_custom_call.1']
    #allocation20 [shape = 'u8[32768]{0}', space=vmem, size = 0x8000, scoped, tag = 'output window, operand 0']
    %15 = vsyncpa [#allocation4], 0
    %s16 = scalar_lea.sflag [#allocation4], 1
    %17 = vsyncpa %s16, 0
    %18 = vsyncpa [#allocation7], 0
    %19 = vsyncpa [#allocation10], 0
    %20 = vsyncpa [#allocation13], 0
    %21 = vsyncpa [#allocation16], 0
    %22 = vsyncpa [#allocation19], 0
    %23 = vsyncpa [#allocation5], 0
    %s24 = scalar_lea.sflag [#allocation5], 1
    %25 = vsyncpa %s24, 0
    loop: start=0, step=1, limit=4
    $region2: #{tpu_custom_call.1} parent=1 // loop_pre_header
      _
    $region3: #{tpu_custom_call.1} parent=1 // loop_header
      %s27 = sphi 0, %s31
      %p28 = scmp.ge.s32.totalorder %s27, 4
      %s37 = sphi 0, %s39
      %s40 = sphi 0, %s37
      %s41 = sphi 0, %s40
      %s57 = sphi 0, %s41
      %s61 = sphi 0, %s61
      %s63 = sphi 0, %s61
      %s64 = sphi 0, %s63
      %s78 = sphi 0, %s64
      %s82 = sphi 0, %s82
      %s84 = sphi 0, %s82
      %s85 = sphi 0, %s84
      %s99 = sphi 0, %s85
      %s103 = sphi 0, %s103
      %s105 = sphi 0, %s103
      %s106 = sphi 0, %s105
      %s120 = sphi 0, %s106
      %s124 = sphi 0, %s124
      %s126 = sphi 0, %s124
      %s127 = sphi 0, %s126
      %s141 = sphi 0, %s127
      %s145 = sphi 0, %s145
      %s147 = sphi 0, %s145
      %s148 = sphi 0, %s147
      %s162 = sphi 0, %s148
      %s166 = sphi 0, %s166
      %s168 = sphi 0, %s166
      %s169 = sphi 0, %s168
      %s183 = sphi 0, %s169
      %s187 = sphi 0, %s187
      %s189 = sphi 0, %s187
      %s190 = sphi 0, %s189
      %s204 = sphi 0, %s190
      %s208 = sphi 0, %s208
      %s210 = sphi 0, %s208
      %s211 = sphi 0, %s210
      %s225 = sphi 0, %s211
      %s229 = sphi 0, %s229
      %s231 = sphi 0, %s229
      %s232 = sphi 0, %s231
      %s246 = sphi 0, %s232
      %s252 = sphi 0, %s254
      %s255 = sphi 0, %s252
      %s256 = sphi 0, %s255
      %s272 = sphi 0, %s256
    $region4: #{tpu_custom_call.1} parent=1 // loop_header_branch
      %30 = sbr.rel (%p28) target = $region8
    $region5: #{tpu_custom_call.1} parent=1 // loop_body
      %s32 = ssub.s32 %s27, 1
      %s33 = ssub.s32 %s27, 2
      %s34 = sadd.s32 %s27, 1
      %s35 = ssub.s32 %s27, %s34
      %p36 = scmp.eq.s32.totalorder %s35, 0
      %s38 = sadd.s32 %s37, 1
      %s39 = scalar_select %p36, %s37, %s38
      %p42 = pneg %p36
      %p43 = scmp.eq.s32.totalorder %s27, 1
      %p44 = por %p42, %p43
      %p45 = scmp.ne.s32.totalorder %s37, %s40
      %p46 = scmp.eq.s32.totalorder %s27, 0
      %p47 = por %p45, %p46
      %p48 = scmp.ne.s32.totalorder %s37, %s40
      %p49 = scmp.eq.s32.totalorder %s32, 1
      %p50 = por %p48, %p49
      %p51 = scmp.ne.s32.totalorder %s40, %s41
      %p52 = scmp.eq.s32.totalorder %s32, 0
      %p53 = por %p51, %p52
      %p54 = scmp.ne.s32.totalorder %s40, %s41
      %p55 = scmp.eq.s32.totalorder %s33, 1
      %p56 = por %p54, %p55
      %p58 = scmp.ne.s32.totalorder %s41, %s57
      %p59 = scmp.eq.s32.totalorder %s33, 0
      %p60 = por %p58, %p59
      %s62 = sadd.s32 %s61, 1
      %p65 = scmp.eq.s32.totalorder %s27, 1
      %p66 = scmp.ne.s32.totalorder %s61, %s63
      %p67 = scmp.eq.s32.totalorder %s27, 0
      %p68 = por %p66, %p67
      %p69 = scmp.ne.s32.totalorder %s61, %s63
      %p70 = scmp.eq.s32.totalorder %s32, 1
      %p71 = por %p69, %p70
      %p72 = scmp.ne.s32.totalorder %s63, %s64
      %p73 = scmp.eq.s32.totalorder %s32, 0
      %p74 = por %p72, %p73
      %p75 = scmp.ne.s32.totalorder %s63, %s64
      %p76 = scmp.eq.s32.totalorder %s33, 1
      %p77 = por %p75, %p76
      %p79 = scmp.ne.s32.totalorder %s64, %s78
      %p80 = scmp.eq.s32.totalorder %s33, 0
      %p81 = por %p79, %p80
      %s83 = sadd.s32 %s82, 1
      %p86 = scmp.eq.s32.totalorder %s27, 1
      %p87 = scmp.ne.s32.totalorder %s82, %s84
      %p88 = scmp.eq.s32.totalorder %s27, 0
      %p89 = por %p87, %p88
      %p90 = scmp.ne.s32.totalorder %s82, %s84
      %p91 = scmp.eq.s32.totalorder %s32, 1
      %p92 = por %p90, %p91
      %p93 = scmp.ne.s32.totalorder %s84, %s85
      %p94 = scmp.eq.s32.totalorder %s32, 0
      %p95 = por %p93, %p94
      %p96 = scmp.ne.s32.totalorder %s84, %s85
      %p97 = scmp.eq.s32.totalorder %s33, 1
      %p98 = por %p96, %p97
      %p100 = scmp.ne.s32.totalorder %s85, %s99
      %p101 = scmp.eq.s32.totalorder %s33, 0
      %p102 = por %p100, %p101
      %s104 = sadd.s32 %s103, 1
      %p107 = scmp.eq.s32.totalorder %s27, 1
      %p108 = scmp.ne.s32.totalorder %s103, %s105
      %p109 = scmp.eq.s32.totalorder %s27, 0
      %p110 = por %p108, %p109
      %p111 = scmp.ne.s32.totalorder %s103, %s105
      %p112 = scmp.eq.s32.totalorder %s32, 1
      %p113 = por %p111, %p112
      %p114 = scmp.ne.s32.totalorder %s105, %s106
      %p115 = scmp.eq.s32.totalorder %s32, 0
      %p116 = por %p114, %p115
      %p117 = scmp.ne.s32.totalorder %s105, %s106
      %p118 = scmp.eq.s32.totalorder %s33, 1
      %p119 = por %p117, %p118
      %p121 = scmp.ne.s32.totalorder %s106, %s120
      %p122 = scmp.eq.s32.totalorder %s33, 0
      %p123 = por %p121, %p122
      %s125 = sadd.s32 %s124, 1
      %p128 = scmp.eq.s32.totalorder %s27, 1
      %p129 = scmp.ne.s32.totalorder %s124, %s126
      %p130 = scmp.eq.s32.totalorder %s27, 0
      %p131 = por %p129, %p130
      %p132 = scmp.ne.s32.totalorder %s124, %s126
      %p133 = scmp.eq.s32.totalorder %s32, 1
      %p134 = por %p132, %p133
      %p135 = scmp.ne.s32.totalorder %s126, %s127
      %p136 = scmp.eq.s32.totalorder %s32, 0
      %p137 = por %p135, %p136
      %p138 = scmp.ne.s32.totalorder %s126, %s127
      %p139 = scmp.eq.s32.totalorder %s33, 1
      %p140 = por %p138, %p139
      %p142 = scmp.ne.s32.totalorder %s127, %s141
      %p143 = scmp.eq.s32.totalorder %s33, 0
      %p144 = por %p142, %p143
      %s146 = sadd.s32 %s145, 1
      %p149 = scmp.eq.s32.totalorder %s27, 1
      %p150 = scmp.ne.s32.totalorder %s145, %s147
      %p151 = scmp.eq.s32.totalorder %s27, 0
      %p152 = por %p150, %p151
      %p153 = scmp.ne.s32.totalorder %s145, %s147
      %p154 = scmp.eq.s32.totalorder %s32, 1
      %p155 = por %p153, %p154
      %p156 = scmp.ne.s32.totalorder %s147, %s148
      %p157 = scmp.eq.s32.totalorder %s32, 0
      %p158 = por %p156, %p157
      %p159 = scmp.ne.s32.totalorder %s147, %s148
      %p160 = scmp.eq.s32.totalorder %s33, 1
      %p161 = por %p159, %p160
      %p163 = scmp.ne.s32.totalorder %s148, %s162
      %p164 = scmp.eq.s32.totalorder %s33, 0
      %p165 = por %p163, %p164
      %s167 = sadd.s32 %s166, 1
      %p170 = scmp.eq.s32.totalorder %s27, 1
      %p171 = scmp.ne.s32.totalorder %s166, %s168
      %p172 = scmp.eq.s32.totalorder %s27, 0
      %p173 = por %p171, %p172
      %p174 = scmp.ne.s32.totalorder %s166, %s168
      %p175 = scmp.eq.s32.totalorder %s32, 1
      %p176 = por %p174, %p175
      %p177 = scmp.ne.s32.totalorder %s168, %s169
      %p178 = scmp.eq.s32.totalorder %s32, 0
      %p179 = por %p177, %p178
      %p180 = scmp.ne.s32.totalorder %s168, %s169
      %p181 = scmp.eq.s32.totalorder %s33, 1
      %p182 = por %p180, %p181
      %p184 = scmp.ne.s32.totalorder %s169, %s183
      %p185 = scmp.eq.s32.totalorder %s33, 0
      %p186 = por %p184, %p185
      %s188 = sadd.s32 %s187, 1
      %p191 = scmp.eq.s32.totalorder %s27, 1
      %p192 = scmp.ne.s32.totalorder %s187, %s189
      %p193 = scmp.eq.s32.totalorder %s27, 0
      %p194 = por %p192, %p193
      %p195 = scmp.ne.s32.totalorder %s187, %s189
      %p196 = scmp.eq.s32.totalorder %s32, 1
      %p197 = por %p195, %p196
      %p198 = scmp.ne.s32.totalorder %s189, %s190
      %p199 = scmp.eq.s32.totalorder %s32, 0
      %p200 = por %p198, %p199
      %p201 = scmp.ne.s32.totalorder %s189, %s190
      %p202 = scmp.eq.s32.totalorder %s33, 1
      %p203 = por %p201, %p202
      %p205 = scmp.ne.s32.totalorder %s190, %s204
      %p206 = scmp.eq.s32.totalorder %s33, 0
      %p207 = por %p205, %p206
      %s209 = sadd.s32 %s208, 1
      %p212 = scmp.eq.s32.totalorder %s27, 1
      %p213 = scmp.ne.s32.totalorder %s208, %s210
      %p214 = scmp.eq.s32.totalorder %s27, 0
      %p215 = por %p213, %p214
      %p216 = scmp.ne.s32.totalorder %s208, %s210
      %p217 = scmp.eq.s32.totalorder %s32, 1
      %p218 = por %p216, %p217
      %p219 = scmp.ne.s32.totalorder %s210, %s211
      %p220 = scmp.eq.s32.totalorder %s32, 0
      %p221 = por %p219, %p220
      %p222 = scmp.ne.s32.totalorder %s210, %s211
      %p223 = scmp.eq.s32.totalorder %s33, 1
      %p224 = por %p222, %p223
      %p226 = scmp.ne.s32.totalorder %s211, %s225
      %p227 = scmp.eq.s32.totalorder %s33, 0
      %p228 = por %p226, %p227
      %s230 = sadd.s32 %s229, 1
      %p233 = scmp.eq.s32.totalorder %s27, 1
      %p234 = scmp.ne.s32.totalorder %s229, %s231
      %p235 = scmp.eq.s32.totalorder %s27, 0
      %p236 = por %p234, %p235
      %p237 = scmp.ne.s32.totalorder %s229, %s231
      %p238 = scmp.eq.s32.totalorder %s32, 1
      %p239 = por %p237, %p238
      %p240 = scmp.ne.s32.totalorder %s231, %s232
      %p241 = scmp.eq.s32.totalorder %s32, 0
      %p242 = por %p240, %p241
      %p243 = scmp.ne.s32.totalorder %s231, %s232
      %p244 = scmp.eq.s32.totalorder %s33, 1
      %p245 = por %p243, %p244
      %p247 = scmp.ne.s32.totalorder %s232, %s246
      %p248 = scmp.eq.s32.totalorder %s33, 0
      %p249 = por %p247, %p248
      %s250 = ssub.s32 %s27, %s34
      %p251 = scmp.eq.s32.totalorder %s250, 0
      %s253 = sadd.s32 %s252, 1
      %s254 = scalar_select %p251, %s252, %s253
      %p257 = pneg %p251
      %p258 = scmp.eq.s32.totalorder %s27, 1
      %p259 = por %p257, %p258
      %p260 = scmp.ne.s32.totalorder %s252, %s255
      %p261 = scmp.eq.s32.totalorder %s27, 0
      %p262 = por %p260, %p261
      %p263 = scmp.ne.s32.totalorder %s252, %s255
      %p264 = scmp.eq.s32.totalorder %s32, 1
      %p265 = por %p263, %p264
      %p266 = scmp.ne.s32.totalorder %s255, %s256
      %p267 = scmp.eq.s32.totalorder %s32, 0
      %p268 = por %p266, %p267
      %p269 = scmp.ne.s32.totalorder %s255, %s256
      %p270 = scmp.eq.s32.totalorder %s33, 1
      %p271 = por %p269, %p270
      %p273 = scmp.ne.s32.totalorder %s256, %s272
      %p274 = scmp.eq.s32.totalorder %s33, 0
      %p275 = por %p273, %p274
      %p276 = scmp.le.s32.totalorder 1, %s27
      %p277 = scmp.lt.s32.totalorder %s27, 3
      %p278 = pnand %p276, %p277
      %p279 = pneg %p278
      // Predicated region
      $region9: #{tpu_custom_call.1} parent=5 // pred_check
        _
      $region10: #{tpu_custom_call.1} parent=5 // pred_check_branch
        %281 = sbr.rel (%p278) target = $region12
      $region11: #{tpu_custom_call.1} parent=5 // pred_region
        %s282 = ssub.s32 %s27, 1
        // Predicated region
        $region13: #{tpu_custom_call.1} parent=11 // pred_check
          %p283 = pneg %p74
        $region14: #{tpu_custom_call.1} parent=11 // pred_check_branch
          %285 = sbr.rel (%p283) target = $region16
        $region15: #{tpu_custom_call.1} parent=11 // pred_region
          %s287 = ssub.s32 192, 192
          %288 = vsyncadd [#allocation7], %s287
          %s290 = sshll.u32 [#allocation6], 4
          %s291 = int_to_ptr.vmem [resolvable:$true] %s290
          %293 = dma.hbm_to_vmem [thread:$0]  %s1, 192, %s291, [#allocation7]
        $region16: #{tpu_custom_call.1} parent=11 // pred_fallthru
          _
        // Predicated region
        $region17: #{tpu_custom_call.1} parent=11 // pred_check
          %p294 = pneg %p95
        $region18: #{tpu_custom_call.1} parent=11 // pred_check_branch
          %296 = sbr.rel (%p294) target = $region20
        $region19: #{tpu_custom_call.1} parent=11 // pred_region
          %s298 = ssub.s32 64, 64
          %299 = vsyncadd [#allocation7], %s298
          %s301 = sshll.u32 [#allocation8], 4
          %s302 = int_to_ptr.vmem [resolvable:$true] %s301
          %304 = dma.hbm_to_vmem [thread:$0]  %s2, 64, %s302, [#allocation7]
        $region20: #{tpu_custom_call.1} parent=11 // pred_fallthru
          _
        // Predicated region
        $region21: #{tpu_custom_call.1} parent=11 // pred_check
          %p305 = pneg %p116
        $region22: #{tpu_custom_call.1} parent=11 // pred_check_branch
          %307 = sbr.rel (%p305) target = $region24
        $region23: #{tpu_custom_call.1} parent=11 // pred_region
          %s309 = ssub.s32 15360, 15360
          %310 = vsyncadd [#allocation10], %s309
          %s311 = sshll.u32 [#allocation9], 4
          %s312 = int_to_ptr.vmem [resolvable:$true] %s311
          %317 = dma.hbm_to_vmem [thread:$0]  %s3, 15360, %s312, [#allocation10], 192, 192, 12
        $region24: #{tpu_custom_call.1} parent=11 // pred_fallthru
          _
        // Predicated region
        $region25: #{tpu_custom_call.1} parent=11 // pred_check
          %p318 = pneg %p137
        $region26: #{tpu_custom_call.1} parent=11 // pred_check_branch
          %320 = sbr.rel (%p318) target = $region28
        $region27: #{tpu_custom_call.1} parent=11 // pred_region
          %s322 = ssub.s32 15360, 15360
          %323 = vsyncadd [#allocation10], %s322
          %s324 = sshll.u32 [#allocation11], 4
          %s325 = int_to_ptr.vmem [resolvable:$true] %s324
          %330 = dma.hbm_to_vmem [thread:$0]  %s4, 15360, %s325, [#allocation10], 192, 192, 12
        $region28: #{tpu_custom_call.1} parent=11 // pred_fallthru
          _
        // Predicated region
        $region29: #{tpu_custom_call.1} parent=11 // pred_check
          %p331 = pneg %p158
        $region30: #{tpu_custom_call.1} parent=11 // pred_check_branch
          %333 = sbr.rel (%p331) target = $region32
        $region31: #{tpu_custom_call.1} parent=11 // pred_region
          %s335 = ssub.s32 15360, 15360
          %336 = vsyncadd [#allocation13], %s335
          %s337 = sshll.u32 [#allocation12], 4
          %s338 = int_to_ptr.vmem [resolvable:$true] %s337
          %343 = dma.hbm_to_vmem [thread:$0]  %s5, 15360, %s338, [#allocation13], 192, 192, 12
        $region32: #{tpu_custom_call.1} parent=11 // pred_fallthru
          _
        // Predicated region
        $region33: #{tpu_custom_call.1} parent=11 // pred_check
          %p344 = pneg %p179
        $region34: #{tpu_custom_call.1} parent=11 // pred_check_branch
          %346 = sbr.rel (%p344) target = $region36
        $region35: #{tpu_custom_call.1} parent=11 // pred_region
          %s348 = ssub.s32 15360, 15360
          %349 = vsyncadd [#allocation13], %s348
          %s350 = sshll.u32 [#allocation14], 4
          %s351 = int_to_ptr.vmem [resolvable:$true] %s350
          %356 = dma.hbm_to_vmem [thread:$0]  %s6, 15360, %s351, [#allocation13], 192, 192, 12
        $region36: #{tpu_custom_call.1} parent=11 // pred_fallthru
          _
        // Predicated region
        $region37: #{tpu_custom_call.1} parent=11 // pred_check
          %p357 = pneg %p200
        $region38: #{tpu_custom_call.1} parent=11 // pred_check_branch
          %359 = sbr.rel (%p357) target = $region40
        $region39: #{tpu_custom_call.1} parent=11 // pred_region
          %s361 = ssub.s32 3072, 3072
          %362 = vsyncadd [#allocation16], %s361
          %s363 = sshll.u32 [#allocation15], 4
          %s364 = int_to_ptr.vmem [resolvable:$true] %s363
          %369 = dma.hbm_to_vmem [thread:$0]  %s7, 3072, %s364, [#allocation16], 64, 64, 4
        $region40: #{tpu_custom_call.1} parent=11 // pred_fallthru
          _
        // Predicated region
        $region41: #{tpu_custom_call.1} parent=11 // pred_check
          %p370 = pneg %p221
        $region42: #{tpu_custom_call.1} parent=11 // pred_check_branch
          %372 = sbr.rel (%p370) target = $region44
        $region43: #{tpu_custom_call.1} parent=11 // pred_region
          %s374 = ssub.s32 3072, 3072
          %375 = vsyncadd [#allocation16], %s374
          %s376 = sshll.u32 [#allocation17], 4
          %s377 = int_to_ptr.vmem [resolvable:$true] %s376
          %382 = dma.hbm_to_vmem [thread:$0]  %s8, 3072, %s377, [#allocation16], 64, 64, 4
        $region44: #{tpu_custom_call.1} parent=11 // pred_fallthru
          _
        // Predicated region
        $region45: #{tpu_custom_call.1} parent=11 // pred_check
          %p383 = pneg %p242
        $region46: #{tpu_custom_call.1} parent=11 // pred_check_branch
          %385 = sbr.rel (%p383) target = $region48
        $region47: #{tpu_custom_call.1} parent=11 // pred_region
          %s387 = ssub.s32 3072, 3072
          %388 = vsyncadd [#allocation19], %s387
          %s389 = sshll.u32 [#allocation18], 4
          %s390 = int_to_ptr.vmem [resolvable:$true] %s389
          %395 = dma.hbm_to_vmem [thread:$0]  %s9, 3072, %s390, [#allocation19], 64, 64, 4
        $region48: #{tpu_custom_call.1} parent=11 // pred_fallthru
          _
      $region12: #{tpu_custom_call.1} parent=5 // pred_fallthru
        _
      %p396 = scmp.lt.s32.totalorder %s27, 2
      // Predicated region
      $region49: #{tpu_custom_call.1} parent=5 // pred_check
        %p397 = pneg %p396
      $region50: #{tpu_custom_call.1} parent=5 // pred_check_branch
        %399 = sbr.rel (%p397) target = $region52
      $region51: #{tpu_custom_call.1} parent=5 // pred_region
        // Predicated region
        $region53: #{tpu_custom_call.1} parent=51 // pred_check
          %p400 = pneg %p47
        $region54: #{tpu_custom_call.1} parent=51 // pred_check_branch
          %402 = sbr.rel (%p400) target = $region56
        $region55: #{tpu_custom_call.1} parent=51 // pred_region
          %s403 = sand.u32 %s37, 1
          %s404 = scalar_lea.sflag [#allocation4], %s403
          %s405 = sand.u32 %s37, 1
          %s406 = smul.addr %s405, 32
          %s407 = scalar_lea.vmem [#allocation3], %s406
          %s408 = smul.u32 2, %s27
          %s410 = ssub.s32 512, 512
          %411 = vsyncadd %s404, %s410
          %s412 = smul.addr %s408, 2
          %s413 = smul.addr %s412, 128
          %s414 = scalar_lea.hbm %s0, %s413
          %s415 = sshll.u32 %s407, 4
          %s416 = int_to_ptr.vmem [resolvable:$true] %s415
          %421 = dma.hbm_to_vmem [thread:$0]  %s414, 512, %s416, %s404, 128, 128, 8
        $region56: #{tpu_custom_call.1} parent=51 // pred_fallthru
          _
      $region52: #{tpu_custom_call.1} parent=5 // pred_fallthru
        _
      %p422 = scmp.le.s32.totalorder 1, %s27
      %p423 = scmp.lt.s32.totalorder %s27, 3
      %p424 = pnand %p422, %p423
      %p425 = pneg %p424
      // Predicated region
      $region57: #{tpu_custom_call.1} parent=5 // pred_check
        _
      $region58: #{tpu_custom_call.1} parent=5 // pred_check_branch
        %427 = sbr.rel (%p424) target = $region60
      $region59: #{tpu_custom_call.1} parent=5 // pred_region
        %s428 = ssub.s32 %s27, 1
        %s429 = sand.u32 %s40, 1
        %s430 = scalar_lea.sflag [#allocation4], %s429
        %s431 = sand.u32 %s40, 1
        %s432 = smul.addr %s431, 32
        %s433 = scalar_lea.vmem [#allocation3], %s432
        // Predicated region
        $region61: #{tpu_custom_call.1} parent=59 // pred_check
          %p434 = pneg %p53
        $region62: #{tpu_custom_call.1} parent=59 // pred_check_branch
          %436 = sbr.rel (%p434) target = $region64
        $region63: #{tpu_custom_call.1} parent=59 // pred_region
          %437 = dma.done %s430, 512
        $region64: #{tpu_custom_call.1} parent=59 // pred_fallthru
          _
        // Predicated region
        $region65: #{tpu_custom_call.1} parent=59 // pred_check
          %p438 = pneg %p74
        $region66: #{tpu_custom_call.1} parent=59 // pred_check_branch
          %440 = sbr.rel (%p438) target = $region68
        $region67: #{tpu_custom_call.1} parent=59 // pred_region
          %441 = dma.done [#allocation7], 192
        $region68: #{tpu_custom_call.1} parent=59 // pred_fallthru
          _
        // Predicated region
        $region69: #{tpu_custom_call.1} parent=59 // pred_check
          %p442 = pneg %p95
        $region70: #{tpu_custom_call.1} parent=59 // pred_check_branch
          %444 = sbr.rel (%p442) target = $region72
        $region71: #{tpu_custom_call.1} parent=59 // pred_region
          %445 = dma.done [#allocation7], 64
        $region72: #{tpu_custom_call.1} parent=59 // pred_fallthru
          _
        // Predicated region
        $region73: #{tpu_custom_call.1} parent=59 // pred_check
          %p446 = pneg %p116
        $region74: #{tpu_custom_call.1} parent=59 // pred_check_branch
          %448 = sbr.rel (%p446) target = $region76
        $region75: #{tpu_custom_call.1} parent=59 // pred_region
          %449 = dma.done [#allocation10], 15360
        $region76: #{tpu_custom_call.1} parent=59 // pred_fallthru
          _
        // Predicated region
        $region77: #{tpu_custom_call.1} parent=59 // pred_check
          %p450 = pneg %p137
        $region78: #{tpu_custom_call.1} parent=59 // pred_check_branch
          %452 = sbr.rel (%p450) target = $region80
        $region79: #{tpu_custom_call.1} parent=59 // pred_region
          %453 = dma.done [#allocation10], 15360
        $region80: #{tpu_custom_call.1} parent=59 // pred_fallthru
          _
        // Predicated region
        $region81: #{tpu_custom_call.1} parent=59 // pred_check
          %p454 = pneg %p158
        $region82: #{tpu_custom_call.1} parent=59 // pred_check_branch
          %456 = sbr.rel (%p454) target = $region84
        $region83: #{tpu_custom_call.1} parent=59 // pred_region
          %457 = dma.done [#allocation13], 15360
        $region84: #{tpu_custom_call.1} parent=59 // pred_fallthru
          _
        // Predicated region
        $region85: #{tpu_custom_call.1} parent=59 // pred_check
          %p458 = pneg %p179
        $region86: #{tpu_custom_call.1} parent=59 // pred_check_branch
          %460 = sbr.rel (%p458) target = $region88
        $region87: #{tpu_custom_call.1} parent=59 // pred_region
          %461 = dma.done [#allocation13], 15360
        $region88: #{tpu_custom_call.1} parent=59 // pred_fallthru
          _
        // Predicated region
        $region89: #{tpu_custom_call.1} parent=59 // pred_check
          %p462 = pneg %p200
        $region90: #{tpu_custom_call.1} parent=59 // pred_check_branch
          %464 = sbr.rel (%p462) target = $region92
        $region91: #{tpu_custom_call.1} parent=59 // pred_region
          %465 = dma.done [#allocation16], 3072
        $region92: #{tpu_custom_call.1} parent=59 // pred_fallthru
          _
        // Predicated region
        $region93: #{tpu_custom_call.1} parent=59 // pred_check
          %p466 = pneg %p221
        $region94: #{tpu_custom_call.1} parent=59 // pred_check_branch
          %468 = sbr.rel (%p466) target = $region96
        $region95: #{tpu_custom_call.1} parent=59 // pred_region
          %469 = dma.done [#allocation16], 3072
        $region96: #{tpu_custom_call.1} parent=59 // pred_fallthru
          _
        // Predicated region
        $region97: #{tpu_custom_call.1} parent=59 // pred_check
          %p470 = pneg %p242
        $region98: #{tpu_custom_call.1} parent=59 // pred_check_branch
          %472 = sbr.rel (%p470) target = $region100
        $region99: #{tpu_custom_call.1} parent=59 // pred_region
          %473 = dma.done [#allocation19], 3072
        $region100: #{tpu_custom_call.1} parent=59 // pred_fallthru
          _
        %s474 = sand.u32 %s40, 1
        %s475 = scalar_lea.sflag [#allocation4], %s474
        %s476 = sand.u32 %s40, 1
        %s477 = smul.addr %s476, 32
        %s478 = scalar_lea.vmem [#allocation3], %s477
        %p479 = pneg %p53
        %p480 = pneg %p50
        %p481 = pneg %p74
        %p482 = pneg %p71
        %p483 = pneg %p95
        %p484 = pneg %p92
        %p485 = pneg %p116
        %p486 = pneg %p113
        %p487 = pneg %p137
        %p488 = pneg %p134
        %p489 = pneg %p158
        %p490 = pneg %p155
        %p491 = pneg %p179
        %p492 = pneg %p176
        %p493 = pneg %p200
        %p494 = pneg %p197
        %p495 = pneg %p221
        %p496 = pneg %p218
        %p497 = pneg %p242
        %p498 = pneg %p239
        %p499 = pneg %p268
        %p500 = pneg %p265
        %s501 = sand.u32 %s255, 1
        %s502 = scalar_lea.sflag [#allocation5], %s501
        %s503 = sand.u32 %s255, 1
        %s504 = smul.addr %s503, 32
        %s505 = scalar_lea.vmem [#allocation20], %s504
        %s506 = smul.u32 2, %s32
        %s507 = smul.u32 2, %s32
        %509 = vst [vmem:[#allocation2] sm:$0xff] 0.0
        %510 = vst [vmem:[#allocation2 + $0x20] sm:$0xff] 0.0
        %511 = vst [vmem:[#allocation2 + $0x18] sm:$0xff] 0.0
        %512 = vst [vmem:[#allocation2 + $0x38] sm:$0xff] 0.0
        %v513 = vld [vmem:[%s433] sm:$0xff]
        %v514 = vld [vmem:[%s433 + $0x8] sm:$0xff]
        %v515 = vld [vmem:[%s433 + $0x10] sm:$0xff]
        %v516 = vld [vmem:[%s433 + $0x18] sm:$0xff]
        %517 = vst [vmem:[#allocation2 + $0x8] sm:$0xff] %v513
        %518 = vst [vmem:[#allocation2 + $0x10] sm:$0xff] %v514
        %519 = vst [vmem:[#allocation2 + $0x28] sm:$0xff] %v515
        %520 = vst [vmem:[#allocation2 + $0x30] sm:$0xff] %v516
        %v521 = vld [vmem:[#allocation2] sm:$0xff]
        %v522 = vld [vmem:[#allocation2 + $0x8] sm:$0xff]
        %v523 = vld [vmem:[#allocation2 + $0x10] sm:$0xff]
        %v524 = vld [vmem:[#allocation2 + $0x18] sm:$0xff]
        %v525 = vld [vmem:[#allocation2 + $0x20] sm:$0xff]
        %v526 = vld [vmem:[#allocation2 + $0x28] sm:$0xff]
        %v527 = vld [vmem:[#allocation2 + $0x30] sm:$0xff]
        %v528 = vld [vmem:[#allocation2 + $0x38] sm:$0xff]
        %vm535 = vcmask 1041408
        %v536 = vrot.slane %v521, 6
        %v537 = vrot.slane %v522, 6
        %v538 = vsel %vm535, %v536, %v537
        %v539 = vrot.slane %v523, 6
        %v540 = vsel %vm535, %v537, %v539
        %v541 = vrot.slane %v525, 6
        %v542 = vrot.slane %v526, 6
        %v543 = vsel %vm535, %v541, %v542
        %v544 = vrot.slane %v527, 6
        %v545 = vsel %vm535, %v542, %v544
        %vm550 = vcmask 1040384
        %v551 = vrot.slane %v521, 7
        %v552 = vrot.slane %v522, 7
        %v553 = vsel %vm550, %v551, %v552
        %v554 = vrot.slane %v523, 7
        %v555 = vsel %vm550, %v552, %v554
        %v556 = vrot.slane %v525, 7
        %v557 = vrot.slane %v526, 7
        %v558 = vsel %vm550, %v556, %v557
        %v559 = vrot.slane %v527, 7
        %v560 = vsel %vm550, %v557, %v559
        %vm567 = vcmask 1046528
        %v568 = vrot.slane %v522, 1
        %v569 = vrot.slane %v523, 1
        %v570 = vsel %vm567, %v568, %v569
        %v571 = vrot.slane %v524, 1
        %v572 = vsel %vm567, %v569, %v571
        %v573 = vrot.slane %v526, 1
        %v574 = vrot.slane %v527, 1
        %v575 = vsel %vm567, %v573, %v574
        %v576 = vrot.slane %v528, 1
        %v577 = vsel %vm567, %v574, %v576
        %vm582 = vcmask 1045504
        %v583 = vrot.slane %v522, 2
        %v584 = vrot.slane %v523, 2
        %v585 = vsel %vm582, %v583, %v584
        %v586 = vrot.slane %v524, 2
        %v587 = vsel %vm582, %v584, %v586
        %v588 = vrot.slane %v526, 2
        %v589 = vrot.slane %v527, 2
        %v590 = vsel %vm582, %v588, %v589
        %v591 = vrot.slane %v528, 2
        %v592 = vsel %vm582, %v589, %v591
        %v597 = vpack.c.bf16 %v540, %v538
        %v598 = vpack.c.bf16 %v555, %v553
        %v599 = vpack.c.bf16 %v523, %v522
        %v600 = vpack.c.bf16 %v572, %v570
        %v601 = vpack.c.bf16 %v587, %v585
        %v602 = vpack.c.bf16 %v545, %v543
        %v603 = vpack.c.bf16 %v560, %v558
        %v604 = vpack.c.bf16 %v527, %v526
        %v605 = vpack.c.bf16 %v577, %v575
        %v606 = vpack.c.bf16 %v592, %v590
        %v607 = vld [vmem:[#allocation9] sm:$0xff]
        %v608 = vld [vmem:[#allocation9 + $0x8] sm:$0xf]
        %v609 = vld [vmem:[#allocation9 + $0xc] sm:$0xff]
        %v610 = vld [vmem:[#allocation9 + $0x14] sm:$0xf]
        %v611 = vld [vmem:[#allocation9 + $0x18] sm:$0xff]
        %v612 = vld [vmem:[#allocation9 + $0x20] sm:$0xf]
        %v613 = vld [vmem:[#allocation9 + $0x24] sm:$0xff]
        %v614 = vld [vmem:[#allocation9 + $0x2c] sm:$0xf]
        %v615 = vld [vmem:[#allocation9 + $0x30] sm:$0xff]
        %v616 = vld [vmem:[#allocation9 + $0x38] sm:$0xf]
        %v617 = vld [vmem:[#allocation9 + $0x3c] sm:$0xff]
        %v618 = vld [vmem:[#allocation9 + $0x44] sm:$0xf]
        %v619 = vld [vmem:[#allocation9 + $0x48] sm:$0xff]
        %v620 = vld [vmem:[#allocation9 + $0x50] sm:$0xf]
        %v621 = vld [vmem:[#allocation9 + $0x54] sm:$0xff]
        %v622 = vld [vmem:[#allocation9 + $0x5c] sm:$0xf]
        %v623 = vld [vmem:[#allocation9 + $0x60] sm:$0xff]
        %v624 = vld [vmem:[#allocation9 + $0x68] sm:$0xf]
        %v625 = vld [vmem:[#allocation9 + $0x6c] sm:$0xff]
        %v626 = vld [vmem:[#allocation9 + $0x74] sm:$0xf]
        %v627 = vld [vmem:[#allocation9 + $0x78] sm:$0xff]
        %v628 = vld [vmem:[#allocation9 + $0x80] sm:$0xf]
        %v629 = vld [vmem:[#allocation9 + $0x84] sm:$0xff]
        %v630 = vld [vmem:[#allocation9 + $0x8c] sm:$0xf]
        %v631 = vld [vmem:[#allocation9 + $0x90] sm:$0xff]
        %v632 = vld [vmem:[#allocation9 + $0x98] sm:$0xf]
        %v633 = vld [vmem:[#allocation9 + $0x9c] sm:$0xff]
        %v634 = vld [vmem:[#allocation9 + $0xa4] sm:$0xf]
        %v635 = vld [vmem:[#allocation9 + $0xa8] sm:$0xff]
        %v636 = vld [vmem:[#allocation9 + $0xb0] sm:$0xf]
        %v637 = vld [vmem:[#allocation9 + $0xb4] sm:$0xff]
        %v638 = vld [vmem:[#allocation9 + $0xbc] sm:$0xf]
        %v639 = vld [vmem:[#allocation9 + $0xc0] sm:$0xff]
        %v640 = vld [vmem:[#allocation9 + $0xc8] sm:$0xf]
        %v641 = vld [vmem:[#allocation9 + $0xcc] sm:$0xff]
        %v642 = vld [vmem:[#allocation9 + $0xd4] sm:$0xf]
        %v643 = vld [vmem:[#allocation9 + $0xd8] sm:$0xff]
        %v644 = vld [vmem:[#allocation9 + $0xe0] sm:$0xf]
        %v645 = vld [vmem:[#allocation9 + $0xe4] sm:$0xff]
        %v646 = vld [vmem:[#allocation9 + $0xec] sm:$0xf]
        %v647 = vld [vmem:[#allocation9 + $0xf0] sm:$0xff]
        %v648 = vld [vmem:[#allocation9 + $0xf8] sm:$0xf]
        %v649 = vld [vmem:[#allocation9 + $0xfc] sm:$0xff]
        %v650 = vld [vmem:[#allocation9 + $0x104] sm:$0xf]
        %v651 = vld [vmem:[#allocation9 + $0x108] sm:$0xff]
        %v652 = vld [vmem:[#allocation9 + $0x110] sm:$0xf]
        %v653 = vld [vmem:[#allocation9 + $0x114] sm:$0xff]
        %v654 = vld [vmem:[#allocation9 + $0x11c] sm:$0xf]
        %v655 = vld [vmem:[#allocation9 + $0x120] sm:$0xff]
        %v656 = vld [vmem:[#allocation9 + $0x128] sm:$0xf]
        %v657 = vld [vmem:[#allocation9 + $0x12c] sm:$0xff]
        %v658 = vld [vmem:[#allocation9 + $0x134] sm:$0xf]
        %v659 = vld [vmem:[#allocation9 + $0x138] sm:$0xff]
        %v660 = vld [vmem:[#allocation9 + $0x140] sm:$0xf]
        %v661 = vld [vmem:[#allocation9 + $0x144] sm:$0xff]
        %v662 = vld [vmem:[#allocation9 + $0x14c] sm:$0xf]
        %v663 = vld [vmem:[#allocation9 + $0x150] sm:$0xff]
        %v664 = vld [vmem:[#allocation9 + $0x158] sm:$0xf]
        %v665 = vld [vmem:[#allocation9 + $0x15c] sm:$0xff]
        %v666 = vld [vmem:[#allocation9 + $0x164] sm:$0xf]
        %v667 = vld [vmem:[#allocation9 + $0x168] sm:$0xff]
        %v668 = vld [vmem:[#allocation9 + $0x170] sm:$0xf]
        %v669 = vld [vmem:[#allocation9 + $0x174] sm:$0xff]
        %v670 = vld [vmem:[#allocation9 + $0x17c] sm:$0xf]
        %v671 = vld [vmem:[#allocation9 + $0x180] sm:$0xff]
        %v672 = vld [vmem:[#allocation9 + $0x188] sm:$0xf]
        %v673 = vld [vmem:[#allocation9 + $0x18c] sm:$0xff]
        %v674 = vld [vmem:[#allocation9 + $0x194] sm:$0xf]
        %v675 = vld [vmem:[#allocation9 + $0x198] sm:$0xff]
        %v676 = vld [vmem:[#allocation9 + $0x1a0] sm:$0xf]
        %v677 = vld [vmem:[#allocation9 + $0x1a4] sm:$0xff]
        %v678 = vld [vmem:[#allocation9 + $0x1ac] sm:$0xf]
        %v679 = vld [vmem:[#allocation9 + $0x1b0] sm:$0xff]
        %v680 = vld [vmem:[#allocation9 + $0x1b8] sm:$0xf]
        %v681 = vld [vmem:[#allocation9 + $0x1bc] sm:$0xff]
        %v682 = vld [vmem:[#allocation9 + $0x1c4] sm:$0xf]
        %v683 = vld [vmem:[#allocation9 + $0x1c8] sm:$0xff]
        %v684 = vld [vmem:[#allocation9 + $0x1d0] sm:$0xf]
        %v685 = vld [vmem:[#allocation9 + $0x1d4] sm:$0xff]
        %v686 = vld [vmem:[#allocation9 + $0x1dc] sm:$0xf]
        %v687 = vld [vmem:[#allocation9 + $0x1e0] sm:$0xff]
        %v688 = vld [vmem:[#allocation9 + $0x1e8] sm:$0xf]
        %v689 = vld [vmem:[#allocation9 + $0x1ec] sm:$0xff]
        %v690 = vld [vmem:[#allocation9 + $0x1f4] sm:$0xf]
        %v691 = vld [vmem:[#allocation9 + $0x1f8] sm:$0xff]
        %v692 = vld [vmem:[#allocation9 + $0x200] sm:$0xf]
        %v693 = vld [vmem:[#allocation9 + $0x204] sm:$0xff]
        %v694 = vld [vmem:[#allocation9 + $0x20c] sm:$0xf]
        %v695 = vld [vmem:[#allocation9 + $0x210] sm:$0xff]
        %v696 = vld [vmem:[#allocation9 + $0x218] sm:$0xf]
        %v697 = vld [vmem:[#allocation9 + $0x21c] sm:$0xff]
        %v698 = vld [vmem:[#allocation9 + $0x224] sm:$0xf]
        %v699 = vld [vmem:[#allocation9 + $0x228] sm:$0xff]
        %v700 = vld [vmem:[#allocation9 + $0x230] sm:$0xf]
        %v701 = vld [vmem:[#allocation9 + $0x234] sm:$0xff]
        %v702 = vld [vmem:[#allocation9 + $0x23c] sm:$0xf]
        %v703 = vld [vmem:[#allocation9 + $0x240] sm:$0xff]
        %v704 = vld [vmem:[#allocation9 + $0x248] sm:$0xf]
        %v705 = vld [vmem:[#allocation9 + $0x24c] sm:$0xff]
        %v706 = vld [vmem:[#allocation9 + $0x254] sm:$0xf]
        %v707 = vld [vmem:[#allocation9 + $0x258] sm:$0xff]
        %v708 = vld [vmem:[#allocation9 + $0x260] sm:$0xf]
        %v709 = vld [vmem:[#allocation9 + $0x264] sm:$0xff]
        %v710 = vld [vmem:[#allocation9 + $0x26c] sm:$0xf]
        %v711 = vld [vmem:[#allocation9 + $0x270] sm:$0xff]
        %v712 = vld [vmem:[#allocation9 + $0x278] sm:$0xf]
        %v713 = vld [vmem:[#allocation9 + $0x27c] sm:$0xff]
        %v714 = vld [vmem:[#allocation9 + $0x284] sm:$0xf]
        %v715 = vld [vmem:[#allocation9 + $0x288] sm:$0xff]
        %v716 = vld [vmem:[#allocation9 + $0x290] sm:$0xf]
        %v717 = vld [vmem:[#allocation9 + $0x294] sm:$0xff]
        %v718 = vld [vmem:[#allocation9 + $0x29c] sm:$0xf]
        %v719 = vld [vmem:[#allocation9 + $0x2a0] sm:$0xff]
        %v720 = vld [vmem:[#allocation9 + $0x2a8] sm:$0xf]
        %v721 = vld [vmem:[#allocation9 + $0x2ac] sm:$0xff]
        %v722 = vld [vmem:[#allocation9 + $0x2b4] sm:$0xf]
        %v723 = vld [vmem:[#allocation9 + $0x2b8] sm:$0xff]
        %v724 = vld [vmem:[#allocation9 + $0x2c0] sm:$0xf]
        %v725 = vld [vmem:[#allocation9 + $0x2c4] sm:$0xff]
        %v726 = vld [vmem:[#allocation9 + $0x2cc] sm:$0xf]
        %v727 = vld [vmem:[#allocation9 + $0x2d0] sm:$0xff]
        %v728 = vld [vmem:[#allocation9 + $0x2d8] sm:$0xf]
        %v729 = vld [vmem:[#allocation9 + $0x2dc] sm:$0xff]
        %v730 = vld [vmem:[#allocation9 + $0x2e4] sm:$0xf]
        %v731 = vld [vmem:[#allocation9 + $0x2e8] sm:$0xff]
        %v732 = vld [vmem:[#allocation9 + $0x2f0] sm:$0xf]
        %v733 = vld [vmem:[#allocation9 + $0x2f4] sm:$0xff]
        %v734 = vld [vmem:[#allocation9 + $0x2fc] sm:$0xf]
        %v735 = vld [vmem:[#allocation9 + $0x300] sm:$0xff]
        %v736 = vld [vmem:[#allocation9 + $0x308] sm:$0xf]
        %v737 = vld [vmem:[#allocation9 + $0x30c] sm:$0xff]
        %v738 = vld [vmem:[#allocation9 + $0x314] sm:$0xf]
        %v739 = vld [vmem:[#allocation9 + $0x318] sm:$0xff]
        %v740 = vld [vmem:[#allocation9 + $0x320] sm:$0xf]
        %v741 = vld [vmem:[#allocation9 + $0x324] sm:$0xff]
        %v742 = vld [vmem:[#allocation9 + $0x32c] sm:$0xf]
        %v743 = vld [vmem:[#allocation9 + $0x330] sm:$0xff]
        %v744 = vld [vmem:[#allocation9 + $0x338] sm:$0xf]
        %v745 = vld [vmem:[#allocation9 + $0x33c] sm:$0xff]
        %v746 = vld [vmem:[#allocation9 + $0x344] sm:$0xf]
        %v747 = vld [vmem:[#allocation9 + $0x348] sm:$0xff]
        %v748 = vld [vmem:[#allocation9 + $0x350] sm:$0xf]
        %v749 = vld [vmem:[#allocation9 + $0x354] sm:$0xff]
        %v750 = vld [vmem:[#allocation9 + $0x35c] sm:$0xf]
        %v751 = vld [vmem:[#allocation9 + $0x360] sm:$0xff]
        %v752 = vld [vmem:[#allocation9 + $0x368] sm:$0xf]
        %v753 = vld [vmem:[#allocation9 + $0x36c] sm:$0xff]
        %v754 = vld [vmem:[#allocation9 + $0x374] sm:$0xf]
        %v755 = vld [vmem:[#allocation9 + $0x378] sm:$0xff]
        %v756 = vld [vmem:[#allocation9 + $0x380] sm:$0xf]
        %v757 = vld [vmem:[#allocation9 + $0x384] sm:$0xff]
        %v758 = vld [vmem:[#allocation9 + $0x38c] sm:$0xf]
        %v759 = vld [vmem:[#allocation9 + $0x390] sm:$0xff]
        %v760 = vld [vmem:[#allocation9 + $0x398] sm:$0xf]
        %v761 = vld [vmem:[#allocation9 + $0x39c] sm:$0xff]
        %v762 = vld [vmem:[#allocation9 + $0x3a4] sm:$0xf]
        %v763 = vld [vmem:[#allocation9 + $0x3a8] sm:$0xff]
        %v764 = vld [vmem:[#allocation9 + $0x3b0] sm:$0xf]
        %v765 = vld [vmem:[#allocation9 + $0x3b4] sm:$0xff]
        %v766 = vld [vmem:[#allocation9 + $0x3bc] sm:$0xf]
        %v767 = vld [vmem:[#allocation6] ss:$4 sm:$0x7]
        %v769 = vlaneseq
        %v770 = vshrl.u32 %v769, 7
        %v771 = vsub.s32 0, %v770
        %v772 = vrot.slane %v767, %v771
        %v773 = vlaneseq
        %v774 = vshrl.u32 %v773, 7
        %v775 = vsub.s32 1, %v774
        %v776 = vrot.slane %v767, %v775
        %v777 = vlaneseq
        %v778 = vshrl.u32 %v777, 7
        %v779 = vsub.s32 2, %v778
        %v780 = vrot.slane %v767, %v779
        %v944 = vunpack.c.l.b16 %v607
        %v945 = vunpack.c.h.b16 %v607
        %v946 = vunpack.c.l.b16 %v608
        %v947 = vunpack.c.l.b16 %v609
        %v948 = vunpack.c.h.b16 %v609
        %v949 = vunpack.c.l.b16 %v610
        %v950 = vunpack.c.l.b16 %v611
        %v951 = vunpack.c.h.b16 %v611
        %v952 = vunpack.c.l.b16 %v612
        %v953 = vunpack.c.l.b16 %v613
        %v954 = vunpack.c.h.b16 %v613
        %v955 = vunpack.c.l.b16 %v614
        %v956 = vunpack.c.l.b16 %v615
        %v957 = vunpack.c.h.b16 %v615
        %v958 = vunpack.c.l.b16 %v616
        %v959 = vunpack.c.l.b16 %v617
        %v960 = vunpack.c.h.b16 %v617
        %v961 = vunpack.c.l.b16 %v618
        %v962 = vunpack.c.l.b16 %v619
        %v963 = vunpack.c.h.b16 %v619
        %v964 = vunpack.c.l.b16 %v620
        %v965 = vunpack.c.l.b16 %v621
        %v966 = vunpack.c.h.b16 %v621
        %v967 = vunpack.c.l.b16 %v622
        %v968 = vunpack.c.l.b16 %v623
        %v969 = vunpack.c.h.b16 %v623
        %v970 = vunpack.c.l.b16 %v624
        %v971 = vunpack.c.l.b16 %v625
        %v972 = vunpack.c.h.b16 %v625
        %v973 = vunpack.c.l.b16 %v626
        %v974 = vunpack.c.l.b16 %v627
        %v975 = vunpack.c.h.b16 %v627
        %v976 = vunpack.c.l.b16 %v628
        %v977 = vunpack.c.l.b16 %v629
        %v978 = vunpack.c.h.b16 %v629
        %v979 = vunpack.c.l.b16 %v630
        %v980 = vunpack.c.l.b16 %v631
        %v981 = vunpack.c.h.b16 %v631
        %v982 = vunpack.c.l.b16 %v632
        %v983 = vunpack.c.l.b16 %v633
        %v984 = vunpack.c.h.b16 %v633
        %v985 = vunpack.c.l.b16 %v634
        %v986 = vunpack.c.l.b16 %v635
        %v987 = vunpack.c.h.b16 %v635
        %v988 = vunpack.c.l.b16 %v636
        %v989 = vunpack.c.l.b16 %v637
        %v990 = vunpack.c.h.b16 %v637
        %v991 = vunpack.c.l.b16 %v638
        %v992 = vunpack.c.l.b16 %v639
        %v993 = vunpack.c.h.b16 %v639
        %v994 = vunpack.c.l.b16 %v640
        %v995 = vunpack.c.l.b16 %v641
        %v996 = vunpack.c.h.b16 %v641
        %v997 = vunpack.c.l.b16 %v642
        %v998 = vunpack.c.l.b16 %v643
        %v999 = vunpack.c.h.b16 %v643
        %v1000 = vunpack.c.l.b16 %v644
        %v1001 = vunpack.c.l.b16 %v645
        %v1002 = vunpack.c.h.b16 %v645
        %v1003 = vunpack.c.l.b16 %v646
        %v1004 = vunpack.c.l.b16 %v647
        %v1005 = vunpack.c.h.b16 %v647
        %v1006 = vunpack.c.l.b16 %v648
        %v1007 = vunpack.c.l.b16 %v649
        %v1008 = vunpack.c.h.b16 %v649
        %v1009 = vunpack.c.l.b16 %v650
        %v1010 = vunpack.c.l.b16 %v651
        %v1011 = vunpack.c.h.b16 %v651
        %v1012 = vunpack.c.l.b16 %v652
        %v1013 = vunpack.c.l.b16 %v653
        %v1014 = vunpack.c.h.b16 %v653
        %v1015 = vunpack.c.l.b16 %v654
        %v1016 = vunpack.c.l.b16 %v655
        %v1017 = vunpack.c.h.b16 %v655
        %v1018 = vunpack.c.l.b16 %v656
        %v1019 = vunpack.c.l.b16 %v657
        %v1020 = vunpack.c.h.b16 %v657
        %v1021 = vunpack.c.l.b16 %v658
        %v1022 = vunpack.c.l.b16 %v659
        %v1023 = vunpack.c.h.b16 %v659
        %v1024 = vunpack.c.l.b16 %v660
        %v1025 = vunpack.c.l.b16 %v661
        %v1026 = vunpack.c.h.b16 %v661
        %v1027 = vunpack.c.l.b16 %v662
        %v1028 = vunpack.c.l.b16 %v663
        %v1029 = vunpack.c.h.b16 %v663
        %v1030 = vunpack.c.l.b16 %v664
        %v1031 = vunpack.c.l.b16 %v665
        %v1032 = vunpack.c.h.b16 %v665
        %v1033 = vunpack.c.l.b16 %v666
        %v1034 = vunpack.c.l.b16 %v667
        %v1035 = vunpack.c.h.b16 %v667
        %v1036 = vunpack.c.l.b16 %v668
        %v1037 = vunpack.c.l.b16 %v669
        %v1038 = vunpack.c.h.b16 %v669
        %v1039 = vunpack.c.l.b16 %v670
        %v1040 = vunpack.c.l.b16 %v671
        %v1041 = vunpack.c.h.b16 %v671
        %v1042 = vunpack.c.l.b16 %v672
        %v1043 = vunpack.c.l.b16 %v673
        %v1044 = vunpack.c.h.b16 %v673
        %v1045 = vunpack.c.l.b16 %v674
        %v1046 = vunpack.c.l.b16 %v675
        %v1047 = vunpack.c.h.b16 %v675
        %v1048 = vunpack.c.l.b16 %v676
        %v1049 = vunpack.c.l.b16 %v677
        %v1050 = vunpack.c.h.b16 %v677
        %v1051 = vunpack.c.l.b16 %v678
        %v1052 = vunpack.c.l.b16 %v679
        %v1053 = vunpack.c.h.b16 %v679
        %v1054 = vunpack.c.l.b16 %v680
        %v1055 = vunpack.c.l.b16 %v681
        %v1056 = vunpack.c.h.b16 %v681
        %v1057 = vunpack.c.l.b16 %v682
        %v1058 = vunpack.c.l.b16 %v683
        %v1059 = vunpack.c.h.b16 %v683
        %v1060 = vunpack.c.l.b16 %v684
        %v1061 = vunpack.c.l.b16 %v685
        %v1062 = vunpack.c.h.b16 %v685
        %v1063 = vunpack.c.l.b16 %v686
        %v1064 = vunpack.c.l.b16 %v687
        %v1065 = vunpack.c.h.b16 %v687
        %v1066 = vunpack.c.l.b16 %v688
        %v1067 = vunpack.c.l.b16 %v689
        %v1068 = vunpack.c.h.b16 %v689
        %v1069 = vunpack.c.l.b16 %v690
        %v1070 = vunpack.c.l.b16 %v691
        %v1071 = vunpack.c.h.b16 %v691
        %v1072 = vunpack.c.l.b16 %v692
        %v1073 = vunpack.c.l.b16 %v693
        %v1074 = vunpack.c.h.b16 %v693
        %v1075 = vunpack.c.l.b16 %v694
        %v1076 = vunpack.c.l.b16 %v695
        %v1077 = vunpack.c.h.b16 %v695
        %v1078 = vunpack.c.l.b16 %v696
        %v1079 = vunpack.c.l.b16 %v697
        %v1080 = vunpack.c.h.b16 %v697
        %v1081 = vunpack.c.l.b16 %v698
        %v1082 = vunpack.c.l.b16 %v699
        %v1083 = vunpack.c.h.b16 %v699
        %v1084 = vunpack.c.l.b16 %v700
        %v1085 = vunpack.c.l.b16 %v701
        %v1086 = vunpack.c.h.b16 %v701
        %v1087 = vunpack.c.l.b16 %v702
        %v1088 = vunpack.c.l.b16 %v703
        %v1089 = vunpack.c.h.b16 %v703
        %v1090 = vunpack.c.l.b16 %v704
        %v1091 = vunpack.c.l.b16 %v705
        %v1092 = vunpack.c.h.b16 %v705
        %v1093 = vunpack.c.l.b16 %v706
        %v1094 = vunpack.c.l.b16 %v707
        %v1095 = vunpack.c.h.b16 %v707
        %v1096 = vunpack.c.l.b16 %v708
        %v1097 = vunpack.c.l.b16 %v709
        %v1098 = vunpack.c.h.b16 %v709
        %v1099 = vunpack.c.l.b16 %v710
        %v1100 = vunpack.c.l.b16 %v711
        %v1101 = vunpack.c.h.b16 %v711
        %v1102 = vunpack.c.l.b16 %v712
        %v1103 = vunpack.c.l.b16 %v713
        %v1104 = vunpack.c.h.b16 %v713
        %v1105 = vunpack.c.l.b16 %v714
        %v1106 = vunpack.c.l.b16 %v715
        %v1107 = vunpack.c.h.b16 %v715
        %v1108 = vunpack.c.l.b16 %v716
        %v1109 = vunpack.c.l.b16 %v717
        %v1110 = vunpack.c.h.b16 %v717
        %v1111 = vunpack.c.l.b16 %v718
        %v1112 = vunpack.c.l.b16 %v719
        %v1113 = vunpack.c.h.b16 %v719
        %v1114 = vunpack.c.l.b16 %v720
        %v1115 = vunpack.c.l.b16 %v721
        %v1116 = vunpack.c.h.b16 %v721
        %v1117 = vunpack.c.l.b16 %v722
        %v1118 = vunpack.c.l.b16 %v723
        %v1119 = vunpack.c.h.b16 %v723
        %v1120 = vunpack.c.l.b16 %v724
        %v1121 = vunpack.c.l.b16 %v725
        %v1122 = vunpack.c.h.b16 %v725
        %v1123 = vunpack.c.l.b16 %v726
        %v1124 = vunpack.c.l.b16 %v727
        %v1125 = vunpack.c.h.b16 %v727
        %v1126 = vunpack.c.l.b16 %v728
        %v1127 = vunpack.c.l.b16 %v729
        %v1128 = vunpack.c.h.b16 %v729
        %v1129 = vunpack.c.l.b16 %v730
        %v1130 = vunpack.c.l.b16 %v731
        %v1131 = vunpack.c.h.b16 %v731
        %v1132 = vunpack.c.l.b16 %v732
        %v1133 = vunpack.c.l.b16 %v733
        %v1134 = vunpack.c.h.b16 %v733
        %v1135 = vunpack.c.l.b16 %v734
        %v1136 = vunpack.c.l.b16 %v735
        %v1137 = vunpack.c.h.b16 %v735
        %v1138 = vunpack.c.l.b16 %v736
        %v1139 = vunpack.c.l.b16 %v737
        %v1140 = vunpack.c.h.b16 %v737
        %v1141 = vunpack.c.l.b16 %v738
        %v1142 = vunpack.c.l.b16 %v739
        %v1143 = vunpack.c.h.b16 %v739
        %v1144 = vunpack.c.l.b16 %v740
        %v1145 = vunpack.c.l.b16 %v741
        %v1146 = vunpack.c.h.b16 %v741
        %v1147 = vunpack.c.l.b16 %v742
        %v1148 = vunpack.c.l.b16 %v743
        %v1149 = vunpack.c.h.b16 %v743
        %v1150 = vunpack.c.l.b16 %v744
        %v1151 = vunpack.c.l.b16 %v745
        %v1152 = vunpack.c.h.b16 %v745
        %v1153 = vunpack.c.l.b16 %v746
        %v1154 = vunpack.c.l.b16 %v747
        %v1155 = vunpack.c.h.b16 %v747
        %v1156 = vunpack.c.l.b16 %v748
        %v1157 = vunpack.c.l.b16 %v749
        %v1158 = vunpack.c.h.b16 %v749
        %v1159 = vunpack.c.l.b16 %v750
        %v1160 = vunpack.c.l.b16 %v751
        %v1161 = vunpack.c.h.b16 %v751
        %v1162 = vunpack.c.l.b16 %v752
        %v1163 = vunpack.c.l.b16 %v753
        %v1164 = vunpack.c.h.b16 %v753
        %v1165 = vunpack.c.l.b16 %v754
        %v1166 = vunpack.c.l.b16 %v755
        %v1167 = vunpack.c.h.b16 %v755
        %v1168 = vunpack.c.l.b16 %v756
        %v1169 = vunpack.c.l.b16 %v757
        %v1170 = vunpack.c.h.b16 %v757
        %v1171 = vunpack.c.l.b16 %v758
        %v1172 = vunpack.c.l.b16 %v759
        %v1173 = vunpack.c.h.b16 %v759
        %v1174 = vunpack.c.l.b16 %v760
        %v1175 = vunpack.c.l.b16 %v761
        %v1176 = vunpack.c.h.b16 %v761
        %v1177 = vunpack.c.l.b16 %v762
        %v1178 = vunpack.c.l.b16 %v763
        %v1179 = vunpack.c.h.b16 %v763
        %v1180 = vunpack.c.l.b16 %v764
        %v1181 = vunpack.c.l.b16 %v765
        %v1182 = vunpack.c.h.b16 %v765
        %v1183 = vunpack.c.l.b16 %v766
        %v1184 = vpack.c.b16 %v947, %v944
        %v1185 = vpack.c.b16 %v948, %v945
        %v1186 = vpack.c.b16 %v949, %v946
        %v1187 = vpack.c.b16 %v953, %v950
        %v1188 = vpack.c.b16 %v954, %v951
        %v1189 = vpack.c.b16 %v955, %v952
        %v1190 = vpack.c.b16 %v959, %v956
        %v1191 = vpack.c.b16 %v960, %v957
        %v1192 = vpack.c.b16 %v961, %v958
        %v1193 = vpack.c.b16 %v965, %v962
        %v1194 = vpack.c.b16 %v966, %v963
        %v1195 = vpack.c.b16 %v967, %v964
        %v1196 = vpack.c.b16 %v971, %v968
        %v1197 = vpack.c.b16 %v972, %v969
        %v1198 = vpack.c.b16 %v973, %v970
        %v1199 = vpack.c.b16 %v977, %v974
        %v1200 = vpack.c.b16 %v978, %v975
        %v1201 = vpack.c.b16 %v979, %v976
        %v1202 = vpack.c.b16 %v983, %v980
        %v1203 = vpack.c.b16 %v984, %v981
        %v1204 = vpack.c.b16 %v985, %v982
        %v1205 = vpack.c.b16 %v989, %v986
        %v1206 = vpack.c.b16 %v990, %v987
        %v1207 = vpack.c.b16 %v991, %v988
        %v1208 = vpack.c.b16 %v995, %v992
        %v1209 = vpack.c.b16 %v996, %v993
        %v1210 = vpack.c.b16 %v997, %v994
        %v1211 = vpack.c.b16 %v1001, %v998
        %v1212 = vpack.c.b16 %v1002, %v999
        %v1213 = vpack.c.b16 %v1003, %v1000
        %v1214 = vpack.c.b16 %v1007, %v1004
        %v1215 = vpack.c.b16 %v1008, %v1005
        %v1216 = vpack.c.b16 %v1009, %v1006
        %v1217 = vpack.c.b16 %v1013, %v1010
        %v1218 = vpack.c.b16 %v1014, %v1011
        %v1219 = vpack.c.b16 %v1015, %v1012
        %v1220 = vpack.c.b16 %v1019, %v1016
        %v1221 = vpack.c.b16 %v1020, %v1017
        %v1222 = vpack.c.b16 %v1021, %v1018
        %v1223 = vpack.c.b16 %v1025, %v1022
        %v1224 = vpack.c.b16 %v1026, %v1023
        %v1225 = vpack.c.b16 %v1027, %v1024
        %v1226 = vpack.c.b16 %v1031, %v1028
        %v1227 = vpack.c.b16 %v1032, %v1029
        %v1228 = vpack.c.b16 %v1033, %v1030
        %v1229 = vpack.c.b16 %v1037, %v1034
        %v1230 = vpack.c.b16 %v1038, %v1035
        %v1231 = vpack.c.b16 %v1039, %v1036
        %v1232 = vpack.c.b16 %v1043, %v1040
        %v1233 = vpack.c.b16 %v1044, %v1041
        %v1234 = vpack.c.b16 %v1045, %v1042
        %v1235 = vpack.c.b16 %v1049, %v1046
        %v1236 = vpack.c.b16 %v1050, %v1047
        %v1237 = vpack.c.b16 %v1051, %v1048
        %v1238 = vpack.c.b16 %v1055, %v1052
        %v1239 = vpack.c.b16 %v1056, %v1053
        %v1240 = vpack.c.b16 %v1057, %v1054
        %v1241 = vpack.c.b16 %v1061, %v1058
        %v1242 = vpack.c.b16 %v1062, %v1059
        %v1243 = vpack.c.b16 %v1063, %v1060
        %v1244 = vpack.c.b16 %v1067, %v1064
        %v1245 = vpack.c.b16 %v1068, %v1065
        %v1246 = vpack.c.b16 %v1069, %v1066
        %v1247 = vpack.c.b16 %v1073, %v1070
        %v1248 = vpack.c.b16 %v1074, %v1071
        %v1249 = vpack.c.b16 %v1075, %v1072
        %v1250 = vpack.c.b16 %v1079, %v1076
        %v1251 = vpack.c.b16 %v1080, %v1077
        %v1252 = vpack.c.b16 %v1081, %v1078
        %v1253 = vpack.c.b16 %v1085, %v1082
        %v1254 = vpack.c.b16 %v1086, %v1083
        %v1255 = vpack.c.b16 %v1087, %v1084
        %v1256 = vpack.c.b16 %v1091, %v1088
        %v1257 = vpack.c.b16 %v1092, %v1089
        %v1258 = vpack.c.b16 %v1093, %v1090
        %v1259 = vpack.c.b16 %v1097, %v1094
        %v1260 = vpack.c.b16 %v1098, %v1095
        %v1261 = vpack.c.b16 %v1099, %v1096
        %v1262 = vpack.c.b16 %v1103, %v1100
        %v1263 = vpack.c.b16 %v1104, %v1101
        %v1264 = vpack.c.b16 %v1105, %v1102
        %v1265 = vpack.c.b16 %v1109, %v1106
        %v1266 = vpack.c.b16 %v1110, %v1107
        %v1267 = vpack.c.b16 %v1111, %v1108
        %v1268 = vpack.c.b16 %v1115, %v1112
        %v1269 = vpack.c.b16 %v1116, %v1113
        %v1270 = vpack.c.b16 %v1117, %v1114
        %v1271 = vpack.c.b16 %v1121, %v1118
        %v1272 = vpack.c.b16 %v1122, %v1119
        %v1273 = vpack.c.b16 %v1123, %v1120
        %v1274 = vpack.c.b16 %v1127, %v1124
        %v1275 = vpack.c.b16 %v1128, %v1125
        %v1276 = vpack.c.b16 %v1129, %v1126
        %v1277 = vpack.c.b16 %v1133, %v1130
        %v1278 = vpack.c.b16 %v1134, %v1131
        %v1279 = vpack.c.b16 %v1135, %v1132
        %v1280 = vpack.c.b16 %v1139, %v1136
        %v1281 = vpack.c.b16 %v1140, %v1137
        %v1282 = vpack.c.b16 %v1141, %v1138
        %v1283 = vpack.c.b16 %v1145, %v1142
        %v1284 = vpack.c.b16 %v1146, %v1143
        %v1285 = vpack.c.b16 %v1147, %v1144
        %v1286 = vpack.c.b16 %v1151, %v1148
        %v1287 = vpack.c.b16 %v1152, %v1149
        %v1288 = vpack.c.b16 %v1153, %v1150
        %v1289 = vpack.c.b16 %v1157, %v1154
        %v1290 = vpack.c.b16 %v1158, %v1155
        %v1291 = vpack.c.b16 %v1159, %v1156
        %v1292 = vpack.c.b16 %v1163, %v1160
        %v1293 = vpack.c.b16 %v1164, %v1161
        %v1294 = vpack.c.b16 %v1165, %v1162
        %v1295 = vpack.c.b16 %v1169, %v1166
        %v1296 = vpack.c.b16 %v1170, %v1167
        %v1297 = vpack.c.b16 %v1171, %v1168
        %v1298 = vpack.c.b16 %v1175, %v1172
        %v1299 = vpack.c.b16 %v1176, %v1173
        %v1300 = vpack.c.b16 %v1177, %v1174
        %v1301 = vpack.c.b16 %v1181, %v1178
        %v1302 = vpack.c.b16 %v1182, %v1179
        %v1303 = vpack.c.b16 %v1183, %v1180
        %1424 = vmatprep.subr.bf16.mxu0 %v1206
        %1425 = vmatpush1.bf16.msra.mxu0 %v1205
        %1426 = vmatprep.subr.bf16.mxu0 %v1203
        %1427 = vmatpush1.bf16.msra.mxu0 %v1202
        %1428 = vmatprep.subr.bf16.mxu0 %v1200
        %1429 = vmatpush1.bf16.msra.mxu0 %v1199
        %1430 = vmatprep.subr.bf16.mxu0 %v1197
        %1431 = vmatpush1.bf16.msra.mxu0 %v1196
        %1432 = vmatprep.subr.bf16.mxu0 %v1194
        %1433 = vmatpush1.bf16.msra.mxu0 %v1193
        %1434 = vmatprep.subr.bf16.mxu0 %v1191
        %1435 = vmatpush1.bf16.msra.mxu0 %v1190
        %1436 = vmatprep.subr.bf16.mxu0 %v1188
        %1437 = vmatpush1.bf16.msra.mxu0 %v1187
        %1438 = vmatprep.subr.bf16.mxu0 %v1185
        %1439 = vmatpush1.bf16.msra.mxu0 %v1184
        %1440 = vmatprep.subr.bf16.mxu0 %v1230
        %1441 = vmatpush2.bf16.msra.mxu0 %v1229
        %1442 = vmatprep.subr.bf16.mxu0 %v1227
        %1443 = vmatpush2.bf16.msra.mxu0 %v1226
        %1444 = vmatprep.subr.bf16.mxu0 %v1224
        %1445 = vmatpush2.bf16.msra.mxu0 %v1223
        %1446 = vmatprep.subr.bf16.mxu0 %v1221
        %1447 = vmatpush2.bf16.msra.mxu0 %v1220
        %1448 = vmatprep.subr.bf16.mxu0 %v1218
        %1449 = vmatpush2.bf16.msra.mxu0 %v1217
        %1450 = vmatprep.subr.bf16.mxu0 %v1215
        %1451 = vmatpush2.bf16.msra.mxu0 %v1214
        %1452 = vmatprep.subr.bf16.mxu0 %v1212
        %1453 = vmatpush2.bf16.msra.mxu0 %v1211
        %1454 = vmatprep.subr.bf16.mxu0 %v1209
        %1455 = vmatpush2.bf16.msra.mxu0 %v1208
        %1456 = vmatprep.mubr.bf16.mxu0 %v598
        %1457 = vmatmul.mubr.bf16.gmra.mxu0 %v597
        %v1458 = vpop.f32.mrf.mxu0
        %v1459 = vadd.f32 %v772, %v1458
        %v1460 = vpop.f32.mrf.mxu0
        %v1461 = vadd.f32 %v776, %v1460
        %v1462 = vpop.f32.mrf.mxu0
        %v1463 = vadd.f32 %v772, %v1462
        %v1464 = vpop.f32.mrf.mxu0
        %v1465 = vadd.f32 %v776, %v1464
        %1466 = vmatprep.mubr.bf16.mxu0 %v603
        %1467 = vmatmul.mubr.bf16.gmra.mxu0 %v602
        %v1468 = vpop.f32.mrf.mxu0
        %v1469 = vadd.f32 %v772, %v1468
        %v1470 = vpop.f32.mrf.mxu0
        %v1471 = vadd.f32 %v776, %v1470
        %v1472 = vpop.f32.mrf.mxu0
        %v1473 = vadd.f32 %v772, %v1472
        %v1474 = vpop.f32.mrf.mxu0
        %v1475 = vadd.f32 %v776, %v1474
        %1476 = vdwg.mxu0
        %1477 = vmatprep.subr.bf16.mxu0 %v1254
        %1478 = vmatpush1.bf16.msra.mxu0 %v1253
        %1479 = vmatprep.subr.bf16.mxu0 %v1251
        %1480 = vmatpush1.bf16.msra.mxu0 %v1250
        %1481 = vmatprep.subr.bf16.mxu0 %v1248
        %1482 = vmatpush1.bf16.msra.mxu0 %v1247
        %1483 = vmatprep.subr.bf16.mxu0 %v1245
        %1484 = vmatpush1.bf16.msra.mxu0 %v1244
        %1485 = vmatprep.subr.bf16.mxu0 %v1242
        %1486 = vmatpush1.bf16.msra.mxu0 %v1241
        %1487 = vmatprep.subr.bf16.mxu0 %v1239
        %1488 = vmatpush1.bf16.msra.mxu0 %v1238
        %1489 = vmatprep.subr.bf16.mxu0 %v1236
        %1490 = vmatpush1.bf16.msra.mxu0 %v1235
        %1491 = vmatprep.subr.bf16.mxu0 %v1233
        %1492 = vmatpush1.bf16.msra.mxu0 %v1232
        %1493 = vmatprep.subr.bf16.mxu0 %v1278
        %1494 = vmatpush2.bf16.msra.mxu0 %v1277
        %1495 = vmatprep.subr.bf16.mxu0 %v1275
        %1496 = vmatpush2.bf16.msra.mxu0 %v1274
        %1497 = vmatprep.subr.bf16.mxu0 %v1272
        %1498 = vmatpush2.bf16.msra.mxu0 %v1271
        %1499 = vmatprep.subr.bf16.mxu0 %v1269
        %1500 = vmatpush2.bf16.msra.mxu0 %v1268
        %1501 = vmatprep.subr.bf16.mxu0 %v1266
        %1502 = vmatpush2.bf16.msra.mxu0 %v1265
        %1503 = vmatprep.subr.bf16.mxu0 %v1263
        %1504 = vmatpush2.bf16.msra.mxu0 %v1262
        %1505 = vmatprep.subr.bf16.mxu0 %v1260
        %1506 = vmatpush2.bf16.msra.mxu0 %v1259
        %1507 = vmatprep.subr.bf16.mxu0 %v1257
        %1508 = vmatpush2.bf16.msra.mxu0 %v1256
        %1509 = vmatprep.mubr.bf16.mxu0 %v600
        %1510 = vmatmul.mubr.bf16.gmra.mxu0 %v599
        %v1511 = vpop.f32.mrf.mxu0
        %v1512 = vadd.f32 %v1459, %v1511
        %v1513 = vpop.f32.mrf.mxu0
        %v1514 = vadd.f32 %v1461, %v1513
        %v1515 = vpop.f32.mrf.mxu0
        %v1516 = vadd.f32 %v1463, %v1515
        %v1517 = vpop.f32.mrf.mxu0
        %v1518 = vadd.f32 %v1465, %v1517
        %1519 = vmatprep.mubr.bf16.mxu0 %v605
        %1520 = vmatmul.mubr.bf16.gmra.mxu0 %v604
        %v1521 = vpop.f32.mrf.mxu0
        %v1522 = vadd.f32 %v1469, %v1521
        %v1523 = vpop.f32.mrf.mxu0
        %v1524 = vadd.f32 %v1471, %v1523
        %v1525 = vpop.f32.mrf.mxu0
        %v1526 = vadd.f32 %v1473, %v1525
        %v1527 = vpop.f32.mrf.mxu0
        %v1528 = vadd.f32 %v1475, %v1527
        %1529 = vdwg.mxu0
        %1530 = vmatprep.subr.bf16.mxu0 %v1302
        %1531 = vmatpush1.bf16.msra.mxu0 %v1301
        %1532 = vmatprep.subr.bf16.mxu0 %v1299
        %1533 = vmatpush1.bf16.msra.mxu0 %v1298
        %1534 = vmatprep.subr.bf16.mxu0 %v1296
        %1535 = vmatpush1.bf16.msra.mxu0 %v1295
        %1536 = vmatprep.subr.bf16.mxu0 %v1293
        %1537 = vmatpush1.bf16.msra.mxu0 %v1292
        %1538 = vmatprep.subr.bf16.mxu0 %v1290
        %1539 = vmatpush1.bf16.msra.mxu0 %v1289
        %1540 = vmatprep.subr.bf16.mxu0 %v1287
        %1541 = vmatpush1.bf16.msra.mxu0 %v1286
        %1542 = vmatprep.subr.bf16.mxu0 %v1284
        %1543 = vmatpush1.bf16.msra.mxu0 %v1283
        %1544 = vmatprep.subr.bf16.mxu0 %v1281
        %1545 = vmatpush1.bf16.msra.mxu0 %v1280
        %1546 = vmatprep.subr.bf16.mxu0 0
        %1547 = vmatpush2.bf16.msra.mxu0 0
        %1548 = vmatprep.subr.bf16.mxu0 0
        %1549 = vmatpush2.bf16.msra.mxu0 0
        %1550 = vmatprep.subr.bf16.mxu0 0
        %1551 = vmatpush2.bf16.msra.mxu0 0
        %1552 = vmatprep.subr.bf16.mxu0 0
        %1553 = vmatpush2.bf16.msra.mxu0 0
        %1554 = vmatprep.subr.bf16.mxu0 0
        %1555 = vmatpush2.bf16.msra.mxu0 0
        %1556 = vmatprep.subr.bf16.mxu0 0
        %1557 = vmatpush2.bf16.msra.mxu0 0
        %1558 = vmatprep.subr.bf16.mxu0 0
        %1559 = vmatpush2.bf16.msra.mxu0 0
        %1560 = vmatprep.subr.bf16.mxu0 0
        %1561 = vmatpush2.bf16.msra.mxu0 0
        %1562 = vmatprep.mubr.bf16.mxu0 0
        %1563 = vmatmul.mubr.bf16.gmra.mxu0 %v601
        %v1564 = vpop.f32.mrf.mxu0
        %v1565 = vadd.f32 %v1512, %v1564
        %v1566 = vpop.f32.mrf.mxu0
        %v1567 = vadd.f32 %v1514, %v1566
        %v1568 = vpop.f32.mrf.mxu0
        %v1569 = vadd.f32 %v1516, %v1568
        %v1570 = vpop.f32.mrf.mxu0
        %v1571 = vadd.f32 %v1518, %v1570
        %1572 = vmatprep.mubr.bf16.mxu0 0
        %1573 = vmatmul.mubr.bf16.gmra.mxu0 %v606
        %v1574 = vpop.f32.mrf.mxu0
        %v1575 = vadd.f32 %v1522, %v1574
        %v1576 = vpop.f32.mrf.mxu0
        %v1577 = vadd.f32 %v1524, %v1576
        %v1578 = vpop.f32.mrf.mxu0
        %v1579 = vadd.f32 %v1526, %v1578
        %v1580 = vpop.f32.mrf.mxu0
        %v1581 = vadd.f32 %v1528, %v1580
        %1582 = vdwg.mxu0
        %1583 = vmatprep.subr.bf16.mxu0 0
        %1584 = vmatpush1.bf16.msra.mxu0 %v1207
        %1585 = vmatprep.subr.bf16.mxu0 0
        %1586 = vmatpush1.bf16.msra.mxu0 %v1204
        %1587 = vmatprep.subr.bf16.mxu0 0
        %1588 = vmatpush1.bf16.msra.mxu0 %v1201
        %1589 = vmatprep.subr.bf16.mxu0 0
        %1590 = vmatpush1.bf16.msra.mxu0 %v1198
        %1591 = vmatprep.subr.bf16.mxu0 0
        %1592 = vmatpush1.bf16.msra.mxu0 %v1195
        %1593 = vmatprep.subr.bf16.mxu0 0
        %1594 = vmatpush1.bf16.msra.mxu0 %v1192
        %1595 = vmatprep.subr.bf16.mxu0 0
        %1596 = vmatpush1.bf16.msra.mxu0 %v1189
        %1597 = vmatprep.subr.bf16.mxu0 0
        %1598 = vmatpush1.bf16.msra.mxu0 %v1186
        %1599 = vmatprep.subr.bf16.mxu0 0
        %1600 = vmatpush2.bf16.msra.mxu0 %v1231
        %1601 = vmatprep.subr.bf16.mxu0 0
        %1602 = vmatpush2.bf16.msra.mxu0 %v1228
        %1603 = vmatprep.subr.bf16.mxu0 0
        %1604 = vmatpush2.bf16.msra.mxu0 %v1225
        %1605 = vmatprep.subr.bf16.mxu0 0
        %1606 = vmatpush2.bf16.msra.mxu0 %v1222
        %1607 = vmatprep.subr.bf16.mxu0 0
        %1608 = vmatpush2.bf16.msra.mxu0 %v1219
        %1609 = vmatprep.subr.bf16.mxu0 0
        %1610 = vmatpush2.bf16.msra.mxu0 %v1216
        %1611 = vmatprep.subr.bf16.mxu0 0
        %1612 = vmatpush2.bf16.msra.mxu0 %v1213
        %1613 = vmatprep.subr.bf16.mxu0 0
        %1614 = vmatpush2.bf16.msra.mxu0 %v1210
        %1615 = vmatprep.mubr.bf16.mxu0 %v598
        %1616 = vmatmul.mubr.bf16.gmra.mxu0 %v597
        %v1617 = vpop.f32.mrf.mxu0
        %v1618 = vadd.f32 %v780, %v1617
        %v1619 = vpop.f32.mrf.mxu0
        %v1620 = vpop.f32.mrf.mxu0
        %v1621 = vadd.f32 %v780, %v1620
        %v1622 = vpop.f32.mrf.mxu0
        %1623 = vmatprep.mubr.bf16.mxu0 %v603
        %1624 = vmatmul.mubr.bf16.gmra.mxu0 %v602
        %v1625 = vpop.f32.mrf.mxu0
        %v1626 = vadd.f32 %v780, %v1625
        %v1627 = vpop.f32.mrf.mxu0
        %v1628 = vpop.f32.mrf.mxu0
        %v1629 = vadd.f32 %v780, %v1628
        %v1630 = vpop.f32.mrf.mxu0
        %1631 = vdwg.mxu0
        %1632 = vmatprep.subr.bf16.mxu0 0
        %1633 = vmatpush1.bf16.msra.mxu0 %v1255
        %1634 = vmatprep.subr.bf16.mxu0 0
        %1635 = vmatpush1.bf16.msra.mxu0 %v1252
        %1636 = vmatprep.subr.bf16.mxu0 0
        %1637 = vmatpush1.bf16.msra.mxu0 %v1249
        %1638 = vmatprep.subr.bf16.mxu0 0
        %1639 = vmatpush1.bf16.msra.mxu0 %v1246
        %1640 = vmatprep.subr.bf16.mxu0 0
        %1641 = vmatpush1.bf16.msra.mxu0 %v1243
        %1642 = vmatprep.subr.bf16.mxu0 0
        %1643 = vmatpush1.bf16.msra.mxu0 %v1240
        %1644 = vmatprep.subr.bf16.mxu0 0
        %1645 = vmatpush1.bf16.msra.mxu0 %v1237
        %1646 = vmatprep.subr.bf16.mxu0 0
        %1647 = vmatpush1.bf16.msra.mxu0 %v1234
        %1648 = vmatprep.subr.bf16.mxu0 0
        %1649 = vmatpush2.bf16.msra.mxu0 %v1279
        %1650 = vmatprep.subr.bf16.mxu0 0
        %1651 = vmatpush2.bf16.msra.mxu0 %v1276
        %1652 = vmatprep.subr.bf16.mxu0 0
        %1653 = vmatpush2.bf16.msra.mxu0 %v1273
        %1654 = vmatprep.subr.bf16.mxu0 0
        %1655 = vmatpush2.bf16.msra.mxu0 %v1270
        %1656 = vmatprep.subr.bf16.mxu0 0
        %1657 = vmatpush2.bf16.msra.mxu0 %v1267
        %1658 = vmatprep.subr.bf16.mxu0 0
        %1659 = vmatpush2.bf16.msra.mxu0 %v1264
        %1660 = vmatprep.subr.bf16.mxu0 0
        %1661 = vmatpush2.bf16.msra.mxu0 %v1261
        %1662 = vmatprep.subr.bf16.mxu0 0
        %1663 = vmatpush2.bf16.msra.mxu0 %v1258
        %1664 = vmatprep.mubr.bf16.mxu0 %v600
        %1665 = vmatmul.mubr.bf16.gmra.mxu0 %v599
        %v1666 = vpop.f32.mrf.mxu0
        %v1667 = vadd.f32 %v1618, %v1666
        %v1668 = vpop.f32.mrf.mxu0
        %v1669 = vpop.f32.mrf.mxu0
        %v1670 = vadd.f32 %v1621, %v1669
        %v1671 = vpop.f32.mrf.mxu0
        %1672 = vmatprep.mubr.bf16.mxu0 %v605
        %1673 = vmatmul.mubr.bf16.gmra.mxu0 %v604
        %v1674 = vpop.f32.mrf.mxu0
        %v1675 = vadd.f32 %v1626, %v1674
        %v1676 = vpop.f32.mrf.mxu0
        %v1677 = vpop.f32.mrf.mxu0
        %v1678 = vadd.f32 %v1629, %v1677
        %v1679 = vpop.f32.mrf.mxu0
        %1680 = vdwg.mxu0
        %1681 = vmatprep.subr.bf16.mxu0 0
        %1682 = vmatpush1.bf16.msra.mxu0 %v1303
        %1683 = vmatprep.subr.bf16.mxu0 0
        %1684 = vmatpush1.bf16.msra.mxu0 %v1300
        %1685 = vmatprep.subr.bf16.mxu0 0
        %1686 = vmatpush1.bf16.msra.mxu0 %v1297
        %1687 = vmatprep.subr.bf16.mxu0 0
        %1688 = vmatpush1.bf16.msra.mxu0 %v1294
        %1689 = vmatprep.subr.bf16.mxu0 0
        %1690 = vmatpush1.bf16.msra.mxu0 %v1291
        %1691 = vmatprep.subr.bf16.mxu0 0
        %1692 = vmatpush1.bf16.msra.mxu0 %v1288
        %1693 = vmatprep.subr.bf16.mxu0 0
        %1694 = vmatpush1.bf16.msra.mxu0 %v1285
        %1695 = vmatprep.subr.bf16.mxu0 0
        %1696 = vmatpush1.bf16.msra.mxu0 %v1282
        %1697 = vmatprep.subr.bf16.mxu0 0
        %1698 = vmatpush2.bf16.msra.mxu0 0
        %1699 = vmatprep.subr.bf16.mxu0 0
        %1700 = vmatpush2.bf16.msra.mxu0 0
        %1701 = vmatprep.subr.bf16.mxu0 0
        %1702 = vmatpush2.bf16.msra.mxu0 0
        %1703 = vmatprep.subr.bf16.mxu0 0
        %1704 = vmatpush2.bf16.msra.mxu0 0
        %1705 = vmatprep.subr.bf16.mxu0 0
        %1706 = vmatpush2.bf16.msra.mxu0 0
        %1707 = vmatprep.subr.bf16.mxu0 0
        %1708 = vmatpush2.bf16.msra.mxu0 0
        %1709 = vmatprep.subr.bf16.mxu0 0
        %1710 = vmatpush2.bf16.msra.mxu0 0
        %1711 = vmatprep.subr.bf16.mxu0 0
        %1712 = vmatpush2.bf16.msra.mxu0 0
        %1713 = vmatprep.mubr.bf16.mxu0 0
        %1714 = vmatmul.mubr.bf16.gmra.mxu0 %v601
        %v1715 = vpop.f32.mrf.mxu0
        %v1716 = vadd.f32 %v1667, %v1715
        %v1717 = vpop.f32.mrf.mxu0
        %v1718 = vpop.f32.mrf.mxu0
        %v1719 = vadd.f32 %v1670, %v1718
        %v1720 = vpop.f32.mrf.mxu0
        %1721 = vmatprep.mubr.bf16.mxu0 0
        %1722 = vmatmul.mubr.bf16.gmra.mxu0 %v606
        %v1723 = vpop.f32.mrf.mxu0
        %v1724 = vadd.f32 %v1675, %v1723
        %v1725 = vpop.f32.mrf.mxu0
        %v1726 = vpop.f32.mrf.mxu0
        %v1727 = vadd.f32 %v1678, %v1726
        %v1728 = vpop.f32.mrf.mxu0
        %1729 = vdwg.mxu0
        %v1730 = vmin.f32 %v1565, 20.0
        %v1731 = vmin.f32 %v1569, 20.0
        %v1732 = vmin.f32 %v1575, 20.0
        %v1733 = vmin.f32 %v1579, 20.0
        %v1734 = vmul.f32 %v1730, 1.442695
        %v1735 = vpow.pop %v1734
        %v1736 = vmul.f32 %v1731, 1.442695
        %v1737 = vpow.pop %v1736
        %v1738 = vmul.f32 %v1732, 1.442695
        %v1739 = vpow.pop %v1738
        %v1740 = vmul.f32 %v1733, 1.442695
        %v1741 = vpow.pop %v1740
        %v1742 = vadd.f32 %v1735, 2.0
        %v1743 = vadd.f32 %v1737, 2.0
        %v1744 = vadd.f32 %v1739, 2.0
        %v1745 = vadd.f32 %v1741, 2.0
        %v1746 = vmul.f32 %v1735, %v1742
        %v1747 = vmul.f32 %v1737, %v1743
        %v1748 = vmul.f32 %v1739, %v1744
        %v1749 = vmul.f32 %v1741, %v1745
        %v1750 = vmul.f32 %v1565, %v1746
        %v1751 = vmul.f32 %v1569, %v1747
        %v1752 = vmul.f32 %v1575, %v1748
        %v1753 = vmul.f32 %v1579, %v1749
        %v1754 = vadd.f32 %v1746, 2.0
        %v1755 = vadd.f32 %v1747, 2.0
        %v1756 = vadd.f32 %v1748, 2.0
        %v1757 = vadd.f32 %v1749, 2.0
        %v1758 = vrcp.pop %v1754
        %v1759 = vrcp.pop %v1755
        %v1760 = vrcp.pop %v1756
        %v1761 = vrcp.pop %v1757
        %v1762 = vmul.f32 %v1750, %v1758
        %v1763 = vmul.f32 %v1751, %v1759
        %v1764 = vmul.f32 %v1752, %v1760
        %v1765 = vmul.f32 %v1753, %v1761
        %v1766 = vmin.f32 %v1567, 20.0
        %v1767 = vmin.f32 %v1571, 20.0
        %v1768 = vmin.f32 %v1577, 20.0
        %v1769 = vmin.f32 %v1581, 20.0
        %v1770 = vmul.f32 %v1766, 1.442695
        %v1771 = vpow.pop %v1770
        %v1772 = vmul.f32 %v1767, 1.442695
        %v1773 = vpow.pop %v1772
        %v1774 = vmul.f32 %v1768, 1.442695
        %v1775 = vpow.pop %v1774
        %v1776 = vmul.f32 %v1769, 1.442695
        %v1777 = vpow.pop %v1776
        %v1778 = vadd.f32 %v1771, 2.0
        %v1779 = vadd.f32 %v1773, 2.0
        %v1780 = vadd.f32 %v1775, 2.0
        %v1781 = vadd.f32 %v1777, 2.0
        %v1782 = vmul.f32 %v1771, %v1778
        %v1783 = vmul.f32 %v1773, %v1779
        %v1784 = vmul.f32 %v1775, %v1780
        %v1785 = vmul.f32 %v1777, %v1781
        %v1786 = vmul.f32 %v1567, %v1782
        %v1787 = vmul.f32 %v1571, %v1783
        %v1788 = vmul.f32 %v1577, %v1784
        %v1789 = vmul.f32 %v1581, %v1785
        %v1790 = vadd.f32 %v1782, 2.0
        %v1791 = vadd.f32 %v1783, 2.0
        %v1792 = vadd.f32 %v1784, 2.0
        %v1793 = vadd.f32 %v1785, 2.0
        %v1794 = vrcp.pop %v1790
        %v1795 = vrcp.pop %v1791
        %v1796 = vrcp.pop %v1792
        %v1797 = vrcp.pop %v1793
        %v1798 = vmul.f32 %v1786, %v1794
        %v1799 = vmul.f32 %v1787, %v1795
        %v1800 = vmul.f32 %v1788, %v1796
        %v1801 = vmul.f32 %v1789, %v1797
        %v1802 = vadd.f32 %v1762, %v1798
        %v1803 = vadd.f32 %v1763, %v1799
        %v1804 = vadd.f32 %v1764, %v1800
        %v1805 = vadd.f32 %v1765, %v1801
        %v1806 = vmin.f32 %v1716, 20.0
        %v1807 = vmin.f32 %v1719, 20.0
        %v1808 = vmin.f32 %v1724, 20.0
        %v1809 = vmin.f32 %v1727, 20.0
        %v1810 = vmul.f32 %v1806, 1.442695
        %v1811 = vpow.pop %v1810
        %v1812 = vmul.f32 %v1807, 1.442695
        %v1813 = vpow.pop %v1812
        %v1814 = vmul.f32 %v1808, 1.442695
        %v1815 = vpow.pop %v1814
        %v1816 = vmul.f32 %v1809, 1.442695
        %v1817 = vpow.pop %v1816
        %v1818 = vadd.f32 %v1811, 2.0
        %v1819 = vadd.f32 %v1813, 2.0
        %v1820 = vadd.f32 %v1815, 2.0
        %v1821 = vadd.f32 %v1817, 2.0
        %v1822 = vmul.f32 %v1811, %v1818
        %v1823 = vmul.f32 %v1813, %v1819
        %v1824 = vmul.f32 %v1815, %v1820
        %v1825 = vmul.f32 %v1817, %v1821
        %v1826 = vmul.f32 %v1716, %v1822
        %v1827 = vmul.f32 %v1719, %v1823
        %v1828 = vmul.f32 %v1724, %v1824
        %v1829 = vmul.f32 %v1727, %v1825
        %v1830 = vadd.f32 %v1822, 2.0
        %v1831 = vadd.f32 %v1823, 2.0
        %v1832 = vadd.f32 %v1824, 2.0
        %v1833 = vadd.f32 %v1825, 2.0
        %v1834 = vrcp.pop %v1830
        %v1835 = vrcp.pop %v1831
        %v1836 = vrcp.pop %v1832
        %v1837 = vrcp.pop %v1833
        %v1838 = vmul.f32 %v1826, %v1834
        %v1839 = vmul.f32 %v1827, %v1835
        %v1840 = vmul.f32 %v1828, %v1836
        %v1841 = vmul.f32 %v1829, %v1837
        %v1842 = vadd.f32 %v1802, %v1838
        %v1843 = vadd.f32 %v1803, %v1839
        %v1844 = vadd.f32 %v1804, %v1840
        %v1845 = vadd.f32 %v1805, %v1841
        %1846 = vst [vmem:[#allocation2 + $0x8] sm:$0xff] %v1842
        %1847 = vst [vmem:[#allocation2 + $0x10] sm:$0xff] %v1843
        %1848 = vst [vmem:[#allocation2 + $0x28] sm:$0xff] %v1844
        %1849 = vst [vmem:[#allocation2 + $0x30] sm:$0xff] %v1845
        %v1850 = vld [vmem:[#allocation2] sm:$0xff]
        %v1851 = vld [vmem:[#allocation2 + $0x8] sm:$0xff]
        %v1852 = vld [vmem:[#allocation2 + $0x10] sm:$0xff]
        %v1853 = vld [vmem:[#allocation2 + $0x18] sm:$0xff]
        %v1854 = vld [vmem:[#allocation2 + $0x20] sm:$0xff]
        %v1855 = vld [vmem:[#allocation2 + $0x28] sm:$0xff]
        %v1856 = vld [vmem:[#allocation2 + $0x30] sm:$0xff]
        %v1857 = vld [vmem:[#allocation2 + $0x38] sm:$0xff]
        %v1864 = vrot.slane %v1850, 6
        %v1865 = vrot.slane %v1851, 6
        %v1866 = vsel %vm535, %v1864, %v1865
        %v1867 = vrot.slane %v1852, 6
        %v1868 = vsel %vm535, %v1865, %v1867
        %v1869 = vrot.slane %v1854, 6
        %v1870 = vrot.slane %v1855, 6
        %v1871 = vsel %vm535, %v1869, %v1870
        %v1872 = vrot.slane %v1856, 6
        %v1873 = vsel %vm535, %v1870, %v1872
        %v1880 = vrot.slane %v1851, 2
        %v1881 = vrot.slane %v1852, 2
        %v1882 = vsel %vm582, %v1880, %v1881
        %v1883 = vrot.slane %v1853, 2
        %v1884 = vsel %vm582, %v1881, %v1883
        %v1885 = vrot.slane %v1855, 2
        %v1886 = vrot.slane %v1856, 2
        %v1887 = vsel %vm582, %v1885, %v1886
        %v1888 = vrot.slane %v1857, 2
        %v1889 = vsel %vm582, %v1886, %v1888
        %v1894 = vpack.c.bf16 %v1868, %v1866
        %v1895 = vpack.c.bf16 %v1852, %v1851
        %v1896 = vpack.c.bf16 %v1884, %v1882
        %v1897 = vpack.c.bf16 %v1873, %v1871
        %v1898 = vpack.c.bf16 %v1856, %v1855
        %v1899 = vpack.c.bf16 %v1889, %v1887
        %v1900 = vld [vmem:[#allocation15] sm:$0xf]
        %v1901 = vld [vmem:[#allocation15 + $0x4] sm:$0xf]
        %v1902 = vld [vmem:[#allocation15 + $0x8] sm:$0xf]
        %v1903 = vld [vmem:[#allocation15 + $0xc] sm:$0xf]
        %v1904 = vld [vmem:[#allocation15 + $0x10] sm:$0xf]
        %v1905 = vld [vmem:[#allocation15 + $0x14] sm:$0xf]
        %v1906 = vld [vmem:[#allocation15 + $0x18] sm:$0xf]
        %v1907 = vld [vmem:[#allocation15 + $0x1c] sm:$0xf]
        %v1908 = vld [vmem:[#allocation15 + $0x20] sm:$0xf]
        %v1909 = vld [vmem:[#allocation15 + $0x24] sm:$0xf]
        %v1910 = vld [vmem:[#allocation15 + $0x28] sm:$0xf]
        %v1911 = vld [vmem:[#allocation15 + $0x2c] sm:$0xf]
        %v1912 = vld [vmem:[#allocation15 + $0x30] sm:$0xf]
        %v1913 = vld [vmem:[#allocation15 + $0x34] sm:$0xf]
        %v1914 = vld [vmem:[#allocation15 + $0x38] sm:$0xf]
        %v1915 = vld [vmem:[#allocation15 + $0x3c] sm:$0xf]
        %v1916 = vld [vmem:[#allocation15 + $0x40] sm:$0xf]
        %v1917 = vld [vmem:[#allocation15 + $0x44] sm:$0xf]
        %v1918 = vld [vmem:[#allocation15 + $0x48] sm:$0xf]
        %v1919 = vld [vmem:[#allocation15 + $0x4c] sm:$0xf]
        %v1920 = vld [vmem:[#allocation15 + $0x50] sm:$0xf]
        %v1921 = vld [vmem:[#allocation15 + $0x54] sm:$0xf]
        %v1922 = vld [vmem:[#allocation15 + $0x58] sm:$0xf]
        %v1923 = vld [vmem:[#allocation15 + $0x5c] sm:$0xf]
        %v1924 = vld [vmem:[#allocation15 + $0x60] sm:$0xf]
        %v1925 = vld [vmem:[#allocation15 + $0x64] sm:$0xf]
        %v1926 = vld [vmem:[#allocation15 + $0x68] sm:$0xf]
        %v1927 = vld [vmem:[#allocation15 + $0x6c] sm:$0xf]
        %v1928 = vld [vmem:[#allocation15 + $0x70] sm:$0xf]
        %v1929 = vld [vmem:[#allocation15 + $0x74] sm:$0xf]
        %v1930 = vld [vmem:[#allocation15 + $0x78] sm:$0xf]
        %v1931 = vld [vmem:[#allocation15 + $0x7c] sm:$0xf]
        %v1932 = vld [vmem:[#allocation15 + $0x80] sm:$0xf]
        %v1933 = vld [vmem:[#allocation15 + $0x84] sm:$0xf]
        %v1934 = vld [vmem:[#allocation15 + $0x88] sm:$0xf]
        %v1935 = vld [vmem:[#allocation15 + $0x8c] sm:$0xf]
        %v1936 = vld [vmem:[#allocation15 + $0x90] sm:$0xf]
        %v1937 = vld [vmem:[#allocation15 + $0x94] sm:$0xf]
        %v1938 = vld [vmem:[#allocation15 + $0x98] sm:$0xf]
        %v1939 = vld [vmem:[#allocation15 + $0x9c] sm:$0xf]
        %v1940 = vld [vmem:[#allocation15 + $0xa0] sm:$0xf]
        %v1941 = vld [vmem:[#allocation15 + $0xa4] sm:$0xf]
        %v1942 = vld [vmem:[#allocation15 + $0xa8] sm:$0xf]
        %v1943 = vld [vmem:[#allocation15 + $0xac] sm:$0xf]
        %v1944 = vld [vmem:[#allocation15 + $0xb0] sm:$0xf]
        %v1945 = vld [vmem:[#allocation15 + $0xb4] sm:$0xf]
        %v1946 = vld [vmem:[#allocation15 + $0xb8] sm:$0xf]
        %v1947 = vld [vmem:[#allocation15 + $0xbc] sm:$0xf]
        %v1948 = vld [vmem:[#allocation8] sm:$0x1]
        %v1949 = vlaneseq
        %v1950 = vshrl.u32 %v1949, 7
        %v1951 = vsub.s32 0, %v1950
        %v1952 = vrot.slane %v1948, %v1951
        %v2001 = vunpack.c.l.b16 %v1900
        %v2002 = vunpack.c.l.b16 %v1901
        %v2003 = vunpack.c.l.b16 %v1902
        %v2004 = vunpack.c.l.b16 %v1903
        %v2005 = vunpack.c.l.b16 %v1904
        %v2006 = vunpack.c.l.b16 %v1905
        %v2007 = vunpack.c.l.b16 %v1906
        %v2008 = vunpack.c.l.b16 %v1907
        %v2009 = vunpack.c.l.b16 %v1908
        %v2010 = vunpack.c.l.b16 %v1909
        %v2011 = vunpack.c.l.b16 %v1910
        %v2012 = vunpack.c.l.b16 %v1911
        %v2013 = vunpack.c.l.b16 %v1912
        %v2014 = vunpack.c.l.b16 %v1913
        %v2015 = vunpack.c.l.b16 %v1914
        %v2016 = vunpack.c.l.b16 %v1915
        %v2017 = vunpack.c.l.b16 %v1916
        %v2018 = vunpack.c.l.b16 %v1917
        %v2019 = vunpack.c.l.b16 %v1918
        %v2020 = vunpack.c.l.b16 %v1919
        %v2021 = vunpack.c.l.b16 %v1920
        %v2022 = vunpack.c.l.b16 %v1921
        %v2023 = vunpack.c.l.b16 %v1922
        %v2024 = vunpack.c.l.b16 %v1923
        %v2025 = vunpack.c.l.b16 %v1924
        %v2026 = vunpack.c.l.b16 %v1925
        %v2027 = vunpack.c.l.b16 %v1926
        %v2028 = vunpack.c.l.b16 %v1927
        %v2029 = vunpack.c.l.b16 %v1928
        %v2030 = vunpack.c.l.b16 %v1929
        %v2031 = vunpack.c.l.b16 %v1930
        %v2032 = vunpack.c.l.b16 %v1931
        %v2033 = vunpack.c.l.b16 %v1932
        %v2034 = vunpack.c.l.b16 %v1933
        %v2035 = vunpack.c.l.b16 %v1934
        %v2036 = vunpack.c.l.b16 %v1935
        %v2037 = vunpack.c.l.b16 %v1936
        %v2038 = vunpack.c.l.b16 %v1937
        %v2039 = vunpack.c.l.b16 %v1938
        %v2040 = vunpack.c.l.b16 %v1939
        %v2041 = vunpack.c.l.b16 %v1940
        %v2042 = vunpack.c.l.b16 %v1941
        %v2043 = vunpack.c.l.b16 %v1942
        %v2044 = vunpack.c.l.b16 %v1943
        %v2045 = vunpack.c.l.b16 %v1944
        %v2046 = vunpack.c.l.b16 %v1945
        %v2047 = vunpack.c.l.b16 %v1946
        %v2048 = vunpack.c.l.b16 %v1947
        %v2049 = vpack.c.b16 %v2002, %v2001
        %v2050 = vpack.c.b16 %v2004, %v2003
        %v2051 = vpack.c.b16 %v2006, %v2005
        %v2052 = vpack.c.b16 %v2008, %v2007
        %v2053 = vpack.c.b16 %v2010, %v2009
        %v2054 = vpack.c.b16 %v2012, %v2011
        %v2055 = vpack.c.b16 %v2014, %v2013
        %v2056 = vpack.c.b16 %v2016, %v2015
        %v2057 = vpack.c.b16 %v2018, %v2017
        %v2058 = vpack.c.b16 %v2020, %v2019
        %v2059 = vpack.c.b16 %v2022, %v2021
        %v2060 = vpack.c.b16 %v2024, %v2023
        %v2061 = vpack.c.b16 %v2026, %v2025
        %v2062 = vpack.c.b16 %v2028, %v2027
        %v2063 = vpack.c.b16 %v2030, %v2029
        %v2064 = vpack.c.b16 %v2032, %v2031
        %v2065 = vpack.c.b16 %v2034, %v2033
        %v2066 = vpack.c.b16 %v2036, %v2035
        %v2067 = vpack.c.b16 %v2038, %v2037
        %v2068 = vpack.c.b16 %v2040, %v2039
        %v2069 = vpack.c.b16 %v2042, %v2041
        %v2070 = vpack.c.b16 %v2044, %v2043
        %v2071 = vpack.c.b16 %v2046, %v2045
        %v2072 = vpack.c.b16 %v2048, %v2047
        %2097 = vmatprep.subr.bf16.mxu0 0
        %2098 = vmatpush1.bf16.msra.mxu0 %v2056
        %2099 = vmatprep.subr.bf16.mxu0 0
        %2100 = vmatpush1.bf16.msra.mxu0 %v2055
        %2101 = vmatprep.subr.bf16.mxu0 0
        %2102 = vmatpush1.bf16.msra.mxu0 %v2054
        %2103 = vmatprep.subr.bf16.mxu0 0
        %2104 = vmatpush1.bf16.msra.mxu0 %v2053
        %2105 = vmatprep.subr.bf16.mxu0 0
        %2106 = vmatpush1.bf16.msra.mxu0 %v2052
        %2107 = vmatprep.subr.bf16.mxu0 0
        %2108 = vmatpush1.bf16.msra.mxu0 %v2051
        %2109 = vmatprep.subr.bf16.mxu0 0
        %2110 = vmatpush1.bf16.msra.mxu0 %v2050
        %2111 = vmatprep.subr.bf16.mxu0 0
        %2112 = vmatpush1.bf16.msra.mxu0 %v2049
        %2113 = vmatprep.subr.bf16.mxu0 0
        %2114 = vmatpush2.bf16.msra.mxu0 %v2064
        %2115 = vmatprep.subr.bf16.mxu0 0
        %2116 = vmatpush2.bf16.msra.mxu0 %v2063
        %2117 = vmatprep.subr.bf16.mxu0 0
        %2118 = vmatpush2.bf16.msra.mxu0 %v2062
        %2119 = vmatprep.subr.bf16.mxu0 0
        %2120 = vmatpush2.bf16.msra.mxu0 %v2061
        %2121 = vmatprep.subr.bf16.mxu0 0
        %2122 = vmatpush2.bf16.msra.mxu0 %v2060
        %2123 = vmatprep.subr.bf16.mxu0 0
        %2124 = vmatpush2.bf16.msra.mxu0 %v2059
        %2125 = vmatprep.subr.bf16.mxu0 0
        %2126 = vmatpush2.bf16.msra.mxu0 %v2058
        %2127 = vmatprep.subr.bf16.mxu0 0
        %2128 = vmatpush2.bf16.msra.mxu0 %v2057
        %2129 = vmatprep.mubr.bf16.mxu0 %v1895
        %2130 = vmatmul.mubr.bf16.gmra.mxu0 %v1894
        %v2131 = vpop.f32.mrf.mxu0
        %v2132 = vadd.f32 %v1952, %v2131
        %v2133 = vpop.f32.mrf.mxu0
        %v2134 = vpop.f32.mrf.mxu0
        %v2135 = vadd.f32 %v1952, %v2134
        %v2136 = vpop.f32.mrf.mxu0
        %2137 = vmatprep.mubr.bf16.mxu0 %v1898
        %2138 = vmatmul.mubr.bf16.gmra.mxu0 %v1897
        %v2139 = vpop.f32.mrf.mxu0
        %v2140 = vadd.f32 %v1952, %v2139
        %v2141 = vpop.f32.mrf.mxu0
        %v2142 = vpop.f32.mrf.mxu0
        %v2143 = vadd.f32 %v1952, %v2142
        %v2144 = vpop.f32.mrf.mxu0
        %2145 = vdwg.mxu0
        %2146 = vmatprep.subr.bf16.mxu0 0
        %2147 = vmatpush1.bf16.msra.mxu0 %v2072
        %2148 = vmatprep.subr.bf16.mxu0 0
        %2149 = vmatpush1.bf16.msra.mxu0 %v2071
        %2150 = vmatprep.subr.bf16.mxu0 0
        %2151 = vmatpush1.bf16.msra.mxu0 %v2070
        %2152 = vmatprep.subr.bf16.mxu0 0
        %2153 = vmatpush1.bf16.msra.mxu0 %v2069
        %2154 = vmatprep.subr.bf16.mxu0 0
        %2155 = vmatpush1.bf16.msra.mxu0 %v2068
        %2156 = vmatprep.subr.bf16.mxu0 0
        %2157 = vmatpush1.bf16.msra.mxu0 %v2067
        %2158 = vmatprep.subr.bf16.mxu0 0
        %2159 = vmatpush1.bf16.msra.mxu0 %v2066
        %2160 = vmatprep.subr.bf16.mxu0 0
        %2161 = vmatpush1.bf16.msra.mxu0 %v2065
        %2162 = vmatprep.subr.bf16.mxu0 0
        %2163 = vmatpush2.bf16.msra.mxu0 0
        %2164 = vmatprep.subr.bf16.mxu0 0
        %2165 = vmatpush2.bf16.msra.mxu0 0
        %2166 = vmatprep.subr.bf16.mxu0 0
        %2167 = vmatpush2.bf16.msra.mxu0 0
        %2168 = vmatprep.subr.bf16.mxu0 0
        %2169 = vmatpush2.bf16.msra.mxu0 0
        %2170 = vmatprep.subr.bf16.mxu0 0
        %2171 = vmatpush2.bf16.msra.mxu0 0
        %2172 = vmatprep.subr.bf16.mxu0 0
        %2173 = vmatpush2.bf16.msra.mxu0 0
        %2174 = vmatprep.subr.bf16.mxu0 0
        %2175 = vmatpush2.bf16.msra.mxu0 0
        %2176 = vmatprep.subr.bf16.mxu0 0
        %2177 = vmatpush2.bf16.msra.mxu0 0
        %2178 = vmatprep.mubr.bf16.mxu0 0
        %2179 = vmatmul.mubr.bf16.gmra.mxu0 %v1896
        %v2180 = vpop.f32.mrf.mxu0
        %v2181 = vadd.f32 %v2132, %v2180
        %v2182 = vpop.f32.mrf.mxu0
        %v2183 = vpop.f32.mrf.mxu0
        %v2184 = vadd.f32 %v2135, %v2183
        %v2185 = vpop.f32.mrf.mxu0
        %2186 = vmatprep.mubr.bf16.mxu0 0
        %2187 = vmatmul.mubr.bf16.gmra.mxu0 %v1899
        %v2188 = vpop.f32.mrf.mxu0
        %v2189 = vadd.f32 %v2140, %v2188
        %v2190 = vpop.f32.mrf.mxu0
        %v2191 = vpop.f32.mrf.mxu0
        %v2192 = vadd.f32 %v2143, %v2191
        %v2193 = vpop.f32.mrf.mxu0
        %2194 = vdwg.mxu0
        %v2195 = vmin.f32 %v2181, 20.0
        %v2196 = vmin.f32 %v2184, 20.0
        %v2197 = vmin.f32 %v2189, 20.0
        %v2198 = vmin.f32 %v2192, 20.0
        %v2199 = vmul.f32 %v2195, 1.442695
        %v2200 = vpow.pop %v2199
        %v2201 = vmul.f32 %v2196, 1.442695
        %v2202 = vpow.pop %v2201
        %v2203 = vmul.f32 %v2197, 1.442695
        %v2204 = vpow.pop %v2203
        %v2205 = vmul.f32 %v2198, 1.442695
        %v2206 = vpow.pop %v2205
        %v2207 = vadd.f32 %v2200, 2.0
        %v2208 = vadd.f32 %v2202, 2.0
        %v2209 = vadd.f32 %v2204, 2.0
        %v2210 = vadd.f32 %v2206, 2.0
        %v2211 = vmul.f32 %v2200, %v2207
        %v2212 = vmul.f32 %v2202, %v2208
        %v2213 = vmul.f32 %v2204, %v2209
        %v2214 = vmul.f32 %v2206, %v2210
        %v2215 = vmul.f32 %v2181, %v2211
        %v2216 = vmul.f32 %v2184, %v2212
        %v2217 = vmul.f32 %v2189, %v2213
        %v2218 = vmul.f32 %v2192, %v2214
        %v2219 = vadd.f32 %v2211, 2.0
        %v2220 = vadd.f32 %v2212, 2.0
        %v2221 = vadd.f32 %v2213, 2.0
        %v2222 = vadd.f32 %v2214, 2.0
        %v2223 = vrcp.pop %v2219
        %v2224 = vrcp.pop %v2220
        %v2225 = vrcp.pop %v2221
        %v2226 = vrcp.pop %v2222
        %v2227 = vmul.f32 %v2215, %v2223
        %v2228 = vmul.f32 %v2216, %v2224
        %v2229 = vmul.f32 %v2217, %v2225
        %v2230 = vmul.f32 %v2218, %v2226
        %2231 = vst [vmem:[#allocation2 + $0x8] sm:$0xff] %v2227
        %2232 = vst [vmem:[#allocation2 + $0x10] sm:$0xff] %v2228
        %2233 = vst [vmem:[#allocation2 + $0x28] sm:$0xff] %v2229
        %2234 = vst [vmem:[#allocation2 + $0x30] sm:$0xff] %v2230
        %v2235 = vld [vmem:[#allocation2] sm:$0xff]
        %v2236 = vld [vmem:[#allocation2 + $0x8] sm:$0xff]
        %v2237 = vld [vmem:[#allocation2 + $0x10] sm:$0xff]
        %v2238 = vld [vmem:[#allocation2 + $0x18] sm:$0xff]
        %v2239 = vld [vmem:[#allocation2 + $0x20] sm:$0xff]
        %v2240 = vld [vmem:[#allocation2 + $0x28] sm:$0xff]
        %v2241 = vld [vmem:[#allocation2 + $0x30] sm:$0xff]
        %v2242 = vld [vmem:[#allocation2 + $0x38] sm:$0xff]
        %v2249 = vrot.slane %v2235, 6
        %v2250 = vrot.slane %v2236, 6
        %v2251 = vsel %vm535, %v2249, %v2250
        %v2252 = vrot.slane %v2237, 6
        %v2253 = vsel %vm535, %v2250, %v2252
        %v2254 = vrot.slane %v2239, 6
        %v2255 = vrot.slane %v2240, 6
        %v2256 = vsel %vm535, %v2254, %v2255
        %v2257 = vrot.slane %v2241, 6
        %v2258 = vsel %vm535, %v2255, %v2257
        %v2263 = vrot.slane %v2235, 7
        %v2264 = vrot.slane %v2236, 7
        %v2265 = vsel %vm550, %v2263, %v2264
        %v2266 = vrot.slane %v2237, 7
        %v2267 = vsel %vm550, %v2264, %v2266
        %v2268 = vrot.slane %v2239, 7
        %v2269 = vrot.slane %v2240, 7
        %v2270 = vsel %vm550, %v2268, %v2269
        %v2271 = vrot.slane %v2241, 7
        %v2272 = vsel %vm550, %v2269, %v2271
        %v2279 = vrot.slane %v2236, 1
        %v2280 = vrot.slane %v2237, 1
        %v2281 = vsel %vm567, %v2279, %v2280
        %v2282 = vrot.slane %v2238, 1
        %v2283 = vsel %vm567, %v2280, %v2282
        %v2284 = vrot.slane %v2240, 1
        %v2285 = vrot.slane %v2241, 1
        %v2286 = vsel %vm567, %v2284, %v2285
        %v2287 = vrot.slane %v2242, 1
        %v2288 = vsel %vm567, %v2285, %v2287
        %v2293 = vrot.slane %v2236, 2
        %v2294 = vrot.slane %v2237, 2
        %v2295 = vsel %vm582, %v2293, %v2294
        %v2296 = vrot.slane %v2238, 2
        %v2297 = vsel %vm582, %v2294, %v2296
        %v2298 = vrot.slane %v2240, 2
        %v2299 = vrot.slane %v2241, 2
        %v2300 = vsel %vm582, %v2298, %v2299
        %v2301 = vrot.slane %v2242, 2
        %v2302 = vsel %vm582, %v2299, %v2301
        %v2307 = vpack.c.bf16 %v2253, %v2251
        %v2308 = vpack.c.bf16 %v2267, %v2265
        %v2309 = vpack.c.bf16 %v2237, %v2236
        %v2310 = vpack.c.bf16 %v2283, %v2281
        %v2311 = vpack.c.bf16 %v2297, %v2295
        %v2312 = vpack.c.bf16 %v2258, %v2256
        %v2313 = vpack.c.bf16 %v2272, %v2270
        %v2314 = vpack.c.bf16 %v2241, %v2240
        %v2315 = vpack.c.bf16 %v2288, %v2286
        %v2316 = vpack.c.bf16 %v2302, %v2300
        %v2317 = vld [vmem:[#allocation11] sm:$0xff]
        %v2318 = vld [vmem:[#allocation11 + $0x8] sm:$0xf]
        %v2319 = vld [vmem:[#allocation11 + $0xc] sm:$0xff]
        %v2320 = vld [vmem:[#allocation11 + $0x14] sm:$0xf]
        %v2321 = vld [vmem:[#allocation11 + $0x18] sm:$0xff]
        %v2322 = vld [vmem:[#allocation11 + $0x20] sm:$0xf]
        %v2323 = vld [vmem:[#allocation11 + $0x24] sm:$0xff]
        %v2324 = vld [vmem:[#allocation11 + $0x2c] sm:$0xf]
        %v2325 = vld [vmem:[#allocation11 + $0x30] sm:$0xff]
        %v2326 = vld [vmem:[#allocation11 + $0x38] sm:$0xf]
        %v2327 = vld [vmem:[#allocation11 + $0x3c] sm:$0xff]
        %v2328 = vld [vmem:[#allocation11 + $0x44] sm:$0xf]
        %v2329 = vld [vmem:[#allocation11 + $0x48] sm:$0xff]
        %v2330 = vld [vmem:[#allocation11 + $0x50] sm:$0xf]
        %v2331 = vld [vmem:[#allocation11 + $0x54] sm:$0xff]
        %v2332 = vld [vmem:[#allocation11 + $0x5c] sm:$0xf]
        %v2333 = vld [vmem:[#allocation11 + $0x60] sm:$0xff]
        %v2334 = vld [vmem:[#allocation11 + $0x68] sm:$0xf]
        %v2335 = vld [vmem:[#allocation11 + $0x6c] sm:$0xff]
        %v2336 = vld [vmem:[#allocation11 + $0x74] sm:$0xf]
        %v2337 = vld [vmem:[#allocation11 + $0x78] sm:$0xff]
        %v2338 = vld [vmem:[#allocation11 + $0x80] sm:$0xf]
        %v2339 = vld [vmem:[#allocation11 + $0x84] sm:$0xff]
        %v2340 = vld [vmem:[#allocation11 + $0x8c] sm:$0xf]
        %v2341 = vld [vmem:[#allocation11 + $0x90] sm:$0xff]
        %v2342 = vld [vmem:[#allocation11 + $0x98] sm:$0xf]
        %v2343 = vld [vmem:[#allocation11 + $0x9c] sm:$0xff]
        %v2344 = vld [vmem:[#allocation11 + $0xa4] sm:$0xf]
        %v2345 = vld [vmem:[#allocation11 + $0xa8] sm:$0xff]
        %v2346 = vld [vmem:[#allocation11 + $0xb0] sm:$0xf]
        %v2347 = vld [vmem:[#allocation11 + $0xb4] sm:$0xff]
        %v2348 = vld [vmem:[#allocation11 + $0xbc] sm:$0xf]
        %v2349 = vld [vmem:[#allocation11 + $0xc0] sm:$0xff]
        %v2350 = vld [vmem:[#allocation11 + $0xc8] sm:$0xf]
        %v2351 = vld [vmem:[#allocation11 + $0xcc] sm:$0xff]
        %v2352 = vld [vmem:[#allocation11 + $0xd4] sm:$0xf]
        %v2353 = vld [vmem:[#allocation11 + $0xd8] sm:$0xff]
        %v2354 = vld [vmem:[#allocation11 + $0xe0] sm:$0xf]
        %v2355 = vld [vmem:[#allocation11 + $0xe4] sm:$0xff]
        %v2356 = vld [vmem:[#allocation11 + $0xec] sm:$0xf]
        %v2357 = vld [vmem:[#allocation11 + $0xf0] sm:$0xff]
        %v2358 = vld [vmem:[#allocation11 + $0xf8] sm:$0xf]
        %v2359 = vld [vmem:[#allocation11 + $0xfc] sm:$0xff]
        %v2360 = vld [vmem:[#allocation11 + $0x104] sm:$0xf]
        %v2361 = vld [vmem:[#allocation11 + $0x108] sm:$0xff]
        %v2362 = vld [vmem:[#allocation11 + $0x110] sm:$0xf]
        %v2363 = vld [vmem:[#allocation11 + $0x114] sm:$0xff]
        %v2364 = vld [vmem:[#allocation11 + $0x11c] sm:$0xf]
        %v2365 = vld [vmem:[#allocation11 + $0x120] sm:$0xff]
        %v2366 = vld [vmem:[#allocation11 + $0x128] sm:$0xf]
        %v2367 = vld [vmem:[#allocation11 + $0x12c] sm:$0xff]
        %v2368 = vld [vmem:[#allocation11 + $0x134] sm:$0xf]
        %v2369 = vld [vmem:[#allocation11 + $0x138] sm:$0xff]
        %v2370 = vld [vmem:[#allocation11 + $0x140] sm:$0xf]
        %v2371 = vld [vmem:[#allocation11 + $0x144] sm:$0xff]
        %v2372 = vld [vmem:[#allocation11 + $0x14c] sm:$0xf]
        %v2373 = vld [vmem:[#allocation11 + $0x150] sm:$0xff]
        %v2374 = vld [vmem:[#allocation11 + $0x158] sm:$0xf]
        %v2375 = vld [vmem:[#allocation11 + $0x15c] sm:$0xff]
        %v2376 = vld [vmem:[#allocation11 + $0x164] sm:$0xf]
        %v2377 = vld [vmem:[#allocation11 + $0x168] sm:$0xff]
        %v2378 = vld [vmem:[#allocation11 + $0x170] sm:$0xf]
        %v2379 = vld [vmem:[#allocation11 + $0x174] sm:$0xff]
        %v2380 = vld [vmem:[#allocation11 + $0x17c] sm:$0xf]
        %v2381 = vld [vmem:[#allocation11 + $0x180] sm:$0xff]
        %v2382 = vld [vmem:[#allocation11 + $0x188] sm:$0xf]
        %v2383 = vld [vmem:[#allocation11 + $0x18c] sm:$0xff]
        %v2384 = vld [vmem:[#allocation11 + $0x194] sm:$0xf]
        %v2385 = vld [vmem:[#allocation11 + $0x198] sm:$0xff]
        %v2386 = vld [vmem:[#allocation11 + $0x1a0] sm:$0xf]
        %v2387 = vld [vmem:[#allocation11 + $0x1a4] sm:$0xff]
        %v2388 = vld [vmem:[#allocation11 + $0x1ac] sm:$0xf]
        %v2389 = vld [vmem:[#allocation11 + $0x1b0] sm:$0xff]
        %v2390 = vld [vmem:[#allocation11 + $0x1b8] sm:$0xf]
        %v2391 = vld [vmem:[#allocation11 + $0x1bc] sm:$0xff]
        %v2392 = vld [vmem:[#allocation11 + $0x1c4] sm:$0xf]
        %v2393 = vld [vmem:[#allocation11 + $0x1c8] sm:$0xff]
        %v2394 = vld [vmem:[#allocation11 + $0x1d0] sm:$0xf]
        %v2395 = vld [vmem:[#allocation11 + $0x1d4] sm:$0xff]
        %v2396 = vld [vmem:[#allocation11 + $0x1dc] sm:$0xf]
        %v2397 = vld [vmem:[#allocation11 + $0x1e0] sm:$0xff]
        %v2398 = vld [vmem:[#allocation11 + $0x1e8] sm:$0xf]
        %v2399 = vld [vmem:[#allocation11 + $0x1ec] sm:$0xff]
        %v2400 = vld [vmem:[#allocation11 + $0x1f4] sm:$0xf]
        %v2401 = vld [vmem:[#allocation11 + $0x1f8] sm:$0xff]
        %v2402 = vld [vmem:[#allocation11 + $0x200] sm:$0xf]
        %v2403 = vld [vmem:[#allocation11 + $0x204] sm:$0xff]
        %v2404 = vld [vmem:[#allocation11 + $0x20c] sm:$0xf]
        %v2405 = vld [vmem:[#allocation11 + $0x210] sm:$0xff]
        %v2406 = vld [vmem:[#allocation11 + $0x218] sm:$0xf]
        %v2407 = vld [vmem:[#allocation11 + $0x21c] sm:$0xff]
        %v2408 = vld [vmem:[#allocation11 + $0x224] sm:$0xf]
        %v2409 = vld [vmem:[#allocation11 + $0x228] sm:$0xff]
        %v2410 = vld [vmem:[#allocation11 + $0x230] sm:$0xf]
        %v2411 = vld [vmem:[#allocation11 + $0x234] sm:$0xff]
        %v2412 = vld [vmem:[#allocation11 + $0x23c] sm:$0xf]
        %v2413 = vld [vmem:[#allocation11 + $0x240] sm:$0xff]
        %v2414 = vld [vmem:[#allocation11 + $0x248] sm:$0xf]
        %v2415 = vld [vmem:[#allocation11 + $0x24c] sm:$0xff]
        %v2416 = vld [vmem:[#allocation11 + $0x254] sm:$0xf]
        %v2417 = vld [vmem:[#allocation11 + $0x258] sm:$0xff]
        %v2418 = vld [vmem:[#allocation11 + $0x260] sm:$0xf]
        %v2419 = vld [vmem:[#allocation11 + $0x264] sm:$0xff]
        %v2420 = vld [vmem:[#allocation11 + $0x26c] sm:$0xf]
        %v2421 = vld [vmem:[#allocation11 + $0x270] sm:$0xff]
        %v2422 = vld [vmem:[#allocation11 + $0x278] sm:$0xf]
        %v2423 = vld [vmem:[#allocation11 + $0x27c] sm:$0xff]
        %v2424 = vld [vmem:[#allocation11 + $0x284] sm:$0xf]
        %v2425 = vld [vmem:[#allocation11 + $0x288] sm:$0xff]
        %v2426 = vld [vmem:[#allocation11 + $0x290] sm:$0xf]
        %v2427 = vld [vmem:[#allocation11 + $0x294] sm:$0xff]
        %v2428 = vld [vmem:[#allocation11 + $0x29c] sm:$0xf]
        %v2429 = vld [vmem:[#allocation11 + $0x2a0] sm:$0xff]
        %v2430 = vld [vmem:[#allocation11 + $0x2a8] sm:$0xf]
        %v2431 = vld [vmem:[#allocation11 + $0x2ac] sm:$0xff]
        %v2432 = vld [vmem:[#allocation11 + $0x2b4] sm:$0xf]
        %v2433 = vld [vmem:[#allocation11 + $0x2b8] sm:$0xff]
        %v2434 = vld [vmem:[#allocation11 + $0x2c0] sm:$0xf]
        %v2435 = vld [vmem:[#allocation11 + $0x2c4] sm:$0xff]
        %v2436 = vld [vmem:[#allocation11 + $0x2cc] sm:$0xf]
        %v2437 = vld [vmem:[#allocation11 + $0x2d0] sm:$0xff]
        %v2438 = vld [vmem:[#allocation11 + $0x2d8] sm:$0xf]
        %v2439 = vld [vmem:[#allocation11 + $0x2dc] sm:$0xff]
        %v2440 = vld [vmem:[#allocation11 + $0x2e4] sm:$0xf]
        %v2441 = vld [vmem:[#allocation11 + $0x2e8] sm:$0xff]
        %v2442 = vld [vmem:[#allocation11 + $0x2f0] sm:$0xf]
        %v2443 = vld [vmem:[#allocation11 + $0x2f4] sm:$0xff]
        %v2444 = vld [vmem:[#allocation11 + $0x2fc] sm:$0xf]
        %v2445 = vld [vmem:[#allocation11 + $0x300] sm:$0xff]
        %v2446 = vld [vmem:[#allocation11 + $0x308] sm:$0xf]
        %v2447 = vld [vmem:[#allocation11 + $0x30c] sm:$0xff]
        %v2448 = vld [vmem:[#allocation11 + $0x314] sm:$0xf]
        %v2449 = vld [vmem:[#allocation11 + $0x318] sm:$0xff]
        %v2450 = vld [vmem:[#allocation11 + $0x320] sm:$0xf]
        %v2451 = vld [vmem:[#allocation11 + $0x324] sm:$0xff]
        %v2452 = vld [vmem:[#allocation11 + $0x32c] sm:$0xf]
        %v2453 = vld [vmem:[#allocation11 + $0x330] sm:$0xff]
        %v2454 = vld [vmem:[#allocation11 + $0x338] sm:$0xf]
        %v2455 = vld [vmem:[#allocation11 + $0x33c] sm:$0xff]
        %v2456 = vld [vmem:[#allocation11 + $0x344] sm:$0xf]
        %v2457 = vld [vmem:[#allocation11 + $0x348] sm:$0xff]
        %v2458 = vld [vmem:[#allocation11 + $0x350] sm:$0xf]
        %v2459 = vld [vmem:[#allocation11 + $0x354] sm:$0xff]
        %v2460 = vld [vmem:[#allocation11 + $0x35c] sm:$0xf]
        %v2461 = vld [vmem:[#allocation11 + $0x360] sm:$0xff]
        %v2462 = vld [vmem:[#allocation11 + $0x368] sm:$0xf]
        %v2463 = vld [vmem:[#allocation11 + $0x36c] sm:$0xff]
        %v2464 = vld [vmem:[#allocation11 + $0x374] sm:$0xf]
        %v2465 = vld [vmem:[#allocation11 + $0x378] sm:$0xff]
        %v2466 = vld [vmem:[#allocation11 + $0x380] sm:$0xf]
        %v2467 = vld [vmem:[#allocation11 + $0x384] sm:$0xff]
        %v2468 = vld [vmem:[#allocation11 + $0x38c] sm:$0xf]
        %v2469 = vld [vmem:[#allocation11 + $0x390] sm:$0xff]
        %v2470 = vld [vmem:[#allocation11 + $0x398] sm:$0xf]
        %v2471 = vld [vmem:[#allocation11 + $0x39c] sm:$0xff]
        %v2472 = vld [vmem:[#allocation11 + $0x3a4] sm:$0xf]
        %v2473 = vld [vmem:[#allocation11 + $0x3a8] sm:$0xff]
        %v2474 = vld [vmem:[#allocation11 + $0x3b0] sm:$0xf]
        %v2475 = vld [vmem:[#allocation11 + $0x3b4] sm:$0xff]
        %v2476 = vld [vmem:[#allocation11 + $0x3bc] sm:$0xf]
        %s2477 = scalar_lea.vmem [#allocation6], 1
        %v2478 = vld [vmem:[%s2477] ss:$4 sm:$0x7]
        %v2480 = vlaneseq
        %v2481 = vshrl.u32 %v2480, 7
        %v2482 = vsub.s32 0, %v2481
        %v2483 = vrot.slane %v2478, %v2482
        %v2484 = vlaneseq
        %v2485 = vshrl.u32 %v2484, 7
        %v2486 = vsub.s32 1, %v2485
        %v2487 = vrot.slane %v2478, %v2486
        %v2488 = vlaneseq
        %v2489 = vshrl.u32 %v2488, 7
        %v2490 = vsub.s32 2, %v2489
        %v2491 = vrot.slane %v2478, %v2490
        %v2655 = vunpack.c.l.b16 %v2317
        %v2656 = vunpack.c.h.b16 %v2317
        %v2657 = vunpack.c.l.b16 %v2318
        %v2658 = vunpack.c.l.b16 %v2319
        %v2659 = vunpack.c.h.b16 %v2319
        %v2660 = vunpack.c.l.b16 %v2320
        %v2661 = vunpack.c.l.b16 %v2321
        %v2662 = vunpack.c.h.b16 %v2321
        %v2663 = vunpack.c.l.b16 %v2322
        %v2664 = vunpack.c.l.b16 %v2323
        %v2665 = vunpack.c.h.b16 %v2323
        %v2666 = vunpack.c.l.b16 %v2324
        %v2667 = vunpack.c.l.b16 %v2325
        %v2668 = vunpack.c.h.b16 %v2325
        %v2669 = vunpack.c.l.b16 %v2326
        %v2670 = vunpack.c.l.b16 %v2327
        %v2671 = vunpack.c.h.b16 %v2327
        %v2672 = vunpack.c.l.b16 %v2328
        %v2673 = vunpack.c.l.b16 %v2329
        %v2674 = vunpack.c.h.b16 %v2329
        %v2675 = vunpack.c.l.b16 %v2330
        %v2676 = vunpack.c.l.b16 %v2331
        %v2677 = vunpack.c.h.b16 %v2331
        %v2678 = vunpack.c.l.b16 %v2332
        %v2679 = vunpack.c.l.b16 %v2333
        %v2680 = vunpack.c.h.b16 %v2333
        %v2681 = vunpack.c.l.b16 %v2334
        %v2682 = vunpack.c.l.b16 %v2335
        %v2683 = vunpack.c.h.b16 %v2335
        %v2684 = vunpack.c.l.b16 %v2336
        %v2685 = vunpack.c.l.b16 %v2337
        %v2686 = vunpack.c.h.b16 %v2337
        %v2687 = vunpack.c.l.b16 %v2338
        %v2688 = vunpack.c.l.b16 %v2339
        %v2689 = vunpack.c.h.b16 %v2339
        %v2690 = vunpack.c.l.b16 %v2340
        %v2691 = vunpack.c.l.b16 %v2341
        %v2692 = vunpack.c.h.b16 %v2341
        %v2693 = vunpack.c.l.b16 %v2342
        %v2694 = vunpack.c.l.b16 %v2343
        %v2695 = vunpack.c.h.b16 %v2343
        %v2696 = vunpack.c.l.b16 %v2344
        %v2697 = vunpack.c.l.b16 %v2345
        %v2698 = vunpack.c.h.b16 %v2345
        %v2699 = vunpack.c.l.b16 %v2346
        %v2700 = vunpack.c.l.b16 %v2347
        %v2701 = vunpack.c.h.b16 %v2347
        %v2702 = vunpack.c.l.b16 %v2348
        %v2703 = vunpack.c.l.b16 %v2349
        %v2704 = vunpack.c.h.b16 %v2349
        %v2705 = vunpack.c.l.b16 %v2350
        %v2706 = vunpack.c.l.b16 %v2351
        %v2707 = vunpack.c.h.b16 %v2351
        %v2708 = vunpack.c.l.b16 %v2352
        %v2709 = vunpack.c.l.b16 %v2353
        %v2710 = vunpack.c.h.b16 %v2353
        %v2711 = vunpack.c.l.b16 %v2354
        %v2712 = vunpack.c.l.b16 %v2355
        %v2713 = vunpack.c.h.b16 %v2355
        %v2714 = vunpack.c.l.b16 %v2356
        %v2715 = vunpack.c.l.b16 %v2357
        %v2716 = vunpack.c.h.b16 %v2357
        %v2717 = vunpack.c.l.b16 %v2358
        %v2718 = vunpack.c.l.b16 %v2359
        %v2719 = vunpack.c.h.b16 %v2359
        %v2720 = vunpack.c.l.b16 %v2360
        %v2721 = vunpack.c.l.b16 %v2361
        %v2722 = vunpack.c.h.b16 %v2361
        %v2723 = vunpack.c.l.b16 %v2362
        %v2724 = vunpack.c.l.b16 %v2363
        %v2725 = vunpack.c.h.b16 %v2363
        %v2726 = vunpack.c.l.b16 %v2364
        %v2727 = vunpack.c.l.b16 %v2365
        %v2728 = vunpack.c.h.b16 %v2365
        %v2729 = vunpack.c.l.b16 %v2366
        %v2730 = vunpack.c.l.b16 %v2367
        %v2731 = vunpack.c.h.b16 %v2367
        %v2732 = vunpack.c.l.b16 %v2368
        %v2733 = vunpack.c.l.b16 %v2369
        %v2734 = vunpack.c.h.b16 %v2369
        %v2735 = vunpack.c.l.b16 %v2370
        %v2736 = vunpack.c.l.b16 %v2371
        %v2737 = vunpack.c.h.b16 %v2371
        %v2738 = vunpack.c.l.b16 %v2372
        %v2739 = vunpack.c.l.b16 %v2373
        %v2740 = vunpack.c.h.b16 %v2373
        %v2741 = vunpack.c.l.b16 %v2374
        %v2742 = vunpack.c.l.b16 %v2375
        %v2743 = vunpack.c.h.b16 %v2375
        %v2744 = vunpack.c.l.b16 %v2376
        %v2745 = vunpack.c.l.b16 %v2377
        %v2746 = vunpack.c.h.b16 %v2377
        %v2747 = vunpack.c.l.b16 %v2378
        %v2748 = vunpack.c.l.b16 %v2379
        %v2749 = vunpack.c.h.b16 %v2379
        %v2750 = vunpack.c.l.b16 %v2380
        %v2751 = vunpack.c.l.b16 %v2381
        %v2752 = vunpack.c.h.b16 %v2381
        %v2753 = vunpack.c.l.b16 %v2382
        %v2754 = vunpack.c.l.b16 %v2383
        %v2755 = vunpack.c.h.b16 %v2383
        %v2756 = vunpack.c.l.b16 %v2384
        %v2757 = vunpack.c.l.b16 %v2385
        %v2758 = vunpack.c.h.b16 %v2385
        %v2759 = vunpack.c.l.b16 %v2386
        %v2760 = vunpack.c.l.b16 %v2387
        %v2761 = vunpack.c.h.b16 %v2387
        %v2762 = vunpack.c.l.b16 %v2388
        %v2763 = vunpack.c.l.b16 %v2389
        %v2764 = vunpack.c.h.b16 %v2389
        %v2765 = vunpack.c.l.b16 %v2390
        %v2766 = vunpack.c.l.b16 %v2391
        %v2767 = vunpack.c.h.b16 %v2391
        %v2768 = vunpack.c.l.b16 %v2392
        %v2769 = vunpack.c.l.b16 %v2393
        %v2770 = vunpack.c.h.b16 %v2393
        %v2771 = vunpack.c.l.b16 %v2394
        %v2772 = vunpack.c.l.b16 %v2395
        %v2773 = vunpack.c.h.b16 %v2395
        %v2774 = vunpack.c.l.b16 %v2396
        %v2775 = vunpack.c.l.b16 %v2397
        %v2776 = vunpack.c.h.b16 %v2397
        %v2777 = vunpack.c.l.b16 %v2398
        %v2778 = vunpack.c.l.b16 %v2399
        %v2779 = vunpack.c.h.b16 %v2399
        %v2780 = vunpack.c.l.b16 %v2400
        %v2781 = vunpack.c.l.b16 %v2401
        %v2782 = vunpack.c.h.b16 %v2401
        %v2783 = vunpack.c.l.b16 %v2402
        %v2784 = vunpack.c.l.b16 %v2403
        %v2785 = vunpack.c.h.b16 %v2403
        %v2786 = vunpack.c.l.b16 %v2404
        %v2787 = vunpack.c.l.b16 %v2405
        %v2788 = vunpack.c.h.b16 %v2405
        %v2789 = vunpack.c.l.b16 %v2406
        %v2790 = vunpack.c.l.b16 %v2407
        %v2791 = vunpack.c.h.b16 %v2407
        %v2792 = vunpack.c.l.b16 %v2408
        %v2793 = vunpack.c.l.b16 %v2409
        %v2794 = vunpack.c.h.b16 %v2409
        %v2795 = vunpack.c.l.b16 %v2410
        %v2796 = vunpack.c.l.b16 %v2411
        %v2797 = vunpack.c.h.b16 %v2411
        %v2798 = vunpack.c.l.b16 %v2412
        %v2799 = vunpack.c.l.b16 %v2413
        %v2800 = vunpack.c.h.b16 %v2413
        %v2801 = vunpack.c.l.b16 %v2414
        %v2802 = vunpack.c.l.b16 %v2415
        %v2803 = vunpack.c.h.b16 %v2415
        %v2804 = vunpack.c.l.b16 %v2416
        %v2805 = vunpack.c.l.b16 %v2417
        %v2806 = vunpack.c.h.b16 %v2417
        %v2807 = vunpack.c.l.b16 %v2418
        %v2808 = vunpack.c.l.b16 %v2419
        %v2809 = vunpack.c.h.b16 %v2419
        %v2810 = vunpack.c.l.b16 %v2420
        %v2811 = vunpack.c.l.b16 %v2421
        %v2812 = vunpack.c.h.b16 %v2421
        %v2813 = vunpack.c.l.b16 %v2422
        %v2814 = vunpack.c.l.b16 %v2423
        %v2815 = vunpack.c.h.b16 %v2423
        %v2816 = vunpack.c.l.b16 %v2424
        %v2817 = vunpack.c.l.b16 %v2425
        %v2818 = vunpack.c.h.b16 %v2425
        %v2819 = vunpack.c.l.b16 %v2426
        %v2820 = vunpack.c.l.b16 %v2427
        %v2821 = vunpack.c.h.b16 %v2427
        %v2822 = vunpack.c.l.b16 %v2428
        %v2823 = vunpack.c.l.b16 %v2429
        %v2824 = vunpack.c.h.b16 %v2429
        %v2825 = vunpack.c.l.b16 %v2430
        %v2826 = vunpack.c.l.b16 %v2431
        %v2827 = vunpack.c.h.b16 %v2431
        %v2828 = vunpack.c.l.b16 %v2432
        %v2829 = vunpack.c.l.b16 %v2433
        %v2830 = vunpack.c.h.b16 %v2433
        %v2831 = vunpack.c.l.b16 %v2434
        %v2832 = vunpack.c.l.b16 %v2435
        %v2833 = vunpack.c.h.b16 %v2435
        %v2834 = vunpack.c.l.b16 %v2436
        %v2835 = vunpack.c.l.b16 %v2437
        %v2836 = vunpack.c.h.b16 %v2437
        %v2837 = vunpack.c.l.b16 %v2438
        %v2838 = vunpack.c.l.b16 %v2439
        %v2839 = vunpack.c.h.b16 %v2439
        %v2840 = vunpack.c.l.b16 %v2440
        %v2841 = vunpack.c.l.b16 %v2441
        %v2842 = vunpack.c.h.b16 %v2441
        %v2843 = vunpack.c.l.b16 %v2442
        %v2844 = vunpack.c.l.b16 %v2443
        %v2845 = vunpack.c.h.b16 %v2443
        %v2846 = vunpack.c.l.b16 %v2444
        %v2847 = vunpack.c.l.b16 %v2445
        %v2848 = vunpack.c.h.b16 %v2445
        %v2849 = vunpack.c.l.b16 %v2446
        %v2850 = vunpack.c.l.b16 %v2447
        %v2851 = vunpack.c.h.b16 %v2447
        %v2852 = vunpack.c.l.b16 %v2448
        %v2853 = vunpack.c.l.b16 %v2449
        %v2854 = vunpack.c.h.b16 %v2449
        %v2855 = vunpack.c.l.b16 %v2450
        %v2856 = vunpack.c.l.b16 %v2451
        %v2857 = vunpack.c.h.b16 %v2451
        %v2858 = vunpack.c.l.b16 %v2452
        %v2859 = vunpack.c.l.b16 %v2453
        %v2860 = vunpack.c.h.b16 %v2453
        %v2861 = vunpack.c.l.b16 %v2454
        %v2862 = vunpack.c.l.b16 %v2455
        %v2863 = vunpack.c.h.b16 %v2455
        %v2864 = vunpack.c.l.b16 %v2456
        %v2865 = vunpack.c.l.b16 %v2457
        %v2866 = vunpack.c.h.b16 %v2457
        %v2867 = vunpack.c.l.b16 %v2458
        %v2868 = vunpack.c.l.b16 %v2459
        %v2869 = vunpack.c.h.b16 %v2459
        %v2870 = vunpack.c.l.b16 %v2460
        %v2871 = vunpack.c.l.b16 %v2461
        %v2872 = vunpack.c.h.b16 %v2461
        %v2873 = vunpack.c.l.b16 %v2462
        %v2874 = vunpack.c.l.b16 %v2463
        %v2875 = vunpack.c.h.b16 %v2463
        %v2876 = vunpack.c.l.b16 %v2464
        %v2877 = vunpack.c.l.b16 %v2465
        %v2878 = vunpack.c.h.b16 %v2465
        %v2879 = vunpack.c.l.b16 %v2466
        %v2880 = vunpack.c.l.b16 %v2467
        %v2881 = vunpack.c.h.b16 %v2467
        %v2882 = vunpack.c.l.b16 %v2468
        %v2883 = vunpack.c.l.b16 %v2469
        %v2884 = vunpack.c.h.b16 %v2469
        %v2885 = vunpack.c.l.b16 %v2470
        %v2886 = vunpack.c.l.b16 %v2471
        %v2887 = vunpack.c.h.b16 %v2471
        %v2888 = vunpack.c.l.b16 %v2472
        %v2889 = vunpack.c.l.b16 %v2473
        %v2890 = vunpack.c.h.b16 %v2473
        %v2891 = vunpack.c.l.b16 %v2474
        %v2892 = vunpack.c.l.b16 %v2475
        %v2893 = vunpack.c.h.b16 %v2475
        %v2894 = vunpack.c.l.b16 %v2476
        %v2895 = vpack.c.b16 %v2658, %v2655
        %v2896 = vpack.c.b16 %v2659, %v2656
        %v2897 = vpack.c.b16 %v2660, %v2657
        %v2898 = vpack.c.b16 %v2664, %v2661
        %v2899 = vpack.c.b16 %v2665, %v2662
        %v2900 = vpack.c.b16 %v2666, %v2663
        %v2901 = vpack.c.b16 %v2670, %v2667
        %v2902 = vpack.c.b16 %v2671, %v2668
        %v2903 = vpack.c.b16 %v2672, %v2669
        %v2904 = vpack.c.b16 %v2676, %v2673
        %v2905 = vpack.c.b16 %v2677, %v2674
        %v2906 = vpack.c.b16 %v2678, %v2675
        %v2907 = vpack.c.b16 %v2682, %v2679
        %v2908 = vpack.c.b16 %v2683, %v2680
        %v2909 = vpack.c.b16 %v2684, %v2681
        %v2910 = vpack.c.b16 %v2688, %v2685
        %v2911 = vpack.c.b16 %v2689, %v2686
        %v2912 = vpack.c.b16 %v2690, %v2687
        %v2913 = vpack.c.b16 %v2694, %v2691
        %v2914 = vpack.c.b16 %v2695, %v2692
        %v2915 = vpack.c.b16 %v2696, %v2693
        %v2916 = vpack.c.b16 %v2700, %v2697
        %v2917 = vpack.c.b16 %v2701, %v2698
        %v2918 = vpack.c.b16 %v2702, %v2699
        %v2919 = vpack.c.b16 %v2706, %v2703
        %v2920 = vpack.c.b16 %v2707, %v2704
        %v2921 = vpack.c.b16 %v2708, %v2705
        %v2922 = vpack.c.b16 %v2712, %v2709
        %v2923 = vpack.c.b16 %v2713, %v2710
        %v2924 = vpack.c.b16 %v2714, %v2711
        %v2925 = vpack.c.b16 %v2718, %v2715
        %v2926 = vpack.c.b16 %v2719, %v2716
        %v2927 = vpack.c.b16 %v2720, %v2717
        %v2928 = vpack.c.b16 %v2724, %v2721
        %v2929 = vpack.c.b16 %v2725, %v2722
        %v2930 = vpack.c.b16 %v2726, %v2723
        %v2931 = vpack.c.b16 %v2730, %v2727
        %v2932 = vpack.c.b16 %v2731, %v2728
        %v2933 = vpack.c.b16 %v2732, %v2729
        %v2934 = vpack.c.b16 %v2736, %v2733
        %v2935 = vpack.c.b16 %v2737, %v2734
        %v2936 = vpack.c.b16 %v2738, %v2735
        %v2937 = vpack.c.b16 %v2742, %v2739
        %v2938 = vpack.c.b16 %v2743, %v2740
        %v2939 = vpack.c.b16 %v2744, %v2741
        %v2940 = vpack.c.b16 %v2748, %v2745
        %v2941 = vpack.c.b16 %v2749, %v2746
        %v2942 = vpack.c.b16 %v2750, %v2747
        %v2943 = vpack.c.b16 %v2754, %v2751
        %v2944 = vpack.c.b16 %v2755, %v2752
        %v2945 = vpack.c.b16 %v2756, %v2753
        %v2946 = vpack.c.b16 %v2760, %v2757
        %v2947 = vpack.c.b16 %v2761, %v2758
        %v2948 = vpack.c.b16 %v2762, %v2759
        %v2949 = vpack.c.b16 %v2766, %v2763
        %v2950 = vpack.c.b16 %v2767, %v2764
        %v2951 = vpack.c.b16 %v2768, %v2765
        %v2952 = vpack.c.b16 %v2772, %v2769
        %v2953 = vpack.c.b16 %v2773, %v2770
        %v2954 = vpack.c.b16 %v2774, %v2771
        %v2955 = vpack.c.b16 %v2778, %v2775
        %v2956 = vpack.c.b16 %v2779, %v2776
        %v2957 = vpack.c.b16 %v2780, %v2777
        %v2958 = vpack.c.b16 %v2784, %v2781
        %v2959 = vpack.c.b16 %v2785, %v2782
        %v2960 = vpack.c.b16 %v2786, %v2783
        %v2961 = vpack.c.b16 %v2790, %v2787
        %v2962 = vpack.c.b16 %v2791, %v2788
        %v2963 = vpack.c.b16 %v2792, %v2789
        %v2964 = vpack.c.b16 %v2796, %v2793
        %v2965 = vpack.c.b16 %v2797, %v2794
        %v2966 = vpack.c.b16 %v2798, %v2795
        %v2967 = vpack.c.b16 %v2802, %v2799
        %v2968 = vpack.c.b16 %v2803, %v2800
        %v2969 = vpack.c.b16 %v2804, %v2801
        %v2970 = vpack.c.b16 %v2808, %v2805
        %v2971 = vpack.c.b16 %v2809, %v2806
        %v2972 = vpack.c.b16 %v2810, %v2807
        %v2973 = vpack.c.b16 %v2814, %v2811
        %v2974 = vpack.c.b16 %v2815, %v2812
        %v2975 = vpack.c.b16 %v2816, %v2813
        %v2976 = vpack.c.b16 %v2820, %v2817
        %v2977 = vpack.c.b16 %v2821, %v2818
        %v2978 = vpack.c.b16 %v2822, %v2819
        %v2979 = vpack.c.b16 %v2826, %v2823
        %v2980 = vpack.c.b16 %v2827, %v2824
        %v2981 = vpack.c.b16 %v2828, %v2825
        %v2982 = vpack.c.b16 %v2832, %v2829
        %v2983 = vpack.c.b16 %v2833, %v2830
        %v2984 = vpack.c.b16 %v2834, %v2831
        %v2985 = vpack.c.b16 %v2838, %v2835
        %v2986 = vpack.c.b16 %v2839, %v2836
        %v2987 = vpack.c.b16 %v2840, %v2837
        %v2988 = vpack.c.b16 %v2844, %v2841
        %v2989 = vpack.c.b16 %v2845, %v2842
        %v2990 = vpack.c.b16 %v2846, %v2843
        %v2991 = vpack.c.b16 %v2850, %v2847
        %v2992 = vpack.c.b16 %v2851, %v2848
        %v2993 = vpack.c.b16 %v2852, %v2849
        %v2994 = vpack.c.b16 %v2856, %v2853
        %v2995 = vpack.c.b16 %v2857, %v2854
        %v2996 = vpack.c.b16 %v2858, %v2855
        %v2997 = vpack.c.b16 %v2862, %v2859
        %v2998 = vpack.c.b16 %v2863, %v2860
        %v2999 = vpack.c.b16 %v2864, %v2861
        %v3000 = vpack.c.b16 %v2868, %v2865
        %v3001 = vpack.c.b16 %v2869, %v2866
        %v3002 = vpack.c.b16 %v2870, %v2867
        %v3003 = vpack.c.b16 %v2874, %v2871
        %v3004 = vpack.c.b16 %v2875, %v2872
        %v3005 = vpack.c.b16 %v2876, %v2873
        %v3006 = vpack.c.b16 %v2880, %v2877
        %v3007 = vpack.c.b16 %v2881, %v2878
        %v3008 = vpack.c.b16 %v2882, %v2879
        %v3009 = vpack.c.b16 %v2886, %v2883
        %v3010 = vpack.c.b16 %v2887, %v2884
        %v3011 = vpack.c.b16 %v2888, %v2885
        %v3012 = vpack.c.b16 %v2892, %v2889
        %v3013 = vpack.c.b16 %v2893, %v2890
        %v3014 = vpack.c.b16 %v2894, %v2891
        %3135 = vmatprep.subr.bf16.mxu0 %v2917
        %3136 = vmatpush1.bf16.msra.mxu0 %v2916
        %3137 = vmatprep.subr.bf16.mxu0 %v2914
        %3138 = vmatpush1.bf16.msra.mxu0 %v2913
        %3139 = vmatprep.subr.bf16.mxu0 %v2911
        %3140 = vmatpush1.bf16.msra.mxu0 %v2910
        %3141 = vmatprep.subr.bf16.mxu0 %v2908
        %3142 = vmatpush1.bf16.msra.mxu0 %v2907
        %3143 = vmatprep.subr.bf16.mxu0 %v2905
        %3144 = vmatpush1.bf16.msra.mxu0 %v2904
        %3145 = vmatprep.subr.bf16.mxu0 %v2902
        %3146 = vmatpush1.bf16.msra.mxu0 %v2901
        %3147 = vmatprep.subr.bf16.mxu0 %v2899
        %3148 = vmatpush1.bf16.msra.mxu0 %v2898
        %3149 = vmatprep.subr.bf16.mxu0 %v2896
        %3150 = vmatpush1.bf16.msra.mxu0 %v2895
        %3151 = vmatprep.subr.bf16.mxu0 %v2941
        %3152 = vmatpush2.bf16.msra.mxu0 %v2940
        %3153 = vmatprep.subr.bf16.mxu0 %v2938
        %3154 = vmatpush2.bf16.msra.mxu0 %v2937
        %3155 = vmatprep.subr.bf16.mxu0 %v2935
        %3156 = vmatpush2.bf16.msra.mxu0 %v2934
        %3157 = vmatprep.subr.bf16.mxu0 %v2932
        %3158 = vmatpush2.bf16.msra.mxu0 %v2931
        %3159 = vmatprep.subr.bf16.mxu0 %v2929
        %3160 = vmatpush2.bf16.msra.mxu0 %v2928
        %3161 = vmatprep.subr.bf16.mxu0 %v2926
        %3162 = vmatpush2.bf16.msra.mxu0 %v2925
        %3163 = vmatprep.subr.bf16.mxu0 %v2923
        %3164 = vmatpush2.bf16.msra.mxu0 %v2922
        %3165 = vmatprep.subr.bf16.mxu0 %v2920
        %3166 = vmatpush2.bf16.msra.mxu0 %v2919
        %3167 = vmatprep.mubr.bf16.mxu0 %v2308
        %3168 = vmatmul.mubr.bf16.gmra.mxu0 %v2307
        %v3169 = vpop.f32.mrf.mxu0
        %v3170 = vadd.f32 %v2483, %v3169
        %v3171 = vpop.f32.mrf.mxu0
        %v3172 = vadd.f32 %v2487, %v3171
        %v3173 = vpop.f32.mrf.mxu0
        %v3174 = vadd.f32 %v2483, %v3173
        %v3175 = vpop.f32.mrf.mxu0
        %v3176 = vadd.f32 %v2487, %v3175
        %3177 = vmatprep.mubr.bf16.mxu0 %v2313
        %3178 = vmatmul.mubr.bf16.gmra.mxu0 %v2312
        %v3179 = vpop.f32.mrf.mxu0
        %v3180 = vadd.f32 %v2483, %v3179
        %v3181 = vpop.f32.mrf.mxu0
        %v3182 = vadd.f32 %v2487, %v3181
        %v3183 = vpop.f32.mrf.mxu0
        %v3184 = vadd.f32 %v2483, %v3183
        %v3185 = vpop.f32.mrf.mxu0
        %v3186 = vadd.f32 %v2487, %v3185
        %3187 = vdwg.mxu0
        %3188 = vmatprep.subr.bf16.mxu0 %v2965
        %3189 = vmatpush1.bf16.msra.mxu0 %v2964
        %3190 = vmatprep.subr.bf16.mxu0 %v2962
        %3191 = vmatpush1.bf16.msra.mxu0 %v2961
        %3192 = vmatprep.subr.bf16.mxu0 %v2959
        %3193 = vmatpush1.bf16.msra.mxu0 %v2958
        %3194 = vmatprep.subr.bf16.mxu0 %v2956
        %3195 = vmatpush1.bf16.msra.mxu0 %v2955
        %3196 = vmatprep.subr.bf16.mxu0 %v2953
        %3197 = vmatpush1.bf16.msra.mxu0 %v2952
        %3198 = vmatprep.subr.bf16.mxu0 %v2950
        %3199 = vmatpush1.bf16.msra.mxu0 %v2949
        %3200 = vmatprep.subr.bf16.mxu0 %v2947
        %3201 = vmatpush1.bf16.msra.mxu0 %v2946
        %3202 = vmatprep.subr.bf16.mxu0 %v2944
        %3203 = vmatpush1.bf16.msra.mxu0 %v2943
        %3204 = vmatprep.subr.bf16.mxu0 %v2989
        %3205 = vmatpush2.bf16.msra.mxu0 %v2988
        %3206 = vmatprep.subr.bf16.mxu0 %v2986
        %3207 = vmatpush2.bf16.msra.mxu0 %v2985
        %3208 = vmatprep.subr.bf16.mxu0 %v2983
        %3209 = vmatpush2.bf16.msra.mxu0 %v2982
        %3210 = vmatprep.subr.bf16.mxu0 %v2980
        %3211 = vmatpush2.bf16.msra.mxu0 %v2979
        %3212 = vmatprep.subr.bf16.mxu0 %v2977
        %3213 = vmatpush2.bf16.msra.mxu0 %v2976
        %3214 = vmatprep.subr.bf16.mxu0 %v2974
        %3215 = vmatpush2.bf16.msra.mxu0 %v2973
        %3216 = vmatprep.subr.bf16.mxu0 %v2971
        %3217 = vmatpush2.bf16.msra.mxu0 %v2970
        %3218 = vmatprep.subr.bf16.mxu0 %v2968
        %3219 = vmatpush2.bf16.msra.mxu0 %v2967
        %3220 = vmatprep.mubr.bf16.mxu0 %v2310
        %3221 = vmatmul.mubr.bf16.gmra.mxu0 %v2309
        %v3222 = vpop.f32.mrf.mxu0
        %v3223 = vadd.f32 %v3170, %v3222
        %v3224 = vpop.f32.mrf.mxu0
        %v3225 = vadd.f32 %v3172, %v3224
        %v3226 = vpop.f32.mrf.mxu0
        %v3227 = vadd.f32 %v3174, %v3226
        %v3228 = vpop.f32.mrf.mxu0
        %v3229 = vadd.f32 %v3176, %v3228
        %3230 = vmatprep.mubr.bf16.mxu0 %v2315
        %3231 = vmatmul.mubr.bf16.gmra.mxu0 %v2314
        %v3232 = vpop.f32.mrf.mxu0
        %v3233 = vadd.f32 %v3180, %v3232
        %v3234 = vpop.f32.mrf.mxu0
        %v3235 = vadd.f32 %v3182, %v3234
        %v3236 = vpop.f32.mrf.mxu0
        %v3237 = vadd.f32 %v3184, %v3236
        %v3238 = vpop.f32.mrf.mxu0
        %v3239 = vadd.f32 %v3186, %v3238
        %3240 = vdwg.mxu0
        %3241 = vmatprep.subr.bf16.mxu0 %v3013
        %3242 = vmatpush1.bf16.msra.mxu0 %v3012
        %3243 = vmatprep.subr.bf16.mxu0 %v3010
        %3244 = vmatpush1.bf16.msra.mxu0 %v3009
        %3245 = vmatprep.subr.bf16.mxu0 %v3007
        %3246 = vmatpush1.bf16.msra.mxu0 %v3006
        %3247 = vmatprep.subr.bf16.mxu0 %v3004
        %3248 = vmatpush1.bf16.msra.mxu0 %v3003
        %3249 = vmatprep.subr.bf16.mxu0 %v3001
        %3250 = vmatpush1.bf16.msra.mxu0 %v3000
        %3251 = vmatprep.subr.bf16.mxu0 %v2998
        %3252 = vmatpush1.bf16.msra.mxu0 %v2997
        %3253 = vmatprep.subr.bf16.mxu0 %v2995
        %3254 = vmatpush1.bf16.msra.mxu0 %v2994
        %3255 = vmatprep.subr.bf16.mxu0 %v2992
        %3256 = vmatpush1.bf16.msra.mxu0 %v2991
        %3257 = vmatprep.subr.bf16.mxu0 0
        %3258 = vmatpush2.bf16.msra.mxu0 0
        %3259 = vmatprep.subr.bf16.mxu0 0
        %3260 = vmatpush2.bf16.msra.mxu0 0
        %3261 = vmatprep.subr.bf16.mxu0 0
        %3262 = vmatpush2.bf16.msra.mxu0 0
        %3263 = vmatprep.subr.bf16.mxu0 0
        %3264 = vmatpush2.bf16.msra.mxu0 0
        %3265 = vmatprep.subr.bf16.mxu0 0
        %3266 = vmatpush2.bf16.msra.mxu0 0
        %3267 = vmatprep.subr.bf16.mxu0 0
        %3268 = vmatpush2.bf16.msra.mxu0 0
        %3269 = vmatprep.subr.bf16.mxu0 0
        %3270 = vmatpush2.bf16.msra.mxu0 0
        %3271 = vmatprep.subr.bf16.mxu0 0
        %3272 = vmatpush2.bf16.msra.mxu0 0
        %3273 = vmatprep.mubr.bf16.mxu0 0
        %3274 = vmatmul.mubr.bf16.gmra.mxu0 %v2311
        %v3275 = vpop.f32.mrf.mxu0
        %v3276 = vadd.f32 %v3223, %v3275
        %v3277 = vpop.f32.mrf.mxu0
        %v3278 = vadd.f32 %v3225, %v3277
        %v3279 = vpop.f32.mrf.mxu0
        %v3280 = vadd.f32 %v3227, %v3279
        %v3281 = vpop.f32.mrf.mxu0
        %v3282 = vadd.f32 %v3229, %v3281
        %3283 = vmatprep.mubr.bf16.mxu0 0
        %3284 = vmatmul.mubr.bf16.gmra.mxu0 %v2316
        %v3285 = vpop.f32.mrf.mxu0
        %v3286 = vadd.f32 %v3233, %v3285
        %v3287 = vpop.f32.mrf.mxu0
        %v3288 = vadd.f32 %v3235, %v3287
        %v3289 = vpop.f32.mrf.mxu0
        %v3290 = vadd.f32 %v3237, %v3289
        %v3291 = vpop.f32.mrf.mxu0
        %v3292 = vadd.f32 %v3239, %v3291
        %3293 = vdwg.mxu0
        %3294 = vmatprep.subr.bf16.mxu0 0
        %3295 = vmatpush1.bf16.msra.mxu0 %v2918
        %3296 = vmatprep.subr.bf16.mxu0 0
        %3297 = vmatpush1.bf16.msra.mxu0 %v2915
        %3298 = vmatprep.subr.bf16.mxu0 0
        %3299 = vmatpush1.bf16.msra.mxu0 %v2912
        %3300 = vmatprep.subr.bf16.mxu0 0
        %3301 = vmatpush1.bf16.msra.mxu0 %v2909
        %3302 = vmatprep.subr.bf16.mxu0 0
        %3303 = vmatpush1.bf16.msra.mxu0 %v2906
        %3304 = vmatprep.subr.bf16.mxu0 0
        %3305 = vmatpush1.bf16.msra.mxu0 %v2903
        %3306 = vmatprep.subr.bf16.mxu0 0
        %3307 = vmatpush1.bf16.msra.mxu0 %v2900
        %3308 = vmatprep.subr.bf16.mxu0 0
        %3309 = vmatpush1.bf16.msra.mxu0 %v2897
        %3310 = vmatprep.subr.bf16.mxu0 0
        %3311 = vmatpush2.bf16.msra.mxu0 %v2942
        %3312 = vmatprep.subr.bf16.mxu0 0
        %3313 = vmatpush2.bf16.msra.mxu0 %v2939
        %3314 = vmatprep.subr.bf16.mxu0 0
        %3315 = vmatpush2.bf16.msra.mxu0 %v2936
        %3316 = vmatprep.subr.bf16.mxu0 0
        %3317 = vmatpush2.bf16.msra.mxu0 %v2933
        %3318 = vmatprep.subr.bf16.mxu0 0
        %3319 = vmatpush2.bf16.msra.mxu0 %v2930
        %3320 = vmatprep.subr.bf16.mxu0 0
        %3321 = vmatpush2.bf16.msra.mxu0 %v2927
        %3322 = vmatprep.subr.bf16.mxu0 0
        %3323 = vmatpush2.bf16.msra.mxu0 %v2924
        %3324 = vmatprep.subr.bf16.mxu0 0
        %3325 = vmatpush2.bf16.msra.mxu0 %v2921
        %3326 = vmatprep.mubr.bf16.mxu0 %v2308
        %3327 = vmatmul.mubr.bf16.gmra.mxu0 %v2307
        %v3328 = vpop.f32.mrf.mxu0
        %v3329 = vadd.f32 %v2491, %v3328
        %v3330 = vpop.f32.mrf.mxu0
        %v3331 = vpop.f32.mrf.mxu0
        %v3332 = vadd.f32 %v2491, %v3331
        %v3333 = vpop.f32.mrf.mxu0
        %3334 = vmatprep.mubr.bf16.mxu0 %v2313
        %3335 = vmatmul.mubr.bf16.gmra.mxu0 %v2312
        %v3336 = vpop.f32.mrf.mxu0
        %v3337 = vadd.f32 %v2491, %v3336
        %v3338 = vpop.f32.mrf.mxu0
        %v3339 = vpop.f32.mrf.mxu0
        %v3340 = vadd.f32 %v2491, %v3339
        %v3341 = vpop.f32.mrf.mxu0
        %3342 = vdwg.mxu0
        %3343 = vmatprep.subr.bf16.mxu0 0
        %3344 = vmatpush1.bf16.msra.mxu0 %v2966
        %3345 = vmatprep.subr.bf16.mxu0 0
        %3346 = vmatpush1.bf16.msra.mxu0 %v2963
        %3347 = vmatprep.subr.bf16.mxu0 0
        %3348 = vmatpush1.bf16.msra.mxu0 %v2960
        %3349 = vmatprep.subr.bf16.mxu0 0
        %3350 = vmatpush1.bf16.msra.mxu0 %v2957
        %3351 = vmatprep.subr.bf16.mxu0 0
        %3352 = vmatpush1.bf16.msra.mxu0 %v2954
        %3353 = vmatprep.subr.bf16.mxu0 0
        %3354 = vmatpush1.bf16.msra.mxu0 %v2951
        %3355 = vmatprep.subr.bf16.mxu0 0
        %3356 = vmatpush1.bf16.msra.mxu0 %v2948
        %3357 = vmatprep.subr.bf16.mxu0 0
        %3358 = vmatpush1.bf16.msra.mxu0 %v2945
        %3359 = vmatprep.subr.bf16.mxu0 0
        %3360 = vmatpush2.bf16.msra.mxu0 %v2990
        %3361 = vmatprep.subr.bf16.mxu0 0
        %3362 = vmatpush2.bf16.msra.mxu0 %v2987
        %3363 = vmatprep.subr.bf16.mxu0 0
        %3364 = vmatpush2.bf16.msra.mxu0 %v2984
        %3365 = vmatprep.subr.bf16.mxu0 0
        %3366 = vmatpush2.bf16.msra.mxu0 %v2981
        %3367 = vmatprep.subr.bf16.mxu0 0
        %3368 = vmatpush2.bf16.msra.mxu0 %v2978
        %3369 = vmatprep.subr.bf16.mxu0 0
        %3370 = vmatpush2.bf16.msra.mxu0 %v2975
        %3371 = vmatprep.subr.bf16.mxu0 0
        %3372 = vmatpush2.bf16.msra.mxu0 %v2972
        %3373 = vmatprep.subr.bf16.mxu0 0
        %3374 = vmatpush2.bf16.msra.mxu0 %v2969
        %3375 = vmatprep.mubr.bf16.mxu0 %v2310
        %3376 = vmatmul.mubr.bf16.gmra.mxu0 %v2309
        %v3377 = vpop.f32.mrf.mxu0
        %v3378 = vadd.f32 %v3329, %v3377
        %v3379 = vpop.f32.mrf.mxu0
        %v3380 = vpop.f32.mrf.mxu0
        %v3381 = vadd.f32 %v3332, %v3380
        %v3382 = vpop.f32.mrf.mxu0
        %3383 = vmatprep.mubr.bf16.mxu0 %v2315
        %3384 = vmatmul.mubr.bf16.gmra.mxu0 %v2314
        %v3385 = vpop.f32.mrf.mxu0
        %v3386 = vadd.f32 %v3337, %v3385
        %v3387 = vpop.f32.mrf.mxu0
        %v3388 = vpop.f32.mrf.mxu0
        %v3389 = vadd.f32 %v3340, %v3388
        %v3390 = vpop.f32.mrf.mxu0
        %3391 = vdwg.mxu0
        %3392 = vmatprep.subr.bf16.mxu0 0
        %3393 = vmatpush1.bf16.msra.mxu0 %v3014
        %3394 = vmatprep.subr.bf16.mxu0 0
        %3395 = vmatpush1.bf16.msra.mxu0 %v3011
        %3396 = vmatprep.subr.bf16.mxu0 0
        %3397 = vmatpush1.bf16.msra.mxu0 %v3008
        %3398 = vmatprep.subr.bf16.mxu0 0
        %3399 = vmatpush1.bf16.msra.mxu0 %v3005
        %3400 = vmatprep.subr.bf16.mxu0 0
        %3401 = vmatpush1.bf16.msra.mxu0 %v3002
        %3402 = vmatprep.subr.bf16.mxu0 0
        %3403 = vmatpush1.bf16.msra.mxu0 %v2999
        %3404 = vmatprep.subr.bf16.mxu0 0
        %3405 = vmatpush1.bf16.msra.mxu0 %v2996
        %3406 = vmatprep.subr.bf16.mxu0 0
        %3407 = vmatpush1.bf16.msra.mxu0 %v2993
        %3408 = vmatprep.subr.bf16.mxu0 0
        %3409 = vmatpush2.bf16.msra.mxu0 0
        %3410 = vmatprep.subr.bf16.mxu0 0
        %3411 = vmatpush2.bf16.msra.mxu0 0
        %3412 = vmatprep.subr.bf16.mxu0 0
        %3413 = vmatpush2.bf16.msra.mxu0 0
        %3414 = vmatprep.subr.bf16.mxu0 0
        %3415 = vmatpush2.bf16.msra.mxu0 0
        %3416 = vmatprep.subr.bf16.mxu0 0
        %3417 = vmatpush2.bf16.msra.mxu0 0
        %3418 = vmatprep.subr.bf16.mxu0 0
        %3419 = vmatpush2.bf16.msra.mxu0 0
        %3420 = vmatprep.subr.bf16.mxu0 0
        %3421 = vmatpush2.bf16.msra.mxu0 0
        %3422 = vmatprep.subr.bf16.mxu0 0
        %3423 = vmatpush2.bf16.msra.mxu0 0
        %3424 = vmatprep.mubr.bf16.mxu0 0
        %3425 = vmatmul.mubr.bf16.gmra.mxu0 %v2311
        %v3426 = vpop.f32.mrf.mxu0
        %v3427 = vadd.f32 %v3378, %v3426
        %v3428 = vpop.f32.mrf.mxu0
        %v3429 = vpop.f32.mrf.mxu0
        %v3430 = vadd.f32 %v3381, %v3429
        %v3431 = vpop.f32.mrf.mxu0
        %3432 = vmatprep.mubr.bf16.mxu0 0
        %3433 = vmatmul.mubr.bf16.gmra.mxu0 %v2316
        %v3434 = vpop.f32.mrf.mxu0
        %v3435 = vadd.f32 %v3386, %v3434
        %v3436 = vpop.f32.mrf.mxu0
        %v3437 = vpop.f32.mrf.mxu0
        %v3438 = vadd.f32 %v3389, %v3437
        %v3439 = vpop.f32.mrf.mxu0
        %3440 = vdwg.mxu0
        %v3441 = vmin.f32 %v3276, 20.0
        %v3442 = vmin.f32 %v3280, 20.0
        %v3443 = vmin.f32 %v3286, 20.0
        %v3444 = vmin.f32 %v3290, 20.0
        %v3445 = vmul.f32 %v3441, 1.442695
        %v3446 = vpow.pop %v3445
        %v3447 = vmul.f32 %v3442, 1.442695
        %v3448 = vpow.pop %v3447
        %v3449 = vmul.f32 %v3443, 1.442695
        %v3450 = vpow.pop %v3449
        %v3451 = vmul.f32 %v3444, 1.442695
        %v3452 = vpow.pop %v3451
        %v3453 = vadd.f32 %v3446, 2.0
        %v3454 = vadd.f32 %v3448, 2.0
        %v3455 = vadd.f32 %v3450, 2.0
        %v3456 = vadd.f32 %v3452, 2.0
        %v3457 = vmul.f32 %v3446, %v3453
        %v3458 = vmul.f32 %v3448, %v3454
        %v3459 = vmul.f32 %v3450, %v3455
        %v3460 = vmul.f32 %v3452, %v3456
        %v3461 = vmul.f32 %v3276, %v3457
        %v3462 = vmul.f32 %v3280, %v3458
        %v3463 = vmul.f32 %v3286, %v3459
        %v3464 = vmul.f32 %v3290, %v3460
        %v3465 = vadd.f32 %v3457, 2.0
        %v3466 = vadd.f32 %v3458, 2.0
        %v3467 = vadd.f32 %v3459, 2.0
        %v3468 = vadd.f32 %v3460, 2.0
        %v3469 = vrcp.pop %v3465
        %v3470 = vrcp.pop %v3466
        %v3471 = vrcp.pop %v3467
        %v3472 = vrcp.pop %v3468
        %v3473 = vmul.f32 %v3461, %v3469
        %v3474 = vmul.f32 %v3462, %v3470
        %v3475 = vmul.f32 %v3463, %v3471
        %v3476 = vmul.f32 %v3464, %v3472
        %v3477 = vmin.f32 %v3278, 20.0
        %v3478 = vmin.f32 %v3282, 20.0
        %v3479 = vmin.f32 %v3288, 20.0
        %v3480 = vmin.f32 %v3292, 20.0
        %v3481 = vmul.f32 %v3477, 1.442695
        %v3482 = vpow.pop %v3481
        %v3483 = vmul.f32 %v3478, 1.442695
        %v3484 = vpow.pop %v3483
        %v3485 = vmul.f32 %v3479, 1.442695
        %v3486 = vpow.pop %v3485
        %v3487 = vmul.f32 %v3480, 1.442695
        %v3488 = vpow.pop %v3487
        %v3489 = vadd.f32 %v3482, 2.0
        %v3490 = vadd.f32 %v3484, 2.0
        %v3491 = vadd.f32 %v3486, 2.0
        %v3492 = vadd.f32 %v3488, 2.0
        %v3493 = vmul.f32 %v3482, %v3489
        %v3494 = vmul.f32 %v3484, %v3490
        %v3495 = vmul.f32 %v3486, %v3491
        %v3496 = vmul.f32 %v3488, %v3492
        %v3497 = vmul.f32 %v3278, %v3493
        %v3498 = vmul.f32 %v3282, %v3494
        %v3499 = vmul.f32 %v3288, %v3495
        %v3500 = vmul.f32 %v3292, %v3496
        %v3501 = vadd.f32 %v3493, 2.0
        %v3502 = vadd.f32 %v3494, 2.0
        %v3503 = vadd.f32 %v3495, 2.0
        %v3504 = vadd.f32 %v3496, 2.0
        %v3505 = vrcp.pop %v3501
        %v3506 = vrcp.pop %v3502
        %v3507 = vrcp.pop %v3503
        %v3508 = vrcp.pop %v3504
        %v3509 = vmul.f32 %v3497, %v3505
        %v3510 = vmul.f32 %v3498, %v3506
        %v3511 = vmul.f32 %v3499, %v3507
        %v3512 = vmul.f32 %v3500, %v3508
        %v3513 = vadd.f32 %v3473, %v3509
        %v3514 = vadd.f32 %v3474, %v3510
        %v3515 = vadd.f32 %v3475, %v3511
        %v3516 = vadd.f32 %v3476, %v3512
        %v3517 = vmin.f32 %v3427, 20.0
        %v3518 = vmin.f32 %v3430, 20.0
        %v3519 = vmin.f32 %v3435, 20.0
        %v3520 = vmin.f32 %v3438, 20.0
        %v3521 = vmul.f32 %v3517, 1.442695
        %v3522 = vpow.pop %v3521
        %v3523 = vmul.f32 %v3518, 1.442695
        %v3524 = vpow.pop %v3523
        %v3525 = vmul.f32 %v3519, 1.442695
        %v3526 = vpow.pop %v3525
        %v3527 = vmul.f32 %v3520, 1.442695
        %v3528 = vpow.pop %v3527
        %v3529 = vadd.f32 %v3522, 2.0
        %v3530 = vadd.f32 %v3524, 2.0
        %v3531 = vadd.f32 %v3526, 2.0
        %v3532 = vadd.f32 %v3528, 2.0
        %v3533 = vmul.f32 %v3522, %v3529
        %v3534 = vmul.f32 %v3524, %v3530
        %v3535 = vmul.f32 %v3526, %v3531
        %v3536 = vmul.f32 %v3528, %v3532
        %v3537 = vmul.f32 %v3427, %v3533
        %v3538 = vmul.f32 %v3430, %v3534
        %v3539 = vmul.f32 %v3435, %v3535
        %v3540 = vmul.f32 %v3438, %v3536
        %v3541 = vadd.f32 %v3533, 2.0
        %v3542 = vadd.f32 %v3534, 2.0
        %v3543 = vadd.f32 %v3535, 2.0
        %v3544 = vadd.f32 %v3536, 2.0
        %v3545 = vrcp.pop %v3541
        %v3546 = vrcp.pop %v3542
        %v3547 = vrcp.pop %v3543
        %v3548 = vrcp.pop %v3544
        %v3549 = vmul.f32 %v3537, %v3545
        %v3550 = vmul.f32 %v3538, %v3546
        %v3551 = vmul.f32 %v3539, %v3547
        %v3552 = vmul.f32 %v3540, %v3548
        %v3553 = vadd.f32 %v3513, %v3549
        %v3554 = vadd.f32 %v3514, %v3550
        %v3555 = vadd.f32 %v3515, %v3551
        %v3556 = vadd.f32 %v3516, %v3552
        %3557 = vst [vmem:[#allocation2 + $0x8] sm:$0xff] %v3553
        %3558 = vst [vmem:[#allocation2 + $0x10] sm:$0xff] %v3554
        %3559 = vst [vmem:[#allocation2 + $0x28] sm:$0xff] %v3555
        %3560 = vst [vmem:[#allocation2 + $0x30] sm:$0xff] %v3556
        %v3561 = vld [vmem:[#allocation2] sm:$0xff]
        %v3562 = vld [vmem:[#allocation2 + $0x8] sm:$0xff]
        %v3563 = vld [vmem:[#allocation2 + $0x10] sm:$0xff]
        %v3564 = vld [vmem:[#allocation2 + $0x18] sm:$0xff]
        %v3565 = vld [vmem:[#allocation2 + $0x20] sm:$0xff]
        %v3566 = vld [vmem:[#allocation2 + $0x28] sm:$0xff]
        %v3567 = vld [vmem:[#allocation2 + $0x30] sm:$0xff]
        %v3568 = vld [vmem:[#allocation2 + $0x38] sm:$0xff]
        %v3575 = vrot.slane %v3561, 6
        %v3576 = vrot.slane %v3562, 6
        %v3577 = vsel %vm535, %v3575, %v3576
        %v3578 = vrot.slane %v3563, 6
        %v3579 = vsel %vm535, %v3576, %v3578
        %v3580 = vrot.slane %v3565, 6
        %v3581 = vrot.slane %v3566, 6
        %v3582 = vsel %vm535, %v3580, %v3581
        %v3583 = vrot.slane %v3567, 6
        %v3584 = vsel %vm535, %v3581, %v3583
        %v3591 = vrot.slane %v3562, 2
        %v3592 = vrot.slane %v3563, 2
        %v3593 = vsel %vm582, %v3591, %v3592
        %v3594 = vrot.slane %v3564, 2
        %v3595 = vsel %vm582, %v3592, %v3594
        %v3596 = vrot.slane %v3566, 2
        %v3597 = vrot.slane %v3567, 2
        %v3598 = vsel %vm582, %v3596, %v3597
        %v3599 = vrot.slane %v3568, 2
        %v3600 = vsel %vm582, %v3597, %v3599
        %v3605 = vpack.c.bf16 %v3579, %v3577
        %v3606 = vpack.c.bf16 %v3563, %v3562
        %v3607 = vpack.c.bf16 %v3595, %v3593
        %v3608 = vpack.c.bf16 %v3584, %v3582
        %v3609 = vpack.c.bf16 %v3567, %v3566
        %v3610 = vpack.c.bf16 %v3600, %v3598
        %v3611 = vld [vmem:[#allocation17] sm:$0xf]
        %v3612 = vld [vmem:[#allocation17 + $0x4] sm:$0xf]
        %v3613 = vld [vmem:[#allocation17 + $0x8] sm:$0xf]
        %v3614 = vld [vmem:[#allocation17 + $0xc] sm:$0xf]
        %v3615 = vld [vmem:[#allocation17 + $0x10] sm:$0xf]
        %v3616 = vld [vmem:[#allocation17 + $0x14] sm:$0xf]
        %v3617 = vld [vmem:[#allocation17 + $0x18] sm:$0xf]
        %v3618 = vld [vmem:[#allocation17 + $0x1c] sm:$0xf]
        %v3619 = vld [vmem:[#allocation17 + $0x20] sm:$0xf]
        %v3620 = vld [vmem:[#allocation17 + $0x24] sm:$0xf]
        %v3621 = vld [vmem:[#allocation17 + $0x28] sm:$0xf]
        %v3622 = vld [vmem:[#allocation17 + $0x2c] sm:$0xf]
        %v3623 = vld [vmem:[#allocation17 + $0x30] sm:$0xf]
        %v3624 = vld [vmem:[#allocation17 + $0x34] sm:$0xf]
        %v3625 = vld [vmem:[#allocation17 + $0x38] sm:$0xf]
        %v3626 = vld [vmem:[#allocation17 + $0x3c] sm:$0xf]
        %v3627 = vld [vmem:[#allocation17 + $0x40] sm:$0xf]
        %v3628 = vld [vmem:[#allocation17 + $0x44] sm:$0xf]
        %v3629 = vld [vmem:[#allocation17 + $0x48] sm:$0xf]
        %v3630 = vld [vmem:[#allocation17 + $0x4c] sm:$0xf]
        %v3631 = vld [vmem:[#allocation17 + $0x50] sm:$0xf]
        %v3632 = vld [vmem:[#allocation17 + $0x54] sm:$0xf]
        %v3633 = vld [vmem:[#allocation17 + $0x58] sm:$0xf]
        %v3634 = vld [vmem:[#allocation17 + $0x5c] sm:$0xf]
        %v3635 = vld [vmem:[#allocation17 + $0x60] sm:$0xf]
        %v3636 = vld [vmem:[#allocation17 + $0x64] sm:$0xf]
        %v3637 = vld [vmem:[#allocation17 + $0x68] sm:$0xf]
        %v3638 = vld [vmem:[#allocation17 + $0x6c] sm:$0xf]
        %v3639 = vld [vmem:[#allocation17 + $0x70] sm:$0xf]
        %v3640 = vld [vmem:[#allocation17 + $0x74] sm:$0xf]
        %v3641 = vld [vmem:[#allocation17 + $0x78] sm:$0xf]
        %v3642 = vld [vmem:[#allocation17 + $0x7c] sm:$0xf]
        %v3643 = vld [vmem:[#allocation17 + $0x80] sm:$0xf]
        %v3644 = vld [vmem:[#allocation17 + $0x84] sm:$0xf]
        %v3645 = vld [vmem:[#allocation17 + $0x88] sm:$0xf]
        %v3646 = vld [vmem:[#allocation17 + $0x8c] sm:$0xf]
        %v3647 = vld [vmem:[#allocation17 + $0x90] sm:$0xf]
        %v3648 = vld [vmem:[#allocation17 + $0x94] sm:$0xf]
        %v3649 = vld [vmem:[#allocation17 + $0x98] sm:$0xf]
        %v3650 = vld [vmem:[#allocation17 + $0x9c] sm:$0xf]
        %v3651 = vld [vmem:[#allocation17 + $0xa0] sm:$0xf]
        %v3652 = vld [vmem:[#allocation17 + $0xa4] sm:$0xf]
        %v3653 = vld [vmem:[#allocation17 + $0xa8] sm:$0xf]
        %v3654 = vld [vmem:[#allocation17 + $0xac] sm:$0xf]
        %v3655 = vld [vmem:[#allocation17 + $0xb0] sm:$0xf]
        %v3656 = vld [vmem:[#allocation17 + $0xb4] sm:$0xf]
        %v3657 = vld [vmem:[#allocation17 + $0xb8] sm:$0xf]
        %v3658 = vld [vmem:[#allocation17 + $0xbc] sm:$0xf]
        %v3659 = vld [vmem:[#allocation8 + $0x1] sm:$0x1]
        %v3660 = vlaneseq
        %v3661 = vshrl.u32 %v3660, 7
        %v3662 = vsub.s32 0, %v3661
        %v3663 = vrot.slane %v3659, %v3662
        %v3712 = vunpack.c.l.b16 %v3611
        %v3713 = vunpack.c.l.b16 %v3612
        %v3714 = vunpack.c.l.b16 %v3613
        %v3715 = vunpack.c.l.b16 %v3614
        %v3716 = vunpack.c.l.b16 %v3615
        %v3717 = vunpack.c.l.b16 %v3616
        %v3718 = vunpack.c.l.b16 %v3617
        %v3719 = vunpack.c.l.b16 %v3618
        %v3720 = vunpack.c.l.b16 %v3619
        %v3721 = vunpack.c.l.b16 %v3620
        %v3722 = vunpack.c.l.b16 %v3621
        %v3723 = vunpack.c.l.b16 %v3622
        %v3724 = vunpack.c.l.b16 %v3623
        %v3725 = vunpack.c.l.b16 %v3624
        %v3726 = vunpack.c.l.b16 %v3625
        %v3727 = vunpack.c.l.b16 %v3626
        %v3728 = vunpack.c.l.b16 %v3627
        %v3729 = vunpack.c.l.b16 %v3628
        %v3730 = vunpack.c.l.b16 %v3629
        %v3731 = vunpack.c.l.b16 %v3630
        %v3732 = vunpack.c.l.b16 %v3631
        %v3733 = vunpack.c.l.b16 %v3632
        %v3734 = vunpack.c.l.b16 %v3633
        %v3735 = vunpack.c.l.b16 %v3634
        %v3736 = vunpack.c.l.b16 %v3635
        %v3737 = vunpack.c.l.b16 %v3636
        %v3738 = vunpack.c.l.b16 %v3637
        %v3739 = vunpack.c.l.b16 %v3638
        %v3740 = vunpack.c.l.b16 %v3639
        %v3741 = vunpack.c.l.b16 %v3640
        %v3742 = vunpack.c.l.b16 %v3641
        %v3743 = vunpack.c.l.b16 %v3642
        %v3744 = vunpack.c.l.b16 %v3643
        %v3745 = vunpack.c.l.b16 %v3644
        %v3746 = vunpack.c.l.b16 %v3645
        %v3747 = vunpack.c.l.b16 %v3646
        %v3748 = vunpack.c.l.b16 %v3647
        %v3749 = vunpack.c.l.b16 %v3648
        %v3750 = vunpack.c.l.b16 %v3649
        %v3751 = vunpack.c.l.b16 %v3650
        %v3752 = vunpack.c.l.b16 %v3651
        %v3753 = vunpack.c.l.b16 %v3652
        %v3754 = vunpack.c.l.b16 %v3653
        %v3755 = vunpack.c.l.b16 %v3654
        %v3756 = vunpack.c.l.b16 %v3655
        %v3757 = vunpack.c.l.b16 %v3656
        %v3758 = vunpack.c.l.b16 %v3657
        %v3759 = vunpack.c.l.b16 %v3658
        %v3760 = vpack.c.b16 %v3713, %v3712
        %v3761 = vpack.c.b16 %v3715, %v3714
        %v3762 = vpack.c.b16 %v3717, %v3716
        %v3763 = vpack.c.b16 %v3719, %v3718
        %v3764 = vpack.c.b16 %v3721, %v3720
        %v3765 = vpack.c.b16 %v3723, %v3722
        %v3766 = vpack.c.b16 %v3725, %v3724
        %v3767 = vpack.c.b16 %v3727, %v3726
        %v3768 = vpack.c.b16 %v3729, %v3728
        %v3769 = vpack.c.b16 %v3731, %v3730
        %v3770 = vpack.c.b16 %v3733, %v3732
        %v3771 = vpack.c.b16 %v3735, %v3734
        %v3772 = vpack.c.b16 %v3737, %v3736
        %v3773 = vpack.c.b16 %v3739, %v3738
        %v3774 = vpack.c.b16 %v3741, %v3740
        %v3775 = vpack.c.b16 %v3743, %v3742
        %v3776 = vpack.c.b16 %v3745, %v3744
        %v3777 = vpack.c.b16 %v3747, %v3746
        %v3778 = vpack.c.b16 %v3749, %v3748
        %v3779 = vpack.c.b16 %v3751, %v3750
        %v3780 = vpack.c.b16 %v3753, %v3752
        %v3781 = vpack.c.b16 %v3755, %v3754
        %v3782 = vpack.c.b16 %v3757, %v3756
        %v3783 = vpack.c.b16 %v3759, %v3758
        %3808 = vmatprep.subr.bf16.mxu0 0
        %3809 = vmatpush1.bf16.msra.mxu0 %v3767
        %3810 = vmatprep.subr.bf16.mxu0 0
        %3811 = vmatpush1.bf16.msra.mxu0 %v3766
        %3812 = vmatprep.subr.bf16.mxu0 0
        %3813 = vmatpush1.bf16.msra.mxu0 %v3765
        %3814 = vmatprep.subr.bf16.mxu0 0
        %3815 = vmatpush1.bf16.msra.mxu0 %v3764
        %3816 = vmatprep.subr.bf16.mxu0 0
        %3817 = vmatpush1.bf16.msra.mxu0 %v3763
        %3818 = vmatprep.subr.bf16.mxu0 0
        %3819 = vmatpush1.bf16.msra.mxu0 %v3762
        %3820 = vmatprep.subr.bf16.mxu0 0
        %3821 = vmatpush1.bf16.msra.mxu0 %v3761
        %3822 = vmatprep.subr.bf16.mxu0 0
        %3823 = vmatpush1.bf16.msra.mxu0 %v3760
        %3824 = vmatprep.subr.bf16.mxu0 0
        %3825 = vmatpush2.bf16.msra.mxu0 %v3775
        %3826 = vmatprep.subr.bf16.mxu0 0
        %3827 = vmatpush2.bf16.msra.mxu0 %v3774
        %3828 = vmatprep.subr.bf16.mxu0 0
        %3829 = vmatpush2.bf16.msra.mxu0 %v3773
        %3830 = vmatprep.subr.bf16.mxu0 0
        %3831 = vmatpush2.bf16.msra.mxu0 %v3772
        %3832 = vmatprep.subr.bf16.mxu0 0
        %3833 = vmatpush2.bf16.msra.mxu0 %v3771
        %3834 = vmatprep.subr.bf16.mxu0 0
        %3835 = vmatpush2.bf16.msra.mxu0 %v3770
        %3836 = vmatprep.subr.bf16.mxu0 0
        %3837 = vmatpush2.bf16.msra.mxu0 %v3769
        %3838 = vmatprep.subr.bf16.mxu0 0
        %3839 = vmatpush2.bf16.msra.mxu0 %v3768
        %3840 = vmatprep.mubr.bf16.mxu0 %v3606
        %3841 = vmatmul.mubr.bf16.gmra.mxu0 %v3605
        %v3842 = vpop.f32.mrf.mxu0
        %v3843 = vadd.f32 %v3663, %v3842
        %v3844 = vpop.f32.mrf.mxu0
        %v3845 = vpop.f32.mrf.mxu0
        %v3846 = vadd.f32 %v3663, %v3845
        %v3847 = vpop.f32.mrf.mxu0
        %3848 = vmatprep.mubr.bf16.mxu0 %v3609
        %3849 = vmatmul.mubr.bf16.gmra.mxu0 %v3608
        %v3850 = vpop.f32.mrf.mxu0
        %v3851 = vadd.f32 %v3663, %v3850
        %v3852 = vpop.f32.mrf.mxu0
        %v3853 = vpop.f32.mrf.mxu0
        %v3854 = vadd.f32 %v3663, %v3853
        %v3855 = vpop.f32.mrf.mxu0
        %3856 = vdwg.mxu0
        %3857 = vmatprep.subr.bf16.mxu0 0
        %3858 = vmatpush1.bf16.msra.mxu0 %v3783
        %3859 = vmatprep.subr.bf16.mxu0 0
        %3860 = vmatpush1.bf16.msra.mxu0 %v3782
        %3861 = vmatprep.subr.bf16.mxu0 0
        %3862 = vmatpush1.bf16.msra.mxu0 %v3781
        %3863 = vmatprep.subr.bf16.mxu0 0
        %3864 = vmatpush1.bf16.msra.mxu0 %v3780
        %3865 = vmatprep.subr.bf16.mxu0 0
        %3866 = vmatpush1.bf16.msra.mxu0 %v3779
        %3867 = vmatprep.subr.bf16.mxu0 0
        %3868 = vmatpush1.bf16.msra.mxu0 %v3778
        %3869 = vmatprep.subr.bf16.mxu0 0
        %3870 = vmatpush1.bf16.msra.mxu0 %v3777
        %3871 = vmatprep.subr.bf16.mxu0 0
        %3872 = vmatpush1.bf16.msra.mxu0 %v3776
        %3873 = vmatprep.subr.bf16.mxu0 0
        %3874 = vmatpush2.bf16.msra.mxu0 0
        %3875 = vmatprep.subr.bf16.mxu0 0
        %3876 = vmatpush2.bf16.msra.mxu0 0
        %3877 = vmatprep.subr.bf16.mxu0 0
        %3878 = vmatpush2.bf16.msra.mxu0 0
        %3879 = vmatprep.subr.bf16.mxu0 0
        %3880 = vmatpush2.bf16.msra.mxu0 0
        %3881 = vmatprep.subr.bf16.mxu0 0
        %3882 = vmatpush2.bf16.msra.mxu0 0
        %3883 = vmatprep.subr.bf16.mxu0 0
        %3884 = vmatpush2.bf16.msra.mxu0 0
        %3885 = vmatprep.subr.bf16.mxu0 0
        %3886 = vmatpush2.bf16.msra.mxu0 0
        %3887 = vmatprep.subr.bf16.mxu0 0
        %3888 = vmatpush2.bf16.msra.mxu0 0
        %3889 = vmatprep.mubr.bf16.mxu0 0
        %3890 = vmatmul.mubr.bf16.gmra.mxu0 %v3607
        %v3891 = vpop.f32.mrf.mxu0
        %v3892 = vadd.f32 %v3843, %v3891
        %v3893 = vpop.f32.mrf.mxu0
        %v3894 = vpop.f32.mrf.mxu0
        %v3895 = vadd.f32 %v3846, %v3894
        %v3896 = vpop.f32.mrf.mxu0
        %3897 = vmatprep.mubr.bf16.mxu0 0
        %3898 = vmatmul.mubr.bf16.gmra.mxu0 %v3610
        %v3899 = vpop.f32.mrf.mxu0
        %v3900 = vadd.f32 %v3851, %v3899
        %v3901 = vpop.f32.mrf.mxu0
        %v3902 = vpop.f32.mrf.mxu0
        %v3903 = vadd.f32 %v3854, %v3902
        %v3904 = vpop.f32.mrf.mxu0
        %3905 = vdwg.mxu0
        %v3906 = vmin.f32 %v3892, 20.0
        %v3907 = vmin.f32 %v3895, 20.0
        %v3908 = vmin.f32 %v3900, 20.0
        %v3909 = vmin.f32 %v3903, 20.0
        %v3910 = vmul.f32 %v3906, 1.442695
        %v3911 = vpow.pop %v3910
        %v3912 = vmul.f32 %v3907, 1.442695
        %v3913 = vpow.pop %v3912
        %v3914 = vmul.f32 %v3908, 1.442695
        %v3915 = vpow.pop %v3914
        %v3916 = vmul.f32 %v3909, 1.442695
        %v3917 = vpow.pop %v3916
        %v3918 = vadd.f32 %v3911, 2.0
        %v3919 = vadd.f32 %v3913, 2.0
        %v3920 = vadd.f32 %v3915, 2.0
        %v3921 = vadd.f32 %v3917, 2.0
        %v3922 = vmul.f32 %v3911, %v3918
        %v3923 = vmul.f32 %v3913, %v3919
        %v3924 = vmul.f32 %v3915, %v3920
        %v3925 = vmul.f32 %v3917, %v3921
        %v3926 = vmul.f32 %v3892, %v3922
        %v3927 = vmul.f32 %v3895, %v3923
        %v3928 = vmul.f32 %v3900, %v3924
        %v3929 = vmul.f32 %v3903, %v3925
        %v3930 = vadd.f32 %v3922, 2.0
        %v3931 = vadd.f32 %v3923, 2.0
        %v3932 = vadd.f32 %v3924, 2.0
        %v3933 = vadd.f32 %v3925, 2.0
        %v3934 = vrcp.pop %v3930
        %v3935 = vrcp.pop %v3931
        %v3936 = vrcp.pop %v3932
        %v3937 = vrcp.pop %v3933
        %v3938 = vmul.f32 %v3926, %v3934
        %v3939 = vmul.f32 %v3927, %v3935
        %v3940 = vmul.f32 %v3928, %v3936
        %v3941 = vmul.f32 %v3929, %v3937
        %3942 = vst [vmem:[#allocation2 + $0x8] sm:$0xff] %v3938
        %3943 = vst [vmem:[#allocation2 + $0x10] sm:$0xff] %v3939
        %3944 = vst [vmem:[#allocation2 + $0x28] sm:$0xff] %v3940
        %3945 = vst [vmem:[#allocation2 + $0x30] sm:$0xff] %v3941
        %v3946 = vld [vmem:[#allocation2] sm:$0xff]
        %v3947 = vld [vmem:[#allocation2 + $0x8] sm:$0xff]
        %v3948 = vld [vmem:[#allocation2 + $0x10] sm:$0xff]
        %v3949 = vld [vmem:[#allocation2 + $0x18] sm:$0xff]
        %v3950 = vld [vmem:[#allocation2 + $0x20] sm:$0xff]
        %v3951 = vld [vmem:[#allocation2 + $0x28] sm:$0xff]
        %v3952 = vld [vmem:[#allocation2 + $0x30] sm:$0xff]
        %v3953 = vld [vmem:[#allocation2 + $0x38] sm:$0xff]
        %v3960 = vrot.slane %v3946, 6
        %v3961 = vrot.slane %v3947, 6
        %v3962 = vsel %vm535, %v3960, %v3961
        %v3963 = vrot.slane %v3948, 6
        %v3964 = vsel %vm535, %v3961, %v3963
        %v3965 = vrot.slane %v3950, 6
        %v3966 = vrot.slane %v3951, 6
        %v3967 = vsel %vm535, %v3965, %v3966
        %v3968 = vrot.slane %v3952, 6
        %v3969 = vsel %vm535, %v3966, %v3968
        %v3974 = vrot.slane %v3946, 7
        %v3975 = vrot.slane %v3947, 7
        %v3976 = vsel %vm550, %v3974, %v3975
        %v3977 = vrot.slane %v3948, 7
        %v3978 = vsel %vm550, %v3975, %v3977
        %v3979 = vrot.slane %v3950, 7
        %v3980 = vrot.slane %v3951, 7
        %v3981 = vsel %vm550, %v3979, %v3980
        %v3982 = vrot.slane %v3952, 7
        %v3983 = vsel %vm550, %v3980, %v3982
        %v3990 = vrot.slane %v3947, 1
        %v3991 = vrot.slane %v3948, 1
        %v3992 = vsel %vm567, %v3990, %v3991
        %v3993 = vrot.slane %v3949, 1
        %v3994 = vsel %vm567, %v3991, %v3993
        %v3995 = vrot.slane %v3951, 1
        %v3996 = vrot.slane %v3952, 1
        %v3997 = vsel %vm567, %v3995, %v3996
        %v3998 = vrot.slane %v3953, 1
        %v3999 = vsel %vm567, %v3996, %v3998
        %v4004 = vrot.slane %v3947, 2
        %v4005 = vrot.slane %v3948, 2
        %v4006 = vsel %vm582, %v4004, %v4005
        %v4007 = vrot.slane %v3949, 2
        %v4008 = vsel %vm582, %v4005, %v4007
        %v4009 = vrot.slane %v3951, 2
        %v4010 = vrot.slane %v3952, 2
        %v4011 = vsel %vm582, %v4009, %v4010
        %v4012 = vrot.slane %v3953, 2
        %v4013 = vsel %vm582, %v4010, %v4012
        %v4018 = vpack.c.bf16 %v3964, %v3962
        %v4019 = vpack.c.bf16 %v3978, %v3976
        %v4020 = vpack.c.bf16 %v3948, %v3947
        %v4021 = vpack.c.bf16 %v3994, %v3992
        %v4022 = vpack.c.bf16 %v4008, %v4006
        %v4023 = vpack.c.bf16 %v3969, %v3967
        %v4024 = vpack.c.bf16 %v3983, %v3981
        %v4025 = vpack.c.bf16 %v3952, %v3951
        %v4026 = vpack.c.bf16 %v3999, %v3997
        %v4027 = vpack.c.bf16 %v4013, %v4011
        %v4028 = vld [vmem:[#allocation12] sm:$0xff]
        %v4029 = vld [vmem:[#allocation12 + $0x8] sm:$0xf]
        %v4030 = vld [vmem:[#allocation12 + $0xc] sm:$0xff]
        %v4031 = vld [vmem:[#allocation12 + $0x14] sm:$0xf]
        %v4032 = vld [vmem:[#allocation12 + $0x18] sm:$0xff]
        %v4033 = vld [vmem:[#allocation12 + $0x20] sm:$0xf]
        %v4034 = vld [vmem:[#allocation12 + $0x24] sm:$0xff]
        %v4035 = vld [vmem:[#allocation12 + $0x2c] sm:$0xf]
        %v4036 = vld [vmem:[#allocation12 + $0x30] sm:$0xff]
        %v4037 = vld [vmem:[#allocation12 + $0x38] sm:$0xf]
        %v4038 = vld [vmem:[#allocation12 + $0x3c] sm:$0xff]
        %v4039 = vld [vmem:[#allocation12 + $0x44] sm:$0xf]
        %v4040 = vld [vmem:[#allocation12 + $0x48] sm:$0xff]
        %v4041 = vld [vmem:[#allocation12 + $0x50] sm:$0xf]
        %v4042 = vld [vmem:[#allocation12 + $0x54] sm:$0xff]
        %v4043 = vld [vmem:[#allocation12 + $0x5c] sm:$0xf]
        %v4044 = vld [vmem:[#allocation12 + $0x60] sm:$0xff]
        %v4045 = vld [vmem:[#allocation12 + $0x68] sm:$0xf]
        %v4046 = vld [vmem:[#allocation12 + $0x6c] sm:$0xff]
        %v4047 = vld [vmem:[#allocation12 + $0x74] sm:$0xf]
        %v4048 = vld [vmem:[#allocation12 + $0x78] sm:$0xff]
        %v4049 = vld [vmem:[#allocation12 + $0x80] sm:$0xf]
        %v4050 = vld [vmem:[#allocation12 + $0x84] sm:$0xff]
        %v4051 = vld [vmem:[#allocation12 + $0x8c] sm:$0xf]
        %v4052 = vld [vmem:[#allocation12 + $0x90] sm:$0xff]
        %v4053 = vld [vmem:[#allocation12 + $0x98] sm:$0xf]
        %v4054 = vld [vmem:[#allocation12 + $0x9c] sm:$0xff]
        %v4055 = vld [vmem:[#allocation12 + $0xa4] sm:$0xf]
        %v4056 = vld [vmem:[#allocation12 + $0xa8] sm:$0xff]
        %v4057 = vld [vmem:[#allocation12 + $0xb0] sm:$0xf]
        %v4058 = vld [vmem:[#allocation12 + $0xb4] sm:$0xff]
        %v4059 = vld [vmem:[#allocation12 + $0xbc] sm:$0xf]
        %v4060 = vld [vmem:[#allocation12 + $0xc0] sm:$0xff]
        %v4061 = vld [vmem:[#allocation12 + $0xc8] sm:$0xf]
        %v4062 = vld [vmem:[#allocation12 + $0xcc] sm:$0xff]
        %v4063 = vld [vmem:[#allocation12 + $0xd4] sm:$0xf]
        %v4064 = vld [vmem:[#allocation12 + $0xd8] sm:$0xff]
        %v4065 = vld [vmem:[#allocation12 + $0xe0] sm:$0xf]
        %v4066 = vld [vmem:[#allocation12 + $0xe4] sm:$0xff]
        %v4067 = vld [vmem:[#allocation12 + $0xec] sm:$0xf]
        %v4068 = vld [vmem:[#allocation12 + $0xf0] sm:$0xff]
        %v4069 = vld [vmem:[#allocation12 + $0xf8] sm:$0xf]
        %v4070 = vld [vmem:[#allocation12 + $0xfc] sm:$0xff]
        %v4071 = vld [vmem:[#allocation12 + $0x104] sm:$0xf]
        %v4072 = vld [vmem:[#allocation12 + $0x108] sm:$0xff]
        %v4073 = vld [vmem:[#allocation12 + $0x110] sm:$0xf]
        %v4074 = vld [vmem:[#allocation12 + $0x114] sm:$0xff]
        %v4075 = vld [vmem:[#allocation12 + $0x11c] sm:$0xf]
        %v4076 = vld [vmem:[#allocation12 + $0x120] sm:$0xff]
        %v4077 = vld [vmem:[#allocation12 + $0x128] sm:$0xf]
        %v4078 = vld [vmem:[#allocation12 + $0x12c] sm:$0xff]
        %v4079 = vld [vmem:[#allocation12 + $0x134] sm:$0xf]
        %v4080 = vld [vmem:[#allocation12 + $0x138] sm:$0xff]
        %v4081 = vld [vmem:[#allocation12 + $0x140] sm:$0xf]
        %v4082 = vld [vmem:[#allocation12 + $0x144] sm:$0xff]
        %v4083 = vld [vmem:[#allocation12 + $0x14c] sm:$0xf]
        %v4084 = vld [vmem:[#allocation12 + $0x150] sm:$0xff]
        %v4085 = vld [vmem:[#allocation12 + $0x158] sm:$0xf]
        %v4086 = vld [vmem:[#allocation12 + $0x15c] sm:$0xff]
        %v4087 = vld [vmem:[#allocation12 + $0x164] sm:$0xf]
        %v4088 = vld [vmem:[#allocation12 + $0x168] sm:$0xff]
        %v4089 = vld [vmem:[#allocation12 + $0x170] sm:$0xf]
        %v4090 = vld [vmem:[#allocation12 + $0x174] sm:$0xff]
        %v4091 = vld [vmem:[#allocation12 + $0x17c] sm:$0xf]
        %v4092 = vld [vmem:[#allocation12 + $0x180] sm:$0xff]
        %v4093 = vld [vmem:[#allocation12 + $0x188] sm:$0xf]
        %v4094 = vld [vmem:[#allocation12 + $0x18c] sm:$0xff]
        %v4095 = vld [vmem:[#allocation12 + $0x194] sm:$0xf]
        %v4096 = vld [vmem:[#allocation12 + $0x198] sm:$0xff]
        %v4097 = vld [vmem:[#allocation12 + $0x1a0] sm:$0xf]
        %v4098 = vld [vmem:[#allocation12 + $0x1a4] sm:$0xff]
        %v4099 = vld [vmem:[#allocation12 + $0x1ac] sm:$0xf]
        %v4100 = vld [vmem:[#allocation12 + $0x1b0] sm:$0xff]
        %v4101 = vld [vmem:[#allocation12 + $0x1b8] sm:$0xf]
        %v4102 = vld [vmem:[#allocation12 + $0x1bc] sm:$0xff]
        %v4103 = vld [vmem:[#allocation12 + $0x1c4] sm:$0xf]
        %v4104 = vld [vmem:[#allocation12 + $0x1c8] sm:$0xff]
        %v4105 = vld [vmem:[#allocation12 + $0x1d0] sm:$0xf]
        %v4106 = vld [vmem:[#allocation12 + $0x1d4] sm:$0xff]
        %v4107 = vld [vmem:[#allocation12 + $0x1dc] sm:$0xf]
        %v4108 = vld [vmem:[#allocation12 + $0x1e0] sm:$0xff]
        %v4109 = vld [vmem:[#allocation12 + $0x1e8] sm:$0xf]
        %v4110 = vld [vmem:[#allocation12 + $0x1ec] sm:$0xff]
        %v4111 = vld [vmem:[#allocation12 + $0x1f4] sm:$0xf]
        %v4112 = vld [vmem:[#allocation12 + $0x1f8] sm:$0xff]
        %v4113 = vld [vmem:[#allocation12 + $0x200] sm:$0xf]
        %v4114 = vld [vmem:[#allocation12 + $0x204] sm:$0xff]
        %v4115 = vld [vmem:[#allocation12 + $0x20c] sm:$0xf]
        %v4116 = vld [vmem:[#allocation12 + $0x210] sm:$0xff]
        %v4117 = vld [vmem:[#allocation12 + $0x218] sm:$0xf]
        %v4118 = vld [vmem:[#allocation12 + $0x21c] sm:$0xff]
        %v4119 = vld [vmem:[#allocation12 + $0x224] sm:$0xf]
        %v4120 = vld [vmem:[#allocation12 + $0x228] sm:$0xff]
        %v4121 = vld [vmem:[#allocation12 + $0x230] sm:$0xf]
        %v4122 = vld [vmem:[#allocation12 + $0x234] sm:$0xff]
        %v4123 = vld [vmem:[#allocation12 + $0x23c] sm:$0xf]
        %v4124 = vld [vmem:[#allocation12 + $0x240] sm:$0xff]
        %v4125 = vld [vmem:[#allocation12 + $0x248] sm:$0xf]
        %v4126 = vld [vmem:[#allocation12 + $0x24c] sm:$0xff]
        %v4127 = vld [vmem:[#allocation12 + $0x254] sm:$0xf]
        %v4128 = vld [vmem:[#allocation12 + $0x258] sm:$0xff]
        %v4129 = vld [vmem:[#allocation12 + $0x260] sm:$0xf]
        %v4130 = vld [vmem:[#allocation12 + $0x264] sm:$0xff]
        %v4131 = vld [vmem:[#allocation12 + $0x26c] sm:$0xf]
        %v4132 = vld [vmem:[#allocation12 + $0x270] sm:$0xff]
        %v4133 = vld [vmem:[#allocation12 + $0x278] sm:$0xf]
        %v4134 = vld [vmem:[#allocation12 + $0x27c] sm:$0xff]
        %v4135 = vld [vmem:[#allocation12 + $0x284] sm:$0xf]
        %v4136 = vld [vmem:[#allocation12 + $0x288] sm:$0xff]
        %v4137 = vld [vmem:[#allocation12 + $0x290] sm:$0xf]
        %v4138 = vld [vmem:[#allocation12 + $0x294] sm:$0xff]
        %v4139 = vld [vmem:[#allocation12 + $0x29c] sm:$0xf]
        %v4140 = vld [vmem:[#allocation12 + $0x2a0] sm:$0xff]
        %v4141 = vld [vmem:[#allocation12 + $0x2a8] sm:$0xf]
        %v4142 = vld [vmem:[#allocation12 + $0x2ac] sm:$0xff]
        %v4143 = vld [vmem:[#allocation12 + $0x2b4] sm:$0xf]
        %v4144 = vld [vmem:[#allocation12 + $0x2b8] sm:$0xff]
        %v4145 = vld [vmem:[#allocation12 + $0x2c0] sm:$0xf]
        %v4146 = vld [vmem:[#allocation12 + $0x2c4] sm:$0xff]
        %v4147 = vld [vmem:[#allocation12 + $0x2cc] sm:$0xf]
        %v4148 = vld [vmem:[#allocation12 + $0x2d0] sm:$0xff]
        %v4149 = vld [vmem:[#allocation12 + $0x2d8] sm:$0xf]
        %v4150 = vld [vmem:[#allocation12 + $0x2dc] sm:$0xff]
        %v4151 = vld [vmem:[#allocation12 + $0x2e4] sm:$0xf]
        %v4152 = vld [vmem:[#allocation12 + $0x2e8] sm:$0xff]
        %v4153 = vld [vmem:[#allocation12 + $0x2f0] sm:$0xf]
        %v4154 = vld [vmem:[#allocation12 + $0x2f4] sm:$0xff]
        %v4155 = vld [vmem:[#allocation12 + $0x2fc] sm:$0xf]
        %v4156 = vld [vmem:[#allocation12 + $0x300] sm:$0xff]
        %v4157 = vld [vmem:[#allocation12 + $0x308] sm:$0xf]
        %v4158 = vld [vmem:[#allocation12 + $0x30c] sm:$0xff]
        %v4159 = vld [vmem:[#allocation12 + $0x314] sm:$0xf]
        %v4160 = vld [vmem:[#allocation12 + $0x318] sm:$0xff]
        %v4161 = vld [vmem:[#allocation12 + $0x320] sm:$0xf]
        %v4162 = vld [vmem:[#allocation12 + $0x324] sm:$0xff]
        %v4163 = vld [vmem:[#allocation12 + $0x32c] sm:$0xf]
        %v4164 = vld [vmem:[#allocation12 + $0x330] sm:$0xff]
        %v4165 = vld [vmem:[#allocation12 + $0x338] sm:$0xf]
        %v4166 = vld [vmem:[#allocation12 + $0x33c] sm:$0xff]
        %v4167 = vld [vmem:[#allocation12 + $0x344] sm:$0xf]
        %v4168 = vld [vmem:[#allocation12 + $0x348] sm:$0xff]
        %v4169 = vld [vmem:[#allocation12 + $0x350] sm:$0xf]
        %v4170 = vld [vmem:[#allocation12 + $0x354] sm:$0xff]
        %v4171 = vld [vmem:[#allocation12 + $0x35c] sm:$0xf]
        %v4172 = vld [vmem:[#allocation12 + $0x360] sm:$0xff]
        %v4173 = vld [vmem:[#allocation12 + $0x368] sm:$0xf]
        %v4174 = vld [vmem:[#allocation12 + $0x36c] sm:$0xff]
        %v4175 = vld [vmem:[#allocation12 + $0x374] sm:$0xf]
        %v4176 = vld [vmem:[#allocation12 + $0x378] sm:$0xff]
        %v4177 = vld [vmem:[#allocation12 + $0x380] sm:$0xf]
        %v4178 = vld [vmem:[#allocation12 + $0x384] sm:$0xff]
        %v4179 = vld [vmem:[#allocation12 + $0x38c] sm:$0xf]
        %v4180 = vld [vmem:[#allocation12 + $0x390] sm:$0xff]
        %v4181 = vld [vmem:[#allocation12 + $0x398] sm:$0xf]
        %v4182 = vld [vmem:[#allocation12 + $0x39c] sm:$0xff]
        %v4183 = vld [vmem:[#allocation12 + $0x3a4] sm:$0xf]
        %v4184 = vld [vmem:[#allocation12 + $0x3a8] sm:$0xff]
        %v4185 = vld [vmem:[#allocation12 + $0x3b0] sm:$0xf]
        %v4186 = vld [vmem:[#allocation12 + $0x3b4] sm:$0xff]
        %v4187 = vld [vmem:[#allocation12 + $0x3bc] sm:$0xf]
        %s4188 = scalar_lea.vmem [#allocation6], 2
        %v4189 = vld [vmem:[%s4188] ss:$4 sm:$0x7]
        %v4191 = vlaneseq
        %v4192 = vshrl.u32 %v4191, 7
        %v4193 = vsub.s32 0, %v4192
        %v4194 = vrot.slane %v4189, %v4193
        %v4195 = vlaneseq
        %v4196 = vshrl.u32 %v4195, 7
        %v4197 = vsub.s32 1, %v4196
        %v4198 = vrot.slane %v4189, %v4197
        %v4199 = vlaneseq
        %v4200 = vshrl.u32 %v4199, 7
        %v4201 = vsub.s32 2, %v4200
        %v4202 = vrot.slane %v4189, %v4201
        %v4366 = vunpack.c.l.b16 %v4028
        %v4367 = vunpack.c.h.b16 %v4028
        %v4368 = vunpack.c.l.b16 %v4029
        %v4369 = vunpack.c.l.b16 %v4030
        %v4370 = vunpack.c.h.b16 %v4030
        %v4371 = vunpack.c.l.b16 %v4031
        %v4372 = vunpack.c.l.b16 %v4032
        %v4373 = vunpack.c.h.b16 %v4032
        %v4374 = vunpack.c.l.b16 %v4033
        %v4375 = vunpack.c.l.b16 %v4034
        %v4376 = vunpack.c.h.b16 %v4034
        %v4377 = vunpack.c.l.b16 %v4035
        %v4378 = vunpack.c.l.b16 %v4036
        %v4379 = vunpack.c.h.b16 %v4036
        %v4380 = vunpack.c.l.b16 %v4037
        %v4381 = vunpack.c.l.b16 %v4038
        %v4382 = vunpack.c.h.b16 %v4038
        %v4383 = vunpack.c.l.b16 %v4039
        %v4384 = vunpack.c.l.b16 %v4040
        %v4385 = vunpack.c.h.b16 %v4040
        %v4386 = vunpack.c.l.b16 %v4041
        %v4387 = vunpack.c.l.b16 %v4042
        %v4388 = vunpack.c.h.b16 %v4042
        %v4389 = vunpack.c.l.b16 %v4043
        %v4390 = vunpack.c.l.b16 %v4044
        %v4391 = vunpack.c.h.b16 %v4044
        %v4392 = vunpack.c.l.b16 %v4045
        %v4393 = vunpack.c.l.b16 %v4046
        %v4394 = vunpack.c.h.b16 %v4046
        %v4395 = vunpack.c.l.b16 %v4047
        %v4396 = vunpack.c.l.b16 %v4048
        %v4397 = vunpack.c.h.b16 %v4048
        %v4398 = vunpack.c.l.b16 %v4049
        %v4399 = vunpack.c.l.b16 %v4050
        %v4400 = vunpack.c.h.b16 %v4050
        %v4401 = vunpack.c.l.b16 %v4051
        %v4402 = vunpack.c.l.b16 %v4052
        %v4403 = vunpack.c.h.b16 %v4052
        %v4404 = vunpack.c.l.b16 %v4053
        %v4405 = vunpack.c.l.b16 %v4054
        %v4406 = vunpack.c.h.b16 %v4054
        %v4407 = vunpack.c.l.b16 %v4055
        %v4408 = vunpack.c.l.b16 %v4056
        %v4409 = vunpack.c.h.b16 %v4056
        %v4410 = vunpack.c.l.b16 %v4057
        %v4411 = vunpack.c.l.b16 %v4058
        %v4412 = vunpack.c.h.b16 %v4058
        %v4413 = vunpack.c.l.b16 %v4059
        %v4414 = vunpack.c.l.b16 %v4060
        %v4415 = vunpack.c.h.b16 %v4060
        %v4416 = vunpack.c.l.b16 %v4061
        %v4417 = vunpack.c.l.b16 %v4062
        %v4418 = vunpack.c.h.b16 %v4062
        %v4419 = vunpack.c.l.b16 %v4063
        %v4420 = vunpack.c.l.b16 %v4064
        %v4421 = vunpack.c.h.b16 %v4064
        %v4422 = vunpack.c.l.b16 %v4065
        %v4423 = vunpack.c.l.b16 %v4066
        %v4424 = vunpack.c.h.b16 %v4066
        %v4425 = vunpack.c.l.b16 %v4067
        %v4426 = vunpack.c.l.b16 %v4068
        %v4427 = vunpack.c.h.b16 %v4068
        %v4428 = vunpack.c.l.b16 %v4069
        %v4429 = vunpack.c.l.b16 %v4070
        %v4430 = vunpack.c.h.b16 %v4070
        %v4431 = vunpack.c.l.b16 %v4071
        %v4432 = vunpack.c.l.b16 %v4072
        %v4433 = vunpack.c.h.b16 %v4072
        %v4434 = vunpack.c.l.b16 %v4073
        %v4435 = vunpack.c.l.b16 %v4074
        %v4436 = vunpack.c.h.b16 %v4074
        %v4437 = vunpack.c.l.b16 %v4075
        %v4438 = vunpack.c.l.b16 %v4076
        %v4439 = vunpack.c.h.b16 %v4076
        %v4440 = vunpack.c.l.b16 %v4077
        %v4441 = vunpack.c.l.b16 %v4078
        %v4442 = vunpack.c.h.b16 %v4078
        %v4443 = vunpack.c.l.b16 %v4079
        %v4444 = vunpack.c.l.b16 %v4080
        %v4445 = vunpack.c.h.b16 %v4080
        %v4446 = vunpack.c.l.b16 %v4081
        %v4447 = vunpack.c.l.b16 %v4082
        %v4448 = vunpack.c.h.b16 %v4082
        %v4449 = vunpack.c.l.b16 %v4083
        %v4450 = vunpack.c.l.b16 %v4084
        %v4451 = vunpack.c.h.b16 %v4084
        %v4452 = vunpack.c.l.b16 %v4085
        %v4453 = vunpack.c.l.b16 %v4086
        %v4454 = vunpack.c.h.b16 %v4086
        %v4455 = vunpack.c.l.b16 %v4087
        %v4456 = vunpack.c.l.b16 %v4088
        %v4457 = vunpack.c.h.b16 %v4088
        %v4458 = vunpack.c.l.b16 %v4089
        %v4459 = vunpack.c.l.b16 %v4090
        %v4460 = vunpack.c.h.b16 %v4090
        %v4461 = vunpack.c.l.b16 %v4091
        %v4462 = vunpack.c.l.b16 %v4092
        %v4463 = vunpack.c.h.b16 %v4092
        %v4464 = vunpack.c.l.b16 %v4093
        %v4465 = vunpack.c.l.b16 %v4094
        %v4466 = vunpack.c.h.b16 %v4094
        %v4467 = vunpack.c.l.b16 %v4095
        %v4468 = vunpack.c.l.b16 %v4096
        %v4469 = vunpack.c.h.b16 %v4096
        %v4470 = vunpack.c.l.b16 %v4097
        %v4471 = vunpack.c.l.b16 %v4098
        %v4472 = vunpack.c.h.b16 %v4098
        %v4473 = vunpack.c.l.b16 %v4099
        %v4474 = vunpack.c.l.b16 %v4100
        %v4475 = vunpack.c.h.b16 %v4100
        %v4476 = vunpack.c.l.b16 %v4101
        %v4477 = vunpack.c.l.b16 %v4102
        %v4478 = vunpack.c.h.b16 %v4102
        %v4479 = vunpack.c.l.b16 %v4103
        %v4480 = vunpack.c.l.b16 %v4104
        %v4481 = vunpack.c.h.b16 %v4104
        %v4482 = vunpack.c.l.b16 %v4105
        %v4483 = vunpack.c.l.b16 %v4106
        %v4484 = vunpack.c.h.b16 %v4106
        %v4485 = vunpack.c.l.b16 %v4107
        %v4486 = vunpack.c.l.b16 %v4108
        %v4487 = vunpack.c.h.b16 %v4108
        %v4488 = vunpack.c.l.b16 %v4109
        %v4489 = vunpack.c.l.b16 %v4110
        %v4490 = vunpack.c.h.b16 %v4110
        %v4491 = vunpack.c.l.b16 %v4111
        %v4492 = vunpack.c.l.b16 %v4112
        %v4493 = vunpack.c.h.b16 %v4112
        %v4494 = vunpack.c.l.b16 %v4113
        %v4495 = vunpack.c.l.b16 %v4114
        %v4496 = vunpack.c.h.b16 %v4114
        %v4497 = vunpack.c.l.b16 %v4115
        %v4498 = vunpack.c.l.b16 %v4116
        %v4499 = vunpack.c.h.b16 %v4116
        %v4500 = vunpack.c.l.b16 %v4117
        %v4501 = vunpack.c.l.b16 %v4118
        %v4502 = vunpack.c.h.b16 %v4118
        %v4503 = vunpack.c.l.b16 %v4119
        %v4504 = vunpack.c.l.b16 %v4120
        %v4505 = vunpack.c.h.b16 %v4120
        %v4506 = vunpack.c.l.b16 %v4121
        %v4507 = vunpack.c.l.b16 %v4122
        %v4508 = vunpack.c.h.b16 %v4122
        %v4509 = vunpack.c.l.b16 %v4123
        %v4510 = vunpack.c.l.b16 %v4124
        %v4511 = vunpack.c.h.b16 %v4124
        %v4512 = vunpack.c.l.b16 %v4125
        %v4513 = vunpack.c.l.b16 %v4126
        %v4514 = vunpack.c.h.b16 %v4126
        %v4515 = vunpack.c.l.b16 %v4127
        %v4516 = vunpack.c.l.b16 %v4128
        %v4517 = vunpack.c.h.b16 %v4128
        %v4518 = vunpack.c.l.b16 %v4129
        %v4519 = vunpack.c.l.b16 %v4130
        %v4520 = vunpack.c.h.b16 %v4130
        %v4521 = vunpack.c.l.b16 %v4131
        %v4522 = vunpack.c.l.b16 %v4132
        %v4523 = vunpack.c.h.b16 %v4132
        %v4524 = vunpack.c.l.b16 %v4133
        %v4525 = vunpack.c.l.b16 %v4134
        %v4526 = vunpack.c.h.b16 %v4134
        %v4527 = vunpack.c.l.b16 %v4135
        %v4528 = vunpack.c.l.b16 %v4136
        %v4529 = vunpack.c.h.b16 %v4136
        %v4530 = vunpack.c.l.b16 %v4137
        %v4531 = vunpack.c.l.b16 %v4138
        %v4532 = vunpack.c.h.b16 %v4138
        %v4533 = vunpack.c.l.b16 %v4139
        %v4534 = vunpack.c.l.b16 %v4140
        %v4535 = vunpack.c.h.b16 %v4140
        %v4536 = vunpack.c.l.b16 %v4141
        %v4537 = vunpack.c.l.b16 %v4142
        %v4538 = vunpack.c.h.b16 %v4142
        %v4539 = vunpack.c.l.b16 %v4143
        %v4540 = vunpack.c.l.b16 %v4144
        %v4541 = vunpack.c.h.b16 %v4144
        %v4542 = vunpack.c.l.b16 %v4145
        %v4543 = vunpack.c.l.b16 %v4146
        %v4544 = vunpack.c.h.b16 %v4146
        %v4545 = vunpack.c.l.b16 %v4147
        %v4546 = vunpack.c.l.b16 %v4148
        %v4547 = vunpack.c.h.b16 %v4148
        %v4548 = vunpack.c.l.b16 %v4149
        %v4549 = vunpack.c.l.b16 %v4150
        %v4550 = vunpack.c.h.b16 %v4150
        %v4551 = vunpack.c.l.b16 %v4151
        %v4552 = vunpack.c.l.b16 %v4152
        %v4553 = vunpack.c.h.b16 %v4152
        %v4554 = vunpack.c.l.b16 %v4153
        %v4555 = vunpack.c.l.b16 %v4154
        %v4556 = vunpack.c.h.b16 %v4154
        %v4557 = vunpack.c.l.b16 %v4155
        %v4558 = vunpack.c.l.b16 %v4156
        %v4559 = vunpack.c.h.b16 %v4156
        %v4560 = vunpack.c.l.b16 %v4157
        %v4561 = vunpack.c.l.b16 %v4158
        %v4562 = vunpack.c.h.b16 %v4158
        %v4563 = vunpack.c.l.b16 %v4159
        %v4564 = vunpack.c.l.b16 %v4160
        %v4565 = vunpack.c.h.b16 %v4160
        %v4566 = vunpack.c.l.b16 %v4161
        %v4567 = vunpack.c.l.b16 %v4162
        %v4568 = vunpack.c.h.b16 %v4162
        %v4569 = vunpack.c.l.b16 %v4163
        %v4570 = vunpack.c.l.b16 %v4164
        %v4571 = vunpack.c.h.b16 %v4164
        %v4572 = vunpack.c.l.b16 %v4165
        %v4573 = vunpack.c.l.b16 %v4166
        %v4574 = vunpack.c.h.b16 %v4166
        %v4575 = vunpack.c.l.b16 %v4167
        %v4576 = vunpack.c.l.b16 %v4168
        %v4577 = vunpack.c.h.b16 %v4168
        %v4578 = vunpack.c.l.b16 %v4169
        %v4579 = vunpack.c.l.b16 %v4170
        %v4580 = vunpack.c.h.b16 %v4170
        %v4581 = vunpack.c.l.b16 %v4171
        %v4582 = vunpack.c.l.b16 %v4172
        %v4583 = vunpack.c.h.b16 %v4172
        %v4584 = vunpack.c.l.b16 %v4173
        %v4585 = vunpack.c.l.b16 %v4174
        %v4586 = vunpack.c.h.b16 %v4174
        %v4587 = vunpack.c.l.b16 %v4175
        %v4588 = vunpack.c.l.b16 %v4176
        %v4589 = vunpack.c.h.b16 %v4176
        %v4590 = vunpack.c.l.b16 %v4177
        %v4591 = vunpack.c.l.b16 %v4178
        %v4592 = vunpack.c.h.b16 %v4178
        %v4593 = vunpack.c.l.b16 %v4179
        %v4594 = vunpack.c.l.b16 %v4180
        %v4595 = vunpack.c.h.b16 %v4180
        %v4596 = vunpack.c.l.b16 %v4181
        %v4597 = vunpack.c.l.b16 %v4182
        %v4598 = vunpack.c.h.b16 %v4182
        %v4599 = vunpack.c.l.b16 %v4183
        %v4600 = vunpack.c.l.b16 %v4184
        %v4601 = vunpack.c.h.b16 %v4184
        %v4602 = vunpack.c.l.b16 %v4185
        %v4603 = vunpack.c.l.b16 %v4186
        %v4604 = vunpack.c.h.b16 %v4186
        %v4605 = vunpack.c.l.b16 %v4187
        %v4606 = vpack.c.b16 %v4369, %v4366
        %v4607 = vpack.c.b16 %v4370, %v4367
        %v4608 = vpack.c.b16 %v4371, %v4368
        %v4609 = vpack.c.b16 %v4375, %v4372
        %v4610 = vpack.c.b16 %v4376, %v4373
        %v4611 = vpack.c.b16 %v4377, %v4374
        %v4612 = vpack.c.b16 %v4381, %v4378
        %v4613 = vpack.c.b16 %v4382, %v4379
        %v4614 = vpack.c.b16 %v4383, %v4380
        %v4615 = vpack.c.b16 %v4387, %v4384
        %v4616 = vpack.c.b16 %v4388, %v4385
        %v4617 = vpack.c.b16 %v4389, %v4386
        %v4618 = vpack.c.b16 %v4393, %v4390
        %v4619 = vpack.c.b16 %v4394, %v4391
        %v4620 = vpack.c.b16 %v4395, %v4392
        %v4621 = vpack.c.b16 %v4399, %v4396
        %v4622 = vpack.c.b16 %v4400, %v4397
        %v4623 = vpack.c.b16 %v4401, %v4398
        %v4624 = vpack.c.b16 %v4405, %v4402
        %v4625 = vpack.c.b16 %v4406, %v4403
        %v4626 = vpack.c.b16 %v4407, %v4404
        %v4627 = vpack.c.b16 %v4411, %v4408
        %v4628 = vpack.c.b16 %v4412, %v4409
        %v4629 = vpack.c.b16 %v4413, %v4410
        %v4630 = vpack.c.b16 %v4417, %v4414
        %v4631 = vpack.c.b16 %v4418, %v4415
        %v4632 = vpack.c.b16 %v4419, %v4416
        %v4633 = vpack.c.b16 %v4423, %v4420
        %v4634 = vpack.c.b16 %v4424, %v4421
        %v4635 = vpack.c.b16 %v4425, %v4422
        %v4636 = vpack.c.b16 %v4429, %v4426
        %v4637 = vpack.c.b16 %v4430, %v4427
        %v4638 = vpack.c.b16 %v4431, %v4428
        %v4639 = vpack.c.b16 %v4435, %v4432
        %v4640 = vpack.c.b16 %v4436, %v4433
        %v4641 = vpack.c.b16 %v4437, %v4434
        %v4642 = vpack.c.b16 %v4441, %v4438
        %v4643 = vpack.c.b16 %v4442, %v4439
        %v4644 = vpack.c.b16 %v4443, %v4440
        %v4645 = vpack.c.b16 %v4447, %v4444
        %v4646 = vpack.c.b16 %v4448, %v4445
        %v4647 = vpack.c.b16 %v4449, %v4446
        %v4648 = vpack.c.b16 %v4453, %v4450
        %v4649 = vpack.c.b16 %v4454, %v4451
        %v4650 = vpack.c.b16 %v4455, %v4452
        %v4651 = vpack.c.b16 %v4459, %v4456
        %v4652 = vpack.c.b16 %v4460, %v4457
        %v4653 = vpack.c.b16 %v4461, %v4458
        %v4654 = vpack.c.b16 %v4465, %v4462
        %v4655 = vpack.c.b16 %v4466, %v4463
        %v4656 = vpack.c.b16 %v4467, %v4464
        %v4657 = vpack.c.b16 %v4471, %v4468
        %v4658 = vpack.c.b16 %v4472, %v4469
        %v4659 = vpack.c.b16 %v4473, %v4470
        %v4660 = vpack.c.b16 %v4477, %v4474
        %v4661 = vpack.c.b16 %v4478, %v4475
        %v4662 = vpack.c.b16 %v4479, %v4476
        %v4663 = vpack.c.b16 %v4483, %v4480
        %v4664 = vpack.c.b16 %v4484, %v4481
        %v4665 = vpack.c.b16 %v4485, %v4482
        %v4666 = vpack.c.b16 %v4489, %v4486
        %v4667 = vpack.c.b16 %v4490, %v4487
        %v4668 = vpack.c.b16 %v4491, %v4488
        %v4669 = vpack.c.b16 %v4495, %v4492
        %v4670 = vpack.c.b16 %v4496, %v4493
        %v4671 = vpack.c.b16 %v4497, %v4494
        %v4672 = vpack.c.b16 %v4501, %v4498
        %v4673 = vpack.c.b16 %v4502, %v4499
        %v4674 = vpack.c.b16 %v4503, %v4500
        %v4675 = vpack.c.b16 %v4507, %v4504
        %v4676 = vpack.c.b16 %v4508, %v4505
        %v4677 = vpack.c.b16 %v4509, %v4506
        %v4678 = vpack.c.b16 %v4513, %v4510
        %v4679 = vpack.c.b16 %v4514, %v4511
        %v4680 = vpack.c.b16 %v4515, %v4512
        %v4681 = vpack.c.b16 %v4519, %v4516
        %v4682 = vpack.c.b16 %v4520, %v4517
        %v4683 = vpack.c.b16 %v4521, %v4518
        %v4684 = vpack.c.b16 %v4525, %v4522
        %v4685 = vpack.c.b16 %v4526, %v4523
        %v4686 = vpack.c.b16 %v4527, %v4524
        %v4687 = vpack.c.b16 %v4531, %v4528
        %v4688 = vpack.c.b16 %v4532, %v4529
        %v4689 = vpack.c.b16 %v4533, %v4530
        %v4690 = vpack.c.b16 %v4537, %v4534
        %v4691 = vpack.c.b16 %v4538, %v4535
        %v4692 = vpack.c.b16 %v4539, %v4536
        %v4693 = vpack.c.b16 %v4543, %v4540
        %v4694 = vpack.c.b16 %v4544, %v4541
        %v4695 = vpack.c.b16 %v4545, %v4542
        %v4696 = vpack.c.b16 %v4549, %v4546
        %v4697 = vpack.c.b16 %v4550, %v4547
        %v4698 = vpack.c.b16 %v4551, %v4548
        %v4699 = vpack.c.b16 %v4555, %v4552
        %v4700 = vpack.c.b16 %v4556, %v4553
        %v4701 = vpack.c.b16 %v4557, %v4554
        %v4702 = vpack.c.b16 %v4561, %v4558
        %v4703 = vpack.c.b16 %v4562, %v4559
        %v4704 = vpack.c.b16 %v4563, %v4560
        %v4705 = vpack.c.b16 %v4567, %v4564
        %v4706 = vpack.c.b16 %v4568, %v4565
        %v4707 = vpack.c.b16 %v4569, %v4566
        %v4708 = vpack.c.b16 %v4573, %v4570
        %v4709 = vpack.c.b16 %v4574, %v4571
        %v4710 = vpack.c.b16 %v4575, %v4572
        %v4711 = vpack.c.b16 %v4579, %v4576
        %v4712 = vpack.c.b16 %v4580, %v4577
        %v4713 = vpack.c.b16 %v4581, %v4578
        %v4714 = vpack.c.b16 %v4585, %v4582
        %v4715 = vpack.c.b16 %v4586, %v4583
        %v4716 = vpack.c.b16 %v4587, %v4584
        %v4717 = vpack.c.b16 %v4591, %v4588
        %v4718 = vpack.c.b16 %v4592, %v4589
        %v4719 = vpack.c.b16 %v4593, %v4590
        %v4720 = vpack.c.b16 %v4597, %v4594
        %v4721 = vpack.c.b16 %v4598, %v4595
        %v4722 = vpack.c.b16 %v4599, %v4596
        %v4723 = vpack.c.b16 %v4603, %v4600
        %v4724 = vpack.c.b16 %v4604, %v4601
        %v4725 = vpack.c.b16 %v4605, %v4602
        %4846 = vmatprep.subr.bf16.mxu0 %v4628
        %4847 = vmatpush1.bf16.msra.mxu0 %v4627
        %4848 = vmatprep.subr.bf16.mxu0 %v4625
        %4849 = vmatpush1.bf16.msra.mxu0 %v4624
        %4850 = vmatprep.subr.bf16.mxu0 %v4622
        %4851 = vmatpush1.bf16.msra.mxu0 %v4621
        %4852 = vmatprep.subr.bf16.mxu0 %v4619
        %4853 = vmatpush1.bf16.msra.mxu0 %v4618
        %4854 = vmatprep.subr.bf16.mxu0 %v4616
        %4855 = vmatpush1.bf16.msra.mxu0 %v4615
        %4856 = vmatprep.subr.bf16.mxu0 %v4613
        %4857 = vmatpush1.bf16.msra.mxu0 %v4612
        %4858 = vmatprep.subr.bf16.mxu0 %v4610
        %4859 = vmatpush1.bf16.msra.mxu0 %v4609
        %4860 = vmatprep.subr.bf16.mxu0 %v4607
        %4861 = vmatpush1.bf16.msra.mxu0 %v4606
        %4862 = vmatprep.subr.bf16.mxu0 %v4652
        %4863 = vmatpush2.bf16.msra.mxu0 %v4651
        %4864 = vmatprep.subr.bf16.mxu0 %v4649
        %4865 = vmatpush2.bf16.msra.mxu0 %v4648
        %4866 = vmatprep.subr.bf16.mxu0 %v4646
        %4867 = vmatpush2.bf16.msra.mxu0 %v4645
        %4868 = vmatprep.subr.bf16.mxu0 %v4643
        %4869 = vmatpush2.bf16.msra.mxu0 %v4642
        %4870 = vmatprep.subr.bf16.mxu0 %v4640
        %4871 = vmatpush2.bf16.msra.mxu0 %v4639
        %4872 = vmatprep.subr.bf16.mxu0 %v4637
        %4873 = vmatpush2.bf16.msra.mxu0 %v4636
        %4874 = vmatprep.subr.bf16.mxu0 %v4634
        %4875 = vmatpush2.bf16.msra.mxu0 %v4633
        %4876 = vmatprep.subr.bf16.mxu0 %v4631
        %4877 = vmatpush2.bf16.msra.mxu0 %v4630
        %4878 = vmatprep.mubr.bf16.mxu0 %v4019
        %4879 = vmatmul.mubr.bf16.gmra.mxu0 %v4018
        %v4880 = vpop.f32.mrf.mxu0
        %v4881 = vadd.f32 %v4194, %v4880
        %v4882 = vpop.f32.mrf.mxu0
        %v4883 = vadd.f32 %v4198, %v4882
        %v4884 = vpop.f32.mrf.mxu0
        %v4885 = vadd.f32 %v4194, %v4884
        %v4886 = vpop.f32.mrf.mxu0
        %v4887 = vadd.f32 %v4198, %v4886
        %4888 = vmatprep.mubr.bf16.mxu0 %v4024
        %4889 = vmatmul.mubr.bf16.gmra.mxu0 %v4023
        %v4890 = vpop.f32.mrf.mxu0
        %v4891 = vadd.f32 %v4194, %v4890
        %v4892 = vpop.f32.mrf.mxu0
        %v4893 = vadd.f32 %v4198, %v4892
        %v4894 = vpop.f32.mrf.mxu0
        %v4895 = vadd.f32 %v4194, %v4894
        %v4896 = vpop.f32.mrf.mxu0
        %v4897 = vadd.f32 %v4198, %v4896
        %4898 = vdwg.mxu0
        %4899 = vmatprep.subr.bf16.mxu0 %v4676
        %4900 = vmatpush1.bf16.msra.mxu0 %v4675
        %4901 = vmatprep.subr.bf16.mxu0 %v4673
        %4902 = vmatpush1.bf16.msra.mxu0 %v4672
        %4903 = vmatprep.subr.bf16.mxu0 %v4670
        %4904 = vmatpush1.bf16.msra.mxu0 %v4669
        %4905 = vmatprep.subr.bf16.mxu0 %v4667
        %4906 = vmatpush1.bf16.msra.mxu0 %v4666
        %4907 = vmatprep.subr.bf16.mxu0 %v4664
        %4908 = vmatpush1.bf16.msra.mxu0 %v4663
        %4909 = vmatprep.subr.bf16.mxu0 %v4661
        %4910 = vmatpush1.bf16.msra.mxu0 %v4660
        %4911 = vmatprep.subr.bf16.mxu0 %v4658
        %4912 = vmatpush1.bf16.msra.mxu0 %v4657
        %4913 = vmatprep.subr.bf16.mxu0 %v4655
        %4914 = vmatpush1.bf16.msra.mxu0 %v4654
        %4915 = vmatprep.subr.bf16.mxu0 %v4700
        %4916 = vmatpush2.bf16.msra.mxu0 %v4699
        %4917 = vmatprep.subr.bf16.mxu0 %v4697
        %4918 = vmatpush2.bf16.msra.mxu0 %v4696
        %4919 = vmatprep.subr.bf16.mxu0 %v4694
        %4920 = vmatpush2.bf16.msra.mxu0 %v4693
        %4921 = vmatprep.subr.bf16.mxu0 %v4691
        %4922 = vmatpush2.bf16.msra.mxu0 %v4690
        %4923 = vmatprep.subr.bf16.mxu0 %v4688
        %4924 = vmatpush2.bf16.msra.mxu0 %v4687
        %4925 = vmatprep.subr.bf16.mxu0 %v4685
        %4926 = vmatpush2.bf16.msra.mxu0 %v4684
        %4927 = vmatprep.subr.bf16.mxu0 %v4682
        %4928 = vmatpush2.bf16.msra.mxu0 %v4681
        %4929 = vmatprep.subr.bf16.mxu0 %v4679
        %4930 = vmatpush2.bf16.msra.mxu0 %v4678
        %4931 = vmatprep.mubr.bf16.mxu0 %v4021
        %4932 = vmatmul.mubr.bf16.gmra.mxu0 %v4020
        %v4933 = vpop.f32.mrf.mxu0
        %v4934 = vadd.f32 %v4881, %v4933
        %v4935 = vpop.f32.mrf.mxu0
        %v4936 = vadd.f32 %v4883, %v4935
        %v4937 = vpop.f32.mrf.mxu0
        %v4938 = vadd.f32 %v4885, %v4937
        %v4939 = vpop.f32.mrf.mxu0
        %v4940 = vadd.f32 %v4887, %v4939
        %4941 = vmatprep.mubr.bf16.mxu0 %v4026
        %4942 = vmatmul.mubr.bf16.gmra.mxu0 %v4025
        %v4943 = vpop.f32.mrf.mxu0
        %v4944 = vadd.f32 %v4891, %v4943
        %v4945 = vpop.f32.mrf.mxu0
        %v4946 = vadd.f32 %v4893, %v4945
        %v4947 = vpop.f32.mrf.mxu0
        %v4948 = vadd.f32 %v4895, %v4947
        %v4949 = vpop.f32.mrf.mxu0
        %v4950 = vadd.f32 %v4897, %v4949
        %4951 = vdwg.mxu0
        %4952 = vmatprep.subr.bf16.mxu0 %v4724
        %4953 = vmatpush1.bf16.msra.mxu0 %v4723
        %4954 = vmatprep.subr.bf16.mxu0 %v4721
        %4955 = vmatpush1.bf16.msra.mxu0 %v4720
        %4956 = vmatprep.subr.bf16.mxu0 %v4718
        %4957 = vmatpush1.bf16.msra.mxu0 %v4717
        %4958 = vmatprep.subr.bf16.mxu0 %v4715
        %4959 = vmatpush1.bf16.msra.mxu0 %v4714
        %4960 = vmatprep.subr.bf16.mxu0 %v4712
        %4961 = vmatpush1.bf16.msra.mxu0 %v4711
        %4962 = vmatprep.subr.bf16.mxu0 %v4709
        %4963 = vmatpush1.bf16.msra.mxu0 %v4708
        %4964 = vmatprep.subr.bf16.mxu0 %v4706
        %4965 = vmatpush1.bf16.msra.mxu0 %v4705
        %4966 = vmatprep.subr.bf16.mxu0 %v4703
        %4967 = vmatpush1.bf16.msra.mxu0 %v4702
        %4968 = vmatprep.subr.bf16.mxu0 0
        %4969 = vmatpush2.bf16.msra.mxu0 0
        %4970 = vmatprep.subr.bf16.mxu0 0
        %4971 = vmatpush2.bf16.msra.mxu0 0
        %4972 = vmatprep.subr.bf16.mxu0 0
        %4973 = vmatpush2.bf16.msra.mxu0 0
        %4974 = vmatprep.subr.bf16.mxu0 0
        %4975 = vmatpush2.bf16.msra.mxu0 0
        %4976 = vmatprep.subr.bf16.mxu0 0
        %4977 = vmatpush2.bf16.msra.mxu0 0
        %4978 = vmatprep.subr.bf16.mxu0 0
        %4979 = vmatpush2.bf16.msra.mxu0 0
        %4980 = vmatprep.subr.bf16.mxu0 0
        %4981 = vmatpush2.bf16.msra.mxu0 0
        %4982 = vmatprep.subr.bf16.mxu0 0
        %4983 = vmatpush2.bf16.msra.mxu0 0
        %4984 = vmatprep.mubr.bf16.mxu0 0
        %4985 = vmatmul.mubr.bf16.gmra.mxu0 %v4022
        %v4986 = vpop.f32.mrf.mxu0
        %v4987 = vadd.f32 %v4934, %v4986
        %v4988 = vpop.f32.mrf.mxu0
        %v4989 = vadd.f32 %v4936, %v4988
        %v4990 = vpop.f32.mrf.mxu0
        %v4991 = vadd.f32 %v4938, %v4990
        %v4992 = vpop.f32.mrf.mxu0
        %v4993 = vadd.f32 %v4940, %v4992
        %4994 = vmatprep.mubr.bf16.mxu0 0
        %4995 = vmatmul.mubr.bf16.gmra.mxu0 %v4027
        %v4996 = vpop.f32.mrf.mxu0
        %v4997 = vadd.f32 %v4944, %v4996
        %v4998 = vpop.f32.mrf.mxu0
        %v4999 = vadd.f32 %v4946, %v4998
        %v5000 = vpop.f32.mrf.mxu0
        %v5001 = vadd.f32 %v4948, %v5000
        %v5002 = vpop.f32.mrf.mxu0
        %v5003 = vadd.f32 %v4950, %v5002
        %5004 = vdwg.mxu0
        %5005 = vmatprep.subr.bf16.mxu0 0
        %5006 = vmatpush1.bf16.msra.mxu0 %v4629
        %5007 = vmatprep.subr.bf16.mxu0 0
        %5008 = vmatpush1.bf16.msra.mxu0 %v4626
        %5009 = vmatprep.subr.bf16.mxu0 0
        %5010 = vmatpush1.bf16.msra.mxu0 %v4623
        %5011 = vmatprep.subr.bf16.mxu0 0
        %5012 = vmatpush1.bf16.msra.mxu0 %v4620
        %5013 = vmatprep.subr.bf16.mxu0 0
        %5014 = vmatpush1.bf16.msra.mxu0 %v4617
        %5015 = vmatprep.subr.bf16.mxu0 0
        %5016 = vmatpush1.bf16.msra.mxu0 %v4614
        %5017 = vmatprep.subr.bf16.mxu0 0
        %5018 = vmatpush1.bf16.msra.mxu0 %v4611
        %5019 = vmatprep.subr.bf16.mxu0 0
        %5020 = vmatpush1.bf16.msra.mxu0 %v4608
        %5021 = vmatprep.subr.bf16.mxu0 0
        %5022 = vmatpush2.bf16.msra.mxu0 %v4653
        %5023 = vmatprep.subr.bf16.mxu0 0
        %5024 = vmatpush2.bf16.msra.mxu0 %v4650
        %5025 = vmatprep.subr.bf16.mxu0 0
        %5026 = vmatpush2.bf16.msra.mxu0 %v4647
        %5027 = vmatprep.subr.bf16.mxu0 0
        %5028 = vmatpush2.bf16.msra.mxu0 %v4644
        %5029 = vmatprep.subr.bf16.mxu0 0
        %5030 = vmatpush2.bf16.msra.mxu0 %v4641
        %5031 = vmatprep.subr.bf16.mxu0 0
        %5032 = vmatpush2.bf16.msra.mxu0 %v4638
        %5033 = vmatprep.subr.bf16.mxu0 0
        %5034 = vmatpush2.bf16.msra.mxu0 %v4635
        %5035 = vmatprep.subr.bf16.mxu0 0
        %5036 = vmatpush2.bf16.msra.mxu0 %v4632
        %5037 = vmatprep.mubr.bf16.mxu0 %v4019
        %5038 = vmatmul.mubr.bf16.gmra.mxu0 %v4018
        %v5039 = vpop.f32.mrf.mxu0
        %v5040 = vadd.f32 %v4202, %v5039
        %v5041 = vpop.f32.mrf.mxu0
        %v5042 = vpop.f32.mrf.mxu0
        %v5043 = vadd.f32 %v4202, %v5042
        %v5044 = vpop.f32.mrf.mxu0
        %5045 = vmatprep.mubr.bf16.mxu0 %v4024
        %5046 = vmatmul.mubr.bf16.gmra.mxu0 %v4023
        %v5047 = vpop.f32.mrf.mxu0
        %v5048 = vadd.f32 %v4202, %v5047
        %v5049 = vpop.f32.mrf.mxu0
        %v5050 = vpop.f32.mrf.mxu0
        %v5051 = vadd.f32 %v4202, %v5050
        %v5052 = vpop.f32.mrf.mxu0
        %5053 = vdwg.mxu0
        %5054 = vmatprep.subr.bf16.mxu0 0
        %5055 = vmatpush1.bf16.msra.mxu0 %v4677
        %5056 = vmatprep.subr.bf16.mxu0 0
        %5057 = vmatpush1.bf16.msra.mxu0 %v4674
        %5058 = vmatprep.subr.bf16.mxu0 0
        %5059 = vmatpush1.bf16.msra.mxu0 %v4671
        %5060 = vmatprep.subr.bf16.mxu0 0
        %5061 = vmatpush1.bf16.msra.mxu0 %v4668
        %5062 = vmatprep.subr.bf16.mxu0 0
        %5063 = vmatpush1.bf16.msra.mxu0 %v4665
        %5064 = vmatprep.subr.bf16.mxu0 0
        %5065 = vmatpush1.bf16.msra.mxu0 %v4662
        %5066 = vmatprep.subr.bf16.mxu0 0
        %5067 = vmatpush1.bf16.msra.mxu0 %v4659
        %5068 = vmatprep.subr.bf16.mxu0 0
        %5069 = vmatpush1.bf16.msra.mxu0 %v4656
        %5070 = vmatprep.subr.bf16.mxu0 0
        %5071 = vmatpush2.bf16.msra.mxu0 %v4701
        %5072 = vmatprep.subr.bf16.mxu0 0
        %5073 = vmatpush2.bf16.msra.mxu0 %v4698
        %5074 = vmatprep.subr.bf16.mxu0 0
        %5075 = vmatpush2.bf16.msra.mxu0 %v4695
        %5076 = vmatprep.subr.bf16.mxu0 0
        %5077 = vmatpush2.bf16.msra.mxu0 %v4692
        %5078 = vmatprep.subr.bf16.mxu0 0
        %5079 = vmatpush2.bf16.msra.mxu0 %v4689
        %5080 = vmatprep.subr.bf16.mxu0 0
        %5081 = vmatpush2.bf16.msra.mxu0 %v4686
        %5082 = vmatprep.subr.bf16.mxu0 0
        %5083 = vmatpush2.bf16.msra.mxu0 %v4683
        %5084 = vmatprep.subr.bf16.mxu0 0
        %5085 = vmatpush2.bf16.msra.mxu0 %v4680
        %5086 = vmatprep.mubr.bf16.mxu0 %v4021
        %5087 = vmatmul.mubr.bf16.gmra.mxu0 %v4020
        %v5088 = vpop.f32.mrf.mxu0
        %v5089 = vadd.f32 %v5040, %v5088
        %v5090 = vpop.f32.mrf.mxu0
        %v5091 = vpop.f32.mrf.mxu0
        %v5092 = vadd.f32 %v5043, %v5091
        %v5093 = vpop.f32.mrf.mxu0
        %5094 = vmatprep.mubr.bf16.mxu0 %v4026
        %5095 = vmatmul.mubr.bf16.gmra.mxu0 %v4025
        %v5096 = vpop.f32.mrf.mxu0
        %v5097 = vadd.f32 %v5048, %v5096
        %v5098 = vpop.f32.mrf.mxu0
        %v5099 = vpop.f32.mrf.mxu0
        %v5100 = vadd.f32 %v5051, %v5099
        %v5101 = vpop.f32.mrf.mxu0
        %5102 = vdwg.mxu0
        %5103 = vmatprep.subr.bf16.mxu0 0
        %5104 = vmatpush1.bf16.msra.mxu0 %v4725
        %5105 = vmatprep.subr.bf16.mxu0 0
        %5106 = vmatpush1.bf16.msra.mxu0 %v4722
        %5107 = vmatprep.subr.bf16.mxu0 0
        %5108 = vmatpush1.bf16.msra.mxu0 %v4719
        %5109 = vmatprep.subr.bf16.mxu0 0
        %5110 = vmatpush1.bf16.msra.mxu0 %v4716
        %5111 = vmatprep.subr.bf16.mxu0 0
        %5112 = vmatpush1.bf16.msra.mxu0 %v4713
        %5113 = vmatprep.subr.bf16.mxu0 0
        %5114 = vmatpush1.bf16.msra.mxu0 %v4710
        %5115 = vmatprep.subr.bf16.mxu0 0
        %5116 = vmatpush1.bf16.msra.mxu0 %v4707
        %5117 = vmatprep.subr.bf16.mxu0 0
        %5118 = vmatpush1.bf16.msra.mxu0 %v4704
        %5119 = vmatprep.subr.bf16.mxu0 0
        %5120 = vmatpush2.bf16.msra.mxu0 0
        %5121 = vmatprep.subr.bf16.mxu0 0
        %5122 = vmatpush2.bf16.msra.mxu0 0
        %5123 = vmatprep.subr.bf16.mxu0 0
        %5124 = vmatpush2.bf16.msra.mxu0 0
        %5125 = vmatprep.subr.bf16.mxu0 0
        %5126 = vmatpush2.bf16.msra.mxu0 0
        %5127 = vmatprep.subr.bf16.mxu0 0
        %5128 = vmatpush2.bf16.msra.mxu0 0
        %5129 = vmatprep.subr.bf16.mxu0 0
        %5130 = vmatpush2.bf16.msra.mxu0 0
        %5131 = vmatprep.subr.bf16.mxu0 0
        %5132 = vmatpush2.bf16.msra.mxu0 0
        %5133 = vmatprep.subr.bf16.mxu0 0
        %5134 = vmatpush2.bf16.msra.mxu0 0
        %5135 = vmatprep.mubr.bf16.mxu0 0
        %5136 = vmatmul.mubr.bf16.gmra.mxu0 %v4022
        %v5137 = vpop.f32.mrf.mxu0
        %v5138 = vadd.f32 %v5089, %v5137
        %v5139 = vpop.f32.mrf.mxu0
        %v5140 = vpop.f32.mrf.mxu0
        %v5141 = vadd.f32 %v5092, %v5140
        %v5142 = vpop.f32.mrf.mxu0
        %5143 = vmatprep.mubr.bf16.mxu0 0
        %5144 = vmatmul.mubr.bf16.gmra.mxu0 %v4027
        %v5145 = vpop.f32.mrf.mxu0
        %v5146 = vadd.f32 %v5097, %v5145
        %v5147 = vpop.f32.mrf.mxu0
        %v5148 = vpop.f32.mrf.mxu0
        %v5149 = vadd.f32 %v5100, %v5148
        %v5150 = vpop.f32.mrf.mxu0
        %5151 = vdwg.mxu0
        %v5152 = vmin.f32 %v4987, 20.0
        %v5153 = vmin.f32 %v4991, 20.0
        %v5154 = vmin.f32 %v4997, 20.0
        %v5155 = vmin.f32 %v5001, 20.0
        %v5156 = vmul.f32 %v5152, 1.442695
        %v5157 = vpow.pop %v5156
        %v5158 = vmul.f32 %v5153, 1.442695
        %v5159 = vpow.pop %v5158
        %v5160 = vmul.f32 %v5154, 1.442695
        %v5161 = vpow.pop %v5160
        %v5162 = vmul.f32 %v5155, 1.442695
        %v5163 = vpow.pop %v5162
        %v5164 = vadd.f32 %v5157, 2.0
        %v5165 = vadd.f32 %v5159, 2.0
        %v5166 = vadd.f32 %v5161, 2.0
        %v5167 = vadd.f32 %v5163, 2.0
        %v5168 = vmul.f32 %v5157, %v5164
        %v5169 = vmul.f32 %v5159, %v5165
        %v5170 = vmul.f32 %v5161, %v5166
        %v5171 = vmul.f32 %v5163, %v5167
        %v5172 = vmul.f32 %v4987, %v5168
        %v5173 = vmul.f32 %v4991, %v5169
        %v5174 = vmul.f32 %v4997, %v5170
        %v5175 = vmul.f32 %v5001, %v5171
        %v5176 = vadd.f32 %v5168, 2.0
        %v5177 = vadd.f32 %v5169, 2.0
        %v5178 = vadd.f32 %v5170, 2.0
        %v5179 = vadd.f32 %v5171, 2.0
        %v5180 = vrcp.pop %v5176
        %v5181 = vrcp.pop %v5177
        %v5182 = vrcp.pop %v5178
        %v5183 = vrcp.pop %v5179
        %v5184 = vmul.f32 %v5172, %v5180
        %v5185 = vmul.f32 %v5173, %v5181
        %v5186 = vmul.f32 %v5174, %v5182
        %v5187 = vmul.f32 %v5175, %v5183
        %v5188 = vmin.f32 %v4989, 20.0
        %v5189 = vmin.f32 %v4993, 20.0
        %v5190 = vmin.f32 %v4999, 20.0
        %v5191 = vmin.f32 %v5003, 20.0
        %v5192 = vmul.f32 %v5188, 1.442695
        %v5193 = vpow.pop %v5192
        %v5194 = vmul.f32 %v5189, 1.442695
        %v5195 = vpow.pop %v5194
        %v5196 = vmul.f32 %v5190, 1.442695
        %v5197 = vpow.pop %v5196
        %v5198 = vmul.f32 %v5191, 1.442695
        %v5199 = vpow.pop %v5198
        %v5200 = vadd.f32 %v5193, 2.0
        %v5201 = vadd.f32 %v5195, 2.0
        %v5202 = vadd.f32 %v5197, 2.0
        %v5203 = vadd.f32 %v5199, 2.0
        %v5204 = vmul.f32 %v5193, %v5200
        %v5205 = vmul.f32 %v5195, %v5201
        %v5206 = vmul.f32 %v5197, %v5202
        %v5207 = vmul.f32 %v5199, %v5203
        %v5208 = vmul.f32 %v4989, %v5204
        %v5209 = vmul.f32 %v4993, %v5205
        %v5210 = vmul.f32 %v4999, %v5206
        %v5211 = vmul.f32 %v5003, %v5207
        %v5212 = vadd.f32 %v5204, 2.0
        %v5213 = vadd.f32 %v5205, 2.0
        %v5214 = vadd.f32 %v5206, 2.0
        %v5215 = vadd.f32 %v5207, 2.0
        %v5216 = vrcp.pop %v5212
        %v5217 = vrcp.pop %v5213
        %v5218 = vrcp.pop %v5214
        %v5219 = vrcp.pop %v5215
        %v5220 = vmul.f32 %v5208, %v5216
        %v5221 = vmul.f32 %v5209, %v5217
        %v5222 = vmul.f32 %v5210, %v5218
        %v5223 = vmul.f32 %v5211, %v5219
        %v5224 = vadd.f32 %v5184, %v5220
        %v5225 = vadd.f32 %v5185, %v5221
        %v5226 = vadd.f32 %v5186, %v5222
        %v5227 = vadd.f32 %v5187, %v5223
        %v5228 = vmin.f32 %v5138, 20.0
        %v5229 = vmin.f32 %v5141, 20.0
        %v5230 = vmin.f32 %v5146, 20.0
        %v5231 = vmin.f32 %v5149, 20.0
        %v5232 = vmul.f32 %v5228, 1.442695
        %v5233 = vpow.pop %v5232
        %v5234 = vmul.f32 %v5229, 1.442695
        %v5235 = vpow.pop %v5234
        %v5236 = vmul.f32 %v5230, 1.442695
        %v5237 = vpow.pop %v5236
        %v5238 = vmul.f32 %v5231, 1.442695
        %v5239 = vpow.pop %v5238
        %v5240 = vadd.f32 %v5233, 2.0
        %v5241 = vadd.f32 %v5235, 2.0
        %v5242 = vadd.f32 %v5237, 2.0
        %v5243 = vadd.f32 %v5239, 2.0
        %v5244 = vmul.f32 %v5233, %v5240
        %v5245 = vmul.f32 %v5235, %v5241
        %v5246 = vmul.f32 %v5237, %v5242
        %v5247 = vmul.f32 %v5239, %v5243
        %v5248 = vmul.f32 %v5138, %v5244
        %v5249 = vmul.f32 %v5141, %v5245
        %v5250 = vmul.f32 %v5146, %v5246
        %v5251 = vmul.f32 %v5149, %v5247
        %v5252 = vadd.f32 %v5244, 2.0
        %v5253 = vadd.f32 %v5245, 2.0
        %v5254 = vadd.f32 %v5246, 2.0
        %v5255 = vadd.f32 %v5247, 2.0
        %v5256 = vrcp.pop %v5252
        %v5257 = vrcp.pop %v5253
        %v5258 = vrcp.pop %v5254
        %v5259 = vrcp.pop %v5255
        %v5260 = vmul.f32 %v5248, %v5256
        %v5261 = vmul.f32 %v5249, %v5257
        %v5262 = vmul.f32 %v5250, %v5258
        %v5263 = vmul.f32 %v5251, %v5259
        %v5264 = vadd.f32 %v5224, %v5260
        %v5265 = vadd.f32 %v5225, %v5261
        %v5266 = vadd.f32 %v5226, %v5262
        %v5267 = vadd.f32 %v5227, %v5263
        %5268 = vst [vmem:[#allocation2 + $0x8] sm:$0xff] %v5264
        %5269 = vst [vmem:[#allocation2 + $0x10] sm:$0xff] %v5265
        %5270 = vst [vmem:[#allocation2 + $0x28] sm:$0xff] %v5266
        %5271 = vst [vmem:[#allocation2 + $0x30] sm:$0xff] %v5267
        %v5272 = vld [vmem:[#allocation2] sm:$0xff]
        %v5273 = vld [vmem:[#allocation2 + $0x8] sm:$0xff]
        %v5274 = vld [vmem:[#allocation2 + $0x10] sm:$0xff]
        %v5275 = vld [vmem:[#allocation2 + $0x18] sm:$0xff]
        %v5276 = vld [vmem:[#allocation2 + $0x20] sm:$0xff]
        %v5277 = vld [vmem:[#allocation2 + $0x28] sm:$0xff]
        %v5278 = vld [vmem:[#allocation2 + $0x30] sm:$0xff]
        %v5279 = vld [vmem:[#allocation2 + $0x38] sm:$0xff]
        %v5286 = vrot.slane %v5272, 6
        %v5287 = vrot.slane %v5273, 6
        %v5288 = vsel %vm535, %v5286, %v5287
        %v5289 = vrot.slane %v5274, 6
        %v5290 = vsel %vm535, %v5287, %v5289
        %v5291 = vrot.slane %v5276, 6
        %v5292 = vrot.slane %v5277, 6
        %v5293 = vsel %vm535, %v5291, %v5292
        %v5294 = vrot.slane %v5278, 6
        %v5295 = vsel %vm535, %v5292, %v5294
        %v5302 = vrot.slane %v5273, 2
        %v5303 = vrot.slane %v5274, 2
        %v5304 = vsel %vm582, %v5302, %v5303
        %v5305 = vrot.slane %v5275, 2
        %v5306 = vsel %vm582, %v5303, %v5305
        %v5307 = vrot.slane %v5277, 2
        %v5308 = vrot.slane %v5278, 2
        %v5309 = vsel %vm582, %v5307, %v5308
        %v5310 = vrot.slane %v5279, 2
        %v5311 = vsel %vm582, %v5308, %v5310
        %v5316 = vpack.c.bf16 %v5290, %v5288
        %v5317 = vpack.c.bf16 %v5274, %v5273
        %v5318 = vpack.c.bf16 %v5306, %v5304
        %v5319 = vpack.c.bf16 %v5295, %v5293
        %v5320 = vpack.c.bf16 %v5278, %v5277
        %v5321 = vpack.c.bf16 %v5311, %v5309
        %v5322 = vld [vmem:[#allocation18] sm:$0xf]
        %v5323 = vld [vmem:[#allocation18 + $0x4] sm:$0xf]
        %v5324 = vld [vmem:[#allocation18 + $0x8] sm:$0xf]
        %v5325 = vld [vmem:[#allocation18 + $0xc] sm:$0xf]
        %v5326 = vld [vmem:[#allocation18 + $0x10] sm:$0xf]
        %v5327 = vld [vmem:[#allocation18 + $0x14] sm:$0xf]
        %v5328 = vld [vmem:[#allocation18 + $0x18] sm:$0xf]
        %v5329 = vld [vmem:[#allocation18 + $0x1c] sm:$0xf]
        %v5330 = vld [vmem:[#allocation18 + $0x20] sm:$0xf]
        %v5331 = vld [vmem:[#allocation18 + $0x24] sm:$0xf]
        %v5332 = vld [vmem:[#allocation18 + $0x28] sm:$0xf]
        %v5333 = vld [vmem:[#allocation18 + $0x2c] sm:$0xf]
        %v5334 = vld [vmem:[#allocation18 + $0x30] sm:$0xf]
        %v5335 = vld [vmem:[#allocation18 + $0x34] sm:$0xf]
        %v5336 = vld [vmem:[#allocation18 + $0x38] sm:$0xf]
        %v5337 = vld [vmem:[#allocation18 + $0x3c] sm:$0xf]
        %v5338 = vld [vmem:[#allocation18 + $0x40] sm:$0xf]
        %v5339 = vld [vmem:[#allocation18 + $0x44] sm:$0xf]
        %v5340 = vld [vmem:[#allocation18 + $0x48] sm:$0xf]
        %v5341 = vld [vmem:[#allocation18 + $0x4c] sm:$0xf]
        %v5342 = vld [vmem:[#allocation18 + $0x50] sm:$0xf]
        %v5343 = vld [vmem:[#allocation18 + $0x54] sm:$0xf]
        %v5344 = vld [vmem:[#allocation18 + $0x58] sm:$0xf]
        %v5345 = vld [vmem:[#allocation18 + $0x5c] sm:$0xf]
        %v5346 = vld [vmem:[#allocation18 + $0x60] sm:$0xf]
        %v5347 = vld [vmem:[#allocation18 + $0x64] sm:$0xf]
        %v5348 = vld [vmem:[#allocation18 + $0x68] sm:$0xf]
        %v5349 = vld [vmem:[#allocation18 + $0x6c] sm:$0xf]
        %v5350 = vld [vmem:[#allocation18 + $0x70] sm:$0xf]
        %v5351 = vld [vmem:[#allocation18 + $0x74] sm:$0xf]
        %v5352 = vld [vmem:[#allocation18 + $0x78] sm:$0xf]
        %v5353 = vld [vmem:[#allocation18 + $0x7c] sm:$0xf]
        %v5354 = vld [vmem:[#allocation18 + $0x80] sm:$0xf]
        %v5355 = vld [vmem:[#allocation18 + $0x84] sm:$0xf]
        %v5356 = vld [vmem:[#allocation18 + $0x88] sm:$0xf]
        %v5357 = vld [vmem:[#allocation18 + $0x8c] sm:$0xf]
        %v5358 = vld [vmem:[#allocation18 + $0x90] sm:$0xf]
        %v5359 = vld [vmem:[#allocation18 + $0x94] sm:$0xf]
        %v5360 = vld [vmem:[#allocation18 + $0x98] sm:$0xf]
        %v5361 = vld [vmem:[#allocation18 + $0x9c] sm:$0xf]
        %v5362 = vld [vmem:[#allocation18 + $0xa0] sm:$0xf]
        %v5363 = vld [vmem:[#allocation18 + $0xa4] sm:$0xf]
        %v5364 = vld [vmem:[#allocation18 + $0xa8] sm:$0xf]
        %v5365 = vld [vmem:[#allocation18 + $0xac] sm:$0xf]
        %v5366 = vld [vmem:[#allocation18 + $0xb0] sm:$0xf]
        %v5367 = vld [vmem:[#allocation18 + $0xb4] sm:$0xf]
        %v5368 = vld [vmem:[#allocation18 + $0xb8] sm:$0xf]
        %v5369 = vld [vmem:[#allocation18 + $0xbc] sm:$0xf]
        %v5370 = vld [vmem:[#allocation8 + $0x2] sm:$0x1]
        %v5371 = vlaneseq
        %v5372 = vshrl.u32 %v5371, 7
        %v5373 = vsub.s32 0, %v5372
        %v5374 = vrot.slane %v5370, %v5373
        %v5423 = vunpack.c.l.b16 %v5322
        %v5424 = vunpack.c.l.b16 %v5323
        %v5425 = vunpack.c.l.b16 %v5324
        %v5426 = vunpack.c.l.b16 %v5325
        %v5427 = vunpack.c.l.b16 %v5326
        %v5428 = vunpack.c.l.b16 %v5327
        %v5429 = vunpack.c.l.b16 %v5328
        %v5430 = vunpack.c.l.b16 %v5329
        %v5431 = vunpack.c.l.b16 %v5330
        %v5432 = vunpack.c.l.b16 %v5331
        %v5433 = vunpack.c.l.b16 %v5332
        %v5434 = vunpack.c.l.b16 %v5333
        %v5435 = vunpack.c.l.b16 %v5334
        %v5436 = vunpack.c.l.b16 %v5335
        %v5437 = vunpack.c.l.b16 %v5336
        %v5438 = vunpack.c.l.b16 %v5337
        %v5439 = vunpack.c.l.b16 %v5338
        %v5440 = vunpack.c.l.b16 %v5339
        %v5441 = vunpack.c.l.b16 %v5340
        %v5442 = vunpack.c.l.b16 %v5341
        %v5443 = vunpack.c.l.b16 %v5342
        %v5444 = vunpack.c.l.b16 %v5343
        %v5445 = vunpack.c.l.b16 %v5344
        %v5446 = vunpack.c.l.b16 %v5345
        %v5447 = vunpack.c.l.b16 %v5346
        %v5448 = vunpack.c.l.b16 %v5347
        %v5449 = vunpack.c.l.b16 %v5348
        %v5450 = vunpack.c.l.b16 %v5349
        %v5451 = vunpack.c.l.b16 %v5350
        %v5452 = vunpack.c.l.b16 %v5351
        %v5453 = vunpack.c.l.b16 %v5352
        %v5454 = vunpack.c.l.b16 %v5353
        %v5455 = vunpack.c.l.b16 %v5354
        %v5456 = vunpack.c.l.b16 %v5355
        %v5457 = vunpack.c.l.b16 %v5356
        %v5458 = vunpack.c.l.b16 %v5357
        %v5459 = vunpack.c.l.b16 %v5358
        %v5460 = vunpack.c.l.b16 %v5359
        %v5461 = vunpack.c.l.b16 %v5360
        %v5462 = vunpack.c.l.b16 %v5361
        %v5463 = vunpack.c.l.b16 %v5362
        %v5464 = vunpack.c.l.b16 %v5363
        %v5465 = vunpack.c.l.b16 %v5364
        %v5466 = vunpack.c.l.b16 %v5365
        %v5467 = vunpack.c.l.b16 %v5366
        %v5468 = vunpack.c.l.b16 %v5367
        %v5469 = vunpack.c.l.b16 %v5368
        %v5470 = vunpack.c.l.b16 %v5369
        %v5471 = vpack.c.b16 %v5424, %v5423
        %v5472 = vpack.c.b16 %v5426, %v5425
        %v5473 = vpack.c.b16 %v5428, %v5427
        %v5474 = vpack.c.b16 %v5430, %v5429
        %v5475 = vpack.c.b16 %v5432, %v5431
        %v5476 = vpack.c.b16 %v5434, %v5433
        %v5477 = vpack.c.b16 %v5436, %v5435
        %v5478 = vpack.c.b16 %v5438, %v5437
        %v5479 = vpack.c.b16 %v5440, %v5439
        %v5480 = vpack.c.b16 %v5442, %v5441
        %v5481 = vpack.c.b16 %v5444, %v5443
        %v5482 = vpack.c.b16 %v5446, %v5445
        %v5483 = vpack.c.b16 %v5448, %v5447
        %v5484 = vpack.c.b16 %v5450, %v5449
        %v5485 = vpack.c.b16 %v5452, %v5451
        %v5486 = vpack.c.b16 %v5454, %v5453
        %v5487 = vpack.c.b16 %v5456, %v5455
        %v5488 = vpack.c.b16 %v5458, %v5457
        %v5489 = vpack.c.b16 %v5460, %v5459
        %v5490 = vpack.c.b16 %v5462, %v5461
        %v5491 = vpack.c.b16 %v5464, %v5463
        %v5492 = vpack.c.b16 %v5466, %v5465
        %v5493 = vpack.c.b16 %v5468, %v5467
        %v5494 = vpack.c.b16 %v5470, %v5469
        %5519 = vmatprep.subr.bf16.mxu0 0
        %5520 = vmatpush1.bf16.msra.mxu0 %v5478
        %5521 = vmatprep.subr.bf16.mxu0 0
        %5522 = vmatpush1.bf16.msra.mxu0 %v5477
        %5523 = vmatprep.subr.bf16.mxu0 0
        %5524 = vmatpush1.bf16.msra.mxu0 %v5476
        %5525 = vmatprep.subr.bf16.mxu0 0
        %5526 = vmatpush1.bf16.msra.mxu0 %v5475
        %5527 = vmatprep.subr.bf16.mxu0 0
        %5528 = vmatpush1.bf16.msra.mxu0 %v5474
        %5529 = vmatprep.subr.bf16.mxu0 0
        %5530 = vmatpush1.bf16.msra.mxu0 %v5473
        %5531 = vmatprep.subr.bf16.mxu0 0
        %5532 = vmatpush1.bf16.msra.mxu0 %v5472
        %5533 = vmatprep.subr.bf16.mxu0 0
        %5534 = vmatpush1.bf16.msra.mxu0 %v5471
        %5535 = vmatprep.subr.bf16.mxu0 0
        %5536 = vmatpush2.bf16.msra.mxu0 %v5486
        %5537 = vmatprep.subr.bf16.mxu0 0
        %5538 = vmatpush2.bf16.msra.mxu0 %v5485
        %5539 = vmatprep.subr.bf16.mxu0 0
        %5540 = vmatpush2.bf16.msra.mxu0 %v5484
        %5541 = vmatprep.subr.bf16.mxu0 0
        %5542 = vmatpush2.bf16.msra.mxu0 %v5483
        %5543 = vmatprep.subr.bf16.mxu0 0
        %5544 = vmatpush2.bf16.msra.mxu0 %v5482
        %5545 = vmatprep.subr.bf16.mxu0 0
        %5546 = vmatpush2.bf16.msra.mxu0 %v5481
        %5547 = vmatprep.subr.bf16.mxu0 0
        %5548 = vmatpush2.bf16.msra.mxu0 %v5480
        %5549 = vmatprep.subr.bf16.mxu0 0
        %5550 = vmatpush2.bf16.msra.mxu0 %v5479
        %5551 = vmatprep.mubr.bf16.mxu0 %v5317
        %5552 = vmatmul.mubr.bf16.gmra.mxu0 %v5316
        %v5553 = vpop.f32.mrf.mxu0
        %v5554 = vadd.f32 %v5374, %v5553
        %v5555 = vpop.f32.mrf.mxu0
        %v5556 = vpop.f32.mrf.mxu0
        %v5557 = vadd.f32 %v5374, %v5556
        %v5558 = vpop.f32.mrf.mxu0
        %5559 = vmatprep.mubr.bf16.mxu0 %v5320
        %5560 = vmatmul.mubr.bf16.gmra.mxu0 %v5319
        %v5561 = vpop.f32.mrf.mxu0
        %v5562 = vadd.f32 %v5374, %v5561
        %v5563 = vpop.f32.mrf.mxu0
        %v5564 = vpop.f32.mrf.mxu0
        %v5565 = vadd.f32 %v5374, %v5564
        %v5566 = vpop.f32.mrf.mxu0
        %5567 = vdwg.mxu0
        %5568 = vmatprep.subr.bf16.mxu0 0
        %5569 = vmatpush1.bf16.msra.mxu0 %v5494
        %5570 = vmatprep.subr.bf16.mxu0 0
        %5571 = vmatpush1.bf16.msra.mxu0 %v5493
        %5572 = vmatprep.subr.bf16.mxu0 0
        %5573 = vmatpush1.bf16.msra.mxu0 %v5492
        %5574 = vmatprep.subr.bf16.mxu0 0
        %5575 = vmatpush1.bf16.msra.mxu0 %v5491
        %5576 = vmatprep.subr.bf16.mxu0 0
        %5577 = vmatpush1.bf16.msra.mxu0 %v5490
        %5578 = vmatprep.subr.bf16.mxu0 0
        %5579 = vmatpush1.bf16.msra.mxu0 %v5489
        %5580 = vmatprep.subr.bf16.mxu0 0
        %5581 = vmatpush1.bf16.msra.mxu0 %v5488
        %5582 = vmatprep.subr.bf16.mxu0 0
        %5583 = vmatpush1.bf16.msra.mxu0 %v5487
        %5584 = vmatprep.subr.bf16.mxu0 0
        %5585 = vmatpush2.bf16.msra.mxu0 0
        %5586 = vmatprep.subr.bf16.mxu0 0
        %5587 = vmatpush2.bf16.msra.mxu0 0
        %5588 = vmatprep.subr.bf16.mxu0 0
        %5589 = vmatpush2.bf16.msra.mxu0 0
        %5590 = vmatprep.subr.bf16.mxu0 0
        %5591 = vmatpush2.bf16.msra.mxu0 0
        %5592 = vmatprep.subr.bf16.mxu0 0
        %5593 = vmatpush2.bf16.msra.mxu0 0
        %5594 = vmatprep.subr.bf16.mxu0 0
        %5595 = vmatpush2.bf16.msra.mxu0 0
        %5596 = vmatprep.subr.bf16.mxu0 0
        %5597 = vmatpush2.bf16.msra.mxu0 0
        %5598 = vmatprep.subr.bf16.mxu0 0
        %5599 = vmatpush2.bf16.msra.mxu0 0
        %5600 = vmatprep.mubr.bf16.mxu0 0
        %5601 = vmatmul.mubr.bf16.gmra.mxu0 %v5318
        %v5602 = vpop.f32.mrf.mxu0
        %v5603 = vadd.f32 %v5554, %v5602
        %v5604 = vpop.f32.mrf.mxu0
        %v5605 = vpop.f32.mrf.mxu0
        %v5606 = vadd.f32 %v5557, %v5605
        %v5607 = vpop.f32.mrf.mxu0
        %5608 = vmatprep.mubr.bf16.mxu0 0
        %5609 = vmatmul.mubr.bf16.gmra.mxu0 %v5321
        %v5610 = vpop.f32.mrf.mxu0
        %v5611 = vadd.f32 %v5562, %v5610
        %v5612 = vpop.f32.mrf.mxu0
        %v5613 = vpop.f32.mrf.mxu0
        %v5614 = vadd.f32 %v5565, %v5613
        %v5615 = vpop.f32.mrf.mxu0
        %5616 = vdwg.mxu0
        %v5617 = vmin.f32 %v5603, 20.0
        %v5618 = vmin.f32 %v5606, 20.0
        %v5619 = vmin.f32 %v5611, 20.0
        %v5620 = vmin.f32 %v5614, 20.0
        %v5621 = vmul.f32 %v5617, 1.442695
        %v5622 = vpow.pop %v5621
        %v5623 = vmul.f32 %v5618, 1.442695
        %v5624 = vpow.pop %v5623
        %v5625 = vmul.f32 %v5619, 1.442695
        %v5626 = vpow.pop %v5625
        %v5627 = vmul.f32 %v5620, 1.442695
        %v5628 = vpow.pop %v5627
        %v5629 = vadd.f32 %v5622, 2.0
        %v5630 = vadd.f32 %v5624, 2.0
        %v5631 = vadd.f32 %v5626, 2.0
        %v5632 = vadd.f32 %v5628, 2.0
        %v5633 = vmul.f32 %v5622, %v5629
        %v5634 = vmul.f32 %v5624, %v5630
        %v5635 = vmul.f32 %v5626, %v5631
        %v5636 = vmul.f32 %v5628, %v5632
        %v5637 = vmul.f32 %v5603, %v5633
        %v5638 = vmul.f32 %v5606, %v5634
        %v5639 = vmul.f32 %v5611, %v5635
        %v5640 = vmul.f32 %v5614, %v5636
        %v5641 = vadd.f32 %v5633, 2.0
        %v5642 = vadd.f32 %v5634, 2.0
        %v5643 = vadd.f32 %v5635, 2.0
        %v5644 = vadd.f32 %v5636, 2.0
        %v5645 = vrcp.pop %v5641
        %v5646 = vrcp.pop %v5642
        %v5647 = vrcp.pop %v5643
        %v5648 = vrcp.pop %v5644
        %v5649 = vmul.f32 %v5637, %v5645
        %v5650 = vmul.f32 %v5638, %v5646
        %v5651 = vmul.f32 %v5639, %v5647
        %v5652 = vmul.f32 %v5640, %v5648
        %5653 = vst [vmem:[#allocation2 + $0x8] sm:$0xff] %v5649
        %5654 = vst [vmem:[#allocation2 + $0x10] sm:$0xff] %v5650
        %5655 = vst [vmem:[#allocation2 + $0x28] sm:$0xff] %v5651
        %5656 = vst [vmem:[#allocation2 + $0x30] sm:$0xff] %v5652
        %v5657 = vld [vmem:[#allocation2] sm:$0xff]
        %v5658 = vld [vmem:[#allocation2 + $0x8] sm:$0xff]
        %v5659 = vld [vmem:[#allocation2 + $0x10] sm:$0xff]
        %v5660 = vld [vmem:[#allocation2 + $0x18] sm:$0xff]
        %v5661 = vld [vmem:[#allocation2 + $0x20] sm:$0xff]
        %v5662 = vld [vmem:[#allocation2 + $0x28] sm:$0xff]
        %v5663 = vld [vmem:[#allocation2 + $0x30] sm:$0xff]
        %v5664 = vld [vmem:[#allocation2 + $0x38] sm:$0xff]
        %v5671 = vrot.slane %v5657, 6
        %v5672 = vrot.slane %v5658, 6
        %v5673 = vsel %vm535, %v5671, %v5672
        %v5674 = vrot.slane %v5659, 6
        %v5675 = vsel %vm535, %v5672, %v5674
        %v5676 = vrot.slane %v5661, 6
        %v5677 = vrot.slane %v5662, 6
        %v5678 = vsel %vm535, %v5676, %v5677
        %v5679 = vrot.slane %v5663, 6
        %v5680 = vsel %vm535, %v5677, %v5679
        %v5685 = vrot.slane %v5657, 7
        %v5686 = vrot.slane %v5658, 7
        %v5687 = vsel %vm550, %v5685, %v5686
        %v5688 = vrot.slane %v5659, 7
        %v5689 = vsel %vm550, %v5686, %v5688
        %v5690 = vrot.slane %v5661, 7
        %v5691 = vrot.slane %v5662, 7
        %v5692 = vsel %vm550, %v5690, %v5691
        %v5693 = vrot.slane %v5663, 7
        %v5694 = vsel %vm550, %v5691, %v5693
        %v5701 = vrot.slane %v5658, 1
        %v5702 = vrot.slane %v5659, 1
        %v5703 = vsel %vm567, %v5701, %v5702
        %v5704 = vrot.slane %v5660, 1
        %v5705 = vsel %vm567, %v5702, %v5704
        %v5706 = vrot.slane %v5662, 1
        %v5707 = vrot.slane %v5663, 1
        %v5708 = vsel %vm567, %v5706, %v5707
        %v5709 = vrot.slane %v5664, 1
        %v5710 = vsel %vm567, %v5707, %v5709
        %v5715 = vrot.slane %v5658, 2
        %v5716 = vrot.slane %v5659, 2
        %v5717 = vsel %vm582, %v5715, %v5716
        %v5718 = vrot.slane %v5660, 2
        %v5719 = vsel %vm582, %v5716, %v5718
        %v5720 = vrot.slane %v5662, 2
        %v5721 = vrot.slane %v5663, 2
        %v5722 = vsel %vm582, %v5720, %v5721
        %v5723 = vrot.slane %v5664, 2
        %v5724 = vsel %vm582, %v5721, %v5723
        %v5729 = vpack.c.bf16 %v5675, %v5673
        %v5730 = vpack.c.bf16 %v5689, %v5687
        %v5731 = vpack.c.bf16 %v5659, %v5658
        %v5732 = vpack.c.bf16 %v5705, %v5703
        %v5733 = vpack.c.bf16 %v5719, %v5717
        %v5734 = vpack.c.bf16 %v5680, %v5678
        %v5735 = vpack.c.bf16 %v5694, %v5692
        %v5736 = vpack.c.bf16 %v5663, %v5662
        %v5737 = vpack.c.bf16 %v5710, %v5708
        %v5738 = vpack.c.bf16 %v5724, %v5722
        %v5739 = vld [vmem:[#allocation14] sm:$0xff]
        %v5740 = vld [vmem:[#allocation14 + $0x8] sm:$0xf]
        %v5741 = vld [vmem:[#allocation14 + $0xc] sm:$0xff]
        %v5742 = vld [vmem:[#allocation14 + $0x14] sm:$0xf]
        %v5743 = vld [vmem:[#allocation14 + $0x18] sm:$0xff]
        %v5744 = vld [vmem:[#allocation14 + $0x20] sm:$0xf]
        %v5745 = vld [vmem:[#allocation14 + $0x24] sm:$0xff]
        %v5746 = vld [vmem:[#allocation14 + $0x2c] sm:$0xf]
        %v5747 = vld [vmem:[#allocation14 + $0x30] sm:$0xff]
        %v5748 = vld [vmem:[#allocation14 + $0x38] sm:$0xf]
        %v5749 = vld [vmem:[#allocation14 + $0x3c] sm:$0xff]
        %v5750 = vld [vmem:[#allocation14 + $0x44] sm:$0xf]
        %v5751 = vld [vmem:[#allocation14 + $0x48] sm:$0xff]
        %v5752 = vld [vmem:[#allocation14 + $0x50] sm:$0xf]
        %v5753 = vld [vmem:[#allocation14 + $0x54] sm:$0xff]
        %v5754 = vld [vmem:[#allocation14 + $0x5c] sm:$0xf]
        %v5755 = vld [vmem:[#allocation14 + $0x60] sm:$0xff]
        %v5756 = vld [vmem:[#allocation14 + $0x68] sm:$0xf]
        %v5757 = vld [vmem:[#allocation14 + $0x6c] sm:$0xff]
        %v5758 = vld [vmem:[#allocation14 + $0x74] sm:$0xf]
        %v5759 = vld [vmem:[#allocation14 + $0x78] sm:$0xff]
        %v5760 = vld [vmem:[#allocation14 + $0x80] sm:$0xf]
        %v5761 = vld [vmem:[#allocation14 + $0x84] sm:$0xff]
        %v5762 = vld [vmem:[#allocation14 + $0x8c] sm:$0xf]
        %v5763 = vld [vmem:[#allocation14 + $0x90] sm:$0xff]
        %v5764 = vld [vmem:[#allocation14 + $0x98] sm:$0xf]
        %v5765 = vld [vmem:[#allocation14 + $0x9c] sm:$0xff]
        %v5766 = vld [vmem:[#allocation14 + $0xa4] sm:$0xf]
        %v5767 = vld [vmem:[#allocation14 + $0xa8] sm:$0xff]
        %v5768 = vld [vmem:[#allocation14 + $0xb0] sm:$0xf]
        %v5769 = vld [vmem:[#allocation14 + $0xb4] sm:$0xff]
        %v5770 = vld [vmem:[#allocation14 + $0xbc] sm:$0xf]
        %v5771 = vld [vmem:[#allocation14 + $0xc0] sm:$0xff]
        %v5772 = vld [vmem:[#allocation14 + $0xc8] sm:$0xf]
        %v5773 = vld [vmem:[#allocation14 + $0xcc] sm:$0xff]
        %v5774 = vld [vmem:[#allocation14 + $0xd4] sm:$0xf]
        %v5775 = vld [vmem:[#allocation14 + $0xd8] sm:$0xff]
        %v5776 = vld [vmem:[#allocation14 + $0xe0] sm:$0xf]
        %v5777 = vld [vmem:[#allocation14 + $0xe4] sm:$0xff]
        %v5778 = vld [vmem:[#allocation14 + $0xec] sm:$0xf]
        %v5779 = vld [vmem:[#allocation14 + $0xf0] sm:$0xff]
        %v5780 = vld [vmem:[#allocation14 + $0xf8] sm:$0xf]
        %v5781 = vld [vmem:[#allocation14 + $0xfc] sm:$0xff]
        %v5782 = vld [vmem:[#allocation14 + $0x104] sm:$0xf]
        %v5783 = vld [vmem:[#allocation14 + $0x108] sm:$0xff]
        %v5784 = vld [vmem:[#allocation14 + $0x110] sm:$0xf]
        %v5785 = vld [vmem:[#allocation14 + $0x114] sm:$0xff]
        %v5786 = vld [vmem:[#allocation14 + $0x11c] sm:$0xf]
        %v5787 = vld [vmem:[#allocation14 + $0x120] sm:$0xff]
        %v5788 = vld [vmem:[#allocation14 + $0x128] sm:$0xf]
        %v5789 = vld [vmem:[#allocation14 + $0x12c] sm:$0xff]
        %v5790 = vld [vmem:[#allocation14 + $0x134] sm:$0xf]
        %v5791 = vld [vmem:[#allocation14 + $0x138] sm:$0xff]
        %v5792 = vld [vmem:[#allocation14 + $0x140] sm:$0xf]
        %v5793 = vld [vmem:[#allocation14 + $0x144] sm:$0xff]
        %v5794 = vld [vmem:[#allocation14 + $0x14c] sm:$0xf]
        %v5795 = vld [vmem:[#allocation14 + $0x150] sm:$0xff]
        %v5796 = vld [vmem:[#allocation14 + $0x158] sm:$0xf]
        %v5797 = vld [vmem:[#allocation14 + $0x15c] sm:$0xff]
        %v5798 = vld [vmem:[#allocation14 + $0x164] sm:$0xf]
        %v5799 = vld [vmem:[#allocation14 + $0x168] sm:$0xff]
        %v5800 = vld [vmem:[#allocation14 + $0x170] sm:$0xf]
        %v5801 = vld [vmem:[#allocation14 + $0x174] sm:$0xff]
        %v5802 = vld [vmem:[#allocation14 + $0x17c] sm:$0xf]
        %v5803 = vld [vmem:[#allocation14 + $0x180] sm:$0xff]
        %v5804 = vld [vmem:[#allocation14 + $0x188] sm:$0xf]
        %v5805 = vld [vmem:[#allocation14 + $0x18c] sm:$0xff]
        %v5806 = vld [vmem:[#allocation14 + $0x194] sm:$0xf]
        %v5807 = vld [vmem:[#allocation14 + $0x198] sm:$0xff]
        %v5808 = vld [vmem:[#allocation14 + $0x1a0] sm:$0xf]
        %v5809 = vld [vmem:[#allocation14 + $0x1a4] sm:$0xff]
        %v5810 = vld [vmem:[#allocation14 + $0x1ac] sm:$0xf]
        %v5811 = vld [vmem:[#allocation14 + $0x1b0] sm:$0xff]
        %v5812 = vld [vmem:[#allocation14 + $0x1b8] sm:$0xf]
        %v5813 = vld [vmem:[#allocation14 + $0x1bc] sm:$0xff]
        %v5814 = vld [vmem:[#allocation14 + $0x1c4] sm:$0xf]
        %v5815 = vld [vmem:[#allocation14 + $0x1c8] sm:$0xff]
        %v5816 = vld [vmem:[#allocation14 + $0x1d0] sm:$0xf]
        %v5817 = vld [vmem:[#allocation14 + $0x1d4] sm:$0xff]
        %v5818 = vld [vmem:[#allocation14 + $0x1dc] sm:$0xf]
        %v5819 = vld [vmem:[#allocation14 + $0x1e0] sm:$0xff]
        %v5820 = vld [vmem:[#allocation14 + $0x1e8] sm:$0xf]
        %v5821 = vld [vmem:[#allocation14 + $0x1ec] sm:$0xff]
        %v5822 = vld [vmem:[#allocation14 + $0x1f4] sm:$0xf]
        %v5823 = vld [vmem:[#allocation14 + $0x1f8] sm:$0xff]
        %v5824 = vld [vmem:[#allocation14 + $0x200] sm:$0xf]
        %v5825 = vld [vmem:[#allocation14 + $0x204] sm:$0xff]
        %v5826 = vld [vmem:[#allocation14 + $0x20c] sm:$0xf]
        %v5827 = vld [vmem:[#allocation14 + $0x210] sm:$0xff]
        %v5828 = vld [vmem:[#allocation14 + $0x218] sm:$0xf]
        %v5829 = vld [vmem:[#allocation14 + $0x21c] sm:$0xff]
        %v5830 = vld [vmem:[#allocation14 + $0x224] sm:$0xf]
        %v5831 = vld [vmem:[#allocation14 + $0x228] sm:$0xff]
        %v5832 = vld [vmem:[#allocation14 + $0x230] sm:$0xf]
        %v5833 = vld [vmem:[#allocation14 + $0x234] sm:$0xff]
        %v5834 = vld [vmem:[#allocation14 + $0x23c] sm:$0xf]
        %v5835 = vld [vmem:[#allocation14 + $0x240] sm:$0xff]
        %v5836 = vld [vmem:[#allocation14 + $0x248] sm:$0xf]
        %v5837 = vld [vmem:[#allocation14 + $0x24c] sm:$0xff]
        %v5838 = vld [vmem:[#allocation14 + $0x254] sm:$0xf]
        %v5839 = vld [vmem:[#allocation14 + $0x258] sm:$0xff]
        %v5840 = vld [vmem:[#allocation14 + $0x260] sm:$0xf]
        %v5841 = vld [vmem:[#allocation14 + $0x264] sm:$0xff]
        %v5842 = vld [vmem:[#allocation14 + $0x26c] sm:$0xf]
        %v5843 = vld [vmem:[#allocation14 + $0x270] sm:$0xff]
        %v5844 = vld [vmem:[#allocation14 + $0x278] sm:$0xf]
        %v5845 = vld [vmem:[#allocation14 + $0x27c] sm:$0xff]
        %v5846 = vld [vmem:[#allocation14 + $0x284] sm:$0xf]
        %v5847 = vld [vmem:[#allocation14 + $0x288] sm:$0xff]
        %v5848 = vld [vmem:[#allocation14 + $0x290] sm:$0xf]
        %v5849 = vld [vmem:[#allocation14 + $0x294] sm:$0xff]
        %v5850 = vld [vmem:[#allocation14 + $0x29c] sm:$0xf]
        %v5851 = vld [vmem:[#allocation14 + $0x2a0] sm:$0xff]
        %v5852 = vld [vmem:[#allocation14 + $0x2a8] sm:$0xf]
        %v5853 = vld [vmem:[#allocation14 + $0x2ac] sm:$0xff]
        %v5854 = vld [vmem:[#allocation14 + $0x2b4] sm:$0xf]
        %v5855 = vld [vmem:[#allocation14 + $0x2b8] sm:$0xff]
        %v5856 = vld [vmem:[#allocation14 + $0x2c0] sm:$0xf]
        %v5857 = vld [vmem:[#allocation14 + $0x2c4] sm:$0xff]
        %v5858 = vld [vmem:[#allocation14 + $0x2cc] sm:$0xf]
        %v5859 = vld [vmem:[#allocation14 + $0x2d0] sm:$0xff]
        %v5860 = vld [vmem:[#allocation14 + $0x2d8] sm:$0xf]
        %v5861 = vld [vmem:[#allocation14 + $0x2dc] sm:$0xff]
        %v5862 = vld [vmem:[#allocation14 + $0x2e4] sm:$0xf]
        %v5863 = vld [vmem:[#allocation14 + $0x2e8] sm:$0xff]
        %v5864 = vld [vmem:[#allocation14 + $0x2f0] sm:$0xf]
        %v5865 = vld [vmem:[#allocation14 + $0x2f4] sm:$0xff]
        %v5866 = vld [vmem:[#allocation14 + $0x2fc] sm:$0xf]
        %v5867 = vld [vmem:[#allocation14 + $0x300] sm:$0xff]
        %v5868 = vld [vmem:[#allocation14 + $0x308] sm:$0xf]
        %v5869 = vld [vmem:[#allocation14 + $0x30c] sm:$0xff]
        %v5870 = vld [vmem:[#allocation14 + $0x314] sm:$0xf]
        %v5871 = vld [vmem:[#allocation14 + $0x318] sm:$0xff]
        %v5872 = vld [vmem:[#allocation14 + $0x320] sm:$0xf]
        %v5873 = vld [vmem:[#allocation14 + $0x324] sm:$0xff]
        %v5874 = vld [vmem:[#allocation14 + $0x32c] sm:$0xf]
        %v5875 = vld [vmem:[#allocation14 + $0x330] sm:$0xff]
        %v5876 = vld [vmem:[#allocation14 + $0x338] sm:$0xf]
        %v5877 = vld [vmem:[#allocation14 + $0x33c] sm:$0xff]
        %v5878 = vld [vmem:[#allocation14 + $0x344] sm:$0xf]
        %v5879 = vld [vmem:[#allocation14 + $0x348] sm:$0xff]
        %v5880 = vld [vmem:[#allocation14 + $0x350] sm:$0xf]
        %v5881 = vld [vmem:[#allocation14 + $0x354] sm:$0xff]
        %v5882 = vld [vmem:[#allocation14 + $0x35c] sm:$0xf]
        %v5883 = vld [vmem:[#allocation14 + $0x360] sm:$0xff]
        %v5884 = vld [vmem:[#allocation14 + $0x368] sm:$0xf]
        %v5885 = vld [vmem:[#allocation14 + $0x36c] sm:$0xff]
        %v5886 = vld [vmem:[#allocation14 + $0x374] sm:$0xf]
        %v5887 = vld [vmem:[#allocation14 + $0x378] sm:$0xff]
        %v5888 = vld [vmem:[#allocation14 + $0x380] sm:$0xf]
        %v5889 = vld [vmem:[#allocation14 + $0x384] sm:$0xff]
        %v5890 = vld [vmem:[#allocation14 + $0x38c] sm:$0xf]
        %v5891 = vld [vmem:[#allocation14 + $0x390] sm:$0xff]
        %v5892 = vld [vmem:[#allocation14 + $0x398] sm:$0xf]
        %v5893 = vld [vmem:[#allocation14 + $0x39c] sm:$0xff]
        %v5894 = vld [vmem:[#allocation14 + $0x3a4] sm:$0xf]
        %v5895 = vld [vmem:[#allocation14 + $0x3a8] sm:$0xff]
        %v5896 = vld [vmem:[#allocation14 + $0x3b0] sm:$0xf]
        %v5897 = vld [vmem:[#allocation14 + $0x3b4] sm:$0xff]
        %v5898 = vld [vmem:[#allocation14 + $0x3bc] sm:$0xf]
        %s5899 = scalar_lea.vmem [#allocation6], 3
        %v5900 = vld [vmem:[%s5899] ss:$4 sm:$0x7]
        %v5902 = vlaneseq
        %v5903 = vshrl.u32 %v5902, 7
        %v5904 = vsub.s32 0, %v5903
        %v5905 = vrot.slane %v5900, %v5904
        %v5906 = vlaneseq
        %v5907 = vshrl.u32 %v5906, 7
        %v5908 = vsub.s32 1, %v5907
        %v5909 = vrot.slane %v5900, %v5908
        %v5910 = vlaneseq
        %v5911 = vshrl.u32 %v5910, 7
        %v5912 = vsub.s32 2, %v5911
        %v5913 = vrot.slane %v5900, %v5912
        %v6077 = vunpack.c.l.b16 %v5739
        %v6078 = vunpack.c.h.b16 %v5739
        %v6079 = vunpack.c.l.b16 %v5740
        %v6080 = vunpack.c.l.b16 %v5741
        %v6081 = vunpack.c.h.b16 %v5741
        %v6082 = vunpack.c.l.b16 %v5742
        %v6083 = vunpack.c.l.b16 %v5743
        %v6084 = vunpack.c.h.b16 %v5743
        %v6085 = vunpack.c.l.b16 %v5744
        %v6086 = vunpack.c.l.b16 %v5745
        %v6087 = vunpack.c.h.b16 %v5745
        %v6088 = vunpack.c.l.b16 %v5746
        %v6089 = vunpack.c.l.b16 %v5747
        %v6090 = vunpack.c.h.b16 %v5747
        %v6091 = vunpack.c.l.b16 %v5748
        %v6092 = vunpack.c.l.b16 %v5749
        %v6093 = vunpack.c.h.b16 %v5749
        %v6094 = vunpack.c.l.b16 %v5750
        %v6095 = vunpack.c.l.b16 %v5751
        %v6096 = vunpack.c.h.b16 %v5751
        %v6097 = vunpack.c.l.b16 %v5752
        %v6098 = vunpack.c.l.b16 %v5753
        %v6099 = vunpack.c.h.b16 %v5753
        %v6100 = vunpack.c.l.b16 %v5754
        %v6101 = vunpack.c.l.b16 %v5755
        %v6102 = vunpack.c.h.b16 %v5755
        %v6103 = vunpack.c.l.b16 %v5756
        %v6104 = vunpack.c.l.b16 %v5757
        %v6105 = vunpack.c.h.b16 %v5757
        %v6106 = vunpack.c.l.b16 %v5758
        %v6107 = vunpack.c.l.b16 %v5759
        %v6108 = vunpack.c.h.b16 %v5759
        %v6109 = vunpack.c.l.b16 %v5760
        %v6110 = vunpack.c.l.b16 %v5761
        %v6111 = vunpack.c.h.b16 %v5761
        %v6112 = vunpack.c.l.b16 %v5762
        %v6113 = vunpack.c.l.b16 %v5763
        %v6114 = vunpack.c.h.b16 %v5763
        %v6115 = vunpack.c.l.b16 %v5764
        %v6116 = vunpack.c.l.b16 %v5765
        %v6117 = vunpack.c.h.b16 %v5765
        %v6118 = vunpack.c.l.b16 %v5766
        %v6119 = vunpack.c.l.b16 %v5767
        %v6120 = vunpack.c.h.b16 %v5767
        %v6121 = vunpack.c.l.b16 %v5768
        %v6122 = vunpack.c.l.b16 %v5769
        %v6123 = vunpack.c.h.b16 %v5769
        %v6124 = vunpack.c.l.b16 %v5770
        %v6125 = vunpack.c.l.b16 %v5771
        %v6126 = vunpack.c.h.b16 %v5771
        %v6127 = vunpack.c.l.b16 %v5772
        %v6128 = vunpack.c.l.b16 %v5773
        %v6129 = vunpack.c.h.b16 %v5773
        %v6130 = vunpack.c.l.b16 %v5774
        %v6131 = vunpack.c.l.b16 %v5775
        %v6132 = vunpack.c.h.b16 %v5775
        %v6133 = vunpack.c.l.b16 %v5776
        %v6134 = vunpack.c.l.b16 %v5777
        %v6135 = vunpack.c.h.b16 %v5777
        %v6136 = vunpack.c.l.b16 %v5778
        %v6137 = vunpack.c.l.b16 %v5779
        %v6138 = vunpack.c.h.b16 %v5779
        %v6139 = vunpack.c.l.b16 %v5780
        %v6140 = vunpack.c.l.b16 %v5781
        %v6141 = vunpack.c.h.b16 %v5781
        %v6142 = vunpack.c.l.b16 %v5782
        %v6143 = vunpack.c.l.b16 %v5783
        %v6144 = vunpack.c.h.b16 %v5783
        %v6145 = vunpack.c.l.b16 %v5784
        %v6146 = vunpack.c.l.b16 %v5785
        %v6147 = vunpack.c.h.b16 %v5785
        %v6148 = vunpack.c.l.b16 %v5786
        %v6149 = vunpack.c.l.b16 %v5787
        %v6150 = vunpack.c.h.b16 %v5787
        %v6151 = vunpack.c.l.b16 %v5788
        %v6152 = vunpack.c.l.b16 %v5789
        %v6153 = vunpack.c.h.b16 %v5789
        %v6154 = vunpack.c.l.b16 %v5790
        %v6155 = vunpack.c.l.b16 %v5791
        %v6156 = vunpack.c.h.b16 %v5791
        %v6157 = vunpack.c.l.b16 %v5792
        %v6158 = vunpack.c.l.b16 %v5793
        %v6159 = vunpack.c.h.b16 %v5793
        %v6160 = vunpack.c.l.b16 %v5794
        %v6161 = vunpack.c.l.b16 %v5795
        %v6162 = vunpack.c.h.b16 %v5795
        %v6163 = vunpack.c.l.b16 %v5796
        %v6164 = vunpack.c.l.b16 %v5797
        %v6165 = vunpack.c.h.b16 %v5797
        %v6166 = vunpack.c.l.b16 %v5798
        %v6167 = vunpack.c.l.b16 %v5799
        %v6168 = vunpack.c.h.b16 %v5799
        %v6169 = vunpack.c.l.b16 %v5800
        %v6170 = vunpack.c.l.b16 %v5801
        %v6171 = vunpack.c.h.b16 %v5801
        %v6172 = vunpack.c.l.b16 %v5802
        %v6173 = vunpack.c.l.b16 %v5803
        %v6174 = vunpack.c.h.b16 %v5803
        %v6175 = vunpack.c.l.b16 %v5804
        %v6176 = vunpack.c.l.b16 %v5805
        %v6177 = vunpack.c.h.b16 %v5805
        %v6178 = vunpack.c.l.b16 %v5806
        %v6179 = vunpack.c.l.b16 %v5807
        %v6180 = vunpack.c.h.b16 %v5807
        %v6181 = vunpack.c.l.b16 %v5808
        %v6182 = vunpack.c.l.b16 %v5809
        %v6183 = vunpack.c.h.b16 %v5809
        %v6184 = vunpack.c.l.b16 %v5810
        %v6185 = vunpack.c.l.b16 %v5811
        %v6186 = vunpack.c.h.b16 %v5811
        %v6187 = vunpack.c.l.b16 %v5812
        %v6188 = vunpack.c.l.b16 %v5813
        %v6189 = vunpack.c.h.b16 %v5813
        %v6190 = vunpack.c.l.b16 %v5814
        %v6191 = vunpack.c.l.b16 %v5815
        %v6192 = vunpack.c.h.b16 %v5815
        %v6193 = vunpack.c.l.b16 %v5816
        %v6194 = vunpack.c.l.b16 %v5817
        %v6195 = vunpack.c.h.b16 %v5817
        %v6196 = vunpack.c.l.b16 %v5818
        %v6197 = vunpack.c.l.b16 %v5819
        %v6198 = vunpack.c.h.b16 %v5819
        %v6199 = vunpack.c.l.b16 %v5820
        %v6200 = vunpack.c.l.b16 %v5821
        %v6201 = vunpack.c.h.b16 %v5821
        %v6202 = vunpack.c.l.b16 %v5822
        %v6203 = vunpack.c.l.b16 %v5823
        %v6204 = vunpack.c.h.b16 %v5823
        %v6205 = vunpack.c.l.b16 %v5824
        %v6206 = vunpack.c.l.b16 %v5825
        %v6207 = vunpack.c.h.b16 %v5825
        %v6208 = vunpack.c.l.b16 %v5826
        %v6209 = vunpack.c.l.b16 %v5827
        %v6210 = vunpack.c.h.b16 %v5827
        %v6211 = vunpack.c.l.b16 %v5828
        %v6212 = vunpack.c.l.b16 %v5829
        %v6213 = vunpack.c.h.b16 %v5829
        %v6214 = vunpack.c.l.b16 %v5830
        %v6215 = vunpack.c.l.b16 %v5831
        %v6216 = vunpack.c.h.b16 %v5831
        %v6217 = vunpack.c.l.b16 %v5832
        %v6218 = vunpack.c.l.b16 %v5833
        %v6219 = vunpack.c.h.b16 %v5833
        %v6220 = vunpack.c.l.b16 %v5834
        %v6221 = vunpack.c.l.b16 %v5835
        %v6222 = vunpack.c.h.b16 %v5835
        %v6223 = vunpack.c.l.b16 %v5836
        %v6224 = vunpack.c.l.b16 %v5837
        %v6225 = vunpack.c.h.b16 %v5837
        %v6226 = vunpack.c.l.b16 %v5838
        %v6227 = vunpack.c.l.b16 %v5839
        %v6228 = vunpack.c.h.b16 %v5839
        %v6229 = vunpack.c.l.b16 %v5840
        %v6230 = vunpack.c.l.b16 %v5841
        %v6231 = vunpack.c.h.b16 %v5841
        %v6232 = vunpack.c.l.b16 %v5842
        %v6233 = vunpack.c.l.b16 %v5843
        %v6234 = vunpack.c.h.b16 %v5843
        %v6235 = vunpack.c.l.b16 %v5844
        %v6236 = vunpack.c.l.b16 %v5845
        %v6237 = vunpack.c.h.b16 %v5845
        %v6238 = vunpack.c.l.b16 %v5846
        %v6239 = vunpack.c.l.b16 %v5847
        %v6240 = vunpack.c.h.b16 %v5847
        %v6241 = vunpack.c.l.b16 %v5848
        %v6242 = vunpack.c.l.b16 %v5849
        %v6243 = vunpack.c.h.b16 %v5849
        %v6244 = vunpack.c.l.b16 %v5850
        %v6245 = vunpack.c.l.b16 %v5851
        %v6246 = vunpack.c.h.b16 %v5851
        %v6247 = vunpack.c.l.b16 %v5852
        %v6248 = vunpack.c.l.b16 %v5853
        %v6249 = vunpack.c.h.b16 %v5853
        %v6250 = vunpack.c.l.b16 %v5854
        %v6251 = vunpack.c.l.b16 %v5855
        %v6252 = vunpack.c.h.b16 %v5855
        %v6253 = vunpack.c.l.b16 %v5856
        %v6254 = vunpack.c.l.b16 %v5857
        %v6255 = vunpack.c.h.b16 %v5857
        %v6256 = vunpack.c.l.b16 %v5858
        %v6257 = vunpack.c.l.b16 %v5859
        %v6258 = vunpack.c.h.b16 %v5859
        %v6259 = vunpack.c.l.b16 %v5860
        %v6260 = vunpack.c.l.b16 %v5861
        %v6261 = vunpack.c.h.b16 %v5861
        %v6262 = vunpack.c.l.b16 %v5862
        %v6263 = vunpack.c.l.b16 %v5863
        %v6264 = vunpack.c.h.b16 %v5863
        %v6265 = vunpack.c.l.b16 %v5864
        %v6266 = vunpack.c.l.b16 %v5865
        %v6267 = vunpack.c.h.b16 %v5865
        %v6268 = vunpack.c.l.b16 %v5866
        %v6269 = vunpack.c.l.b16 %v5867
        %v6270 = vunpack.c.h.b16 %v5867
        %v6271 = vunpack.c.l.b16 %v5868
        %v6272 = vunpack.c.l.b16 %v5869
        %v6273 = vunpack.c.h.b16 %v5869
        %v6274 = vunpack.c.l.b16 %v5870
        %v6275 = vunpack.c.l.b16 %v5871
        %v6276 = vunpack.c.h.b16 %v5871
        %v6277 = vunpack.c.l.b16 %v5872
        %v6278 = vunpack.c.l.b16 %v5873
        %v6279 = vunpack.c.h.b16 %v5873
        %v6280 = vunpack.c.l.b16 %v5874
        %v6281 = vunpack.c.l.b16 %v5875
        %v6282 = vunpack.c.h.b16 %v5875
        %v6283 = vunpack.c.l.b16 %v5876
        %v6284 = vunpack.c.l.b16 %v5877
        %v6285 = vunpack.c.h.b16 %v5877
        %v6286 = vunpack.c.l.b16 %v5878
        %v6287 = vunpack.c.l.b16 %v5879
        %v6288 = vunpack.c.h.b16 %v5879
        %v6289 = vunpack.c.l.b16 %v5880
        %v6290 = vunpack.c.l.b16 %v5881
        %v6291 = vunpack.c.h.b16 %v5881
        %v6292 = vunpack.c.l.b16 %v5882
        %v6293 = vunpack.c.l.b16 %v5883
        %v6294 = vunpack.c.h.b16 %v5883
        %v6295 = vunpack.c.l.b16 %v5884
        %v6296 = vunpack.c.l.b16 %v5885
        %v6297 = vunpack.c.h.b16 %v5885
        %v6298 = vunpack.c.l.b16 %v5886
        %v6299 = vunpack.c.l.b16 %v5887
        %v6300 = vunpack.c.h.b16 %v5887
        %v6301 = vunpack.c.l.b16 %v5888
        %v6302 = vunpack.c.l.b16 %v5889
        %v6303 = vunpack.c.h.b16 %v5889
        %v6304 = vunpack.c.l.b16 %v5890
        %v6305 = vunpack.c.l.b16 %v5891
        %v6306 = vunpack.c.h.b16 %v5891
        %v6307 = vunpack.c.l.b16 %v5892
        %v6308 = vunpack.c.l.b16 %v5893
        %v6309 = vunpack.c.h.b16 %v5893
        %v6310 = vunpack.c.l.b16 %v5894
        %v6311 = vunpack.c.l.b16 %v5895
        %v6312 = vunpack.c.h.b16 %v5895
        %v6313 = vunpack.c.l.b16 %v5896
        %v6314 = vunpack.c.l.b16 %v5897
        %v6315 = vunpack.c.h.b16 %v5897
        %v6316 = vunpack.c.l.b16 %v5898
        %v6317 = vpack.c.b16 %v6080, %v6077
        %v6318 = vpack.c.b16 %v6081, %v6078
        %v6319 = vpack.c.b16 %v6082, %v6079
        %v6320 = vpack.c.b16 %v6086, %v6083
        %v6321 = vpack.c.b16 %v6087, %v6084
        %v6322 = vpack.c.b16 %v6088, %v6085
        %v6323 = vpack.c.b16 %v6092, %v6089
        %v6324 = vpack.c.b16 %v6093, %v6090
        %v6325 = vpack.c.b16 %v6094, %v6091
        %v6326 = vpack.c.b16 %v6098, %v6095
        %v6327 = vpack.c.b16 %v6099, %v6096
        %v6328 = vpack.c.b16 %v6100, %v6097
        %v6329 = vpack.c.b16 %v6104, %v6101
        %v6330 = vpack.c.b16 %v6105, %v6102
        %v6331 = vpack.c.b16 %v6106, %v6103
        %v6332 = vpack.c.b16 %v6110, %v6107
        %v6333 = vpack.c.b16 %v6111, %v6108
        %v6334 = vpack.c.b16 %v6112, %v6109
        %v6335 = vpack.c.b16 %v6116, %v6113
        %v6336 = vpack.c.b16 %v6117, %v6114
        %v6337 = vpack.c.b16 %v6118, %v6115
        %v6338 = vpack.c.b16 %v6122, %v6119
        %v6339 = vpack.c.b16 %v6123, %v6120
        %v6340 = vpack.c.b16 %v6124, %v6121
        %v6341 = vpack.c.b16 %v6128, %v6125
        %v6342 = vpack.c.b16 %v6129, %v6126
        %v6343 = vpack.c.b16 %v6130, %v6127
        %v6344 = vpack.c.b16 %v6134, %v6131
        %v6345 = vpack.c.b16 %v6135, %v6132
        %v6346 = vpack.c.b16 %v6136, %v6133
        %v6347 = vpack.c.b16 %v6140, %v6137
        %v6348 = vpack.c.b16 %v6141, %v6138
        %v6349 = vpack.c.b16 %v6142, %v6139
        %v6350 = vpack.c.b16 %v6146, %v6143
        %v6351 = vpack.c.b16 %v6147, %v6144
        %v6352 = vpack.c.b16 %v6148, %v6145
        %v6353 = vpack.c.b16 %v6152, %v6149
        %v6354 = vpack.c.b16 %v6153, %v6150
        %v6355 = vpack.c.b16 %v6154, %v6151
        %v6356 = vpack.c.b16 %v6158, %v6155
        %v6357 = vpack.c.b16 %v6159, %v6156
        %v6358 = vpack.c.b16 %v6160, %v6157
        %v6359 = vpack.c.b16 %v6164, %v6161
        %v6360 = vpack.c.b16 %v6165, %v6162
        %v6361 = vpack.c.b16 %v6166, %v6163
        %v6362 = vpack.c.b16 %v6170, %v6167
        %v6363 = vpack.c.b16 %v6171, %v6168
        %v6364 = vpack.c.b16 %v6172, %v6169
        %v6365 = vpack.c.b16 %v6176, %v6173
        %v6366 = vpack.c.b16 %v6177, %v6174
        %v6367 = vpack.c.b16 %v6178, %v6175
        %v6368 = vpack.c.b16 %v6182, %v6179
        %v6369 = vpack.c.b16 %v6183, %v6180
        %v6370 = vpack.c.b16 %v6184, %v6181
        %v6371 = vpack.c.b16 %v6188, %v6185
        %v6372 = vpack.c.b16 %v6189, %v6186
        %v6373 = vpack.c.b16 %v6190, %v6187
        %v6374 = vpack.c.b16 %v6194, %v6191
        %v6375 = vpack.c.b16 %v6195, %v6192
        %v6376 = vpack.c.b16 %v6196, %v6193
        %v6377 = vpack.c.b16 %v6200, %v6197
        %v6378 = vpack.c.b16 %v6201, %v6198
        %v6379 = vpack.c.b16 %v6202, %v6199
        %v6380 = vpack.c.b16 %v6206, %v6203
        %v6381 = vpack.c.b16 %v6207, %v6204
        %v6382 = vpack.c.b16 %v6208, %v6205
        %v6383 = vpack.c.b16 %v6212, %v6209
        %v6384 = vpack.c.b16 %v6213, %v6210
        %v6385 = vpack.c.b16 %v6214, %v6211
        %v6386 = vpack.c.b16 %v6218, %v6215
        %v6387 = vpack.c.b16 %v6219, %v6216
        %v6388 = vpack.c.b16 %v6220, %v6217
        %v6389 = vpack.c.b16 %v6224, %v6221
        %v6390 = vpack.c.b16 %v6225, %v6222
        %v6391 = vpack.c.b16 %v6226, %v6223
        %v6392 = vpack.c.b16 %v6230, %v6227
        %v6393 = vpack.c.b16 %v6231, %v6228
        %v6394 = vpack.c.b16 %v6232, %v6229
        %v6395 = vpack.c.b16 %v6236, %v6233
        %v6396 = vpack.c.b16 %v6237, %v6234
        %v6397 = vpack.c.b16 %v6238, %v6235
        %v6398 = vpack.c.b16 %v6242, %v6239
        %v6399 = vpack.c.b16 %v6243, %v6240
        %v6400 = vpack.c.b16 %v6244, %v6241
        %v6401 = vpack.c.b16 %v6248, %v6245
        %v6402 = vpack.c.b16 %v6249, %v6246
        %v6403 = vpack.c.b16 %v6250, %v6247
        %v6404 = vpack.c.b16 %v6254, %v6251
        %v6405 = vpack.c.b16 %v6255, %v6252
        %v6406 = vpack.c.b16 %v6256, %v6253
        %v6407 = vpack.c.b16 %v6260, %v6257
        %v6408 = vpack.c.b16 %v6261, %v6258
        %v6409 = vpack.c.b16 %v6262, %v6259
        %v6410 = vpack.c.b16 %v6266, %v6263
        %v6411 = vpack.c.b16 %v6267, %v6264
        %v6412 = vpack.c.b16 %v6268, %v6265
        %v6413 = vpack.c.b16 %v6272, %v6269
        %v6414 = vpack.c.b16 %v6273, %v6270
        %v6415 = vpack.c.b16 %v6274, %v6271
        %v6416 = vpack.c.b16 %v6278, %v6275
        %v6417 = vpack.c.b16 %v6279, %v6276
        %v6418 = vpack.c.b16 %v6280, %v6277
        %v6419 = vpack.c.b16 %v6284, %v6281
        %v6420 = vpack.c.b16 %v6285, %v6282
        %v6421 = vpack.c.b16 %v6286, %v6283
        %v6422 = vpack.c.b16 %v6290, %v6287
        %v6423 = vpack.c.b16 %v6291, %v6288
        %v6424 = vpack.c.b16 %v6292, %v6289
        %v6425 = vpack.c.b16 %v6296, %v6293
        %v6426 = vpack.c.b16 %v6297, %v6294
        %v6427 = vpack.c.b16 %v6298, %v6295
        %v6428 = vpack.c.b16 %v6302, %v6299
        %v6429 = vpack.c.b16 %v6303, %v6300
        %v6430 = vpack.c.b16 %v6304, %v6301
        %v6431 = vpack.c.b16 %v6308, %v6305
        %v6432 = vpack.c.b16 %v6309, %v6306
        %v6433 = vpack.c.b16 %v6310, %v6307
        %v6434 = vpack.c.b16 %v6314, %v6311
        %v6435 = vpack.c.b16 %v6315, %v6312
        %v6436 = vpack.c.b16 %v6316, %v6313
        %6557 = vmatprep.subr.bf16.mxu0 %v6339
        %6558 = vmatpush1.bf16.msra.mxu0 %v6338
        %6559 = vmatprep.subr.bf16.mxu0 %v6336
        %6560 = vmatpush1.bf16.msra.mxu0 %v6335
        %6561 = vmatprep.subr.bf16.mxu0 %v6333
        %6562 = vmatpush1.bf16.msra.mxu0 %v6332
        %6563 = vmatprep.subr.bf16.mxu0 %v6330
        %6564 = vmatpush1.bf16.msra.mxu0 %v6329
        %6565 = vmatprep.subr.bf16.mxu0 %v6327
        %6566 = vmatpush1.bf16.msra.mxu0 %v6326
        %6567 = vmatprep.subr.bf16.mxu0 %v6324
        %6568 = vmatpush1.bf16.msra.mxu0 %v6323
        %6569 = vmatprep.subr.bf16.mxu0 %v6321
        %6570 = vmatpush1.bf16.msra.mxu0 %v6320
        %6571 = vmatprep.subr.bf16.mxu0 %v6318
        %6572 = vmatpush1.bf16.msra.mxu0 %v6317
        %6573 = vmatprep.subr.bf16.mxu0 %v6363
        %6574 = vmatpush2.bf16.msra.mxu0 %v6362
        %6575 = vmatprep.subr.bf16.mxu0 %v6360
        %6576 = vmatpush2.bf16.msra.mxu0 %v6359
        %6577 = vmatprep.subr.bf16.mxu0 %v6357
        %6578 = vmatpush2.bf16.msra.mxu0 %v6356
        %6579 = vmatprep.subr.bf16.mxu0 %v6354
        %6580 = vmatpush2.bf16.msra.mxu0 %v6353
        %6581 = vmatprep.subr.bf16.mxu0 %v6351
        %6582 = vmatpush2.bf16.msra.mxu0 %v6350
        %6583 = vmatprep.subr.bf16.mxu0 %v6348
        %6584 = vmatpush2.bf16.msra.mxu0 %v6347
        %6585 = vmatprep.subr.bf16.mxu0 %v6345
        %6586 = vmatpush2.bf16.msra.mxu0 %v6344
        %6587 = vmatprep.subr.bf16.mxu0 %v6342
        %6588 = vmatpush2.bf16.msra.mxu0 %v6341
        %6589 = vmatprep.mubr.bf16.mxu0 %v5730
        %6590 = vmatmul.mubr.bf16.gmra.mxu0 %v5729
        %v6591 = vpop.f32.mrf.mxu0
        %v6592 = vadd.f32 %v5905, %v6591
        %v6593 = vpop.f32.mrf.mxu0
        %v6594 = vadd.f32 %v5909, %v6593
        %v6595 = vpop.f32.mrf.mxu0
        %v6596 = vadd.f32 %v5905, %v6595
        %v6597 = vpop.f32.mrf.mxu0
        %v6598 = vadd.f32 %v5909, %v6597
        %6599 = vmatprep.mubr.bf16.mxu0 %v5735
        %6600 = vmatmul.mubr.bf16.gmra.mxu0 %v5734
        %v6601 = vpop.f32.mrf.mxu0
        %v6602 = vadd.f32 %v5905, %v6601
        %v6603 = vpop.f32.mrf.mxu0
        %v6604 = vadd.f32 %v5909, %v6603
        %v6605 = vpop.f32.mrf.mxu0
        %v6606 = vadd.f32 %v5905, %v6605
        %v6607 = vpop.f32.mrf.mxu0
        %v6608 = vadd.f32 %v5909, %v6607
        %6609 = vdwg.mxu0
        %6610 = vmatprep.subr.bf16.mxu0 %v6387
        %6611 = vmatpush1.bf16.msra.mxu0 %v6386
        %6612 = vmatprep.subr.bf16.mxu0 %v6384
        %6613 = vmatpush1.bf16.msra.mxu0 %v6383
        %6614 = vmatprep.subr.bf16.mxu0 %v6381
        %6615 = vmatpush1.bf16.msra.mxu0 %v6380
        %6616 = vmatprep.subr.bf16.mxu0 %v6378
        %6617 = vmatpush1.bf16.msra.mxu0 %v6377
        %6618 = vmatprep.subr.bf16.mxu0 %v6375
        %6619 = vmatpush1.bf16.msra.mxu0 %v6374
        %6620 = vmatprep.subr.bf16.mxu0 %v6372
        %6621 = vmatpush1.bf16.msra.mxu0 %v6371
        %6622 = vmatprep.subr.bf16.mxu0 %v6369
        %6623 = vmatpush1.bf16.msra.mxu0 %v6368
        %6624 = vmatprep.subr.bf16.mxu0 %v6366
        %6625 = vmatpush1.bf16.msra.mxu0 %v6365
        %6626 = vmatprep.subr.bf16.mxu0 %v6411
        %6627 = vmatpush2.bf16.msra.mxu0 %v6410
        %6628 = vmatprep.subr.bf16.mxu0 %v6408
        %6629 = vmatpush2.bf16.msra.mxu0 %v6407
        %6630 = vmatprep.subr.bf16.mxu0 %v6405
        %6631 = vmatpush2.bf16.msra.mxu0 %v6404
        %6632 = vmatprep.subr.bf16.mxu0 %v6402
        %6633 = vmatpush2.bf16.msra.mxu0 %v6401
        %6634 = vmatprep.subr.bf16.mxu0 %v6399
        %6635 = vmatpush2.bf16.msra.mxu0 %v6398
        %6636 = vmatprep.subr.bf16.mxu0 %v6396
        %6637 = vmatpush2.bf16.msra.mxu0 %v6395
        %6638 = vmatprep.subr.bf16.mxu0 %v6393
        %6639 = vmatpush2.bf16.msra.mxu0 %v6392
        %6640 = vmatprep.subr.bf16.mxu0 %v6390
        %6641 = vmatpush2.bf16.msra.mxu0 %v6389
        %6642 = vmatprep.mubr.bf16.mxu0 %v5732
        %6643 = vmatmul.mubr.bf16.gmra.mxu0 %v5731
        %v6644 = vpop.f32.mrf.mxu0
        %v6645 = vadd.f32 %v6592, %v6644
        %v6646 = vpop.f32.mrf.mxu0
        %v6647 = vadd.f32 %v6594, %v6646
        %v6648 = vpop.f32.mrf.mxu0
        %v6649 = vadd.f32 %v6596, %v6648
        %v6650 = vpop.f32.mrf.mxu0
        %v6651 = vadd.f32 %v6598, %v6650
        %6652 = vmatprep.mubr.bf16.mxu0 %v5737
        %6653 = vmatmul.mubr.bf16.gmra.mxu0 %v5736
        %v6654 = vpop.f32.mrf.mxu0
        %v6655 = vadd.f32 %v6602, %v6654
        %v6656 = vpop.f32.mrf.mxu0
        %v6657 = vadd.f32 %v6604, %v6656
        %v6658 = vpop.f32.mrf.mxu0
        %v6659 = vadd.f32 %v6606, %v6658
        %v6660 = vpop.f32.mrf.mxu0
        %v6661 = vadd.f32 %v6608, %v6660
        %6662 = vdwg.mxu0
        %6663 = vmatprep.subr.bf16.mxu0 %v6435
        %6664 = vmatpush1.bf16.msra.mxu0 %v6434
        %6665 = vmatprep.subr.bf16.mxu0 %v6432
        %6666 = vmatpush1.bf16.msra.mxu0 %v6431
        %6667 = vmatprep.subr.bf16.mxu0 %v6429
        %6668 = vmatpush1.bf16.msra.mxu0 %v6428
        %6669 = vmatprep.subr.bf16.mxu0 %v6426
        %6670 = vmatpush1.bf16.msra.mxu0 %v6425
        %6671 = vmatprep.subr.bf16.mxu0 %v6423
        %6672 = vmatpush1.bf16.msra.mxu0 %v6422
        %6673 = vmatprep.subr.bf16.mxu0 %v6420
        %6674 = vmatpush1.bf16.msra.mxu0 %v6419
        %6675 = vmatprep.subr.bf16.mxu0 %v6417
        %6676 = vmatpush1.bf16.msra.mxu0 %v6416
        %6677 = vmatprep.subr.bf16.mxu0 %v6414
        %6678 = vmatpush1.bf16.msra.mxu0 %v6413
        %6679 = vmatprep.subr.bf16.mxu0 0
        %6680 = vmatpush2.bf16.msra.mxu0 0
        %6681 = vmatprep.subr.bf16.mxu0 0
        %6682 = vmatpush2.bf16.msra.mxu0 0
        %6683 = vmatprep.subr.bf16.mxu0 0
        %6684 = vmatpush2.bf16.msra.mxu0 0
        %6685 = vmatprep.subr.bf16.mxu0 0
        %6686 = vmatpush2.bf16.msra.mxu0 0
        %6687 = vmatprep.subr.bf16.mxu0 0
        %6688 = vmatpush2.bf16.msra.mxu0 0
        %6689 = vmatprep.subr.bf16.mxu0 0
        %6690 = vmatpush2.bf16.msra.mxu0 0
        %6691 = vmatprep.subr.bf16.mxu0 0
        %6692 = vmatpush2.bf16.msra.mxu0 0
        %6693 = vmatprep.subr.bf16.mxu0 0
        %6694 = vmatpush2.bf16.msra.mxu0 0
        %6695 = vmatprep.mubr.bf16.mxu0 0
        %6696 = vmatmul.mubr.bf16.gmra.mxu0 %v5733
        %v6697 = vpop.f32.mrf.mxu0
        %v6698 = vadd.f32 %v6645, %v6697
        %v6699 = vpop.f32.mrf.mxu0
        %v6700 = vadd.f32 %v6647, %v6699
        %v6701 = vpop.f32.mrf.mxu0
        %v6702 = vadd.f32 %v6649, %v6701
        %v6703 = vpop.f32.mrf.mxu0
        %v6704 = vadd.f32 %v6651, %v6703
        %6705 = vmatprep.mubr.bf16.mxu0 0
        %6706 = vmatmul.mubr.bf16.gmra.mxu0 %v5738
        %v6707 = vpop.f32.mrf.mxu0
        %v6708 = vadd.f32 %v6655, %v6707
        %v6709 = vpop.f32.mrf.mxu0
        %v6710 = vadd.f32 %v6657, %v6709
        %v6711 = vpop.f32.mrf.mxu0
        %v6712 = vadd.f32 %v6659, %v6711
        %v6713 = vpop.f32.mrf.mxu0
        %v6714 = vadd.f32 %v6661, %v6713
        %6715 = vdwg.mxu0
        %6716 = vmatprep.subr.bf16.mxu0 0
        %6717 = vmatpush1.bf16.msra.mxu0 %v6340
        %6718 = vmatprep.subr.bf16.mxu0 0
        %6719 = vmatpush1.bf16.msra.mxu0 %v6337
        %6720 = vmatprep.subr.bf16.mxu0 0
        %6721 = vmatpush1.bf16.msra.mxu0 %v6334
        %6722 = vmatprep.subr.bf16.mxu0 0
        %6723 = vmatpush1.bf16.msra.mxu0 %v6331
        %6724 = vmatprep.subr.bf16.mxu0 0
        %6725 = vmatpush1.bf16.msra.mxu0 %v6328
        %6726 = vmatprep.subr.bf16.mxu0 0
        %6727 = vmatpush1.bf16.msra.mxu0 %v6325
        %6728 = vmatprep.subr.bf16.mxu0 0
        %6729 = vmatpush1.bf16.msra.mxu0 %v6322
        %6730 = vmatprep.subr.bf16.mxu0 0
        %6731 = vmatpush1.bf16.msra.mxu0 %v6319
        %6732 = vmatprep.subr.bf16.mxu0 0
        %6733 = vmatpush2.bf16.msra.mxu0 %v6364
        %6734 = vmatprep.subr.bf16.mxu0 0
        %6735 = vmatpush2.bf16.msra.mxu0 %v6361
        %6736 = vmatprep.subr.bf16.mxu0 0
        %6737 = vmatpush2.bf16.msra.mxu0 %v6358
        %6738 = vmatprep.subr.bf16.mxu0 0
        %6739 = vmatpush2.bf16.msra.mxu0 %v6355
        %6740 = vmatprep.subr.bf16.mxu0 0
        %6741 = vmatpush2.bf16.msra.mxu0 %v6352
        %6742 = vmatprep.subr.bf16.mxu0 0
        %6743 = vmatpush2.bf16.msra.mxu0 %v6349
        %6744 = vmatprep.subr.bf16.mxu0 0
        %6745 = vmatpush2.bf16.msra.mxu0 %v6346
        %6746 = vmatprep.subr.bf16.mxu0 0
        %6747 = vmatpush2.bf16.msra.mxu0 %v6343
        %6748 = vmatprep.mubr.bf16.mxu0 %v5730
        %6749 = vmatmul.mubr.bf16.gmra.mxu0 %v5729
        %v6750 = vpop.f32.mrf.mxu0
        %v6751 = vadd.f32 %v5913, %v6750
        %v6752 = vpop.f32.mrf.mxu0
        %v6753 = vpop.f32.mrf.mxu0
        %v6754 = vadd.f32 %v5913, %v6753
        %v6755 = vpop.f32.mrf.mxu0
        %6756 = vmatprep.mubr.bf16.mxu0 %v5735
        %6757 = vmatmul.mubr.bf16.gmra.mxu0 %v5734
        %v6758 = vpop.f32.mrf.mxu0
        %v6759 = vadd.f32 %v5913, %v6758
        %v6760 = vpop.f32.mrf.mxu0
        %v6761 = vpop.f32.mrf.mxu0
        %v6762 = vadd.f32 %v5913, %v6761
        %v6763 = vpop.f32.mrf.mxu0
        %6764 = vdwg.mxu0
        %6765 = vmatprep.subr.bf16.mxu0 0
        %6766 = vmatpush1.bf16.msra.mxu0 %v6388
        %6767 = vmatprep.subr.bf16.mxu0 0
        %6768 = vmatpush1.bf16.msra.mxu0 %v6385
        %6769 = vmatprep.subr.bf16.mxu0 0
        %6770 = vmatpush1.bf16.msra.mxu0 %v6382
        %6771 = vmatprep.subr.bf16.mxu0 0
        %6772 = vmatpush1.bf16.msra.mxu0 %v6379
        %6773 = vmatprep.subr.bf16.mxu0 0
        %6774 = vmatpush1.bf16.msra.mxu0 %v6376
        %6775 = vmatprep.subr.bf16.mxu0 0
        %6776 = vmatpush1.bf16.msra.mxu0 %v6373
        %6777 = vmatprep.subr.bf16.mxu0 0
        %6778 = vmatpush1.bf16.msra.mxu0 %v6370
        %6779 = vmatprep.subr.bf16.mxu0 0
        %6780 = vmatpush1.bf16.msra.mxu0 %v6367
        %6781 = vmatprep.subr.bf16.mxu0 0
        %6782 = vmatpush2.bf16.msra.mxu0 %v6412
        %6783 = vmatprep.subr.bf16.mxu0 0
        %6784 = vmatpush2.bf16.msra.mxu0 %v6409
        %6785 = vmatprep.subr.bf16.mxu0 0
        %6786 = vmatpush2.bf16.msra.mxu0 %v6406
        %6787 = vmatprep.subr.bf16.mxu0 0
        %6788 = vmatpush2.bf16.msra.mxu0 %v6403
        %6789 = vmatprep.subr.bf16.mxu0 0
        %6790 = vmatpush2.bf16.msra.mxu0 %v6400
        %6791 = vmatprep.subr.bf16.mxu0 0
        %6792 = vmatpush2.bf16.msra.mxu0 %v6397
        %6793 = vmatprep.subr.bf16.mxu0 0
        %6794 = vmatpush2.bf16.msra.mxu0 %v6394
        %6795 = vmatprep.subr.bf16.mxu0 0
        %6796 = vmatpush2.bf16.msra.mxu0 %v6391
        %6797 = vmatprep.mubr.bf16.mxu0 %v5732
        %6798 = vmatmul.mubr.bf16.gmra.mxu0 %v5731
        %v6799 = vpop.f32.mrf.mxu0
        %v6800 = vadd.f32 %v6751, %v6799
        %v6801 = vpop.f32.mrf.mxu0
        %v6802 = vpop.f32.mrf.mxu0
        %v6803 = vadd.f32 %v6754, %v6802
        %v6804 = vpop.f32.mrf.mxu0
        %6805 = vmatprep.mubr.bf16.mxu0 %v5737
        %6806 = vmatmul.mubr.bf16.gmra.mxu0 %v5736
        %v6807 = vpop.f32.mrf.mxu0
        %v6808 = vadd.f32 %v6759, %v6807
        %v6809 = vpop.f32.mrf.mxu0
        %v6810 = vpop.f32.mrf.mxu0
        %v6811 = vadd.f32 %v6762, %v6810
        %v6812 = vpop.f32.mrf.mxu0
        %6813 = vdwg.mxu0
        %6814 = vmatprep.subr.bf16.mxu0 0
        %6815 = vmatpush1.bf16.msra.mxu0 %v6436
        %6816 = vmatprep.subr.bf16.mxu0 0
        %6817 = vmatpush1.bf16.msra.mxu0 %v6433
        %6818 = vmatprep.subr.bf16.mxu0 0
        %6819 = vmatpush1.bf16.msra.mxu0 %v6430
        %6820 = vmatprep.subr.bf16.mxu0 0
        %6821 = vmatpush1.bf16.msra.mxu0 %v6427
        %6822 = vmatprep.subr.bf16.mxu0 0
        %6823 = vmatpush1.bf16.msra.mxu0 %v6424
        %6824 = vmatprep.subr.bf16.mxu0 0
        %6825 = vmatpush1.bf16.msra.mxu0 %v6421
        %6826 = vmatprep.subr.bf16.mxu0 0
        %6827 = vmatpush1.bf16.msra.mxu0 %v6418
        %6828 = vmatprep.subr.bf16.mxu0 0
        %6829 = vmatpush1.bf16.msra.mxu0 %v6415
        %6830 = vmatprep.subr.bf16.mxu0 0
        %6831 = vmatpush2.bf16.msra.mxu0 0
        %6832 = vmatprep.subr.bf16.mxu0 0
        %6833 = vmatpush2.bf16.msra.mxu0 0
        %6834 = vmatprep.subr.bf16.mxu0 0
        %6835 = vmatpush2.bf16.msra.mxu0 0
        %6836 = vmatprep.subr.bf16.mxu0 0
        %6837 = vmatpush2.bf16.msra.mxu0 0
        %6838 = vmatprep.subr.bf16.mxu0 0
        %6839 = vmatpush2.bf16.msra.mxu0 0
        %6840 = vmatprep.subr.bf16.mxu0 0
        %6841 = vmatpush2.bf16.msra.mxu0 0
        %6842 = vmatprep.subr.bf16.mxu0 0
        %6843 = vmatpush2.bf16.msra.mxu0 0
        %6844 = vmatprep.subr.bf16.mxu0 0
        %6845 = vmatpush2.bf16.msra.mxu0 0
        %6846 = vmatprep.mubr.bf16.mxu0 0
        %6847 = vmatmul.mubr.bf16.gmra.mxu0 %v5733
        %v6848 = vpop.f32.mrf.mxu0
        %v6849 = vadd.f32 %v6800, %v6848
        %v6850 = vpop.f32.mrf.mxu0
        %v6851 = vpop.f32.mrf.mxu0
        %v6852 = vadd.f32 %v6803, %v6851
        %v6853 = vpop.f32.mrf.mxu0
        %6854 = vmatprep.mubr.bf16.mxu0 0
        %6855 = vmatmul.mubr.bf16.gmra.mxu0 %v5738
        %v6856 = vpop.f32.mrf.mxu0
        %v6857 = vadd.f32 %v6808, %v6856
        %v6858 = vpop.f32.mrf.mxu0
        %v6859 = vpop.f32.mrf.mxu0
        %v6860 = vadd.f32 %v6811, %v6859
        %v6861 = vpop.f32.mrf.mxu0
        %6862 = vdwg.mxu0
        %v6863 = vmin.f32 %v6698, 20.0
        %v6864 = vmin.f32 %v6702, 20.0
        %v6865 = vmin.f32 %v6708, 20.0
        %v6866 = vmin.f32 %v6712, 20.0
        %v6867 = vmul.f32 %v6863, 1.442695
        %v6868 = vpow.pop %v6867
        %v6869 = vmul.f32 %v6864, 1.442695
        %v6870 = vpow.pop %v6869
        %v6871 = vmul.f32 %v6865, 1.442695
        %v6872 = vpow.pop %v6871
        %v6873 = vmul.f32 %v6866, 1.442695
        %v6874 = vpow.pop %v6873
        %v6875 = vadd.f32 %v6868, 2.0
        %v6876 = vadd.f32 %v6870, 2.0
        %v6877 = vadd.f32 %v6872, 2.0
        %v6878 = vadd.f32 %v6874, 2.0
        %v6879 = vmul.f32 %v6868, %v6875
        %v6880 = vmul.f32 %v6870, %v6876
        %v6881 = vmul.f32 %v6872, %v6877
        %v6882 = vmul.f32 %v6874, %v6878
        %v6883 = vmul.f32 %v6698, %v6879
        %v6884 = vmul.f32 %v6702, %v6880
        %v6885 = vmul.f32 %v6708, %v6881
        %v6886 = vmul.f32 %v6712, %v6882
        %v6887 = vadd.f32 %v6879, 2.0
        %v6888 = vadd.f32 %v6880, 2.0
        %v6889 = vadd.f32 %v6881, 2.0
        %v6890 = vadd.f32 %v6882, 2.0
        %v6891 = vrcp.pop %v6887
        %v6892 = vrcp.pop %v6888
        %v6893 = vrcp.pop %v6889
        %v6894 = vrcp.pop %v6890
        %v6895 = vmul.f32 %v6883, %v6891
        %v6896 = vmul.f32 %v6884, %v6892
        %v6897 = vmul.f32 %v6885, %v6893
        %v6898 = vmul.f32 %v6886, %v6894
        %v6899 = vmin.f32 %v6700, 20.0
        %v6900 = vmin.f32 %v6704, 20.0
        %v6901 = vmin.f32 %v6710, 20.0
        %v6902 = vmin.f32 %v6714, 20.0
        %v6903 = vmul.f32 %v6899, 1.442695
        %v6904 = vpow.pop %v6903
        %v6905 = vmul.f32 %v6900, 1.442695
        %v6906 = vpow.pop %v6905
        %v6907 = vmul.f32 %v6901, 1.442695
        %v6908 = vpow.pop %v6907
        %v6909 = vmul.f32 %v6902, 1.442695
        %v6910 = vpow.pop %v6909
        %v6911 = vadd.f32 %v6904, 2.0
        %v6912 = vadd.f32 %v6906, 2.0
        %v6913 = vadd.f32 %v6908, 2.0
        %v6914 = vadd.f32 %v6910, 2.0
        %v6915 = vmul.f32 %v6904, %v6911
        %v6916 = vmul.f32 %v6906, %v6912
        %v6917 = vmul.f32 %v6908, %v6913
        %v6918 = vmul.f32 %v6910, %v6914
        %v6919 = vmul.f32 %v6700, %v6915
        %v6920 = vmul.f32 %v6704, %v6916
        %v6921 = vmul.f32 %v6710, %v6917
        %v6922 = vmul.f32 %v6714, %v6918
        %v6923 = vadd.f32 %v6915, 2.0
        %v6924 = vadd.f32 %v6916, 2.0
        %v6925 = vadd.f32 %v6917, 2.0
        %v6926 = vadd.f32 %v6918, 2.0
        %v6927 = vrcp.pop %v6923
        %v6928 = vrcp.pop %v6924
        %v6929 = vrcp.pop %v6925
        %v6930 = vrcp.pop %v6926
        %v6931 = vmul.f32 %v6919, %v6927
        %v6932 = vmul.f32 %v6920, %v6928
        %v6933 = vmul.f32 %v6921, %v6929
        %v6934 = vmul.f32 %v6922, %v6930
        %v6935 = vadd.f32 %v6895, %v6931
        %v6936 = vadd.f32 %v6896, %v6932
        %v6937 = vadd.f32 %v6897, %v6933
        %v6938 = vadd.f32 %v6898, %v6934
        %v6939 = vmin.f32 %v6849, 20.0
        %v6940 = vmin.f32 %v6852, 20.0
        %v6941 = vmin.f32 %v6857, 20.0
        %v6942 = vmin.f32 %v6860, 20.0
        %v6943 = vmul.f32 %v6939, 1.442695
        %v6944 = vpow.pop %v6943
        %v6945 = vmul.f32 %v6940, 1.442695
        %v6946 = vpow.pop %v6945
        %v6947 = vmul.f32 %v6941, 1.442695
        %v6948 = vpow.pop %v6947
        %v6949 = vmul.f32 %v6942, 1.442695
        %v6950 = vpow.pop %v6949
        %v6951 = vadd.f32 %v6944, 2.0
        %v6952 = vadd.f32 %v6946, 2.0
        %v6953 = vadd.f32 %v6948, 2.0
        %v6954 = vadd.f32 %v6950, 2.0
        %v6955 = vmul.f32 %v6944, %v6951
        %v6956 = vmul.f32 %v6946, %v6952
        %v6957 = vmul.f32 %v6948, %v6953
        %v6958 = vmul.f32 %v6950, %v6954
        %v6959 = vmul.f32 %v6849, %v6955
        %v6960 = vmul.f32 %v6852, %v6956
        %v6961 = vmul.f32 %v6857, %v6957
        %v6962 = vmul.f32 %v6860, %v6958
        %v6963 = vadd.f32 %v6955, 2.0
        %v6964 = vadd.f32 %v6956, 2.0
        %v6965 = vadd.f32 %v6957, 2.0
        %v6966 = vadd.f32 %v6958, 2.0
        %v6967 = vrcp.pop %v6963
        %v6968 = vrcp.pop %v6964
        %v6969 = vrcp.pop %v6965
        %v6970 = vrcp.pop %v6966
        %v6971 = vmul.f32 %v6959, %v6967
        %v6972 = vmul.f32 %v6960, %v6968
        %v6973 = vmul.f32 %v6961, %v6969
        %v6974 = vmul.f32 %v6962, %v6970
        %v6975 = vadd.f32 %v6935, %v6971
        %v6976 = vadd.f32 %v6936, %v6972
        %v6977 = vadd.f32 %v6937, %v6973
        %v6978 = vadd.f32 %v6938, %v6974
        %6979 = vst [vmem:[%s505] sm:$0xff] %v6975
        %6980 = vst [vmem:[%s505 + $0x8] sm:$0xff] %v6976
        %6981 = vst [vmem:[%s505 + $0x10] sm:$0xff] %v6977
        %6982 = vst [vmem:[%s505 + $0x18] sm:$0xff] %v6978
        %s6983 = sand.u32 %s255, 1
        %s6984 = scalar_lea.sflag [#allocation5], %s6983
        %s6985 = sand.u32 %s255, 1
        %s6986 = smul.addr %s6985, 32
        %s6987 = scalar_lea.vmem [#allocation20], %s6986
        // Predicated region
        $region101: #{tpu_custom_call.1} parent=59 // pred_check
          %p6988 = pneg %p265
        $region102: #{tpu_custom_call.1} parent=59 // pred_check_branch
          %6990 = sbr.rel (%p6988) target = $region104
        $region103: #{tpu_custom_call.1} parent=59 // pred_region
          %s6991 = smul.u32 2, %s32
          %s6993 = ssub.s32 512, 512
          %6994 = vsyncadd %s6984, %s6993
          %s6995 = smul.addr %s6991, 2
          %s6996 = smul.addr %s6995, 128
          %s6997 = scalar_lea.hbm %s10, %s6996
          %s6998 = sshll.u32 %s6987, 4
          %s6999 = int_to_ptr.vmem [resolvable:$true] %s6998
          %7004 = dma.vmem_to_hbm [thread:$0]  %s6999, 512, %s6997, %s6984, 128, 128, 8
        $region104: #{tpu_custom_call.1} parent=59 // pred_fallthru
          _
      $region60: #{tpu_custom_call.1} parent=5 // pred_fallthru
        _
      %p7005 = scmp.le.s32.totalorder 2, %s27
      // Predicated region
      $region105: #{tpu_custom_call.1} parent=5 // pred_check
        %p7006 = pneg %p7005
      $region106: #{tpu_custom_call.1} parent=5 // pred_check_branch
        %7008 = sbr.rel (%p7006) target = $region108
      $region107: #{tpu_custom_call.1} parent=5 // pred_region
        %s7009 = ssub.s32 %s27, 2
        // Predicated region
        $region109: #{tpu_custom_call.1} parent=107 // pred_check
          %p7010 = pneg %p271
        $region110: #{tpu_custom_call.1} parent=107 // pred_check_branch
          %7012 = sbr.rel (%p7010) target = $region112
        $region111: #{tpu_custom_call.1} parent=107 // pred_region
          %s7013 = sand.u32 %s256, 1
          %s7014 = scalar_lea.sflag [#allocation5], %s7013
          %s7015 = sand.u32 %s256, 1
          %s7016 = smul.addr %s7015, 32
          %s7017 = scalar_lea.vmem [#allocation20], %s7016
          %7018 = dma.done %s7014, 512
        $region112: #{tpu_custom_call.1} parent=107 // pred_fallthru
          _
      $region108: #{tpu_custom_call.1} parent=5 // pred_fallthru
        _
    $region6: #{tpu_custom_call.1} parent=1 // loop_footer
      %s31 = sadd.s32 1, %s27
    $region7: #{tpu_custom_call.1} parent=1 // loop_footer_branch
      %26 = sbr.rel target = $region3
    $region8: #{tpu_custom_call.1} parent=1 // loop_exit
      _
    %7019 = vsyncpa [#allocation4], 1
    %s7020 = scalar_lea.sflag [#allocation4], 1
    %7021 = vsyncpa %s7020, 1
    %7022 = vsyncpa [#allocation7], 1
    %7023 = vsyncpa [#allocation10], 1
    %7024 = vsyncpa [#allocation13], 1
    %7025 = vsyncpa [#allocation16], 1
    %7026 = vsyncpa [#allocation19], 1
    %7027 = vsyncpa [#allocation5], 1
    %s7028 = scalar_lea.sflag [#allocation5], 1
    %7029 = vsyncpa %s7028, 1

</llo_original>
